<compile_context>
chip_gen: v7x
topology: tpu7x:2x2x1
jax: 0.10.0
libtpu: 0.0.40
codegen_flags: <defaults>
</compile_context>

<pallas_src>
import functools

import jax
import jax.numpy as jnp
from jax import lax
from jax.experimental import pallas as pl
from jax.experimental.pallas import tpu as pltpu


# ----------------------------------------------------------------------------
# Pallas kernel: grid = (batch, Cin chunk).
# ----------------------------------------------------------------------------
def _aspp_kernel(x_ref, w1_ref, w9_ref, wimg_ref, bimg_ref, bcat_ref,
                 out_ref, acc_img_ref, acc_br_ref,
                 *, H, W, Cr, rates, inv_hw):
    R = len(rates)
    c = pl.program_id(1)

    @pl.when(c == 0)
    def _init():
        acc_img_ref[...] = jnp.zeros_like(acc_img_ref)
        acc_br_ref[...] = jnp.zeros_like(acc_br_ref)

    x = x_ref[0]                                   # (H, W, Ck)  compute dtype
    x2d = x.reshape(H * W, x.shape[-1])            # (H*W, Ck)

    # ---- image-pool partial: XLU column-sum (f32) + tiny (1,Ck)@(Ck,Cr) ----
    s = jnp.sum(x2d.astype(jnp.float32), axis=0, keepdims=True)        # (1, Ck)
    acc_img_ref[...] += jnp.dot(s, wimg_ref[...],
                                preferred_element_type=jnp.float32)

    # ---- 1x1 branch partial ----
    y1 = jnp.dot(x2d, w1_ref[...], preferred_element_type=jnp.float32)
    acc_br_ref[0] += y1.reshape(H, W, Cr)

    # ---- dilated 3x3 branches ----
    # Hoisted column masks: one iota, one (1, W, 1) mask per distinct dx.
    col = lax.broadcasted_iota(jnp.int32, (1, W, 1), 1)
    col_masks = {}
    for r in rates:
        for dx in (-r, r):
            w_lo, w_hi = max(0, -dx), min(W, W - dx)
            if w_lo < w_hi and dx not in col_masks:
                col_masks[dx] = (col >= w_lo) & (col < w_hi)

    for bi, r in enumerate(rates):
        for ky in range(3):
            dy = (ky - 1) * r
            h_lo, h_hi = max(0, -dy), min(H, H - dy)
            if h_lo >= h_hi:
                continue                  # whole tap row fully clipped
            # one fused matmul for the 3 taps sharing this row offset
            w_grp = w9_ref[bi, ky]                                 # (Ck, 3*Cr)
            z3 = jnp.dot(x2d, w_grp, preferred_element_type=jnp.float32)
            z3 = z3.reshape(H, W, 3 * Cr)
            group = None
            for kx in range(3):
                dx = (kx - 1) * r
                w_lo, w_hi = max(0, -dx), min(W, W - dx)
                if w_lo >= w_hi:
                    continue              # tap fully clipped in x
                tap = z3[:, :, kx * Cr:(kx + 1) * Cr]
                if dx != 0:
                    # shift columns on the XLU, keep the add full-width
                    tap = pltpu.roll(tap, (-dx) % W, 1)
                    tap = jnp.where(col_masks[dx], tap, 0.0)
                group = tap if group is None else group + tap
            if group is not None:
                # single RMW commit per (branch, ky): rows are a cheap
                # leading-dim slice; columns stay full width (no vst.msk).
                acc_br_ref[1 + bi, h_lo:h_hi] += group[h_lo + dy:h_hi + dy]

    # ---- finalize: bias + ReLU + cast, channel-offset stores into the
    #      concatenated output.  Channel order: [img, 1x1, r0, r1, r2]. ----
    @pl.when(c == pl.num_programs(1) - 1)
    def _finalize():
        img = acc_img_ref[...] * inv_hw + bimg_ref[...]
        img = jnp.maximum(img, 0.0).reshape(1, 1, Cr)
        out_ref[0, :, :, 0:Cr] = jnp.broadcast_to(
            img, (H, W, Cr)).astype(out_ref.dtype)
        for bi in range(1 + R):
            b = bcat_ref[bi:bi + 1, :].reshape(1, 1, Cr)
            y = jnp.maximum(acc_br_ref[bi] + b, 0.0)
            off = (1 + bi) * Cr
            out_ref[0, :, :, off:off + Cr] = y.astype(out_ref.dtype)


# ----------------------------------------------------------------------------
# Host-side parameter preparation: fold BN scale into weights, group taps by ky.
# ----------------------------------------------------------------------------
def prepare_params(params, rates, compute_dtype=jnp.bfloat16):
    Cin, Cr = params["w1"].shape
    R = len(rates)

    w1s = params["w1"] * params["s1"].reshape(1, Cr)                   # (Cin, Cr)
    w3s = params["w3"] * params["s3"].reshape(R, 1, 1, 1, Cr)          # (R,3,3,Cin,Cr)
    wimgs = params["wimg"] * params["simg"].reshape(1, Cr)             # (Cin, Cr)

    # (R, 3, Cin, 3*Cr): for each rate and each ky, the 3 kx taps concatenated
    # on output channels, so the kernel fuses them in one matmul and indexes
    # [bi, ky] on cheap leading dims (no lane-misaligned weight slices).
    w9 = jnp.stack(
        [jnp.stack(
            [jnp.concatenate([w3s[i, ky, kx] for kx in range(3)], axis=-1)
             for ky in range(3)], axis=0)
         for i in range(R)], axis=0)

    bcat = jnp.concatenate([params["b1"].reshape(1, Cr),
                            params["b3"].reshape(R, Cr)], axis=0)      # (1+R, Cr)

    return dict(
        w1=w1s.astype(compute_dtype),
        w9=w9.astype(compute_dtype),
        wimg=wimgs.astype(jnp.float32),      # img branch kept in f32 (tiny)
        bimg=params["bimg"].reshape(1, Cr).astype(jnp.float32),
        bcat=bcat.astype(jnp.float32),
    )


# ----------------------------------------------------------------------------
# Wrapper
# ----------------------------------------------------------------------------
def _vmem_limit_bytes():
    # Derive from the chip's actual VMEM (don't hard-cap 128-MiB parts at
    # 48 MiB); leave ~15% headroom for Mosaic-internal scratch.  The fallback
    # guards ONLY the info query (e.g. interpret mode), never kernel errors.
    try:
        info = pltpu.get_tpu_info()
        cap = getattr(info, "vmem_capacity_bytes", None) or \
              getattr(info, "vmem_size_bytes", None)
        if cap:
            return int(cap * 0.85)
    except Exception:
        pass
    return 48 * 1024 * 1024


def aspp_pallas(x_c, prep, rates=(6, 12, 18), out_dtype=jnp.bfloat16,
                cin_block=512):
    """x_c: (N, H, W, Cin) in the compute dtype.  Returns (N, H, W, 5*Cr).

    cin_block: Cin reduction tile.  ~256 on v7x (64 MiB VMEM), 512-1024 on
    v5e/v6e.  Must divide Cin (it is clamped to Cin for small test shapes).
    """
    N, H, W, Cin = x_c.shape
    Cr = prep["wimg"].shape[1]
    R = len(rates)

    Ck = min(cin_block, Cin)
    assert Cin % Ck == 0, (Cin, Ck)
    n_chunks = Cin // Ck

    kernel = functools.partial(_aspp_kernel, H=H, W=W, Cr=Cr,
                               rates=tuple(rates), inv_hw=1.0 / (H * W))

    in_specs = [
        pl.BlockSpec((1, H, W, Ck), lambda n, c: (n, 0, 0, c)),        # x
        pl.BlockSpec((Ck, Cr), lambda n, c: (c, 0)),                   # w1
        pl.BlockSpec((R, 3, Ck, 3 * Cr), lambda n, c: (0, 0, c, 0)),   # w9 (taps)
        pl.BlockSpec((Ck, Cr), lambda n, c: (c, 0)),                   # wimg
        pl.BlockSpec((1, Cr), lambda n, c: (0, 0)),                    # bimg
        pl.BlockSpec((1 + R, Cr), lambda n, c: (0, 0)),                # bcat
    ]
    out_spec = pl.BlockSpec((1, H, W, (2 + R) * Cr), lambda n, c: (n, 0, 0, 0))

    return pl.pallas_call(
        kernel,
        out_shape=jax.ShapeDtypeStruct((N, H, W, (2 + R) * Cr), out_dtype),
        grid_spec=pltpu.PrefetchScalarGridSpec(
            num_scalar_prefetch=0,
            grid=(N, n_chunks),
            in_specs=in_specs,
            out_specs=out_spec,
            scratch_shapes=[
                pltpu.VMEM((1, Cr), jnp.float32),              # img-pool acc
                pltpu.VMEM((1 + R, H, W, Cr), jnp.float32),    # branch accs
            ]),
        compiler_params=pltpu.CompilerParams(
            dimension_semantics=("parallel", "arbitrary"),
            vmem_limit_bytes=_vmem_limit_bytes()),
    )(x_c, prep["w1"], prep["w9"], prep["wimg"], prep["bimg"], prep["bcat"])


# ----------------------------------------------------------------------------
# Pure-JAX reference (NHWC, independent lax convs).  Uses the same bf16
# quantization of inputs / scale-folded weights so the comparison is tight.
# ----------------------------------------------------------------------------
def aspp_reference(x_c, params, rates=(6, 12, 18), compute_dtype=jnp.bfloat16):
    N, H, W, Cin = x_c.shape
    Cr = params["w1"].shape[1]
    xf = x_c.astype(jnp.float32)
    dn = ("NHWC", "HWIO", "NHWC")
    hi = lax.Precision.HIGHEST

    def q(w):  # scale-folded weight quantized like the kernel path
        return w.astype(compute_dtype).astype(jnp.float32)

    # image pooling branch (kernel keeps this branch in f32)
    mean = jnp.mean(xf, axis=(1, 2), keepdims=True)
    wimg = (params["wimg"] * params["simg"].reshape(1, Cr)).astype(jnp.float32)
    img = lax.conv_general_dilated(mean, wimg.reshape(1, 1, Cin, Cr), (1, 1),
                                   "VALID", dimension_numbers=dn, precision=hi)
    img = jnp.maximum(img + params["bimg"].reshape(1, 1, 1, Cr), 0.0)
    outs = [jnp.broadcast_to(img, (N, H, W, Cr))]

    # 1x1 branch
    w1 = q(params["w1"] * params["s1"].reshape(1, Cr))
    y1 = lax.conv_general_dilated(xf, w1.reshape(1, 1, Cin, Cr), (1, 1), "VALID",
                                  dimension_numbers=dn, precision=hi)
    outs.append(jnp.maximum(y1 + params["b1"].reshape(1, 1, 1, Cr), 0.0))

    # dilated branches
    for bi, r in enumerate(rates):
        w3 = q(params["w3"][bi] * params["s3"][bi, 0].reshape(1, 1, 1, Cr))
        yr = lax.conv_general_dilated(xf, w3, (1, 1), [(r, r), (r, r)],
                                      rhs_dilation=(r, r), dimension_numbers=dn,
                                      precision=hi)
        outs.append(jnp.maximum(yr + params["b3"][bi, 0].reshape(1, 1, 1, Cr), 0.0))
    return jnp.concatenate(outs, axis=-1)


# ----------------------------------------------------------------------------
# Deterministic parameter construction (synthetic; BN folded to scale/bias).
# ----------------------------------------------------------------------------
def make_params(key, Cin, Cr, n_rates, eps=1e-5):
    ks = jax.random.split(key, 16)

    def fold_bn(kg, kb, km, kv):
        gamma = 1.0 + 0.1 * jax.random.normal(kg, (Cr,), jnp.float32)
        beta = 0.1 * jax.random.normal(kb, (Cr,), jnp.float32)
        rmean = 0.05 * jax.random.normal(km, (Cr,), jnp.float32)
        rvar = 1.0 + 0.1 * jax.random.uniform(kv, (Cr,), jnp.float32)
        scale = gamma / jnp.sqrt(rvar + eps)
        bias = beta - rmean * scale
        return scale, bias

    w1 = 0.1 * jax.random.normal(ks[0], (Cin, Cr), jnp.float32)
    s1, b1 = fold_bn(ks[1], ks[2], ks[3], ks[4])
    w3 = 0.1 * jax.random.normal(ks[5], (n_rates, 3, 3, Cin, Cr), jnp.float32)
    s3_l, b3_l = [], []
    for i in range(n_rates):
        s, b = fold_bn(*jax.random.split(ks[6 + i], 4))
        s3_l.append(s)
        b3_l.append(b)
    s3 = jnp.stack(s3_l).reshape(n_rates, 1, Cr)
    b3 = jnp.stack(b3_l).reshape(n_rates, 1, Cr)
    wimg = 0.1 * jax.random.normal(ks[10], (Cin, Cr), jnp.float32)
    simg, bimg = fold_bn(ks[11], ks[12], ks[13], ks[14])

    return dict(w1=w1, s1=s1.reshape(1, Cr), b1=b1.reshape(1, Cr),
                w3=w3, s3=s3, b3=b3,
                wimg=wimg, simg=simg.reshape(1, Cr), bimg=bimg.reshape(1, Cr))


if __name__ == "__main__":
    # Small shapes consistent with the module (NCHW at the PyTorch boundary).
    # NOTE: tune / benchmark only at production shapes (H=W=64, Cin=2048,
    # Cr=256); these toy shapes pad every tile to 128 lanes.
    N, Cin, H, W = 2, 4, 16, 16
    Cr = 8                      # reduction_dim (small for the test)
    rates = (6, 12, 18)         # output_stride == 16
    compute_dtype = jnp.bfloat16

    key = jax.random.PRNGKey(0)
    kx_, kp = jax.random.split(key)
    x_nchw = jax.random.normal(kx_, (N, Cin, H, W), jnp.float32)
    x_nhwc = jnp.transpose(x_nchw, (0, 2, 3, 1))   # NCHW -> NHWC for the kernel
    x_c = x_nhwc.astype(compute_dtype)             # bf16 activations for the MXU

    params = make_params(kp, Cin, Cr, len(rates))
    prep = prepare_params(params, rates, compute_dtype)

    out = aspp_pallas(x_c, prep, rates)            # bf16 output by default
    out = jax.block_until_ready(out)

    ref = jax.block_until_ready(aspp_reference(x_c, params, rates, compute_dtype))
    assert out.shape == (N, H, W, 5 * Cr), out.shape
    err = float(jnp.max(jnp.abs(out.astype(jnp.float32) - ref)))
    # bf16 output (halved writeback): tolerance covers the final bf16 rounding.
    assert err < 5e-2, f"max abs diff {err}"

    # back to PyTorch's NCHW channel-concat convention if desired:
    out_nchw = jnp.transpose(out, (0, 3, 1, 2))
    assert out_nchw.shape == (N, 5 * Cr, H, W)

    print("KERNEL_OK")
</pallas_src>

<mosaic_0001>
module attributes {stable_mosaic.version = 11 : i64} {
  func.func @_aspp_kernel(%arg0: i32, %arg1: i32, %arg2: memref<1x16x16x4xbf16, #tpu.memory_space<vmem>>, %arg3: memref<4x8xbf16, #tpu.memory_space<vmem>>, %arg4: memref<3x3x4x24xbf16, #tpu.memory_space<vmem>>, %arg5: memref<4x8xf32, #tpu.memory_space<vmem>>, %arg6: memref<1x8xf32, #tpu.memory_space<vmem>>, %arg7: memref<4x8xf32, #tpu.memory_space<vmem>>, %arg8: memref<1x16x16x40xbf16, #tpu.memory_space<vmem>>, %arg9: memref<1x8xf32, #tpu.memory_space<vmem>>, %arg10: memref<4x16x16x8xf32, #tpu.memory_space<vmem>>) attributes {dimension_semantics = [#tpu.dimension_semantics<parallel>, #tpu.dimension_semantics<arbitrary>], iteration_bounds = array<i64: 2, 1>, scalar_prefetch = 0 : i64, scratch_operands = 2 : i64, tpu.core_type = #tpu.core_type<tc>, window_params = [{transform_indices = @transform_0, window_bounds = array<i64: 1, 16, 16, 4>}, {transform_indices = @transform_1, window_bounds = array<i64: 4, 8>}, {transform_indices = @transform_2, window_bounds = array<i64: 3, 3, 4, 24>}, {transform_indices = @transform_3, window_bounds = array<i64: 4, 8>}, {pipeline_mode = #tpu.pipeline_mode<synchronous>, transform_indices = @transform_4, window_bounds = array<i64: 1, 8>}, {pipeline_mode = #tpu.pipeline_mode<synchronous>, transform_indices = @transform_5, window_bounds = array<i64: 4, 8>}, {transform_indices = @transform_6, window_bounds = array<i64: 1, 16, 16, 40>}]} {
    %c0_i32 = arith.constant 0 : i32
    %0 = arith.cmpi eq, %arg1, %c0_i32 : i32
    %1 = arith.extui %0 : i1 to i32
    %c0_i32_0 = arith.constant 0 : i32
    %2 = arith.cmpi ne, %1, %c0_i32_0 : i32
    scf.if %2 {
      %cst_137 = arith.constant 0.000000e+00 : f32
      %212 = vector.broadcast %cst_137 : f32 to vector<1x8xf32>
      %c0_138 = arith.constant 0 : index
      %c0_139 = arith.constant 0 : index
      %213 = vector.load %arg9[%c0_138, %c0_139] : memref<1x8xf32, #tpu.memory_space<vmem>>, vector<1x8xf32>
      tpu.vector_store %arg9[%c0_138, %c0_139], %212 {strides = array<i32>} : memref<1x8xf32, #tpu.memory_space<vmem>>, vector<1x8xf32>,
      %cst_140 = arith.constant 0.000000e+00 : f32
      %214 = vector.broadcast %cst_140 : f32 to vector<4x16x16x8xf32>
      %c0_141 = arith.constant 0 : index
      %c0_142 = arith.constant 0 : index
      %c0_143 = arith.constant 0 : index
      %c0_144 = arith.constant 0 : index
      %215 = vector.load %arg10[%c0_141, %c0_142, %c0_143, %c0_144] : memref<4x16x16x8xf32, #tpu.memory_space<vmem>>, vector<4x16x16x8xf32>
      tpu.vector_store %arg10[%c0_141, %c0_142, %c0_143, %c0_144], %214 {strides = array<i32>} : memref<4x16x16x8xf32, #tpu.memory_space<vmem>>, vector<4x16x16x8xf32>,
    } else {
    }
    %c0 = arith.constant 0 : index
    %c0_1 = arith.constant 0 : index
    %c0_2 = arith.constant 0 : index
    %c0_3 = arith.constant 0 : index
    %3 = vector.load %arg2[%c0, %c0_1, %c0_2, %c0_3] : memref<1x16x16x4xbf16, #tpu.memory_space<vmem>>, vector<1x16x16x4xbf16>
    %4 = vector.shape_cast %3 : vector<1x16x16x4xbf16> to vector<16x16x4xbf16>
    %5 = vector.shape_cast %4 : vector<16x16x4xbf16> to vector<256x4xbf16>
    %6 = arith.extf %5 : vector<256x4xbf16> to vector<256x4xf32>
    %cst = arith.constant dense<0.000000e+00> : vector<4xf32>
    %7 = vector.multi_reduction <add>, %6, %cst [0] : vector<256x4xf32> to vector<4xf32>
    %8 = vector.shape_cast %7 : vector<4xf32> to vector<1x4xf32>
    %c0_4 = arith.constant 0 : index
    %c0_5 = arith.constant 0 : index
    %9 = vector.load %arg9[%c0_4, %c0_5] : memref<1x8xf32, #tpu.memory_space<vmem>>, vector<1x8xf32>
    %c0_6 = arith.constant 0 : index
    %c0_7 = arith.constant 0 : index
    %10 = vector.load %arg5[%c0_6, %c0_7] : memref<4x8xf32, #tpu.memory_space<vmem>>, vector<4x8xf32>
    %cst_8 = arith.constant dense<0.000000e+00> : vector<1x8xf32>
    %11 = tpu.matmul %8, %10, %cst_8 {dimension_numbers = #tpu.dot_dimension_numbers<[1], [0], [0], [1], [0, 0, 1, 1], [], []>} : vector<1x4xf32>, vector<4x8xf32>, vector<1x8xf32> -> vector<1x8xf32>
    %12 = arith.addf %9, %11 : vector<1x8xf32>
    %c0_9 = arith.constant 0 : index
    %c0_10 = arith.constant 0 : index
    %13 = vector.load %arg9[%c0_9, %c0_10] : memref<1x8xf32, #tpu.memory_space<vmem>>, vector<1x8xf32>
    tpu.vector_store %arg9[%c0_9, %c0_10], %12 {strides = array<i32>} : memref<1x8xf32, #tpu.memory_space<vmem>>, vector<1x8xf32>,
    %c0_11 = arith.constant 0 : index
    %c0_12 = arith.constant 0 : index
    %14 = vector.load %arg3[%c0_11, %c0_12] : memref<4x8xbf16, #tpu.memory_space<vmem>>, vector<4x8xbf16>
    %cst_13 = arith.constant dense<0.000000e+00> : vector<256x8xf32>
    %15 = tpu.matmul %5, %14, %cst_13 {dimension_numbers = #tpu.dot_dimension_numbers<[1], [0], [0], [1], [0, 0, 1, 1], [], []>} : vector<256x4xbf16>, vector<4x8xbf16>, vector<256x8xf32> -> vector<256x8xf32>
    %c0_14 = arith.constant 0 : index
    %c0_15 = arith.constant 0 : index
    %c0_16 = arith.constant 0 : index
    %c0_17 = arith.constant 0 : index
    %16 = vector.load %arg10[%c0_14, %c0_15, %c0_16, %c0_17] : memref<4x16x16x8xf32, #tpu.memory_space<vmem>>, vector<1x16x16x8xf32>
    %17 = vector.shape_cast %16 : vector<1x16x16x8xf32> to vector<16x16x8xf32>
    %18 = vector.shape_cast %15 : vector<256x8xf32> to vector<16x16x8xf32>
    %19 = arith.addf %17, %18 : vector<16x16x8xf32>
    %c0_18 = arith.constant 0 : index
    %c0_19 = arith.constant 0 : index
    %c0_20 = arith.constant 0 : index
    %c0_21 = arith.constant 0 : index
    %20 = vector.load %arg10[%c0_18, %c0_19, %c0_20, %c0_21] : memref<4x16x16x8xf32, #tpu.memory_space<vmem>>, vector<1x16x16x8xf32>
    %21 = vector.shape_cast %20 : vector<1x16x16x8xf32> to vector<16x16x8xf32>
    %22 = vector.shape_cast %19 : vector<16x16x8xf32> to vector<1x16x16x8xf32>
    tpu.vector_store %arg10[%c0_18, %c0_19, %c0_20, %c0_21], %22 {strides = array<i32>} : memref<4x16x16x8xf32, #tpu.memory_space<vmem>>, vector<1x16x16x8xf32>,
    %23 = tpu.iota {dimensions = array<i32: 1>} : vector<1x16x1xi32>
    %c6_i32 = arith.constant 6 : i32
    %24 = vector.broadcast %c6_i32 : i32 to vector<1x16x1xi32>
    %25 = arith.cmpi sge, %23, %24 : vector<1x16x1xi32>
    %c16_i32 = arith.constant 16 : i32
    %26 = vector.broadcast %c16_i32 : i32 to vector<1x16x1xi32>
    %27 = arith.cmpi slt, %23, %26 : vector<1x16x1xi32>
    %28 = arith.andi %25, %27 : vector<1x16x1xi1>
    %c0_i32_22 = arith.constant 0 : i32
    %29 = vector.broadcast %c0_i32_22 : i32 to vector<1x16x1xi32>
    %30 = arith.cmpi sge, %23, %29 : vector<1x16x1xi32>
    %c10_i32 = arith.constant 10 : i32
    %31 = vector.broadcast %c10_i32 : i32 to vector<1x16x1xi32>
    %32 = arith.cmpi slt, %23, %31 : vector<1x16x1xi32>
    %33 = arith.andi %30, %32 : vector<1x16x1xi1>
    %c12_i32 = arith.constant 12 : i32
    %34 = vector.broadcast %c12_i32 : i32 to vector<1x16x1xi32>
    %35 = arith.cmpi sge, %23, %34 : vector<1x16x1xi32>
    %c16_i32_23 = arith.constant 16 : i32
    %36 = vector.broadcast %c16_i32_23 : i32 to vector<1x16x1xi32>
    %37 = arith.cmpi slt, %23, %36 : vector<1x16x1xi32>
    %38 = arith.andi %35, %37 : vector<1x16x1xi1>
    %c0_i32_24 = arith.constant 0 : i32
    %39 = vector.broadcast %c0_i32_24 : i32 to vector<1x16x1xi32>
    %40 = arith.cmpi sge, %23, %39 : vector<1x16x1xi32>
    %c4_i32 = arith.constant 4 : i32
    %41 = vector.broadcast %c4_i32 : i32 to vector<1x16x1xi32>
    %42 = arith.cmpi slt, %23, %41 : vector<1x16x1xi32>
    %43 = arith.andi %40, %42 : vector<1x16x1xi1>
    %c0_25 = arith.constant 0 : index
    %c0_26 = arith.constant 0 : index
    %c0_27 = arith.constant 0 : index
    %c0_28 = arith.constant 0 : index
    %44 = vector.load %arg4[%c0_25, %c0_26, %c0_27, %c0_28] : memref<3x3x4x24xbf16, #tpu.memory_space<vmem>>, vector<1x1x4x24xbf16>
    %45 = vector.shape_cast %44 : vector<1x1x4x24xbf16> to vector<4x24xbf16>
    %cst_29 = arith.constant dense<0.000000e+00> : vector<256x24xf32>
    %46 = tpu.matmul %5, %45, %cst_29 {dimension_numbers = #tpu.dot_dimension_numbers<[1], [0], [0], [1], [0, 0, 1, 1], [], []>} : vector<256x4xbf16>, vector<4x24xbf16>, vector<256x24xf32> -> vector<256x24xf32>
    %47 = vector.shape_cast %46 : vector<256x24xf32> to vector<16x16x24xf32>
    %48 = vector.extract_strided_slice %47 {offsets = [0, 0, 0], sizes = [16, 16, 8], strides = [1, 1, 1]} : vector<16x16x24xf32> to vector<16x16x8xf32>
    %c6_i32_30 = arith.constant 6 : i32
    %49 = tpu.dynamic_rotate %48 by %c6_i32_30 dim 1 : vector<16x16x8xf32>, i32 -> vector<16x16x8xf32>
    %cst_31 = arith.constant 0.000000e+00 : f32
    %50 = vector.shape_cast %28 : vector<1x16x1xi1> to vector<1x16x1xi1>
    %51 = vector.broadcast %50 : vector<1x16x1xi1> to vector<16x16x8xi1>
    %52 = vector.broadcast %cst_31 : f32 to vector<16x16x8xf32>
    %53 = arith.select %51, %49, %52 : vector<16x16x8xi1>, vector<16x16x8xf32>
    %54 = vector.extract_strided_slice %47 {offsets = [0, 0, 8], sizes = [16, 16, 8], strides = [1, 1, 1]} : vector<16x16x24xf32> to vector<16x16x8xf32>
    %55 = arith.addf %53, %54 : vector<16x16x8xf32>
    %56 = vector.extract_strided_slice %47 {offsets = [0, 0, 16], sizes = [16, 16, 8], strides = [1, 1, 1]} : vector<16x16x24xf32> to vector<16x16x8xf32>
    %c10_i32_32 = arith.constant 10 : i32
    %57 = tpu.dynamic_rotate %56 by %c10_i32_32 dim 1 : vector<16x16x8xf32>, i32 -> vector<16x16x8xf32>
    %cst_33 = arith.constant 0.000000e+00 : f32
    %58 = vector.shape_cast %33 : vector<1x16x1xi1> to vector<1x16x1xi1>
    %59 = vector.broadcast %58 : vector<1x16x1xi1> to vector<16x16x8xi1>
    %60 = vector.broadcast %cst_33 : f32 to vector<16x16x8xf32>
    %61 = arith.select %59, %57, %60 : vector<16x16x8xi1>, vector<16x16x8xf32>
    %62 = arith.addf %55, %61 : vector<16x16x8xf32>
    %c1 = arith.constant 1 : index
    %c6 = arith.constant 6 : index
    %c0_34 = arith.constant 0 : index
    %c0_35 = arith.constant 0 : index
    %63 = vector.load %arg10[%c1, %c6, %c0_34, %c0_35] : memref<4x16x16x8xf32, #tpu.memory_space<vmem>>, vector<1x10x16x8xf32>
    %64 = vector.shape_cast %63 : vector<1x10x16x8xf32> to vector<10x16x8xf32>
    %65 = vector.extract_strided_slice %62 {offsets = [0, 0, 0], sizes = [10, 16, 8], strides = [1, 1, 1]} : vector<16x16x8xf32> to vector<10x16x8xf32>
    %66 = arith.addf %64, %65 : vector<10x16x8xf32>
    %c1_36 = arith.constant 1 : index
    %c6_37 = arith.constant 6 : index
    %c0_38 = arith.constant 0 : index
    %c0_39 = arith.constant 0 : index
    %67 = vector.load %arg10[%c1_36, %c6_37, %c0_38, %c0_39] : memref<4x16x16x8xf32, #tpu.memory_space<vmem>>, vector<1x10x16x8xf32>
    %68 = vector.shape_cast %67 : vector<1x10x16x8xf32> to vector<10x16x8xf32>
    %69 = vector.shape_cast %66 : vector<10x16x8xf32> to vector<1x10x16x8xf32>
    tpu.vector_store %arg10[%c1_36, %c6_37, %c0_38, %c0_39], %69 {strides = array<i32>} : memref<4x16x16x8xf32, #tpu.memory_space<vmem>>, vector<1x10x16x8xf32>,
    %c0_40 = arith.constant 0 : index
    %c1_41 = arith.constant 1 : index
    %c0_42 = arith.constant 0 : index
    %c0_43 = arith.constant 0 : index
    %70 = vector.load %arg4[%c0_40, %c1_41, %c0_42, %c0_43] : memref<3x3x4x24xbf16, #tpu.memory_space<vmem>>, vector<1x1x4x24xbf16>
    %71 = vector.shape_cast %70 : vector<1x1x4x24xbf16> to vector<4x24xbf16>
    %cst_44 = arith.constant dense<0.000000e+00> : vector<256x24xf32>
    %72 = tpu.matmul %5, %71, %cst_44 {dimension_numbers = #tpu.dot_dimension_numbers<[1], [0], [0], [1], [0, 0, 1, 1], [], []>} : vector<256x4xbf16>, vector<4x24xbf16>, vector<256x24xf32> -> vector<256x24xf32>
    %73 = vector.shape_cast %72 : vector<256x24xf32> to vector<16x16x24xf32>
    %74 = vector.extract_strided_slice %73 {offsets = [0, 0, 0], sizes = [16, 16, 8], strides = [1, 1, 1]} : vector<16x16x24xf32> to vector<16x16x8xf32>
    %c6_i32_45 = arith.constant 6 : i32
    %75 = tpu.dynamic_rotate %74 by %c6_i32_45 dim 1 : vector<16x16x8xf32>, i32 -> vector<16x16x8xf32>
    %cst_46 = arith.constant 0.000000e+00 : f32
    %76 = vector.shape_cast %28 : vector<1x16x1xi1> to vector<1x16x1xi1>
    %77 = vector.broadcast %76 : vector<1x16x1xi1> to vector<16x16x8xi1>
    %78 = vector.broadcast %cst_46 : f32 to vector<16x16x8xf32>
    %79 = arith.select %77, %75, %78 : vector<16x16x8xi1>, vector<16x16x8xf32>
    %80 = vector.extract_strided_slice %73 {offsets = [0, 0, 8], sizes = [16, 16, 8], strides = [1, 1, 1]} : vector<16x16x24xf32> to vector<16x16x8xf32>
    %81 = arith.addf %79, %80 : vector<16x16x8xf32>
    %82 = vector.extract_strided_slice %73 {offsets = [0, 0, 16], sizes = [16, 16, 8], strides = [1, 1, 1]} : vector<16x16x24xf32> to vector<16x16x8xf32>
    %c10_i32_47 = arith.constant 10 : i32
    %83 = tpu.dynamic_rotate %82 by %c10_i32_47 dim 1 : vector<16x16x8xf32>, i32 -> vector<16x16x8xf32>
    %cst_48 = arith.constant 0.000000e+00 : f32
    %84 = vector.shape_cast %33 : vector<1x16x1xi1> to vector<1x16x1xi1>
    %85 = vector.broadcast %84 : vector<1x16x1xi1> to vector<16x16x8xi1>
    %86 = vector.broadcast %cst_48 : f32 to vector<16x16x8xf32>
    %87 = arith.select %85, %83, %86 : vector<16x16x8xi1>, vector<16x16x8xf32>
    %88 = arith.addf %81, %87 : vector<16x16x8xf32>
    %c1_49 = arith.constant 1 : index
    %c0_50 = arith.constant 0 : index
    %c0_51 = arith.constant 0 : index
    %c0_52 = arith.constant 0 : index
    %89 = vector.load %arg10[%c1_49, %c0_50, %c0_51, %c0_52] : memref<4x16x16x8xf32, #tpu.memory_space<vmem>>, vector<1x16x16x8xf32>
    %90 = vector.shape_cast %89 : vector<1x16x16x8xf32> to vector<16x16x8xf32>
    %91 = arith.addf %90, %88 : vector<16x16x8xf32>
    %c1_53 = arith.constant 1 : index
    %c0_54 = arith.constant 0 : index
    %c0_55 = arith.constant 0 : index
    %c0_56 = arith.constant 0 : index
    %92 = vector.load %arg10[%c1_53, %c0_54, %c0_55, %c0_56] : memref<4x16x16x8xf32, #tpu.memory_space<vmem>>, vector<1x16x16x8xf32>
    %93 = vector.shape_cast %92 : vector<1x16x16x8xf32> to vector<16x16x8xf32>
    %94 = vector.shape_cast %91 : vector<16x16x8xf32> to vector<1x16x16x8xf32>
    tpu.vector_store %arg10[%c1_53, %c0_54, %c0_55, %c0_56], %94 {strides = array<i32>} : memref<4x16x16x8xf32, #tpu.memory_space<vmem>>, vector<1x16x16x8xf32>,
    %c0_57 = arith.constant 0 : index
    %c2 = arith.constant 2 : index
    %c0_58 = arith.constant 0 : index
    %c0_59 = arith.constant 0 : index
    %95 = vector.load %arg4[%c0_57, %c2, %c0_58, %c0_59] : memref<3x3x4x24xbf16, #tpu.memory_space<vmem>>, vector<1x1x4x24xbf16>
    %96 = vector.shape_cast %95 : vector<1x1x4x24xbf16> to vector<4x24xbf16>
    %cst_60 = arith.constant dense<0.000000e+00> : vector<256x24xf32>
    %97 = tpu.matmul %5, %96, %cst_60 {dimension_numbers = #tpu.dot_dimension_numbers<[1], [0], [0], [1], [0, 0, 1, 1], [], []>} : vector<256x4xbf16>, vector<4x24xbf16>, vector<256x24xf32> -> vector<256x24xf32>
    %98 = vector.shape_cast %97 : vector<256x24xf32> to vector<16x16x24xf32>
    %99 = vector.extract_strided_slice %98 {offsets = [0, 0, 0], sizes = [16, 16, 8], strides = [1, 1, 1]} : vector<16x16x24xf32> to vector<16x16x8xf32>
    %c6_i32_61 = arith.constant 6 : i32
    %100 = tpu.dynamic_rotate %99 by %c6_i32_61 dim 1 : vector<16x16x8xf32>, i32 -> vector<16x16x8xf32>
    %cst_62 = arith.constant 0.000000e+00 : f32
    %101 = vector.shape_cast %28 : vector<1x16x1xi1> to vector<1x16x1xi1>
    %102 = vector.broadcast %101 : vector<1x16x1xi1> to vector<16x16x8xi1>
    %103 = vector.broadcast %cst_62 : f32 to vector<16x16x8xf32>
    %104 = arith.select %102, %100, %103 : vector<16x16x8xi1>, vector<16x16x8xf32>
    %105 = vector.extract_strided_slice %98 {offsets = [0, 0, 8], sizes = [16, 16, 8], strides = [1, 1, 1]} : vector<16x16x24xf32> to vector<16x16x8xf32>
    %106 = arith.addf %104, %105 : vector<16x16x8xf32>
    %107 = vector.extract_strided_slice %98 {offsets = [0, 0, 16], sizes = [16, 16, 8], strides = [1, 1, 1]} : vector<16x16x24xf32> to vector<16x16x8xf32>
    %c10_i32_63 = arith.constant 10 : i32
    %108 = tpu.dynamic_rotate %107 by %c10_i32_63 dim 1 : vector<16x16x8xf32>, i32 -> vector<16x16x8xf32>
    %cst_64 = arith.constant 0.000000e+00 : f32
    %109 = vector.shape_cast %33 : vector<1x16x1xi1> to vector<1x16x1xi1>
    %110 = vector.broadcast %109 : vector<1x16x1xi1> to vector<16x16x8xi1>
    %111 = vector.broadcast %cst_64 : f32 to vector<16x16x8xf32>
    %112 = arith.select %110, %108, %111 : vector<16x16x8xi1>, vector<16x16x8xf32>
    %113 = arith.addf %106, %112 : vector<16x16x8xf32>
    %c1_65 = arith.constant 1 : index
    %c0_66 = arith.constant 0 : index
    %c0_67 = arith.constant 0 : index
    %c0_68 = arith.constant 0 : index
    %114 = vector.load %arg10[%c1_65, %c0_66, %c0_67, %c0_68] : memref<4x16x16x8xf32, #tpu.memory_space<vmem>>, vector<1x10x16x8xf32>
    %115 = vector.shape_cast %114 : vector<1x10x16x8xf32> to vector<10x16x8xf32>
    %116 = vector.extract_strided_slice %113 {offsets = [6, 0, 0], sizes = [10, 16, 8], strides = [1, 1, 1]} : vector<16x16x8xf32> to vector<10x16x8xf32>
    %117 = arith.addf %115, %116 : vector<10x16x8xf32>
    %c1_69 = arith.constant 1 : index
    %c0_70 = arith.constant 0 : index
    %c0_71 = arith.constant 0 : index
    %c0_72 = arith.constant 0 : index
    %118 = vector.load %arg10[%c1_69, %c0_70, %c0_71, %c0_72] : memref<4x16x16x8xf32, #tpu.memory_space<vmem>>, vector<1x10x16x8xf32>
    %119 = vector.shape_cast %118 : vector<1x10x16x8xf32> to vector<10x16x8xf32>
    %120 = vector.shape_cast %117 : vector<10x16x8xf32> to vector<1x10x16x8xf32>
    tpu.vector_store %arg10[%c1_69, %c0_70, %c0_71, %c0_72], %120 {strides = array<i32>} : memref<4x16x16x8xf32, #tpu.memory_space<vmem>>, vector<1x10x16x8xf32>,
    %c1_73 = arith.constant 1 : index
    %c0_74 = arith.constant 0 : index
    %c0_75 = arith.constant 0 : index
    %c0_76 = arith.constant 0 : index
    %121 = vector.load %arg4[%c1_73, %c0_74, %c0_75, %c0_76] : memref<3x3x4x24xbf16, #tpu.memory_space<vmem>>, vector<1x1x4x24xbf16>
    %122 = vector.shape_cast %121 : vector<1x1x4x24xbf16> to vector<4x24xbf16>
    %cst_77 = arith.constant dense<0.000000e+00> : vector<256x24xf32>
    %123 = tpu.matmul %5, %122, %cst_77 {dimension_numbers = #tpu.dot_dimension_numbers<[1], [0], [0], [1], [0, 0, 1, 1], [], []>} : vector<256x4xbf16>, vector<4x24xbf16>, vector<256x24xf32> -> vector<256x24xf32>
    %124 = vector.shape_cast %123 : vector<256x24xf32> to vector<16x16x24xf32>
    %125 = vector.extract_strided_slice %124 {offsets = [0, 0, 0], sizes = [16, 16, 8], strides = [1, 1, 1]} : vector<16x16x24xf32> to vector<16x16x8xf32>
    %c12_i32_78 = arith.constant 12 : i32
    %126 = tpu.dynamic_rotate %125 by %c12_i32_78 dim 1 : vector<16x16x8xf32>, i32 -> vector<16x16x8xf32>
    %cst_79 = arith.constant 0.000000e+00 : f32
    %127 = vector.shape_cast %38 : vector<1x16x1xi1> to vector<1x16x1xi1>
    %128 = vector.broadcast %127 : vector<1x16x1xi1> to vector<16x16x8xi1>
    %129 = vector.broadcast %cst_79 : f32 to vector<16x16x8xf32>
    %130 = arith.select %128, %126, %129 : vector<16x16x8xi1>, vector<16x16x8xf32>
    %131 = vector.extract_strided_slice %124 {offsets = [0, 0, 8], sizes = [16, 16, 8], strides = [1, 1, 1]} : vector<16x16x24xf32> to vector<16x16x8xf32>
    %132 = arith.addf %130, %131 : vector<16x16x8xf32>
    %133 = vector.extract_strided_slice %124 {offsets = [0, 0, 16], sizes = [16, 16, 8], strides = [1, 1, 1]} : vector<16x16x24xf32> to vector<16x16x8xf32>
    %c4_i32_80 = arith.constant 4 : i32
    %134 = tpu.dynamic_rotate %133 by %c4_i32_80 dim 1 : vector<16x16x8xf32>, i32 -> vector<16x16x8xf32>
    %cst_81 = arith.constant 0.000000e+00 : f32
    %135 = vector.shape_cast %43 : vector<1x16x1xi1> to vector<1x16x1xi1>
    %136 = vector.broadcast %135 : vector<1x16x1xi1> to vector<16x16x8xi1>
    %137 = vector.broadcast %cst_81 : f32 to vector<16x16x8xf32>
    %138 = arith.select %136, %134, %137 : vector<16x16x8xi1>, vector<16x16x8xf32>
    %139 = arith.addf %132, %138 : vector<16x16x8xf32>
    %c2_82 = arith.constant 2 : index
    %c12 = arith.constant 12 : index
    %c0_83 = arith.constant 0 : index
    %c0_84 = arith.constant 0 : index
    %140 = vector.load %arg10[%c2_82, %c12, %c0_83, %c0_84] : memref<4x16x16x8xf32, #tpu.memory_space<vmem>>, vector<1x4x16x8xf32>
    %141 = vector.shape_cast %140 : vector<1x4x16x8xf32> to vector<4x16x8xf32>
    %142 = vector.extract_strided_slice %139 {offsets = [0, 0, 0], sizes = [4, 16, 8], strides = [1, 1, 1]} : vector<16x16x8xf32> to vector<4x16x8xf32>
    %143 = arith.addf %141, %142 : vector<4x16x8xf32>
    %c2_85 = arith.constant 2 : index
    %c12_86 = arith.constant 12 : index
    %c0_87 = arith.constant 0 : index
    %c0_88 = arith.constant 0 : index
    %144 = vector.load %arg10[%c2_85, %c12_86, %c0_87, %c0_88] : memref<4x16x16x8xf32, #tpu.memory_space<vmem>>, vector<1x4x16x8xf32>
    %145 = vector.shape_cast %144 : vector<1x4x16x8xf32> to vector<4x16x8xf32>
    %146 = vector.shape_cast %143 : vector<4x16x8xf32> to vector<1x4x16x8xf32>
    tpu.vector_store %arg10[%c2_85, %c12_86, %c0_87, %c0_88], %146 {strides = array<i32>} : memref<4x16x16x8xf32, #tpu.memory_space<vmem>>, vector<1x4x16x8xf32>,
    %c1_89 = arith.constant 1 : index
    %c1_90 = arith.constant 1 : index
    %c0_91 = arith.constant 0 : index
    %c0_92 = arith.constant 0 : index
    %147 = vector.load %arg4[%c1_89, %c1_90, %c0_91, %c0_92] : memref<3x3x4x24xbf16, #tpu.memory_space<vmem>>, vector<1x1x4x24xbf16>
    %148 = vector.shape_cast %147 : vector<1x1x4x24xbf16> to vector<4x24xbf16>
    %cst_93 = arith.constant dense<0.000000e+00> : vector<256x24xf32>
    %149 = tpu.matmul %5, %148, %cst_93 {dimension_numbers = #tpu.dot_dimension_numbers<[1], [0], [0], [1], [0, 0, 1, 1], [], []>} : vector<256x4xbf16>, vector<4x24xbf16>, vector<256x24xf32> -> vector<256x24xf32>
    %150 = vector.shape_cast %149 : vector<256x24xf32> to vector<16x16x24xf32>
    %151 = vector.extract_strided_slice %150 {offsets = [0, 0, 0], sizes = [16, 16, 8], strides = [1, 1, 1]} : vector<16x16x24xf32> to vector<16x16x8xf32>
    %c12_i32_94 = arith.constant 12 : i32
    %152 = tpu.dynamic_rotate %151 by %c12_i32_94 dim 1 : vector<16x16x8xf32>, i32 -> vector<16x16x8xf32>
    %cst_95 = arith.constant 0.000000e+00 : f32
    %153 = vector.shape_cast %38 : vector<1x16x1xi1> to vector<1x16x1xi1>
    %154 = vector.broadcast %153 : vector<1x16x1xi1> to vector<16x16x8xi1>
    %155 = vector.broadcast %cst_95 : f32 to vector<16x16x8xf32>
    %156 = arith.select %154, %152, %155 : vector<16x16x8xi1>, vector<16x16x8xf32>
    %157 = vector.extract_strided_slice %150 {offsets = [0, 0, 8], sizes = [16, 16, 8], strides = [1, 1, 1]} : vector<16x16x24xf32> to vector<16x16x8xf32>
    %158 = arith.addf %156, %157 : vector<16x16x8xf32>
    %159 = vector.extract_strided_slice %150 {offsets = [0, 0, 16], sizes = [16, 16, 8], strides = [1, 1, 1]} : vector<16x16x24xf32> to vector<16x16x8xf32>
    %c4_i32_96 = arith.constant 4 : i32
    %160 = tpu.dynamic_rotate %159 by %c4_i32_96 dim 1 : vector<16x16x8xf32>, i32 -> vector<16x16x8xf32>
    %cst_97 = arith.constant 0.000000e+00 : f32
    %161 = vector.shape_cast %43 : vector<1x16x1xi1> to vector<1x16x1xi1>
    %162 = vector.broadcast %161 : vector<1x16x1xi1> to vector<16x16x8xi1>
    %163 = vector.broadcast %cst_97 : f32 to vector<16x16x8xf32>
    %164 = arith.select %162, %160, %163 : vector<16x16x8xi1>, vector<16x16x8xf32>
    %165 = arith.addf %158, %164 : vector<16x16x8xf32>
    %c2_98 = arith.constant 2 : index
    %c0_99 = arith.constant 0 : index
    %c0_100 = arith.constant 0 : index
    %c0_101 = arith.constant 0 : index
    %166 = vector.load %arg10[%c2_98, %c0_99, %c0_100, %c0_101] : memref<4x16x16x8xf32, #tpu.memory_space<vmem>>, vector<1x16x16x8xf32>
    %167 = vector.shape_cast %166 : vector<1x16x16x8xf32> to vector<16x16x8xf32>
    %168 = arith.addf %167, %165 : vector<16x16x8xf32>
    %c2_102 = arith.constant 2 : index
    %c0_103 = arith.constant 0 : index
    %c0_104 = arith.constant 0 : index
    %c0_105 = arith.constant 0 : index
    %169 = vector.load %arg10[%c2_102, %c0_103, %c0_104, %c0_105] : memref<4x16x16x8xf32, #tpu.memory_space<vmem>>, vector<1x16x16x8xf32>
    %170 = vector.shape_cast %169 : vector<1x16x16x8xf32> to vector<16x16x8xf32>
    %171 = vector.shape_cast %168 : vector<16x16x8xf32> to vector<1x16x16x8xf32>
    tpu.vector_store %arg10[%c2_102, %c0_103, %c0_104, %c0_105], %171 {strides = array<i32>} : memref<4x16x16x8xf32, #tpu.memory_space<vmem>>, vector<1x16x16x8xf32>,
    %c1_106 = arith.constant 1 : index
    %c2_107 = arith.constant 2 : index
    %c0_108 = arith.constant 0 : index
    %c0_109 = arith.constant 0 : index
    %172 = vector.load %arg4[%c1_106, %c2_107, %c0_108, %c0_109] : memref<3x3x4x24xbf16, #tpu.memory_space<vmem>>, vector<1x1x4x24xbf16>
    %173 = vector.shape_cast %172 : vector<1x1x4x24xbf16> to vector<4x24xbf16>
    %cst_110 = arith.constant dense<0.000000e+00> : vector<256x24xf32>
    %174 = tpu.matmul %5, %173, %cst_110 {dimension_numbers = #tpu.dot_dimension_numbers<[1], [0], [0], [1], [0, 0, 1, 1], [], []>} : vector<256x4xbf16>, vector<4x24xbf16>, vector<256x24xf32> -> vector<256x24xf32>
    %175 = vector.shape_cast %174 : vector<256x24xf32> to vector<16x16x24xf32>
    %176 = vector.extract_strided_slice %175 {offsets = [0, 0, 0], sizes = [16, 16, 8], strides = [1, 1, 1]} : vector<16x16x24xf32> to vector<16x16x8xf32>
    %c12_i32_111 = arith.constant 12 : i32
    %177 = tpu.dynamic_rotate %176 by %c12_i32_111 dim 1 : vector<16x16x8xf32>, i32 -> vector<16x16x8xf32>
    %cst_112 = arith.constant 0.000000e+00 : f32
    %178 = vector.shape_cast %38 : vector<1x16x1xi1> to vector<1x16x1xi1>
    %179 = vector.broadcast %178 : vector<1x16x1xi1> to vector<16x16x8xi1>
    %180 = vector.broadcast %cst_112 : f32 to vector<16x16x8xf32>
    %181 = arith.select %179, %177, %180 : vector<16x16x8xi1>, vector<16x16x8xf32>
    %182 = vector.extract_strided_slice %175 {offsets = [0, 0, 8], sizes = [16, 16, 8], strides = [1, 1, 1]} : vector<16x16x24xf32> to vector<16x16x8xf32>
    %183 = arith.addf %181, %182 : vector<16x16x8xf32>
    %184 = vector.extract_strided_slice %175 {offsets = [0, 0, 16], sizes = [16, 16, 8], strides = [1, 1, 1]} : vector<16x16x24xf32> to vector<16x16x8xf32>
    %c4_i32_113 = arith.constant 4 : i32
    %185 = tpu.dynamic_rotate %184 by %c4_i32_113 dim 1 : vector<16x16x8xf32>, i32 -> vector<16x16x8xf32>
    %cst_114 = arith.constant 0.000000e+00 : f32
    %186 = vector.shape_cast %43 : vector<1x16x1xi1> to vector<1x16x1xi1>
    %187 = vector.broadcast %186 : vector<1x16x1xi1> to vector<16x16x8xi1>
    %188 = vector.broadcast %cst_114 : f32 to vector<16x16x8xf32>
    %189 = arith.select %187, %185, %188 : vector<16x16x8xi1>, vector<16x16x8xf32>
    %190 = arith.addf %183, %189 : vector<16x16x8xf32>
    %c2_115 = arith.constant 2 : index
    %c0_116 = arith.constant 0 : index
    %c0_117 = arith.constant 0 : index
    %c0_118 = arith.constant 0 : index
    %191 = vector.load %arg10[%c2_115, %c0_116, %c0_117, %c0_118] : memref<4x16x16x8xf32, #tpu.memory_space<vmem>>, vector<1x4x16x8xf32>
    %192 = vector.shape_cast %191 : vector<1x4x16x8xf32> to vector<4x16x8xf32>
    %193 = vector.extract_strided_slice %190 {offsets = [12, 0, 0], sizes = [4, 16, 8], strides = [1, 1, 1]} : vector<16x16x8xf32> to vector<4x16x8xf32>
    %194 = arith.addf %192, %193 : vector<4x16x8xf32>
    %c2_119 = arith.constant 2 : index
    %c0_120 = arith.constant 0 : index
    %c0_121 = arith.constant 0 : index
    %c0_122 = arith.constant 0 : index
    %195 = vector.load %arg10[%c2_119, %c0_120, %c0_121, %c0_122] : memref<4x16x16x8xf32, #tpu.memory_space<vmem>>, vector<1x4x16x8xf32>
    %196 = vector.shape_cast %195 : vector<1x4x16x8xf32> to vector<4x16x8xf32>
    %197 = vector.shape_cast %194 : vector<4x16x8xf32> to vector<1x4x16x8xf32>
    tpu.vector_store %arg10[%c2_119, %c0_120, %c0_121, %c0_122], %197 {strides = array<i32>} : memref<4x16x16x8xf32, #tpu.memory_space<vmem>>, vector<1x4x16x8xf32>,
    %c2_123 = arith.constant 2 : index
    %c1_124 = arith.constant 1 : index
    %c0_125 = arith.constant 0 : index
    %c0_126 = arith.constant 0 : index
    %198 = vector.load %arg4[%c2_123, %c1_124, %c0_125, %c0_126] : memref<3x3x4x24xbf16, #tpu.memory_space<vmem>>, vector<1x1x4x24xbf16>
    %199 = vector.shape_cast %198 : vector<1x1x4x24xbf16> to vector<4x24xbf16>
    %cst_127 = arith.constant dense<0.000000e+00> : vector<256x24xf32>
    %200 = tpu.matmul %5, %199, %cst_127 {dimension_numbers = #tpu.dot_dimension_numbers<[1], [0], [0], [1], [0, 0, 1, 1], [], []>} : vector<256x4xbf16>, vector<4x24xbf16>, vector<256x24xf32> -> vector<256x24xf32>
    %201 = vector.shape_cast %200 : vector<256x24xf32> to vector<16x16x24xf32>
    %202 = vector.extract_strided_slice %201 {offsets = [0, 0, 8], sizes = [16, 16, 8], strides = [1, 1, 1]} : vector<16x16x24xf32> to vector<16x16x8xf32>
    %c3 = arith.constant 3 : index
    %c0_128 = arith.constant 0 : index
    %c0_129 = arith.constant 0 : index
    %c0_130 = arith.constant 0 : index
    %203 = vector.load %arg10[%c3, %c0_128, %c0_129, %c0_130] : memref<4x16x16x8xf32, #tpu.memory_space<vmem>>, vector<1x16x16x8xf32>
    %204 = vector.shape_cast %203 : vector<1x16x16x8xf32> to vector<16x16x8xf32>
    %205 = arith.addf %204, %202 : vector<16x16x8xf32>
    %c3_131 = arith.constant 3 : index
    %c0_132 = arith.constant 0 : index
    %c0_133 = arith.constant 0 : index
    %c0_134 = arith.constant 0 : index
    %206 = vector.load %arg10[%c3_131, %c0_132, %c0_133, %c0_134] : memref<4x16x16x8xf32, #tpu.memory_space<vmem>>, vector<1x16x16x8xf32>
    %207 = vector.shape_cast %206 : vector<1x16x16x8xf32> to vector<16x16x8xf32>
    %208 = vector.shape_cast %205 : vector<16x16x8xf32> to vector<1x16x16x8xf32>
    tpu.vector_store %arg10[%c3_131, %c0_132, %c0_133, %c0_134], %208 {strides = array<i32>} : memref<4x16x16x8xf32, #tpu.memory_space<vmem>>, vector<1x16x16x8xf32>,
    %c0_i32_135 = arith.constant 0 : i32
    %209 = arith.cmpi eq, %arg1, %c0_i32_135 : i32
    %210 = arith.extui %209 : i1 to i32
    %c0_i32_136 = arith.constant 0 : i32
    %211 = arith.cmpi ne, %210, %c0_i32_136 : i32
    scf.if %211 {
      %c0_137 = arith.constant 0 : index
      %c0_138 = arith.constant 0 : index
      %212 = vector.load %arg9[%c0_137, %c0_138] : memref<1x8xf32, #tpu.memory_space<vmem>>, vector<1x8xf32>
      %cst_139 = arith.constant 3.906250e-03 : f32
      %213 = vector.broadcast %cst_139 : f32 to vector<1x8xf32>
      %214 = arith.mulf %212, %213 : vector<1x8xf32>
      %c0_140 = arith.constant 0 : index
      %c0_141 = arith.constant 0 : index
      %215 = vector.load %arg6[%c0_140, %c0_141] : memref<1x8xf32, #tpu.memory_space<vmem>>, vector<1x8xf32>
      %216 = arith.addf %214, %215 : vector<1x8xf32>
      %cst_142 = arith.constant 0.000000e+00 : f32
      %217 = vector.broadcast %cst_142 : f32 to vector<1x8xf32>
      %218 = arith.maximumf %216, %217 : vector<1x8xf32>
      %219 = vector.shape_cast %218 : vector<1x8xf32> to vector<1x1x8xf32>
      %220 = vector.shape_cast %219 : vector<1x1x8xf32> to vector<1x1x8xf32>
      %221 = vector.broadcast %220 : vector<1x1x8xf32> to vector<16x16x8xf32>
      %222 = arith.truncf %221 : vector<16x16x8xf32> to vector<16x16x8xbf16>
      %c0_143 = arith.constant 0 : index
      %c0_144 = arith.constant 0 : index
      %c0_145 = arith.constant 0 : index
      %c0_146 = arith.constant 0 : index
      %223 = vector.load %arg8[%c0_143, %c0_144, %c0_145, %c0_146] : memref<1x16x16x40xbf16, #tpu.memory_space<vmem>>, vector<1x16x16x8xbf16>
      %224 = vector.shape_cast %223 : vector<1x16x16x8xbf16> to vector<16x16x8xbf16>
      %225 = vector.shape_cast %222 : vector<16x16x8xbf16> to vector<1x16x16x8xbf16>
      tpu.vector_store %arg8[%c0_143, %c0_144, %c0_145, %c0_146], %225 {strides = array<i32>} : memref<1x16x16x40xbf16, #tpu.memory_space<vmem>>, vector<1x16x16x8xbf16>,
      %c0_147 = arith.constant 0 : index
      %c0_148 = arith.constant 0 : index
      %226 = vector.load %arg7[%c0_147, %c0_148] : memref<4x8xf32, #tpu.memory_space<vmem>>, vector<1x8xf32>
      %227 = vector.shape_cast %226 : vector<1x8xf32> to vector<1x1x8xf32>
      %c0_149 = arith.constant 0 : index
      %c0_150 = arith.constant 0 : index
      %c0_151 = arith.constant 0 : index
      %c0_152 = arith.constant 0 : index
      %228 = vector.load %arg10[%c0_149, %c0_150, %c0_151, %c0_152] : memref<4x16x16x8xf32, #tpu.memory_space<vmem>>, vector<1x16x16x8xf32>
      %229 = vector.shape_cast %228 : vector<1x16x16x8xf32> to vector<16x16x8xf32>
      %230 = vector.broadcast %227 : vector<1x1x8xf32> to vector<16x16x8xf32>
      %231 = arith.addf %229, %230 : vector<16x16x8xf32>
      %cst_153 = arith.constant 0.000000e+00 : f32
      %232 = vector.broadcast %cst_153 : f32 to vector<16x16x8xf32>
      %233 = arith.maximumf %231, %232 : vector<16x16x8xf32>
      %234 = arith.truncf %233 : vector<16x16x8xf32> to vector<16x16x8xbf16>
      %c0_154 = arith.constant 0 : index
      %c0_155 = arith.constant 0 : index
      %c0_156 = arith.constant 0 : index
      %c8 = arith.constant 8 : index
      %235 = vector.load %arg8[%c0_154, %c0_155, %c0_156, %c8] : memref<1x16x16x40xbf16, #tpu.memory_space<vmem>>, vector<1x16x16x8xbf16>
      %236 = vector.shape_cast %235 : vector<1x16x16x8xbf16> to vector<16x16x8xbf16>
      %237 = vector.shape_cast %234 : vector<16x16x8xbf16> to vector<1x16x16x8xbf16>
      tpu.vector_store %arg8[%c0_154, %c0_155, %c0_156, %c8], %237 {strides = array<i32>} : memref<1x16x16x40xbf16, #tpu.memory_space<vmem>>, vector<1x16x16x8xbf16>,
      %c1_157 = arith.constant 1 : index
      %c0_158 = arith.constant 0 : index
      %238 = vector.load %arg7[%c1_157, %c0_158] : memref<4x8xf32, #tpu.memory_space<vmem>>, vector<1x8xf32>
      %239 = vector.shape_cast %238 : vector<1x8xf32> to vector<1x1x8xf32>
      %c1_159 = arith.constant 1 : index
      %c0_160 = arith.constant 0 : index
      %c0_161 = arith.constant 0 : index
      %c0_162 = arith.constant 0 : index
      %240 = vector.load %arg10[%c1_159, %c0_160, %c0_161, %c0_162] : memref<4x16x16x8xf32, #tpu.memory_space<vmem>>, vector<1x16x16x8xf32>
      %241 = vector.shape_cast %240 : vector<1x16x16x8xf32> to vector<16x16x8xf32>
      %242 = vector.broadcast %239 : vector<1x1x8xf32> to vector<16x16x8xf32>
      %243 = arith.addf %241, %242 : vector<16x16x8xf32>
      %cst_163 = arith.constant 0.000000e+00 : f32
      %244 = vector.broadcast %cst_163 : f32 to vector<16x16x8xf32>
      %245 = arith.maximumf %243, %244 : vector<16x16x8xf32>
      %246 = arith.truncf %245 : vector<16x16x8xf32> to vector<16x16x8xbf16>
      %c0_164 = arith.constant 0 : index
      %c0_165 = arith.constant 0 : index
      %c0_166 = arith.constant 0 : index
      %c16 = arith.constant 16 : index
      %247 = vector.load %arg8[%c0_164, %c0_165, %c0_166, %c16] : memref<1x16x16x40xbf16, #tpu.memory_space<vmem>>, vector<1x16x16x8xbf16>
      %248 = vector.shape_cast %247 : vector<1x16x16x8xbf16> to vector<16x16x8xbf16>
      %249 = vector.shape_cast %246 : vector<16x16x8xbf16> to vector<1x16x16x8xbf16>
      tpu.vector_store %arg8[%c0_164, %c0_165, %c0_166, %c16], %249 {strides = array<i32>} : memref<1x16x16x40xbf16, #tpu.memory_space<vmem>>, vector<1x16x16x8xbf16>,
      %c2_167 = arith.constant 2 : index
      %c0_168 = arith.constant 0 : index
      %250 = vector.load %arg7[%c2_167, %c0_168] : memref<4x8xf32, #tpu.memory_space<vmem>>, vector<1x8xf32>
      %251 = vector.shape_cast %250 : vector<1x8xf32> to vector<1x1x8xf32>
      %c2_169 = arith.constant 2 : index
      %c0_170 = arith.constant 0 : index
      %c0_171 = arith.constant 0 : index
      %c0_172 = arith.constant 0 : index
      %252 = vector.load %arg10[%c2_169, %c0_170, %c0_171, %c0_172] : memref<4x16x16x8xf32, #tpu.memory_space<vmem>>, vector<1x16x16x8xf32>
      %253 = vector.shape_cast %252 : vector<1x16x16x8xf32> to vector<16x16x8xf32>
      %254 = vector.broadcast %251 : vector<1x1x8xf32> to vector<16x16x8xf32>
      %255 = arith.addf %253, %254 : vector<16x16x8xf32>
      %cst_173 = arith.constant 0.000000e+00 : f32
      %256 = vector.broadcast %cst_173 : f32 to vector<16x16x8xf32>
      %257 = arith.maximumf %255, %256 : vector<16x16x8xf32>
      %258 = arith.truncf %257 : vector<16x16x8xf32> to vector<16x16x8xbf16>
      %c0_174 = arith.constant 0 : index
      %c0_175 = arith.constant 0 : index
      %c0_176 = arith.constant 0 : index
      %c24 = arith.constant 24 : index
      %259 = vector.load %arg8[%c0_174, %c0_175, %c0_176, %c24] : memref<1x16x16x40xbf16, #tpu.memory_space<vmem>>, vector<1x16x16x8xbf16>
      %260 = vector.shape_cast %259 : vector<1x16x16x8xbf16> to vector<16x16x8xbf16>
      %261 = vector.shape_cast %258 : vector<16x16x8xbf16> to vector<1x16x16x8xbf16>
      tpu.vector_store %arg8[%c0_174, %c0_175, %c0_176, %c24], %261 {strides = array<i32>} : memref<1x16x16x40xbf16, #tpu.memory_space<vmem>>, vector<1x16x16x8xbf16>,
      %c3_177 = arith.constant 3 : index
      %c0_178 = arith.constant 0 : index
      %262 = vector.load %arg7[%c3_177, %c0_178] : memref<4x8xf32, #tpu.memory_space<vmem>>, vector<1x8xf32>
      %263 = vector.shape_cast %262 : vector<1x8xf32> to vector<1x1x8xf32>
      %c3_179 = arith.constant 3 : index
      %c0_180 = arith.constant 0 : index
      %c0_181 = arith.constant 0 : index
      %c0_182 = arith.constant 0 : index
      %264 = vector.load %arg10[%c3_179, %c0_180, %c0_181, %c0_182] : memref<4x16x16x8xf32, #tpu.memory_space<vmem>>, vector<1x16x16x8xf32>
      %265 = vector.shape_cast %264 : vector<1x16x16x8xf32> to vector<16x16x8xf32>
      %266 = vector.broadcast %263 : vector<1x1x8xf32> to vector<16x16x8xf32>
      %267 = arith.addf %265, %266 : vector<16x16x8xf32>
      %cst_183 = arith.constant 0.000000e+00 : f32
      %268 = vector.broadcast %cst_183 : f32 to vector<16x16x8xf32>
      %269 = arith.maximumf %267, %268 : vector<16x16x8xf32>
      %270 = arith.truncf %269 : vector<16x16x8xf32> to vector<16x16x8xbf16>
      %c0_184 = arith.constant 0 : index
      %c0_185 = arith.constant 0 : index
      %c0_186 = arith.constant 0 : index
      %c32 = arith.constant 32 : index
      %271 = vector.load %arg8[%c0_184, %c0_185, %c0_186, %c32] : memref<1x16x16x40xbf16, #tpu.memory_space<vmem>>, vector<1x16x16x8xbf16>
      %272 = vector.shape_cast %271 : vector<1x16x16x8xbf16> to vector<16x16x8xbf16>
      %273 = vector.shape_cast %270 : vector<16x16x8xbf16> to vector<1x16x16x8xbf16>
      tpu.vector_store %arg8[%c0_184, %c0_185, %c0_186, %c32], %273 {strides = array<i32>} : memref<1x16x16x40xbf16, #tpu.memory_space<vmem>>, vector<1x16x16x8xbf16>,
    } else {
    }
    return
  }
  func.func @transform_0(%arg0: i32, %arg1: i32) -> (i32, i32, i32, i32) {
    %c0_i32 = arith.constant 0 : i32
    %c0_i32_0 = arith.constant 0 : i32
    %c0_i32_1 = arith.constant 0 : i32
    return %arg0, %c0_i32, %c0_i32_0, %arg1 : i32, i32, i32, i32
  }
  func.func @transform_1(%arg0: i32, %arg1: i32) -> (i32, i32) {
    %c0_i32 = arith.constant 0 : i32
    %c0_i32_0 = arith.constant 0 : i32
    return %arg1, %c0_i32 : i32, i32
  }
  func.func @transform_2(%arg0: i32, %arg1: i32) -> (i32, i32, i32, i32) {
    %c0_i32 = arith.constant 0 : i32
    %c0_i32_0 = arith.constant 0 : i32
    %c0_i32_1 = arith.constant 0 : i32
    %c0_i32_2 = arith.constant 0 : i32
    return %c0_i32, %c0_i32_0, %arg1, %c0_i32_1 : i32, i32, i32, i32
  }
  func.func @transform_3(%arg0: i32, %arg1: i32) -> (i32, i32) {
    %c0_i32 = arith.constant 0 : i32
    %c0_i32_0 = arith.constant 0 : i32
    return %arg1, %c0_i32 : i32, i32
  }
  func.func @transform_4(%arg0: i32, %arg1: i32) -> (i32, i32) {
    %c0_i32 = arith.constant 0 : i32
    %c0_i32_0 = arith.constant 0 : i32
    %c0_i32_1 = arith.constant 0 : i32
    return %c0_i32, %c0_i32_0 : i32, i32
  }
  func.func @transform_5(%arg0: i32, %arg1: i32) -> (i32, i32) {
    %c0_i32 = arith.constant 0 : i32
    %c0_i32_0 = arith.constant 0 : i32
    %c0_i32_1 = arith.constant 0 : i32
    return %c0_i32, %c0_i32_0 : i32, i32
  }
  func.func @transform_6(%arg0: i32, %arg1: i32) -> (i32, i32, i32, i32) {
    %c0_i32 = arith.constant 0 : i32
    %c0_i32_0 = arith.constant 0 : i32
    %c0_i32_1 = arith.constant 0 : i32
    %c0_i32_2 = arith.constant 0 : i32
    return %arg0, %c0_i32, %c0_i32_0, %c0_i32_1 : i32, i32, i32, i32
  }
}

</mosaic_0001>

<llo_original>
// kernel: tpu_custom_call.1
$region0: #{tpu_custom_call.1}
  #allocation0 [shape = 'u32[]', space=smem, size = 0x4, offset = 0x4, fixed_abs, tag = 'smem constant byte address 0x4 - core index']
  #allocation1 [shape = 'u32[144,128]{1,0:T(1,128)}', space=vmem, size = 0x12000, scoped, tag = 'internal scratch']
  #allocation2 [shape = 'f32[1,8]{1,0:T(1,128)}', space=vmem, size = 0x200, scoped, tag = 'scratch operand']
  #allocation3 [shape = 'f32[4,16,16,8]{3,2,1,0:T(8,128)}', space=vmem, size = 0x80000, scoped, tag = 'scratch operand']
  %s0 = inlined_call_operand.vmem [shape: bf16[2,16,16,4], index: 0, kind: input, shape index: {}]
  %s1 = inlined_call_operand.vmem [shape: bf16[4,8], index: 1, kind: input, shape index: {}]
  %s2 = inlined_call_operand.vmem [shape: bf16[3,3,4,24], index: 2, kind: input, shape index: {}]
  %s3 = inlined_call_operand.vmem [shape: f32[4,8], index: 3, kind: input, shape index: {}]
  %s4 = inlined_call_operand.vmem [shape: f32[1,8], index: 4, kind: input, shape index: {}]
  %s5 = inlined_call_operand.vmem [shape: f32[4,8], index: 5, kind: input, shape index: {}]
  %s6 = inlined_call_operand.hbm [shape: bf16[2,16,16,40], index: 6, kind: output, shape index: {}]
  %s7 = sld [smem:[#allocation0]]
  $region65: #{tpu_custom_call.1} parent=0
    _
  %s9 = ssub.s32 1, %s7
  %s10 = scalar_select 0, %s9, %s7
  $region1: #{tpu_custom_call.1} parent=0
    #allocation4 [shape = 'u8[131072]{0}', space=vmem, size = 0x20000, scoped, tag = 'output window, operand 0']
    #allocation5 [shape = 's32[2]{0}', space=sflag, size = 0x8, scoped, tag = 'scoped memory for tpu_custom_call.1']
    %11 = vsyncpa [#allocation5], 0
    %s12 = scalar_lea.sflag [#allocation5], 1
    %13 = vsyncpa %s12, 0
    loop: start=0, step=1, limit=4
    $region2: #{tpu_custom_call.1} parent=1 // loop_pre_header
      _
    $region3: #{tpu_custom_call.1} parent=1 // loop_header
      %s15 = sphi 0, %s19
      %p16 = scmp.ge.s32.totalorder %s15, 4
      %s22 = sphi 0, %s34
      %s23 = sphi 0, %s30
      %s24 = sphi 0, %s22
      %s25 = sphi 0, %s23
      %s26 = sphi 0, %s24
      %s27 = sphi 0, %s25
      %s39 = sphi 0, %s41
      %s42 = sphi 0, %s39
      %s43 = sphi 0, %s42
      %s59 = sphi 0, %s43
      %s65 = sphi 0, %s67
      %s68 = sphi 0, %s65
      %s69 = sphi 0, %s68
      %s85 = sphi 0, %s69
      %s91 = sphi 0, %s93
      %s94 = sphi 0, %s91
      %s95 = sphi 0, %s94
      %s111 = sphi 0, %s95
      %s117 = sphi 0, %s119
      %s120 = sphi 0, %s117
      %s121 = sphi 0, %s120
      %s137 = sphi 0, %s121
      %s141 = sphi 0, %s141
      %s143 = sphi 0, %s141
      %s144 = sphi 0, %s143
      %s158 = sphi 0, %s144
      %s162 = sphi 0, %s162
      %s164 = sphi 0, %s162
      %s165 = sphi 0, %s164
      %s179 = sphi 0, %s165
      %s185 = sphi 0, %s187
      %s188 = sphi 0, %s185
      %s189 = sphi 0, %s188
      %s205 = sphi 0, %s189
    $region4: #{tpu_custom_call.1} parent=1 // loop_header_branch
      %18 = sbr.rel (%p16) target = $region8
    $region5: #{tpu_custom_call.1} parent=1 // loop_body
      %s20 = ssub.s32 %s15, 1
      %s21 = ssub.s32 %s15, 2
      %s28 = sadd.s32 1, %s23
      %p29 = scmp.ge.s32.totalorder %s28, 1
      %s30 = scalar_select %p29, 0, %s28
      %s31 = sadd.s32 1, %s22
      %s32 = scalar_select %p29, %s31, %s22
      %p33 = scmp.ge.s32.totalorder %s32, 2
      %s34 = scalar_select %p33, 0, %s32
      %s35 = ssub.s32 %s22, %s34
      %s36 = ssub.s32 %s23, %s30
      %s37 = sor.u32 %s35, %s36
      %p38 = scmp.eq.s32.totalorder %s37, 0
      %s40 = sadd.s32 %s39, 1
      %s41 = scalar_select %p38, %s39, %s40
      %p44 = pneg %p38
      %p45 = scmp.eq.s32.totalorder %s15, 1
      %p46 = por %p44, %p45
      %p47 = scmp.ne.s32.totalorder %s39, %s42
      %p48 = scmp.eq.s32.totalorder %s15, 0
      %p49 = por %p47, %p48
      %p50 = scmp.ne.s32.totalorder %s39, %s42
      %p51 = scmp.eq.s32.totalorder %s20, 1
      %p52 = por %p50, %p51
      %p53 = scmp.ne.s32.totalorder %s42, %s43
      %p54 = scmp.eq.s32.totalorder %s20, 0
      %p55 = por %p53, %p54
      %p56 = scmp.ne.s32.totalorder %s42, %s43
      %p57 = scmp.eq.s32.totalorder %s21, 1
      %p58 = por %p56, %p57
      %p60 = scmp.ne.s32.totalorder %s43, %s59
      %p61 = scmp.eq.s32.totalorder %s21, 0
      %p62 = por %p60, %p61
      %s63 = ssub.s32 %s23, %s30
      %p64 = scmp.eq.s32.totalorder %s63, 0
      %s66 = sadd.s32 %s65, 1
      %s67 = scalar_select %p64, %s65, %s66
      %p70 = pneg %p64
      %p71 = scmp.eq.s32.totalorder %s15, 1
      %p72 = por %p70, %p71
      %p73 = scmp.ne.s32.totalorder %s65, %s68
      %p74 = scmp.eq.s32.totalorder %s15, 0
      %p75 = por %p73, %p74
      %p76 = scmp.ne.s32.totalorder %s65, %s68
      %p77 = scmp.eq.s32.totalorder %s20, 1
      %p78 = por %p76, %p77
      %p79 = scmp.ne.s32.totalorder %s68, %s69
      %p80 = scmp.eq.s32.totalorder %s20, 0
      %p81 = por %p79, %p80
      %p82 = scmp.ne.s32.totalorder %s68, %s69
      %p83 = scmp.eq.s32.totalorder %s21, 1
      %p84 = por %p82, %p83
      %p86 = scmp.ne.s32.totalorder %s69, %s85
      %p87 = scmp.eq.s32.totalorder %s21, 0
      %p88 = por %p86, %p87
      %s89 = ssub.s32 %s23, %s30
      %p90 = scmp.eq.s32.totalorder %s89, 0
      %s92 = sadd.s32 %s91, 1
      %s93 = scalar_select %p90, %s91, %s92
      %p96 = pneg %p90
      %p97 = scmp.eq.s32.totalorder %s15, 1
      %p98 = por %p96, %p97
      %p99 = scmp.ne.s32.totalorder %s91, %s94
      %p100 = scmp.eq.s32.totalorder %s15, 0
      %p101 = por %p99, %p100
      %p102 = scmp.ne.s32.totalorder %s91, %s94
      %p103 = scmp.eq.s32.totalorder %s20, 1
      %p104 = por %p102, %p103
      %p105 = scmp.ne.s32.totalorder %s94, %s95
      %p106 = scmp.eq.s32.totalorder %s20, 0
      %p107 = por %p105, %p106
      %p108 = scmp.ne.s32.totalorder %s94, %s95
      %p109 = scmp.eq.s32.totalorder %s21, 1
      %p110 = por %p108, %p109
      %p112 = scmp.ne.s32.totalorder %s95, %s111
      %p113 = scmp.eq.s32.totalorder %s21, 0
      %p114 = por %p112, %p113
      %s115 = ssub.s32 %s23, %s30
      %p116 = scmp.eq.s32.totalorder %s115, 0
      %s118 = sadd.s32 %s117, 1
      %s119 = scalar_select %p116, %s117, %s118
      %p122 = pneg %p116
      %p123 = scmp.eq.s32.totalorder %s15, 1
      %p124 = por %p122, %p123
      %p125 = scmp.ne.s32.totalorder %s117, %s120
      %p126 = scmp.eq.s32.totalorder %s15, 0
      %p127 = por %p125, %p126
      %p128 = scmp.ne.s32.totalorder %s117, %s120
      %p129 = scmp.eq.s32.totalorder %s20, 1
      %p130 = por %p128, %p129
      %p131 = scmp.ne.s32.totalorder %s120, %s121
      %p132 = scmp.eq.s32.totalorder %s20, 0
      %p133 = por %p131, %p132
      %p134 = scmp.ne.s32.totalorder %s120, %s121
      %p135 = scmp.eq.s32.totalorder %s21, 1
      %p136 = por %p134, %p135
      %p138 = scmp.ne.s32.totalorder %s121, %s137
      %p139 = scmp.eq.s32.totalorder %s21, 0
      %p140 = por %p138, %p139
      %s142 = sadd.s32 %s141, 1
      %p145 = scmp.eq.s32.totalorder %s15, 1
      %p146 = scmp.ne.s32.totalorder %s141, %s143
      %p147 = scmp.eq.s32.totalorder %s15, 0
      %p148 = por %p146, %p147
      %p149 = scmp.ne.s32.totalorder %s141, %s143
      %p150 = scmp.eq.s32.totalorder %s20, 1
      %p151 = por %p149, %p150
      %p152 = scmp.ne.s32.totalorder %s143, %s144
      %p153 = scmp.eq.s32.totalorder %s20, 0
      %p154 = por %p152, %p153
      %p155 = scmp.ne.s32.totalorder %s143, %s144
      %p156 = scmp.eq.s32.totalorder %s21, 1
      %p157 = por %p155, %p156
      %p159 = scmp.ne.s32.totalorder %s144, %s158
      %p160 = scmp.eq.s32.totalorder %s21, 0
      %p161 = por %p159, %p160
      %s163 = sadd.s32 %s162, 1
      %p166 = scmp.eq.s32.totalorder %s15, 1
      %p167 = scmp.ne.s32.totalorder %s162, %s164
      %p168 = scmp.eq.s32.totalorder %s15, 0
      %p169 = por %p167, %p168
      %p170 = scmp.ne.s32.totalorder %s162, %s164
      %p171 = scmp.eq.s32.totalorder %s20, 1
      %p172 = por %p170, %p171
      %p173 = scmp.ne.s32.totalorder %s164, %s165
      %p174 = scmp.eq.s32.totalorder %s20, 0
      %p175 = por %p173, %p174
      %p176 = scmp.ne.s32.totalorder %s164, %s165
      %p177 = scmp.eq.s32.totalorder %s21, 1
      %p178 = por %p176, %p177
      %p180 = scmp.ne.s32.totalorder %s165, %s179
      %p181 = scmp.eq.s32.totalorder %s21, 0
      %p182 = por %p180, %p181
      %s183 = ssub.s32 %s22, %s34
      %p184 = scmp.eq.s32.totalorder %s183, 0
      %s186 = sadd.s32 %s185, 1
      %s187 = scalar_select %p184, %s185, %s186
      %p190 = pneg %p184
      %p191 = scmp.eq.s32.totalorder %s15, 1
      %p192 = por %p190, %p191
      %p193 = scmp.ne.s32.totalorder %s185, %s188
      %p194 = scmp.eq.s32.totalorder %s15, 0
      %p195 = por %p193, %p194
      %p196 = scmp.ne.s32.totalorder %s185, %s188
      %p197 = scmp.eq.s32.totalorder %s20, 1
      %p198 = por %p196, %p197
      %p199 = scmp.ne.s32.totalorder %s188, %s189
      %p200 = scmp.eq.s32.totalorder %s20, 0
      %p201 = por %p199, %p200
      %p202 = scmp.ne.s32.totalorder %s188, %s189
      %p203 = scmp.eq.s32.totalorder %s21, 1
      %p204 = por %p202, %p203
      %p206 = scmp.ne.s32.totalorder %s189, %s205
      %p207 = scmp.eq.s32.totalorder %s21, 0
      %p208 = por %p206, %p207
      %p209 = scmp.le.s32.totalorder 1, %s15
      %p210 = scmp.lt.s32.totalorder %s15, 3
      %p211 = pnand %p209, %p210
      %p212 = pneg %p211
      // Predicated region
      $region9: #{tpu_custom_call.1} parent=5 // pred_check
        _
      $region10: #{tpu_custom_call.1} parent=5 // pred_check_branch
        %214 = sbr.rel (%p211) target = $region12
      $region11: #{tpu_custom_call.1} parent=5 // pred_region
        %s215 = ssub.s32 %s15, 1
        // Predicated region
        $region13: #{tpu_custom_call.1} parent=11 // pred_check
          %p216 = pneg %p81
        $region14: #{tpu_custom_call.1} parent=11 // pred_check_branch
          %218 = sbr.rel (%p216) target = $region16
        $region15: #{tpu_custom_call.1} parent=11 // pred_region
          %p219 = scmp.lt.s32.totalorder %s25, 0
          %s220 = scalar_select %p219, %s25, 0
          %s221 = smul.addr %s220, 2
          %s222 = scalar_lea.vmem %s1, %s221
        $region16: #{tpu_custom_call.1} parent=11 // pred_fallthru
          _
        // Predicated region
        $region17: #{tpu_custom_call.1} parent=11 // pred_check
          %p223 = pneg %p107
        $region18: #{tpu_custom_call.1} parent=11 // pred_check_branch
          %225 = sbr.rel (%p223) target = $region20
        $region19: #{tpu_custom_call.1} parent=11 // pred_region
          %p226 = scmp.lt.s32.totalorder %s25, 0
          %s227 = scalar_select %p226, %s25, 0
          %s228 = smul.addr %s227, 2
          %s229 = scalar_lea.vmem %s2, %s228
        $region20: #{tpu_custom_call.1} parent=11 // pred_fallthru
          _
        // Predicated region
        $region21: #{tpu_custom_call.1} parent=11 // pred_check
          %p230 = pneg %p133
        $region22: #{tpu_custom_call.1} parent=11 // pred_check_branch
          %232 = sbr.rel (%p230) target = $region24
        $region23: #{tpu_custom_call.1} parent=11 // pred_region
          %p233 = scmp.lt.s32.totalorder %s25, 0
          %s234 = scalar_select %p233, %s25, 0
          %s235 = smul.addr %s234, 4
          %s236 = scalar_lea.vmem %s3, %s235
        $region24: #{tpu_custom_call.1} parent=11 // pred_fallthru
          _
        // Predicated region
        $region25: #{tpu_custom_call.1} parent=11 // pred_check
          %p237 = pneg %p154
        $region26: #{tpu_custom_call.1} parent=11 // pred_check_branch
          %239 = sbr.rel (%p237) target = $region28
        $region27: #{tpu_custom_call.1} parent=11 // pred_region
          _
        $region28: #{tpu_custom_call.1} parent=11 // pred_fallthru
          _
        // Predicated region
        $region29: #{tpu_custom_call.1} parent=11 // pred_check
          %p240 = pneg %p175
        $region30: #{tpu_custom_call.1} parent=11 // pred_check_branch
          %242 = sbr.rel (%p240) target = $region32
        $region31: #{tpu_custom_call.1} parent=11 // pred_region
          _
        $region32: #{tpu_custom_call.1} parent=11 // pred_fallthru
          _
      $region12: #{tpu_custom_call.1} parent=5 // pred_fallthru
        _
      %p243 = scmp.lt.s32.totalorder %s15, 2
      // Predicated region
      $region33: #{tpu_custom_call.1} parent=5 // pred_check
        %p244 = pneg %p243
      $region34: #{tpu_custom_call.1} parent=5 // pred_check_branch
        %246 = sbr.rel (%p244) target = $region36
      $region35: #{tpu_custom_call.1} parent=5 // pred_region
        // Predicated region
        $region37: #{tpu_custom_call.1} parent=35 // pred_check
          %p247 = pneg %p49
        $region38: #{tpu_custom_call.1} parent=35 // pred_check_branch
          %249 = sbr.rel (%p247) target = $region40
        $region39: #{tpu_custom_call.1} parent=35 // pred_region
          %p250 = scmp.lt.s32.totalorder %s22, 1
          %s251 = scalar_select %p250, %s22, 1
          %p252 = scmp.lt.s32.totalorder %s23, 0
          %s253 = scalar_select %p252, %s23, 0
          %s254 = smul.addr %s251, 32
          %s255 = sadd.s32 %s253, %s254
          %s256 = smul.addr %s255, 4
          %s257 = scalar_lea.vmem %s0, %s256
        $region40: #{tpu_custom_call.1} parent=35 // pred_fallthru
          _
      $region36: #{tpu_custom_call.1} parent=5 // pred_fallthru
        _
      %p258 = scmp.le.s32.totalorder 1, %s15
      %p259 = scmp.lt.s32.totalorder %s15, 3
      %p260 = pnand %p258, %p259
      %p261 = pneg %p260
      // Predicated region
      $region41: #{tpu_custom_call.1} parent=5 // pred_check
        _
      $region42: #{tpu_custom_call.1} parent=5 // pred_check_branch
        %263 = sbr.rel (%p260) target = $region44
      $region43: #{tpu_custom_call.1} parent=5 // pred_region
        %s264 = ssub.s32 %s15, 1
        %p265 = scmp.lt.s32.totalorder %s24, 1
        %s266 = scalar_select %p265, %s24, 1
        %p267 = scmp.lt.s32.totalorder %s25, 0
        %s268 = scalar_select %p267, %s25, 0
        %s269 = smul.addr %s266, 32
        %s270 = sadd.s32 %s268, %s269
        %s271 = smul.addr %s270, 4
        %s272 = scalar_lea.vmem %s0, %s271
        %p273 = pneg %p55
        %p274 = pneg %p52
        %p275 = scmp.lt.s32.totalorder %s25, 0
        %s276 = scalar_select %p275, %s25, 0
        %s277 = smul.addr %s276, 2
        %s278 = scalar_lea.vmem %s1, %s277
        %p279 = pneg %p81
        %p280 = pneg %p78
        %p281 = scmp.lt.s32.totalorder %s25, 0
        %s282 = scalar_select %p281, %s25, 0
        %s283 = smul.addr %s282, 2
        %s284 = scalar_lea.vmem %s2, %s283
        %p285 = pneg %p107
        %p286 = pneg %p104
        %p287 = scmp.lt.s32.totalorder %s25, 0
        %s288 = scalar_select %p287, %s25, 0
        %s289 = smul.addr %s288, 4
        %s290 = scalar_lea.vmem %s3, %s289
        %p291 = pneg %p133
        %p292 = pneg %p130
        %p293 = pneg %p154
        %p294 = pneg %p151
        %p295 = pneg %p175
        %p296 = pneg %p172
        %p297 = pneg %p201
        %p298 = pneg %p198
        %s299 = sand.u32 %s188, 1
        %s300 = scalar_lea.sflag [#allocation5], %s299
        %s301 = sand.u32 %s188, 1
        %s302 = smul.addr %s301, 128
        %s303 = scalar_lea.vmem [#allocation4], %s302
        %p304 = scmp.lt.s32.totalorder %s24, 1
        %s305 = scalar_select %p304, %s24, 1
        %p306 = scmp.lt.s32.totalorder %s25, 0
        %s307 = scalar_select %p306, %s25, 0
        %s308 = smul.addr %s305, 32
        %s309 = sadd.s32 %s307, %s308
        %s310 = smul.addr %s309, 4
        %s311 = scalar_lea.vmem %s0, %s310
        %p312 = scmp.lt.s32.totalorder %s25, 0
        %s313 = scalar_select %p312, %s25, 0
        %s314 = smul.addr %s313, 2
        %s315 = scalar_lea.vmem %s1, %s314
        %p316 = scmp.lt.s32.totalorder %s25, 0
        %s317 = scalar_select %p316, %s25, 0
        %s318 = smul.addr %s317, 2
        %s319 = scalar_lea.vmem %s2, %s318
        %p320 = scmp.lt.s32.totalorder %s25, 0
        %s321 = scalar_select %p320, %s25, 0
        %s322 = smul.addr %s321, 4
        %s323 = scalar_lea.vmem %s3, %s322
        %p325 = scmp.eq.s32.totalorder %s25, 0
        // Predicated region
        $region45: #{tpu_custom_call.1} parent=43 // pred_check
          %p326 = pneg %p325
        $region46: #{tpu_custom_call.1} parent=43 // pred_check_branch
          %328 = sbr.rel (%p326) target = $region48
        $region47: #{tpu_custom_call.1} parent=43 // pred_region
          %vm329 = vcmask 57344
          %330 = vst.msk [vmem:[#allocation2] sm:$0x1] %vm329, 0.0
          %vm331 = vcmask 64512
          %332 = vst.msk [vmem:[#allocation3] sm:$0xff] %vm331, 0.0
          %333 = vst.msk [vmem:[#allocation3 + $0x8] sm:$0xff] %vm331, 0.0
          %334 = vst.msk [vmem:[#allocation3 + $0x10] sm:$0xff] %vm331, 0.0
          %335 = vst.msk [vmem:[#allocation3 + $0x18] sm:$0xff] %vm331, 0.0
          %336 = vst.msk [vmem:[#allocation3 + $0x20] sm:$0xff] %vm331, 0.0
          %337 = vst.msk [vmem:[#allocation3 + $0x28] sm:$0xff] %vm331, 0.0
          %338 = vst.msk [vmem:[#allocation3 + $0x30] sm:$0xff] %vm331, 0.0
          %339 = vst.msk [vmem:[#allocation3 + $0x38] sm:$0xff] %vm331, 0.0
          %340 = vst.msk [vmem:[#allocation3 + $0x40] sm:$0xff] %vm331, 0.0
          %341 = vst.msk [vmem:[#allocation3 + $0x48] sm:$0xff] %vm331, 0.0
          %342 = vst.msk [vmem:[#allocation3 + $0x50] sm:$0xff] %vm331, 0.0
          %343 = vst.msk [vmem:[#allocation3 + $0x58] sm:$0xff] %vm331, 0.0
          %344 = vst.msk [vmem:[#allocation3 + $0x60] sm:$0xff] %vm331, 0.0
          %345 = vst.msk [vmem:[#allocation3 + $0x68] sm:$0xff] %vm331, 0.0
          %346 = vst.msk [vmem:[#allocation3 + $0x70] sm:$0xff] %vm331, 0.0
          %347 = vst.msk [vmem:[#allocation3 + $0x78] sm:$0xff] %vm331, 0.0
          %348 = vst.msk [vmem:[#allocation3 + $0x80] sm:$0xff] %vm331, 0.0
          %349 = vst.msk [vmem:[#allocation3 + $0x88] sm:$0xff] %vm331, 0.0
          %350 = vst.msk [vmem:[#allocation3 + $0x90] sm:$0xff] %vm331, 0.0
          %351 = vst.msk [vmem:[#allocation3 + $0x98] sm:$0xff] %vm331, 0.0
          %352 = vst.msk [vmem:[#allocation3 + $0xa0] sm:$0xff] %vm331, 0.0
          %353 = vst.msk [vmem:[#allocation3 + $0xa8] sm:$0xff] %vm331, 0.0
          %354 = vst.msk [vmem:[#allocation3 + $0xb0] sm:$0xff] %vm331, 0.0
          %355 = vst.msk [vmem:[#allocation3 + $0xb8] sm:$0xff] %vm331, 0.0
          %356 = vst.msk [vmem:[#allocation3 + $0xc0] sm:$0xff] %vm331, 0.0
          %357 = vst.msk [vmem:[#allocation3 + $0xc8] sm:$0xff] %vm331, 0.0
          %358 = vst.msk [vmem:[#allocation3 + $0xd0] sm:$0xff] %vm331, 0.0
          %359 = vst.msk [vmem:[#allocation3 + $0xd8] sm:$0xff] %vm331, 0.0
          %360 = vst.msk [vmem:[#allocation3 + $0xe0] sm:$0xff] %vm331, 0.0
          %361 = vst.msk [vmem:[#allocation3 + $0xe8] sm:$0xff] %vm331, 0.0
          %362 = vst.msk [vmem:[#allocation3 + $0xf0] sm:$0xff] %vm331, 0.0
          %363 = vst.msk [vmem:[#allocation3 + $0xf8] sm:$0xff] %vm331, 0.0
          %364 = vst.msk [vmem:[#allocation3 + $0x100] sm:$0xff] %vm331, 0.0
          %365 = vst.msk [vmem:[#allocation3 + $0x108] sm:$0xff] %vm331, 0.0
          %366 = vst.msk [vmem:[#allocation3 + $0x110] sm:$0xff] %vm331, 0.0
          %367 = vst.msk [vmem:[#allocation3 + $0x118] sm:$0xff] %vm331, 0.0
          %368 = vst.msk [vmem:[#allocation3 + $0x120] sm:$0xff] %vm331, 0.0
          %369 = vst.msk [vmem:[#allocation3 + $0x128] sm:$0xff] %vm331, 0.0
          %370 = vst.msk [vmem:[#allocation3 + $0x130] sm:$0xff] %vm331, 0.0
          %371 = vst.msk [vmem:[#allocation3 + $0x138] sm:$0xff] %vm331, 0.0
          %372 = vst.msk [vmem:[#allocation3 + $0x140] sm:$0xff] %vm331, 0.0
          %373 = vst.msk [vmem:[#allocation3 + $0x148] sm:$0xff] %vm331, 0.0
          %374 = vst.msk [vmem:[#allocation3 + $0x150] sm:$0xff] %vm331, 0.0
          %375 = vst.msk [vmem:[#allocation3 + $0x158] sm:$0xff] %vm331, 0.0
          %376 = vst.msk [vmem:[#allocation3 + $0x160] sm:$0xff] %vm331, 0.0
          %377 = vst.msk [vmem:[#allocation3 + $0x168] sm:$0xff] %vm331, 0.0
          %378 = vst.msk [vmem:[#allocation3 + $0x170] sm:$0xff] %vm331, 0.0
          %379 = vst.msk [vmem:[#allocation3 + $0x178] sm:$0xff] %vm331, 0.0
          %380 = vst.msk [vmem:[#allocation3 + $0x180] sm:$0xff] %vm331, 0.0
          %381 = vst.msk [vmem:[#allocation3 + $0x188] sm:$0xff] %vm331, 0.0
          %382 = vst.msk [vmem:[#allocation3 + $0x190] sm:$0xff] %vm331, 0.0
          %383 = vst.msk [vmem:[#allocation3 + $0x198] sm:$0xff] %vm331, 0.0
          %384 = vst.msk [vmem:[#allocation3 + $0x1a0] sm:$0xff] %vm331, 0.0
          %385 = vst.msk [vmem:[#allocation3 + $0x1a8] sm:$0xff] %vm331, 0.0
          %386 = vst.msk [vmem:[#allocation3 + $0x1b0] sm:$0xff] %vm331, 0.0
          %387 = vst.msk [vmem:[#allocation3 + $0x1b8] sm:$0xff] %vm331, 0.0
          %388 = vst.msk [vmem:[#allocation3 + $0x1c0] sm:$0xff] %vm331, 0.0
          %389 = vst.msk [vmem:[#allocation3 + $0x1c8] sm:$0xff] %vm331, 0.0
          %390 = vst.msk [vmem:[#allocation3 + $0x1d0] sm:$0xff] %vm331, 0.0
          %391 = vst.msk [vmem:[#allocation3 + $0x1d8] sm:$0xff] %vm331, 0.0
          %392 = vst.msk [vmem:[#allocation3 + $0x1e0] sm:$0xff] %vm331, 0.0
          %393 = vst.msk [vmem:[#allocation3 + $0x1e8] sm:$0xff] %vm331, 0.0
          %394 = vst.msk [vmem:[#allocation3 + $0x1f0] sm:$0xff] %vm331, 0.0
          %395 = vst.msk [vmem:[#allocation3 + $0x1f8] sm:$0xff] %vm331, 0.0
          %396 = vst.msk [vmem:[#allocation3 + $0x200] sm:$0xff] %vm331, 0.0
          %397 = vst.msk [vmem:[#allocation3 + $0x208] sm:$0xff] %vm331, 0.0
          %398 = vst.msk [vmem:[#allocation3 + $0x210] sm:$0xff] %vm331, 0.0
          %399 = vst.msk [vmem:[#allocation3 + $0x218] sm:$0xff] %vm331, 0.0
          %400 = vst.msk [vmem:[#allocation3 + $0x220] sm:$0xff] %vm331, 0.0
          %401 = vst.msk [vmem:[#allocation3 + $0x228] sm:$0xff] %vm331, 0.0
          %402 = vst.msk [vmem:[#allocation3 + $0x230] sm:$0xff] %vm331, 0.0
          %403 = vst.msk [vmem:[#allocation3 + $0x238] sm:$0xff] %vm331, 0.0
          %404 = vst.msk [vmem:[#allocation3 + $0x240] sm:$0xff] %vm331, 0.0
          %405 = vst.msk [vmem:[#allocation3 + $0x248] sm:$0xff] %vm331, 0.0
          %406 = vst.msk [vmem:[#allocation3 + $0x250] sm:$0xff] %vm331, 0.0
          %407 = vst.msk [vmem:[#allocation3 + $0x258] sm:$0xff] %vm331, 0.0
          %408 = vst.msk [vmem:[#allocation3 + $0x260] sm:$0xff] %vm331, 0.0
          %409 = vst.msk [vmem:[#allocation3 + $0x268] sm:$0xff] %vm331, 0.0
          %410 = vst.msk [vmem:[#allocation3 + $0x270] sm:$0xff] %vm331, 0.0
          %411 = vst.msk [vmem:[#allocation3 + $0x278] sm:$0xff] %vm331, 0.0
          %412 = vst.msk [vmem:[#allocation3 + $0x280] sm:$0xff] %vm331, 0.0
          %413 = vst.msk [vmem:[#allocation3 + $0x288] sm:$0xff] %vm331, 0.0
          %414 = vst.msk [vmem:[#allocation3 + $0x290] sm:$0xff] %vm331, 0.0
          %415 = vst.msk [vmem:[#allocation3 + $0x298] sm:$0xff] %vm331, 0.0
          %416 = vst.msk [vmem:[#allocation3 + $0x2a0] sm:$0xff] %vm331, 0.0
          %417 = vst.msk [vmem:[#allocation3 + $0x2a8] sm:$0xff] %vm331, 0.0
          %418 = vst.msk [vmem:[#allocation3 + $0x2b0] sm:$0xff] %vm331, 0.0
          %419 = vst.msk [vmem:[#allocation3 + $0x2b8] sm:$0xff] %vm331, 0.0
          %420 = vst.msk [vmem:[#allocation3 + $0x2c0] sm:$0xff] %vm331, 0.0
          %421 = vst.msk [vmem:[#allocation3 + $0x2c8] sm:$0xff] %vm331, 0.0
          %422 = vst.msk [vmem:[#allocation3 + $0x2d0] sm:$0xff] %vm331, 0.0
          %423 = vst.msk [vmem:[#allocation3 + $0x2d8] sm:$0xff] %vm331, 0.0
          %424 = vst.msk [vmem:[#allocation3 + $0x2e0] sm:$0xff] %vm331, 0.0
          %425 = vst.msk [vmem:[#allocation3 + $0x2e8] sm:$0xff] %vm331, 0.0
          %426 = vst.msk [vmem:[#allocation3 + $0x2f0] sm:$0xff] %vm331, 0.0
          %427 = vst.msk [vmem:[#allocation3 + $0x2f8] sm:$0xff] %vm331, 0.0
          %428 = vst.msk [vmem:[#allocation3 + $0x300] sm:$0xff] %vm331, 0.0
          %429 = vst.msk [vmem:[#allocation3 + $0x308] sm:$0xff] %vm331, 0.0
          %430 = vst.msk [vmem:[#allocation3 + $0x310] sm:$0xff] %vm331, 0.0
          %431 = vst.msk [vmem:[#allocation3 + $0x318] sm:$0xff] %vm331, 0.0
          %432 = vst.msk [vmem:[#allocation3 + $0x320] sm:$0xff] %vm331, 0.0
          %433 = vst.msk [vmem:[#allocation3 + $0x328] sm:$0xff] %vm331, 0.0
          %434 = vst.msk [vmem:[#allocation3 + $0x330] sm:$0xff] %vm331, 0.0
          %435 = vst.msk [vmem:[#allocation3 + $0x338] sm:$0xff] %vm331, 0.0
          %436 = vst.msk [vmem:[#allocation3 + $0x340] sm:$0xff] %vm331, 0.0
          %437 = vst.msk [vmem:[#allocation3 + $0x348] sm:$0xff] %vm331, 0.0
          %438 = vst.msk [vmem:[#allocation3 + $0x350] sm:$0xff] %vm331, 0.0
          %439 = vst.msk [vmem:[#allocation3 + $0x358] sm:$0xff] %vm331, 0.0
          %440 = vst.msk [vmem:[#allocation3 + $0x360] sm:$0xff] %vm331, 0.0
          %441 = vst.msk [vmem:[#allocation3 + $0x368] sm:$0xff] %vm331, 0.0
          %442 = vst.msk [vmem:[#allocation3 + $0x370] sm:$0xff] %vm331, 0.0
          %443 = vst.msk [vmem:[#allocation3 + $0x378] sm:$0xff] %vm331, 0.0
          %444 = vst.msk [vmem:[#allocation3 + $0x380] sm:$0xff] %vm331, 0.0
          %445 = vst.msk [vmem:[#allocation3 + $0x388] sm:$0xff] %vm331, 0.0
          %446 = vst.msk [vmem:[#allocation3 + $0x390] sm:$0xff] %vm331, 0.0
          %447 = vst.msk [vmem:[#allocation3 + $0x398] sm:$0xff] %vm331, 0.0
          %448 = vst.msk [vmem:[#allocation3 + $0x3a0] sm:$0xff] %vm331, 0.0
          %449 = vst.msk [vmem:[#allocation3 + $0x3a8] sm:$0xff] %vm331, 0.0
          %450 = vst.msk [vmem:[#allocation3 + $0x3b0] sm:$0xff] %vm331, 0.0
          %451 = vst.msk [vmem:[#allocation3 + $0x3b8] sm:$0xff] %vm331, 0.0
          %452 = vst.msk [vmem:[#allocation3 + $0x3c0] sm:$0xff] %vm331, 0.0
          %453 = vst.msk [vmem:[#allocation3 + $0x3c8] sm:$0xff] %vm331, 0.0
          %454 = vst.msk [vmem:[#allocation3 + $0x3d0] sm:$0xff] %vm331, 0.0
          %455 = vst.msk [vmem:[#allocation3 + $0x3d8] sm:$0xff] %vm331, 0.0
          %456 = vst.msk [vmem:[#allocation3 + $0x3e0] sm:$0xff] %vm331, 0.0
          %457 = vst.msk [vmem:[#allocation3 + $0x3e8] sm:$0xff] %vm331, 0.0
          %458 = vst.msk [vmem:[#allocation3 + $0x3f0] sm:$0xff] %vm331, 0.0
          %459 = vst.msk [vmem:[#allocation3 + $0x3f8] sm:$0xff] %vm331, 0.0
        $region48: #{tpu_custom_call.1} parent=43 // pred_fallthru
          _
        %v460 = vld [vmem:[%s311] sm:$0xf]
        %v461 = vld [vmem:[%s311 + $0x4] sm:$0xf]
        %v462 = vld [vmem:[%s311 + $0x8] sm:$0xf]
        %v463 = vld [vmem:[%s311 + $0xc] sm:$0xf]
        %v464 = vld [vmem:[%s311 + $0x10] sm:$0xf]
        %v465 = vld [vmem:[%s311 + $0x14] sm:$0xf]
        %v466 = vld [vmem:[%s311 + $0x18] sm:$0xf]
        %v467 = vld [vmem:[%s311 + $0x1c] sm:$0xf]
        %v468 = vld [vmem:[%s311 + $0x20] sm:$0xf]
        %v469 = vld [vmem:[%s311 + $0x24] sm:$0xf]
        %v470 = vld [vmem:[%s311 + $0x28] sm:$0xf]
        %v471 = vld [vmem:[%s311 + $0x2c] sm:$0xf]
        %v472 = vld [vmem:[%s311 + $0x30] sm:$0xf]
        %v473 = vld [vmem:[%s311 + $0x34] sm:$0xf]
        %v474 = vld [vmem:[%s311 + $0x38] sm:$0xf]
        %v475 = vld [vmem:[%s311 + $0x3c] sm:$0xf]
        %v476 = vld [vmem:[%s311 + $0x40] sm:$0xf]
        %v477 = vld [vmem:[%s311 + $0x44] sm:$0xf]
        %v478 = vld [vmem:[%s311 + $0x48] sm:$0xf]
        %v479 = vld [vmem:[%s311 + $0x4c] sm:$0xf]
        %v480 = vld [vmem:[%s311 + $0x50] sm:$0xf]
        %v481 = vld [vmem:[%s311 + $0x54] sm:$0xf]
        %v482 = vld [vmem:[%s311 + $0x58] sm:$0xf]
        %v483 = vld [vmem:[%s311 + $0x5c] sm:$0xf]
        %v484 = vld [vmem:[%s311 + $0x60] sm:$0xf]
        %v485 = vld [vmem:[%s311 + $0x64] sm:$0xf]
        %v486 = vld [vmem:[%s311 + $0x68] sm:$0xf]
        %v487 = vld [vmem:[%s311 + $0x6c] sm:$0xf]
        %v488 = vld [vmem:[%s311 + $0x70] sm:$0xf]
        %v489 = vld [vmem:[%s311 + $0x74] sm:$0xf]
        %v490 = vld [vmem:[%s311 + $0x78] sm:$0xf]
        %v491 = vld [vmem:[%s311 + $0x7c] sm:$0xf]
        %v492 = vunpack.c.l.bf16 %v460
        %v493 = vunpack.c.l.bf16 %v461
        %v494 = vunpack.c.l.bf16 %v462
        %v495 = vunpack.c.l.bf16 %v463
        %v496 = vunpack.c.l.bf16 %v464
        %v497 = vunpack.c.l.bf16 %v465
        %v498 = vunpack.c.l.bf16 %v466
        %v499 = vunpack.c.l.bf16 %v467
        %v500 = vunpack.c.l.bf16 %v468
        %v501 = vunpack.c.l.bf16 %v469
        %v502 = vunpack.c.l.bf16 %v470
        %v503 = vunpack.c.l.bf16 %v471
        %v504 = vunpack.c.l.bf16 %v472
        %v505 = vunpack.c.l.bf16 %v473
        %v506 = vunpack.c.l.bf16 %v474
        %v507 = vunpack.c.l.bf16 %v475
        %v508 = vunpack.c.l.bf16 %v476
        %v509 = vunpack.c.l.bf16 %v477
        %v510 = vunpack.c.l.bf16 %v478
        %v511 = vunpack.c.l.bf16 %v479
        %v512 = vunpack.c.l.bf16 %v480
        %v513 = vunpack.c.l.bf16 %v481
        %v514 = vunpack.c.l.bf16 %v482
        %v515 = vunpack.c.l.bf16 %v483
        %v516 = vunpack.c.l.bf16 %v484
        %v517 = vunpack.c.l.bf16 %v485
        %v518 = vunpack.c.l.bf16 %v486
        %v519 = vunpack.c.l.bf16 %v487
        %v520 = vunpack.c.l.bf16 %v488
        %v521 = vunpack.c.l.bf16 %v489
        %v522 = vunpack.c.l.bf16 %v490
        %v523 = vunpack.c.l.bf16 %v491
        %vm524 = vcmask 31744
        %v525 = vsel %vm524, %v492, 0.0
        %v526 = vsel %vm524, %v493, 0.0
        %v527 = vadd.f32 %v525, %v526
        %v528 = vsel %vm524, %v494, 0.0
        %v529 = vadd.f32 %v527, %v528
        %v530 = vsel %vm524, %v495, 0.0
        %v531 = vadd.f32 %v529, %v530
        %v532 = vsel %vm524, %v496, 0.0
        %v533 = vadd.f32 %v531, %v532
        %v534 = vsel %vm524, %v497, 0.0
        %v535 = vadd.f32 %v533, %v534
        %v536 = vsel %vm524, %v498, 0.0
        %v537 = vadd.f32 %v535, %v536
        %v538 = vsel %vm524, %v499, 0.0
        %v539 = vadd.f32 %v537, %v538
        %v540 = vsel %vm524, %v500, 0.0
        %v541 = vadd.f32 %v539, %v540
        %v542 = vsel %vm524, %v501, 0.0
        %v543 = vadd.f32 %v541, %v542
        %v544 = vsel %vm524, %v502, 0.0
        %v545 = vadd.f32 %v543, %v544
        %v546 = vsel %vm524, %v503, 0.0
        %v547 = vadd.f32 %v545, %v546
        %v548 = vsel %vm524, %v504, 0.0
        %v549 = vadd.f32 %v547, %v548
        %v550 = vsel %vm524, %v505, 0.0
        %v551 = vadd.f32 %v549, %v550
        %v552 = vsel %vm524, %v506, 0.0
        %v553 = vadd.f32 %v551, %v552
        %v554 = vsel %vm524, %v507, 0.0
        %v555 = vadd.f32 %v553, %v554
        %v556 = vsel %vm524, %v508, 0.0
        %v557 = vadd.f32 %v555, %v556
        %v558 = vsel %vm524, %v509, 0.0
        %v559 = vadd.f32 %v557, %v558
        %v560 = vsel %vm524, %v510, 0.0
        %v561 = vadd.f32 %v559, %v560
        %v562 = vsel %vm524, %v511, 0.0
        %v563 = vadd.f32 %v561, %v562
        %v564 = vsel %vm524, %v512, 0.0
        %v565 = vadd.f32 %v563, %v564
        %v566 = vsel %vm524, %v513, 0.0
        %v567 = vadd.f32 %v565, %v566
        %v568 = vsel %vm524, %v514, 0.0
        %v569 = vadd.f32 %v567, %v568
        %v570 = vsel %vm524, %v515, 0.0
        %v571 = vadd.f32 %v569, %v570
        %v572 = vsel %vm524, %v516, 0.0
        %v573 = vadd.f32 %v571, %v572
        %v574 = vsel %vm524, %v517, 0.0
        %v575 = vadd.f32 %v573, %v574
        %v576 = vsel %vm524, %v518, 0.0
        %v577 = vadd.f32 %v575, %v576
        %v578 = vsel %vm524, %v519, 0.0
        %v579 = vadd.f32 %v577, %v578
        %v580 = vsel %vm524, %v520, 0.0
        %v581 = vadd.f32 %v579, %v580
        %v582 = vsel %vm524, %v521, 0.0
        %v583 = vadd.f32 %v581, %v582
        %v584 = vsel %vm524, %v522, 0.0
        %v585 = vadd.f32 %v583, %v584
        %v586 = vsel %vm524, %v523, 0.0
        %v587 = vadd.f32 %v585, %v586
        %v588 = vrot.slane %v587, 4
        %v589 = vadd.f32 %v587, %v588
        %v590 = vrot.slane %v589, 2
        %v591 = vadd.f32 %v589, %v590
        %v592 = vrot.slane %v591, 1
        %v593 = vadd.f32 %v591, %v592
        %v594 = vld [vmem:[#allocation2] sm:$0x1]
        %v595 = vld [vmem:[%s323] sm:$0xf]
        %v597 = vsel %vm524, %v593, 0
        %vm599 = vcmask 1043456
        %v601 = vsel %vm599, %v595, 0
        %603 = vmatprep.subr.mxu0 0.0
        %604 = vmatpush1.msra.mxu0 %v601
        %605 = vmatprep.subr.mxu0 0.0
        %606 = vmatpush1.msra.mxu0 0.0
        %607 = vmatprep.subr.mxu0 0.0
        %608 = vmatpush1.msra.mxu0 0.0
        %609 = vmatprep.subr.mxu0 0.0
        %610 = vmatpush1.msra.mxu0 0.0
        %611 = vmatprep.subr.mxu0 0.0
        %612 = vmatpush1.msra.mxu0 0.0
        %613 = vmatprep.subr.mxu0 0.0
        %614 = vmatpush1.msra.mxu0 0.0
        %615 = vmatprep.subr.mxu0 0.0
        %616 = vmatpush1.msra.mxu0 0.0
        %617 = vmatprep.subr.mxu0 0.0
        %618 = vmatpush1.msra.mxu0 0.0
        %619 = vmatprep.subr.mxu0 0.0
        %620 = vmatpush1.msra.mxu0 0.0
        %621 = vmatprep.subr.mxu0 0.0
        %622 = vmatpush1.msra.mxu0 0.0
        %623 = vmatprep.subr.mxu0 0.0
        %624 = vmatpush1.msra.mxu0 0.0
        %625 = vmatprep.subr.mxu0 0.0
        %626 = vmatpush1.msra.mxu0 0.0
        %627 = vmatprep.subr.mxu0 0.0
        %628 = vmatpush1.msra.mxu0 0.0
        %629 = vmatprep.subr.mxu0 0.0
        %630 = vmatpush1.msra.mxu0 0.0
        %631 = vmatprep.subr.mxu0 0.0
        %632 = vmatpush1.msra.mxu0 0.0
        %633 = vmatprep.subr.mxu0 0.0
        %634 = vmatpush1.msra.mxu0 0.0
        %635 = vmatprep.subr.mxu0 0.0
        %636 = vmatpush1.msra.mxu0 0.0
        %637 = vmatprep.subr.mxu0 0.0
        %638 = vmatpush1.msra.mxu0 0.0
        %639 = vmatprep.subr.mxu0 0.0
        %640 = vmatpush1.msra.mxu0 0.0
        %641 = vmatprep.subr.mxu0 0.0
        %642 = vmatpush1.msra.mxu0 0.0
        %643 = vmatprep.subr.mxu0 0.0
        %644 = vmatpush1.msra.mxu0 0.0
        %645 = vmatprep.subr.mxu0 0.0
        %646 = vmatpush1.msra.mxu0 0.0
        %647 = vmatprep.subr.mxu0 0.0
        %648 = vmatpush1.msra.mxu0 0.0
        %649 = vmatprep.subr.mxu0 0.0
        %650 = vmatpush1.msra.mxu0 0.0
        %651 = vmatprep.subr.mxu0 0.0
        %652 = vmatpush1.msra.mxu0 0.0
        %653 = vmatprep.subr.mxu0 0.0
        %654 = vmatpush1.msra.mxu0 0.0
        %655 = vmatprep.subr.mxu0 0.0
        %656 = vmatpush1.msra.mxu0 0.0
        %657 = vmatprep.subr.mxu0 0.0
        %658 = vmatpush1.msra.mxu0 0.0
        %659 = vmatprep.subr.mxu0 0.0
        %660 = vmatpush1.msra.mxu0 0.0
        %661 = vmatprep.subr.mxu0 0.0
        %662 = vmatpush1.msra.mxu0 0.0
        %663 = vmatprep.subr.mxu0 0.0
        %664 = vmatpush1.msra.mxu0 0.0
        %665 = vmatprep.subr.mxu0 0.0
        %666 = vmatpush1.msra.mxu0 0.0
        %667 = vmatprep.mubr.f32.mxu0 0.0
        %668 = vmatmul.mubr.f32.gmra.mrb[0].mxu0 %v597
        %v669 = vpop.f32.mrb[0].mxu0
        %v670 = vadd.f32 0.0, %v669
        %v671 = vpop.f32.mrb[0].mxu0
        %672 = vdwg.mxu0
        %v673 = vadd.f32 %v594, %v670
        %vm674 = vcmask 57344
        %675 = vst.msk [vmem:[#allocation2] sm:$0x1] %vm674, %v673
        %v676 = vld [vmem:[%s315] sm:$0x3]
        %v709 = vunpack.c.l.b16 %v460
        %v710 = vunpack.c.l.b16 %v461
        %v711 = vunpack.c.l.b16 %v462
        %v712 = vunpack.c.l.b16 %v463
        %v713 = vunpack.c.l.b16 %v464
        %v714 = vunpack.c.l.b16 %v465
        %v715 = vunpack.c.l.b16 %v466
        %v716 = vunpack.c.l.b16 %v467
        %v717 = vunpack.c.l.b16 %v468
        %v718 = vunpack.c.l.b16 %v469
        %v719 = vunpack.c.l.b16 %v470
        %v720 = vunpack.c.l.b16 %v471
        %v721 = vunpack.c.l.b16 %v472
        %v722 = vunpack.c.l.b16 %v473
        %v723 = vunpack.c.l.b16 %v474
        %v724 = vunpack.c.l.b16 %v475
        %v725 = vunpack.c.l.b16 %v476
        %v726 = vunpack.c.l.b16 %v477
        %v727 = vunpack.c.l.b16 %v478
        %v728 = vunpack.c.l.b16 %v479
        %v729 = vunpack.c.l.b16 %v480
        %v730 = vunpack.c.l.b16 %v481
        %v731 = vunpack.c.l.b16 %v482
        %v732 = vunpack.c.l.b16 %v483
        %v733 = vunpack.c.l.b16 %v484
        %v734 = vunpack.c.l.b16 %v485
        %v735 = vunpack.c.l.b16 %v486
        %v736 = vunpack.c.l.b16 %v487
        %v737 = vunpack.c.l.b16 %v488
        %v738 = vunpack.c.l.b16 %v489
        %v739 = vunpack.c.l.b16 %v490
        %v740 = vunpack.c.l.b16 %v491
        %v741 = vpack.c.b16 %v710, %v709
        %v742 = vpack.c.b16 %v712, %v711
        %v743 = vpack.c.b16 %v714, %v713
        %v744 = vpack.c.b16 %v716, %v715
        %v745 = vpack.c.b16 %v718, %v717
        %v746 = vpack.c.b16 %v720, %v719
        %v747 = vpack.c.b16 %v722, %v721
        %v748 = vpack.c.b16 %v724, %v723
        %v749 = vpack.c.b16 %v726, %v725
        %v750 = vpack.c.b16 %v728, %v727
        %v751 = vpack.c.b16 %v730, %v729
        %v752 = vpack.c.b16 %v732, %v731
        %v753 = vpack.c.b16 %v734, %v733
        %v754 = vpack.c.b16 %v736, %v735
        %v755 = vpack.c.b16 %v738, %v737
        %v756 = vpack.c.b16 %v740, %v739
        %v758 = vsel %vm524, %v741, 0
        %v761 = vsel %vm524, %v742, 0
        %v764 = vsel %vm524, %v743, 0
        %v767 = vsel %vm524, %v744, 0
        %v770 = vsel %vm524, %v745, 0
        %v773 = vsel %vm524, %v746, 0
        %v776 = vsel %vm524, %v747, 0
        %v779 = vsel %vm524, %v748, 0
        %v782 = vsel %vm524, %v749, 0
        %v785 = vsel %vm524, %v750, 0
        %v788 = vsel %vm524, %v751, 0
        %v791 = vsel %vm524, %v752, 0
        %v794 = vsel %vm524, %v753, 0
        %v797 = vsel %vm524, %v754, 0
        %v800 = vsel %vm524, %v755, 0
        %v803 = vsel %vm524, %v756, 0
        %vm805 = vcmask 1041408
        %v807 = vsel %vm805, %v676, 0
        %809 = vmatprep.subr.bf16.mxu0 0
        %810 = vmatpush1.bf16.msra.mxu0 %v807
        %811 = vmatprep.subr.bf16.mxu0 0
        %812 = vmatpush1.bf16.msra.mxu0 0
        %813 = vmatprep.subr.bf16.mxu0 0
        %814 = vmatpush1.bf16.msra.mxu0 0
        %815 = vmatprep.subr.bf16.mxu0 0
        %816 = vmatpush1.bf16.msra.mxu0 0
        %817 = vmatprep.subr.bf16.mxu0 0
        %818 = vmatpush1.bf16.msra.mxu0 0
        %819 = vmatprep.subr.bf16.mxu0 0
        %820 = vmatpush1.bf16.msra.mxu0 0
        %821 = vmatprep.subr.bf16.mxu0 0
        %822 = vmatpush1.bf16.msra.mxu0 0
        %823 = vmatprep.subr.bf16.mxu0 0
        %824 = vmatpush1.bf16.msra.mxu0 0
        %825 = vmatprep.subr.bf16.mxu0 0
        %826 = vmatpush1.bf16.msra.mxu0 0
        %827 = vmatprep.subr.bf16.mxu0 0
        %828 = vmatpush1.bf16.msra.mxu0 0
        %829 = vmatprep.subr.bf16.mxu0 0
        %830 = vmatpush1.bf16.msra.mxu0 0
        %831 = vmatprep.subr.bf16.mxu0 0
        %832 = vmatpush1.bf16.msra.mxu0 0
        %833 = vmatprep.subr.bf16.mxu0 0
        %834 = vmatpush1.bf16.msra.mxu0 0
        %835 = vmatprep.subr.bf16.mxu0 0
        %836 = vmatpush1.bf16.msra.mxu0 0
        %837 = vmatprep.subr.bf16.mxu0 0
        %838 = vmatpush1.bf16.msra.mxu0 0
        %839 = vmatprep.subr.bf16.mxu0 0
        %840 = vmatpush1.bf16.msra.mxu0 0
        %841 = vmatprep.mubr.bf16.mxu0 0
        %842 = vmatmul.mubr.bf16.gmra.mrb[0].mxu0 %v758
        %v843 = vpop.f32.mrb[0].mxu0
        %v844 = vadd.f32 0.0, %v843
        %v845 = vpop.f32.mrb[0].mxu0
        %v846 = vpop.f32.mrb[0].mxu0
        %v847 = vadd.f32 0.0, %v846
        %v848 = vpop.f32.mrb[0].mxu0
        %849 = vmatprep.mubr.bf16.mxu0 0
        %850 = vmatmul.mubr.bf16.gmra.mrb[0].mxu0 %v761
        %v851 = vpop.f32.mrb[0].mxu0
        %v852 = vadd.f32 0.0, %v851
        %v853 = vpop.f32.mrb[0].mxu0
        %v854 = vpop.f32.mrb[0].mxu0
        %v855 = vadd.f32 0.0, %v854
        %v856 = vpop.f32.mrb[0].mxu0
        %857 = vmatprep.mubr.bf16.mxu0 0
        %858 = vmatmul.mubr.bf16.gmra.mrb[0].mxu0 %v764
        %v859 = vpop.f32.mrb[0].mxu0
        %v860 = vadd.f32 0.0, %v859
        %v861 = vpop.f32.mrb[0].mxu0
        %v862 = vpop.f32.mrb[0].mxu0
        %v863 = vadd.f32 0.0, %v862
        %v864 = vpop.f32.mrb[0].mxu0
        %865 = vmatprep.mubr.bf16.mxu0 0
        %866 = vmatmul.mubr.bf16.gmra.mrb[0].mxu0 %v767
        %v867 = vpop.f32.mrb[0].mxu0
        %v868 = vadd.f32 0.0, %v867
        %v869 = vpop.f32.mrb[0].mxu0
        %v870 = vpop.f32.mrb[0].mxu0
        %v871 = vadd.f32 0.0, %v870
        %v872 = vpop.f32.mrb[0].mxu0
        %873 = vmatprep.mubr.bf16.mxu0 0
        %874 = vmatmul.mubr.bf16.gmra.mrb[0].mxu0 %v770
        %v875 = vpop.f32.mrb[0].mxu0
        %v876 = vadd.f32 0.0, %v875
        %v877 = vpop.f32.mrb[0].mxu0
        %v878 = vpop.f32.mrb[0].mxu0
        %v879 = vadd.f32 0.0, %v878
        %v880 = vpop.f32.mrb[0].mxu0
        %881 = vmatprep.mubr.bf16.mxu0 0
        %882 = vmatmul.mubr.bf16.gmra.mrb[0].mxu0 %v773
        %v883 = vpop.f32.mrb[0].mxu0
        %v884 = vadd.f32 0.0, %v883
        %v885 = vpop.f32.mrb[0].mxu0
        %v886 = vpop.f32.mrb[0].mxu0
        %v887 = vadd.f32 0.0, %v886
        %v888 = vpop.f32.mrb[0].mxu0
        %889 = vmatprep.mubr.bf16.mxu0 0
        %890 = vmatmul.mubr.bf16.gmra.mrb[0].mxu0 %v776
        %v891 = vpop.f32.mrb[0].mxu0
        %v892 = vadd.f32 0.0, %v891
        %v893 = vpop.f32.mrb[0].mxu0
        %v894 = vpop.f32.mrb[0].mxu0
        %v895 = vadd.f32 0.0, %v894
        %v896 = vpop.f32.mrb[0].mxu0
        %897 = vmatprep.mubr.bf16.mxu0 0
        %898 = vmatmul.mubr.bf16.gmra.mrb[0].mxu0 %v779
        %v899 = vpop.f32.mrb[0].mxu0
        %v900 = vadd.f32 0.0, %v899
        %v901 = vpop.f32.mrb[0].mxu0
        %v902 = vpop.f32.mrb[0].mxu0
        %v903 = vadd.f32 0.0, %v902
        %v904 = vpop.f32.mrb[0].mxu0
        %905 = vmatprep.mubr.bf16.mxu0 0
        %906 = vmatmul.mubr.bf16.gmra.mrb[0].mxu0 %v782
        %v907 = vpop.f32.mrb[0].mxu0
        %v908 = vadd.f32 0.0, %v907
        %v909 = vpop.f32.mrb[0].mxu0
        %v910 = vpop.f32.mrb[0].mxu0
        %v911 = vadd.f32 0.0, %v910
        %v912 = vpop.f32.mrb[0].mxu0
        %913 = vmatprep.mubr.bf16.mxu0 0
        %914 = vmatmul.mubr.bf16.gmra.mrb[0].mxu0 %v785
        %v915 = vpop.f32.mrb[0].mxu0
        %v916 = vadd.f32 0.0, %v915
        %v917 = vpop.f32.mrb[0].mxu0
        %v918 = vpop.f32.mrb[0].mxu0
        %v919 = vadd.f32 0.0, %v918
        %v920 = vpop.f32.mrb[0].mxu0
        %921 = vmatprep.mubr.bf16.mxu0 0
        %922 = vmatmul.mubr.bf16.gmra.mrb[0].mxu0 %v788
        %v923 = vpop.f32.mrb[0].mxu0
        %v924 = vadd.f32 0.0, %v923
        %v925 = vpop.f32.mrb[0].mxu0
        %v926 = vpop.f32.mrb[0].mxu0
        %v927 = vadd.f32 0.0, %v926
        %v928 = vpop.f32.mrb[0].mxu0
        %929 = vmatprep.mubr.bf16.mxu0 0
        %930 = vmatmul.mubr.bf16.gmra.mrb[0].mxu0 %v791
        %v931 = vpop.f32.mrb[0].mxu0
        %v932 = vadd.f32 0.0, %v931
        %v933 = vpop.f32.mrb[0].mxu0
        %v934 = vpop.f32.mrb[0].mxu0
        %v935 = vadd.f32 0.0, %v934
        %v936 = vpop.f32.mrb[0].mxu0
        %937 = vmatprep.mubr.bf16.mxu0 0
        %938 = vmatmul.mubr.bf16.gmra.mrb[0].mxu0 %v794
        %v939 = vpop.f32.mrb[0].mxu0
        %v940 = vadd.f32 0.0, %v939
        %v941 = vpop.f32.mrb[0].mxu0
        %v942 = vpop.f32.mrb[0].mxu0
        %v943 = vadd.f32 0.0, %v942
        %v944 = vpop.f32.mrb[0].mxu0
        %945 = vmatprep.mubr.bf16.mxu0 0
        %946 = vmatmul.mubr.bf16.gmra.mrb[0].mxu0 %v797
        %v947 = vpop.f32.mrb[0].mxu0
        %v948 = vadd.f32 0.0, %v947
        %v949 = vpop.f32.mrb[0].mxu0
        %v950 = vpop.f32.mrb[0].mxu0
        %v951 = vadd.f32 0.0, %v950
        %v952 = vpop.f32.mrb[0].mxu0
        %953 = vmatprep.mubr.bf16.mxu0 0
        %954 = vmatmul.mubr.bf16.gmra.mrb[0].mxu0 %v800
        %v955 = vpop.f32.mrb[0].mxu0
        %v956 = vadd.f32 0.0, %v955
        %v957 = vpop.f32.mrb[0].mxu0
        %v958 = vpop.f32.mrb[0].mxu0
        %v959 = vadd.f32 0.0, %v958
        %v960 = vpop.f32.mrb[0].mxu0
        %961 = vmatprep.mubr.bf16.mxu0 0
        %962 = vmatmul.mubr.bf16.gmra.mrb[0].mxu0 %v803
        %v963 = vpop.f32.mrb[0].mxu0
        %v964 = vadd.f32 0.0, %v963
        %v965 = vpop.f32.mrb[0].mxu0
        %v966 = vpop.f32.mrb[0].mxu0
        %v967 = vadd.f32 0.0, %v966
        %v968 = vpop.f32.mrb[0].mxu0
        %969 = vdwg.mxu0
        %v970 = vld [vmem:[#allocation3] sm:$0xff]
        %v971 = vld [vmem:[#allocation3 + $0x8] sm:$0xff]
        %v972 = vld [vmem:[#allocation3 + $0x10] sm:$0xff]
        %v973 = vld [vmem:[#allocation3 + $0x18] sm:$0xff]
        %v974 = vld [vmem:[#allocation3 + $0x20] sm:$0xff]
        %v975 = vld [vmem:[#allocation3 + $0x28] sm:$0xff]
        %v976 = vld [vmem:[#allocation3 + $0x30] sm:$0xff]
        %v977 = vld [vmem:[#allocation3 + $0x38] sm:$0xff]
        %v978 = vld [vmem:[#allocation3 + $0x40] sm:$0xff]
        %v979 = vld [vmem:[#allocation3 + $0x48] sm:$0xff]
        %v980 = vld [vmem:[#allocation3 + $0x50] sm:$0xff]
        %v981 = vld [vmem:[#allocation3 + $0x58] sm:$0xff]
        %v982 = vld [vmem:[#allocation3 + $0x60] sm:$0xff]
        %v983 = vld [vmem:[#allocation3 + $0x68] sm:$0xff]
        %v984 = vld [vmem:[#allocation3 + $0x70] sm:$0xff]
        %v985 = vld [vmem:[#allocation3 + $0x78] sm:$0xff]
        %v986 = vld [vmem:[#allocation3 + $0x80] sm:$0xff]
        %v987 = vld [vmem:[#allocation3 + $0x88] sm:$0xff]
        %v988 = vld [vmem:[#allocation3 + $0x90] sm:$0xff]
        %v989 = vld [vmem:[#allocation3 + $0x98] sm:$0xff]
        %v990 = vld [vmem:[#allocation3 + $0xa0] sm:$0xff]
        %v991 = vld [vmem:[#allocation3 + $0xa8] sm:$0xff]
        %v992 = vld [vmem:[#allocation3 + $0xb0] sm:$0xff]
        %v993 = vld [vmem:[#allocation3 + $0xb8] sm:$0xff]
        %v994 = vld [vmem:[#allocation3 + $0xc0] sm:$0xff]
        %v995 = vld [vmem:[#allocation3 + $0xc8] sm:$0xff]
        %v996 = vld [vmem:[#allocation3 + $0xd0] sm:$0xff]
        %v997 = vld [vmem:[#allocation3 + $0xd8] sm:$0xff]
        %v998 = vld [vmem:[#allocation3 + $0xe0] sm:$0xff]
        %v999 = vld [vmem:[#allocation3 + $0xe8] sm:$0xff]
        %v1000 = vld [vmem:[#allocation3 + $0xf0] sm:$0xff]
        %v1001 = vld [vmem:[#allocation3 + $0xf8] sm:$0xff]
        %v1002 = vadd.f32 %v970, %v844
        %v1003 = vadd.f32 %v971, %v847
        %v1004 = vadd.f32 %v972, %v852
        %v1005 = vadd.f32 %v973, %v855
        %v1006 = vadd.f32 %v974, %v860
        %v1007 = vadd.f32 %v975, %v863
        %v1008 = vadd.f32 %v976, %v868
        %v1009 = vadd.f32 %v977, %v871
        %v1010 = vadd.f32 %v978, %v876
        %v1011 = vadd.f32 %v979, %v879
        %v1012 = vadd.f32 %v980, %v884
        %v1013 = vadd.f32 %v981, %v887
        %v1014 = vadd.f32 %v982, %v892
        %v1015 = vadd.f32 %v983, %v895
        %v1016 = vadd.f32 %v984, %v900
        %v1017 = vadd.f32 %v985, %v903
        %v1018 = vadd.f32 %v986, %v908
        %v1019 = vadd.f32 %v987, %v911
        %v1020 = vadd.f32 %v988, %v916
        %v1021 = vadd.f32 %v989, %v919
        %v1022 = vadd.f32 %v990, %v924
        %v1023 = vadd.f32 %v991, %v927
        %v1024 = vadd.f32 %v992, %v932
        %v1025 = vadd.f32 %v993, %v935
        %v1026 = vadd.f32 %v994, %v940
        %v1027 = vadd.f32 %v995, %v943
        %v1028 = vadd.f32 %v996, %v948
        %v1029 = vadd.f32 %v997, %v951
        %v1030 = vadd.f32 %v998, %v956
        %v1031 = vadd.f32 %v999, %v959
        %v1032 = vadd.f32 %v1000, %v964
        %v1033 = vadd.f32 %v1001, %v967
        %vm1034 = vcmask 64512
        %1035 = vst.msk [vmem:[#allocation3] sm:$0xff] %vm1034, %v1002
        %1036 = vst.msk [vmem:[#allocation3 + $0x8] sm:$0xff] %vm1034, %v1003
        %1037 = vst.msk [vmem:[#allocation3 + $0x10] sm:$0xff] %vm1034, %v1004
        %1038 = vst.msk [vmem:[#allocation3 + $0x18] sm:$0xff] %vm1034, %v1005
        %1039 = vst.msk [vmem:[#allocation3 + $0x20] sm:$0xff] %vm1034, %v1006
        %1040 = vst.msk [vmem:[#allocation3 + $0x28] sm:$0xff] %vm1034, %v1007
        %1041 = vst.msk [vmem:[#allocation3 + $0x30] sm:$0xff] %vm1034, %v1008
        %1042 = vst.msk [vmem:[#allocation3 + $0x38] sm:$0xff] %vm1034, %v1009
        %1043 = vst.msk [vmem:[#allocation3 + $0x40] sm:$0xff] %vm1034, %v1010
        %1044 = vst.msk [vmem:[#allocation3 + $0x48] sm:$0xff] %vm1034, %v1011
        %1045 = vst.msk [vmem:[#allocation3 + $0x50] sm:$0xff] %vm1034, %v1012
        %1046 = vst.msk [vmem:[#allocation3 + $0x58] sm:$0xff] %vm1034, %v1013
        %1047 = vst.msk [vmem:[#allocation3 + $0x60] sm:$0xff] %vm1034, %v1014
        %1048 = vst.msk [vmem:[#allocation3 + $0x68] sm:$0xff] %vm1034, %v1015
        %1049 = vst.msk [vmem:[#allocation3 + $0x70] sm:$0xff] %vm1034, %v1016
        %1050 = vst.msk [vmem:[#allocation3 + $0x78] sm:$0xff] %vm1034, %v1017
        %1051 = vst.msk [vmem:[#allocation3 + $0x80] sm:$0xff] %vm1034, %v1018
        %1052 = vst.msk [vmem:[#allocation3 + $0x88] sm:$0xff] %vm1034, %v1019
        %1053 = vst.msk [vmem:[#allocation3 + $0x90] sm:$0xff] %vm1034, %v1020
        %1054 = vst.msk [vmem:[#allocation3 + $0x98] sm:$0xff] %vm1034, %v1021
        %1055 = vst.msk [vmem:[#allocation3 + $0xa0] sm:$0xff] %vm1034, %v1022
        %1056 = vst.msk [vmem:[#allocation3 + $0xa8] sm:$0xff] %vm1034, %v1023
        %1057 = vst.msk [vmem:[#allocation3 + $0xb0] sm:$0xff] %vm1034, %v1024
        %1058 = vst.msk [vmem:[#allocation3 + $0xb8] sm:$0xff] %vm1034, %v1025
        %1059 = vst.msk [vmem:[#allocation3 + $0xc0] sm:$0xff] %vm1034, %v1026
        %1060 = vst.msk [vmem:[#allocation3 + $0xc8] sm:$0xff] %vm1034, %v1027
        %1061 = vst.msk [vmem:[#allocation3 + $0xd0] sm:$0xff] %vm1034, %v1028
        %1062 = vst.msk [vmem:[#allocation3 + $0xd8] sm:$0xff] %vm1034, %v1029
        %1063 = vst.msk [vmem:[#allocation3 + $0xe0] sm:$0xff] %vm1034, %v1030
        %1064 = vst.msk [vmem:[#allocation3 + $0xe8] sm:$0xff] %vm1034, %v1031
        %1065 = vst.msk [vmem:[#allocation3 + $0xf0] sm:$0xff] %vm1034, %v1032
        %1066 = vst.msk [vmem:[#allocation3 + $0xf8] sm:$0xff] %vm1034, %v1033
        %v1067 = vlaneseq
        %v1068 = vshrl.u32 %v1067, 7
        %v1069 = vadd.s32 %v1068, 8
        %vm1070 = vcmp.ge.s32.totalorder %v1068, 6
        %vm1071 = vcmp.ge.s32.totalorder %v1069, 6
        %vm1072 = vcmp.lt.s32.totalorder %v1068, 16
        %vm1073 = vcmp.lt.s32.totalorder %v1069, 16
        %vm1074 = vmand %vm1070, %vm1072
        %vm1075 = vmand %vm1071, %vm1073
        %vm1076 = vcmp.ge.s32.totalorder %v1068, 0
        %vm1077 = vcmp.ge.s32.totalorder %v1069, 0
        %vm1078 = vcmp.lt.s32.totalorder %v1068, 10
        %vm1079 = vcmp.lt.s32.totalorder %v1069, 10
        %vm1080 = vmand %vm1076, %vm1078
        %vm1081 = vmand %vm1077, %vm1079
        %vm1082 = vcmp.ge.s32.totalorder %v1068, 12
        %vm1083 = vcmp.ge.s32.totalorder %v1069, 12
        %vm1084 = vmand %vm1082, %vm1072
        %vm1085 = vmand %vm1083, %vm1073
        %vm1086 = vcmp.lt.s32.totalorder %v1068, 4
        %vm1087 = vcmp.lt.s32.totalorder %v1069, 4
        %vm1088 = vmand %vm1076, %vm1086
        %vm1089 = vmand %vm1077, %vm1087
        %v1090 = vld [vmem:[%s319] sm:$0x3]
        %v1092 = vsel %vm805, %v1090, 0
        %1094 = vmatprep.subr.bf16.mxu0 0
        %1095 = vmatpush1.bf16.msra.mxu0 %v1092
        %1096 = vmatprep.subr.bf16.mxu0 0
        %1097 = vmatpush1.bf16.msra.mxu0 0
        %1098 = vmatprep.subr.bf16.mxu0 0
        %1099 = vmatpush1.bf16.msra.mxu0 0
        %1100 = vmatprep.subr.bf16.mxu0 0
        %1101 = vmatpush1.bf16.msra.mxu0 0
        %1102 = vmatprep.subr.bf16.mxu0 0
        %1103 = vmatpush1.bf16.msra.mxu0 0
        %1104 = vmatprep.subr.bf16.mxu0 0
        %1105 = vmatpush1.bf16.msra.mxu0 0
        %1106 = vmatprep.subr.bf16.mxu0 0
        %1107 = vmatpush1.bf16.msra.mxu0 0
        %1108 = vmatprep.subr.bf16.mxu0 0
        %1109 = vmatpush1.bf16.msra.mxu0 0
        %1110 = vmatprep.subr.bf16.mxu0 0
        %1111 = vmatpush1.bf16.msra.mxu0 0
        %1112 = vmatprep.subr.bf16.mxu0 0
        %1113 = vmatpush1.bf16.msra.mxu0 0
        %1114 = vmatprep.subr.bf16.mxu0 0
        %1115 = vmatpush1.bf16.msra.mxu0 0
        %1116 = vmatprep.subr.bf16.mxu0 0
        %1117 = vmatpush1.bf16.msra.mxu0 0
        %1118 = vmatprep.subr.bf16.mxu0 0
        %1119 = vmatpush1.bf16.msra.mxu0 0
        %1120 = vmatprep.subr.bf16.mxu0 0
        %1121 = vmatpush1.bf16.msra.mxu0 0
        %1122 = vmatprep.subr.bf16.mxu0 0
        %1123 = vmatpush1.bf16.msra.mxu0 0
        %1124 = vmatprep.subr.bf16.mxu0 0
        %1125 = vmatpush1.bf16.msra.mxu0 0
        %1126 = vmatprep.mubr.bf16.mxu0 0
        %1127 = vmatmul.mubr.bf16.gmra.mrb[0].mxu0 %v758
        %v1128 = vpop.f32.mrb[0].mxu0
        %v1129 = vadd.f32 0.0, %v1128
        %v1130 = vpop.f32.mrb[0].mxu0
        %v1131 = vpop.f32.mrb[0].mxu0
        %v1132 = vadd.f32 0.0, %v1131
        %v1133 = vpop.f32.mrb[0].mxu0
        %1134 = vmatprep.mubr.bf16.mxu0 0
        %1135 = vmatmul.mubr.bf16.gmra.mrb[0].mxu0 %v761
        %v1136 = vpop.f32.mrb[0].mxu0
        %v1137 = vadd.f32 0.0, %v1136
        %v1138 = vpop.f32.mrb[0].mxu0
        %v1139 = vpop.f32.mrb[0].mxu0
        %v1140 = vadd.f32 0.0, %v1139
        %v1141 = vpop.f32.mrb[0].mxu0
        %1142 = vmatprep.mubr.bf16.mxu0 0
        %1143 = vmatmul.mubr.bf16.gmra.mrb[0].mxu0 %v764
        %v1144 = vpop.f32.mrb[0].mxu0
        %v1145 = vadd.f32 0.0, %v1144
        %v1146 = vpop.f32.mrb[0].mxu0
        %v1147 = vpop.f32.mrb[0].mxu0
        %v1148 = vadd.f32 0.0, %v1147
        %v1149 = vpop.f32.mrb[0].mxu0
        %1150 = vmatprep.mubr.bf16.mxu0 0
        %1151 = vmatmul.mubr.bf16.gmra.mrb[0].mxu0 %v767
        %v1152 = vpop.f32.mrb[0].mxu0
        %v1153 = vadd.f32 0.0, %v1152
        %v1154 = vpop.f32.mrb[0].mxu0
        %v1155 = vpop.f32.mrb[0].mxu0
        %v1156 = vadd.f32 0.0, %v1155
        %v1157 = vpop.f32.mrb[0].mxu0
        %1158 = vmatprep.mubr.bf16.mxu0 0
        %1159 = vmatmul.mubr.bf16.gmra.mrb[0].mxu0 %v770
        %v1160 = vpop.f32.mrb[0].mxu0
        %v1161 = vadd.f32 0.0, %v1160
        %v1162 = vpop.f32.mrb[0].mxu0
        %v1163 = vpop.f32.mrb[0].mxu0
        %v1164 = vadd.f32 0.0, %v1163
        %v1165 = vpop.f32.mrb[0].mxu0
        %1166 = vmatprep.mubr.bf16.mxu0 0
        %1167 = vmatmul.mubr.bf16.gmra.mrb[0].mxu0 %v773
        %v1168 = vpop.f32.mrb[0].mxu0
        %v1169 = vadd.f32 0.0, %v1168
        %v1170 = vpop.f32.mrb[0].mxu0
        %v1171 = vpop.f32.mrb[0].mxu0
        %v1172 = vadd.f32 0.0, %v1171
        %v1173 = vpop.f32.mrb[0].mxu0
        %1174 = vmatprep.mubr.bf16.mxu0 0
        %1175 = vmatmul.mubr.bf16.gmra.mrb[0].mxu0 %v776
        %v1176 = vpop.f32.mrb[0].mxu0
        %v1177 = vadd.f32 0.0, %v1176
        %v1178 = vpop.f32.mrb[0].mxu0
        %v1179 = vpop.f32.mrb[0].mxu0
        %v1180 = vadd.f32 0.0, %v1179
        %v1181 = vpop.f32.mrb[0].mxu0
        %1182 = vmatprep.mubr.bf16.mxu0 0
        %1183 = vmatmul.mubr.bf16.gmra.mrb[0].mxu0 %v779
        %v1184 = vpop.f32.mrb[0].mxu0
        %v1185 = vadd.f32 0.0, %v1184
        %v1186 = vpop.f32.mrb[0].mxu0
        %v1187 = vpop.f32.mrb[0].mxu0
        %v1188 = vadd.f32 0.0, %v1187
        %v1189 = vpop.f32.mrb[0].mxu0
        %1190 = vmatprep.mubr.bf16.mxu0 0
        %1191 = vmatmul.mubr.bf16.gmra.mrb[0].mxu0 %v782
        %v1192 = vpop.f32.mrb[0].mxu0
        %v1193 = vadd.f32 0.0, %v1192
        %v1194 = vpop.f32.mrb[0].mxu0
        %v1195 = vpop.f32.mrb[0].mxu0
        %v1196 = vadd.f32 0.0, %v1195
        %v1197 = vpop.f32.mrb[0].mxu0
        %1198 = vmatprep.mubr.bf16.mxu0 0
        %1199 = vmatmul.mubr.bf16.gmra.mrb[0].mxu0 %v785
        %v1200 = vpop.f32.mrb[0].mxu0
        %v1201 = vadd.f32 0.0, %v1200
        %v1202 = vpop.f32.mrb[0].mxu0
        %v1203 = vpop.f32.mrb[0].mxu0
        %v1204 = vadd.f32 0.0, %v1203
        %v1205 = vpop.f32.mrb[0].mxu0
        %1206 = vmatprep.mubr.bf16.mxu0 0
        %1207 = vmatmul.mubr.bf16.gmra.mrb[0].mxu0 %v788
        %v1208 = vpop.f32.mrb[0].mxu0
        %v1209 = vpop.f32.mrb[0].mxu0
        %v1210 = vpop.f32.mrb[0].mxu0
        %v1211 = vpop.f32.mrb[0].mxu0
        %1212 = vmatprep.mubr.bf16.mxu0 0
        %1213 = vmatmul.mubr.bf16.gmra.mrb[0].mxu0 %v791
        %v1214 = vpop.f32.mrb[0].mxu0
        %v1215 = vpop.f32.mrb[0].mxu0
        %v1216 = vpop.f32.mrb[0].mxu0
        %v1217 = vpop.f32.mrb[0].mxu0
        %1218 = vmatprep.mubr.bf16.mxu0 0
        %1219 = vmatmul.mubr.bf16.gmra.mrb[0].mxu0 %v794
        %v1220 = vpop.f32.mrb[0].mxu0
        %v1221 = vpop.f32.mrb[0].mxu0
        %v1222 = vpop.f32.mrb[0].mxu0
        %v1223 = vpop.f32.mrb[0].mxu0
        %1224 = vmatprep.mubr.bf16.mxu0 0
        %1225 = vmatmul.mubr.bf16.gmra.mrb[0].mxu0 %v797
        %v1226 = vpop.f32.mrb[0].mxu0
        %v1227 = vpop.f32.mrb[0].mxu0
        %v1228 = vpop.f32.mrb[0].mxu0
        %v1229 = vpop.f32.mrb[0].mxu0
        %1230 = vmatprep.mubr.bf16.mxu0 0
        %1231 = vmatmul.mubr.bf16.gmra.mrb[0].mxu0 %v800
        %v1232 = vpop.f32.mrb[0].mxu0
        %v1233 = vpop.f32.mrb[0].mxu0
        %v1234 = vpop.f32.mrb[0].mxu0
        %v1235 = vpop.f32.mrb[0].mxu0
        %1236 = vmatprep.mubr.bf16.mxu0 0
        %1237 = vmatmul.mubr.bf16.gmra.mrb[0].mxu0 %v803
        %v1238 = vpop.f32.mrb[0].mxu0
        %v1239 = vpop.f32.mrb[0].mxu0
        %v1240 = vpop.f32.mrb[0].mxu0
        %v1241 = vpop.f32.mrb[0].mxu0
        %1242 = vdwg.mxu0
        %v1243 = vrot.slane %v1129, 2
        %v1244 = vrot.slane %v1137, 2
        %v1245 = vrot.slane %v1145, 2
        %v1246 = vrot.slane %v1153, 2
        %v1247 = vrot.slane %v1161, 2
        %v1248 = vrot.slane %v1169, 2
        %v1249 = vrot.slane %v1177, 2
        %v1250 = vrot.slane %v1185, 2
        %v1251 = vrot.slane %v1193, 2
        %v1252 = vrot.slane %v1201, 2
        %v1253 = vrot.slane %v1132, 2
        %v1254 = vrot.slane %v1140, 2
        %v1255 = vrot.slane %v1148, 2
        %v1256 = vrot.slane %v1156, 2
        %v1257 = vrot.slane %v1164, 2
        %v1258 = vrot.slane %v1172, 2
        %v1259 = vrot.slane %v1180, 2
        %v1260 = vrot.slane %v1188, 2
        %v1261 = vrot.slane %v1196, 2
        %v1262 = vrot.slane %v1204, 2
        %vm1263 = vcmp.lt.s32.totalorder %v1068, 6
        %v1264 = vsel %vm1263, %v1243, %v1253
        %v1265 = vsel %vm1263, %v1244, %v1254
        %v1266 = vsel %vm1263, %v1245, %v1255
        %v1267 = vsel %vm1263, %v1246, %v1256
        %v1268 = vsel %vm1263, %v1247, %v1257
        %v1269 = vsel %vm1263, %v1248, %v1258
        %v1270 = vsel %vm1263, %v1249, %v1259
        %v1271 = vsel %vm1263, %v1250, %v1260
        %v1272 = vsel %vm1263, %v1251, %v1261
        %v1273 = vsel %vm1263, %v1252, %v1262
        %v1274 = vsel %vm1263, %v1253, %v1243
        %v1275 = vsel %vm1263, %v1254, %v1244
        %v1276 = vsel %vm1263, %v1255, %v1245
        %v1277 = vsel %vm1263, %v1256, %v1246
        %v1278 = vsel %vm1263, %v1257, %v1247
        %v1279 = vsel %vm1263, %v1258, %v1248
        %v1280 = vsel %vm1263, %v1259, %v1249
        %v1281 = vsel %vm1263, %v1260, %v1250
        %v1282 = vsel %vm1263, %v1261, %v1251
        %v1283 = vsel %vm1263, %v1262, %v1252
        %v1284 = vsel %vm1074, 1, 0
        %v1285 = vsel %vm1075, 1, 0
        %vm1286 = vcmp.eq.s32.totalorder %v1284, 1
        %vm1287 = vcmp.eq.s32.totalorder %v1285, 1
        %v1288 = vsel %vm1286, %v1274, 0.0
        %v1289 = vsel %vm1287, %v1264, 0.0
        %v1290 = vsel %vm1286, %v1275, 0.0
        %v1291 = vsel %vm1287, %v1265, 0.0
        %v1292 = vsel %vm1286, %v1276, 0.0
        %v1293 = vsel %vm1287, %v1266, 0.0
        %v1294 = vsel %vm1286, %v1277, 0.0
        %v1295 = vsel %vm1287, %v1267, 0.0
        %v1296 = vsel %vm1286, %v1278, 0.0
        %v1297 = vsel %vm1287, %v1268, 0.0
        %v1298 = vsel %vm1286, %v1279, 0.0
        %v1299 = vsel %vm1287, %v1269, 0.0
        %v1300 = vsel %vm1286, %v1280, 0.0
        %v1301 = vsel %vm1287, %v1270, 0.0
        %v1302 = vsel %vm1286, %v1281, 0.0
        %v1303 = vsel %vm1287, %v1271, 0.0
        %v1304 = vsel %vm1286, %v1282, 0.0
        %v1305 = vsel %vm1287, %v1272, 0.0
        %v1306 = vsel %vm1286, %v1283, 0.0
        %v1307 = vsel %vm1287, %v1273, 0.0
        %1328 = vrot.lane.b32.xlu0 %v1129, 120
        %v1329 = vpop.permute.xlu0 %1328
        %1330 = vrot.lane.b32.xlu0 %v1132, 120
        %v1331 = vpop.permute.xlu0 %1330
        %1332 = vrot.lane.b32.xlu0 %v1137, 120
        %v1333 = vpop.permute.xlu0 %1332
        %1334 = vrot.lane.b32.xlu0 %v1140, 120
        %v1335 = vpop.permute.xlu0 %1334
        %1336 = vrot.lane.b32.xlu0 %v1145, 120
        %v1337 = vpop.permute.xlu0 %1336
        %1338 = vrot.lane.b32.xlu0 %v1148, 120
        %v1339 = vpop.permute.xlu0 %1338
        %1340 = vrot.lane.b32.xlu0 %v1153, 120
        %v1341 = vpop.permute.xlu0 %1340
        %1342 = vrot.lane.b32.xlu0 %v1156, 120
        %v1343 = vpop.permute.xlu0 %1342
        %1344 = vrot.lane.b32.xlu0 %v1161, 120
        %v1345 = vpop.permute.xlu0 %1344
        %1346 = vrot.lane.b32.xlu0 %v1164, 120
        %v1347 = vpop.permute.xlu0 %1346
        %1348 = vrot.lane.b32.xlu0 %v1169, 120
        %v1349 = vpop.permute.xlu0 %1348
        %1350 = vrot.lane.b32.xlu0 %v1172, 120
        %v1351 = vpop.permute.xlu0 %1350
        %1352 = vrot.lane.b32.xlu0 %v1177, 120
        %v1353 = vpop.permute.xlu0 %1352
        %1354 = vrot.lane.b32.xlu0 %v1180, 120
        %v1355 = vpop.permute.xlu0 %1354
        %1356 = vrot.lane.b32.xlu0 %v1185, 120
        %v1357 = vpop.permute.xlu0 %1356
        %1358 = vrot.lane.b32.xlu0 %v1188, 120
        %v1359 = vpop.permute.xlu0 %1358
        %1360 = vrot.lane.b32.xlu0 %v1193, 120
        %v1361 = vpop.permute.xlu0 %1360
        %1362 = vrot.lane.b32.xlu0 %v1196, 120
        %v1363 = vpop.permute.xlu0 %1362
        %1364 = vrot.lane.b32.xlu0 %v1201, 120
        %v1365 = vpop.permute.xlu0 %1364
        %1366 = vrot.lane.b32.xlu0 %v1204, 120
        %v1367 = vpop.permute.xlu0 %1366
        %v1388 = vadd.f32 %v1288, %v1329
        %v1389 = vadd.f32 %v1289, %v1331
        %v1390 = vadd.f32 %v1290, %v1333
        %v1391 = vadd.f32 %v1291, %v1335
        %v1392 = vadd.f32 %v1292, %v1337
        %v1393 = vadd.f32 %v1293, %v1339
        %v1394 = vadd.f32 %v1294, %v1341
        %v1395 = vadd.f32 %v1295, %v1343
        %v1396 = vadd.f32 %v1296, %v1345
        %v1397 = vadd.f32 %v1297, %v1347
        %v1398 = vadd.f32 %v1298, %v1349
        %v1399 = vadd.f32 %v1299, %v1351
        %v1400 = vadd.f32 %v1300, %v1353
        %v1401 = vadd.f32 %v1301, %v1355
        %v1402 = vadd.f32 %v1302, %v1357
        %v1403 = vadd.f32 %v1303, %v1359
        %v1404 = vadd.f32 %v1304, %v1361
        %v1405 = vadd.f32 %v1305, %v1363
        %v1406 = vadd.f32 %v1306, %v1365
        %v1407 = vadd.f32 %v1307, %v1367
        %1408 = vrot.lane.b32.xlu0 %v1129, 112
        %v1409 = vpop.permute.xlu0 %1408
        %1410 = vrot.lane.b32.xlu0 %v1132, 112
        %v1411 = vpop.permute.xlu0 %1410
        %1412 = vrot.lane.b32.xlu0 %v1137, 112
        %v1413 = vpop.permute.xlu0 %1412
        %1414 = vrot.lane.b32.xlu0 %v1140, 112
        %v1415 = vpop.permute.xlu0 %1414
        %1416 = vrot.lane.b32.xlu0 %v1145, 112
        %v1417 = vpop.permute.xlu0 %1416
        %1418 = vrot.lane.b32.xlu0 %v1148, 112
        %v1419 = vpop.permute.xlu0 %1418
        %1420 = vrot.lane.b32.xlu0 %v1153, 112
        %v1421 = vpop.permute.xlu0 %1420
        %1422 = vrot.lane.b32.xlu0 %v1156, 112
        %v1423 = vpop.permute.xlu0 %1422
        %1424 = vrot.lane.b32.xlu0 %v1161, 112
        %v1425 = vpop.permute.xlu0 %1424
        %1426 = vrot.lane.b32.xlu0 %v1164, 112
        %v1427 = vpop.permute.xlu0 %1426
        %1428 = vrot.lane.b32.xlu0 %v1169, 112
        %v1429 = vpop.permute.xlu0 %1428
        %1430 = vrot.lane.b32.xlu0 %v1172, 112
        %v1431 = vpop.permute.xlu0 %1430
        %1432 = vrot.lane.b32.xlu0 %v1177, 112
        %v1433 = vpop.permute.xlu0 %1432
        %1434 = vrot.lane.b32.xlu0 %v1180, 112
        %v1435 = vpop.permute.xlu0 %1434
        %1436 = vrot.lane.b32.xlu0 %v1185, 112
        %v1437 = vpop.permute.xlu0 %1436
        %1438 = vrot.lane.b32.xlu0 %v1188, 112
        %v1439 = vpop.permute.xlu0 %1438
        %1440 = vrot.lane.b32.xlu0 %v1193, 112
        %v1441 = vpop.permute.xlu0 %1440
        %1442 = vrot.lane.b32.xlu0 %v1196, 112
        %v1443 = vpop.permute.xlu0 %1442
        %1444 = vrot.lane.b32.xlu0 %v1201, 112
        %v1445 = vpop.permute.xlu0 %1444
        %1446 = vrot.lane.b32.xlu0 %v1204, 112
        %v1447 = vpop.permute.xlu0 %1446
        %v1468 = vrot.slane %v1409, 6
        %v1469 = vrot.slane %v1413, 6
        %v1470 = vrot.slane %v1417, 6
        %v1471 = vrot.slane %v1421, 6
        %v1472 = vrot.slane %v1425, 6
        %v1473 = vrot.slane %v1429, 6
        %v1474 = vrot.slane %v1433, 6
        %v1475 = vrot.slane %v1437, 6
        %v1476 = vrot.slane %v1441, 6
        %v1477 = vrot.slane %v1445, 6
        %v1478 = vrot.slane %v1411, 6
        %v1479 = vrot.slane %v1415, 6
        %v1480 = vrot.slane %v1419, 6
        %v1481 = vrot.slane %v1423, 6
        %v1482 = vrot.slane %v1427, 6
        %v1483 = vrot.slane %v1431, 6
        %v1484 = vrot.slane %v1435, 6
        %v1485 = vrot.slane %v1439, 6
        %v1486 = vrot.slane %v1443, 6
        %v1487 = vrot.slane %v1447, 6
        %vm1488 = vcmp.lt.s32.totalorder %v1068, 2
        %v1489 = vsel %vm1488, %v1468, %v1478
        %v1490 = vsel %vm1488, %v1469, %v1479
        %v1491 = vsel %vm1488, %v1470, %v1480
        %v1492 = vsel %vm1488, %v1471, %v1481
        %v1493 = vsel %vm1488, %v1472, %v1482
        %v1494 = vsel %vm1488, %v1473, %v1483
        %v1495 = vsel %vm1488, %v1474, %v1484
        %v1496 = vsel %vm1488, %v1475, %v1485
        %v1497 = vsel %vm1488, %v1476, %v1486
        %v1498 = vsel %vm1488, %v1477, %v1487
        %v1499 = vsel %vm1488, %v1478, %v1468
        %v1500 = vsel %vm1488, %v1479, %v1469
        %v1501 = vsel %vm1488, %v1480, %v1470
        %v1502 = vsel %vm1488, %v1481, %v1471
        %v1503 = vsel %vm1488, %v1482, %v1472
        %v1504 = vsel %vm1488, %v1483, %v1473
        %v1505 = vsel %vm1488, %v1484, %v1474
        %v1506 = vsel %vm1488, %v1485, %v1475
        %v1507 = vsel %vm1488, %v1486, %v1476
        %v1508 = vsel %vm1488, %v1487, %v1477
        %v1509 = vsel %vm1080, 1, 0
        %v1510 = vsel %vm1081, 1, 0
        %vm1511 = vcmp.eq.s32.totalorder %v1509, 1
        %vm1512 = vcmp.eq.s32.totalorder %v1510, 1
        %v1513 = vsel %vm1511, %v1489, 0.0
        %v1514 = vsel %vm1512, %v1499, 0.0
        %v1515 = vsel %vm1511, %v1490, 0.0
        %v1516 = vsel %vm1512, %v1500, 0.0
        %v1517 = vsel %vm1511, %v1491, 0.0
        %v1518 = vsel %vm1512, %v1501, 0.0
        %v1519 = vsel %vm1511, %v1492, 0.0
        %v1520 = vsel %vm1512, %v1502, 0.0
        %v1521 = vsel %vm1511, %v1493, 0.0
        %v1522 = vsel %vm1512, %v1503, 0.0
        %v1523 = vsel %vm1511, %v1494, 0.0
        %v1524 = vsel %vm1512, %v1504, 0.0
        %v1525 = vsel %vm1511, %v1495, 0.0
        %v1526 = vsel %vm1512, %v1505, 0.0
        %v1527 = vsel %vm1511, %v1496, 0.0
        %v1528 = vsel %vm1512, %v1506, 0.0
        %v1529 = vsel %vm1511, %v1497, 0.0
        %v1530 = vsel %vm1512, %v1507, 0.0
        %v1531 = vsel %vm1511, %v1498, 0.0
        %v1532 = vsel %vm1512, %v1508, 0.0
        %v1533 = vadd.f32 %v1388, %v1513
        %v1534 = vadd.f32 %v1389, %v1514
        %v1535 = vadd.f32 %v1390, %v1515
        %v1536 = vadd.f32 %v1391, %v1516
        %v1537 = vadd.f32 %v1392, %v1517
        %v1538 = vadd.f32 %v1393, %v1518
        %v1539 = vadd.f32 %v1394, %v1519
        %v1540 = vadd.f32 %v1395, %v1520
        %v1541 = vadd.f32 %v1396, %v1521
        %v1542 = vadd.f32 %v1397, %v1522
        %v1543 = vadd.f32 %v1398, %v1523
        %v1544 = vadd.f32 %v1399, %v1524
        %v1545 = vadd.f32 %v1400, %v1525
        %v1546 = vadd.f32 %v1401, %v1526
        %v1547 = vadd.f32 %v1402, %v1527
        %v1548 = vadd.f32 %v1403, %v1528
        %v1549 = vadd.f32 %v1404, %v1529
        %v1550 = vadd.f32 %v1405, %v1530
        %v1551 = vadd.f32 %v1406, %v1531
        %v1552 = vadd.f32 %v1407, %v1532
        %s1553 = scalar_lea.vmem [#allocation3], 352
        %v1554 = vld [vmem:[%s1553] sm:$0xff]
        %v1555 = vld [vmem:[%s1553 + $0x8] sm:$0xff]
        %v1556 = vld [vmem:[%s1553 + $0x10] sm:$0xff]
        %v1557 = vld [vmem:[%s1553 + $0x18] sm:$0xff]
        %v1558 = vld [vmem:[%s1553 + $0x20] sm:$0xff]
        %v1559 = vld [vmem:[%s1553 + $0x28] sm:$0xff]
        %v1560 = vld [vmem:[%s1553 + $0x30] sm:$0xff]
        %v1561 = vld [vmem:[%s1553 + $0x38] sm:$0xff]
        %v1562 = vld [vmem:[%s1553 + $0x40] sm:$0xff]
        %v1563 = vld [vmem:[%s1553 + $0x48] sm:$0xff]
        %v1564 = vld [vmem:[%s1553 + $0x50] sm:$0xff]
        %v1565 = vld [vmem:[%s1553 + $0x58] sm:$0xff]
        %v1566 = vld [vmem:[%s1553 + $0x60] sm:$0xff]
        %v1567 = vld [vmem:[%s1553 + $0x68] sm:$0xff]
        %v1568 = vld [vmem:[%s1553 + $0x70] sm:$0xff]
        %v1569 = vld [vmem:[%s1553 + $0x78] sm:$0xff]
        %v1570 = vld [vmem:[%s1553 + $0x80] sm:$0xff]
        %v1571 = vld [vmem:[%s1553 + $0x88] sm:$0xff]
        %v1572 = vld [vmem:[%s1553 + $0x90] sm:$0xff]
        %v1573 = vld [vmem:[%s1553 + $0x98] sm:$0xff]
        %v1574 = vadd.f32 %v1554, %v1533
        %v1575 = vadd.f32 %v1555, %v1534
        %v1576 = vadd.f32 %v1556, %v1535
        %v1577 = vadd.f32 %v1557, %v1536
        %v1578 = vadd.f32 %v1558, %v1537
        %v1579 = vadd.f32 %v1559, %v1538
        %v1580 = vadd.f32 %v1560, %v1539
        %v1581 = vadd.f32 %v1561, %v1540
        %v1582 = vadd.f32 %v1562, %v1541
        %v1583 = vadd.f32 %v1563, %v1542
        %v1584 = vadd.f32 %v1564, %v1543
        %v1585 = vadd.f32 %v1565, %v1544
        %v1586 = vadd.f32 %v1566, %v1545
        %v1587 = vadd.f32 %v1567, %v1546
        %v1588 = vadd.f32 %v1568, %v1547
        %v1589 = vadd.f32 %v1569, %v1548
        %v1590 = vadd.f32 %v1570, %v1549
        %v1591 = vadd.f32 %v1571, %v1550
        %v1592 = vadd.f32 %v1572, %v1551
        %v1593 = vadd.f32 %v1573, %v1552
        %1594 = vst.msk [vmem:[%s1553] sm:$0xff] %vm1034, %v1574
        %1595 = vst.msk [vmem:[%s1553 + $0x8] sm:$0xff] %vm1034, %v1575
        %1596 = vst.msk [vmem:[%s1553 + $0x10] sm:$0xff] %vm1034, %v1576
        %1597 = vst.msk [vmem:[%s1553 + $0x18] sm:$0xff] %vm1034, %v1577
        %1598 = vst.msk [vmem:[%s1553 + $0x20] sm:$0xff] %vm1034, %v1578
        %1599 = vst.msk [vmem:[%s1553 + $0x28] sm:$0xff] %vm1034, %v1579
        %1600 = vst.msk [vmem:[%s1553 + $0x30] sm:$0xff] %vm1034, %v1580
        %1601 = vst.msk [vmem:[%s1553 + $0x38] sm:$0xff] %vm1034, %v1581
        %1602 = vst.msk [vmem:[%s1553 + $0x40] sm:$0xff] %vm1034, %v1582
        %1603 = vst.msk [vmem:[%s1553 + $0x48] sm:$0xff] %vm1034, %v1583
        %1604 = vst.msk [vmem:[%s1553 + $0x50] sm:$0xff] %vm1034, %v1584
        %1605 = vst.msk [vmem:[%s1553 + $0x58] sm:$0xff] %vm1034, %v1585
        %1606 = vst.msk [vmem:[%s1553 + $0x60] sm:$0xff] %vm1034, %v1586
        %1607 = vst.msk [vmem:[%s1553 + $0x68] sm:$0xff] %vm1034, %v1587
        %1608 = vst.msk [vmem:[%s1553 + $0x70] sm:$0xff] %vm1034, %v1588
        %1609 = vst.msk [vmem:[%s1553 + $0x78] sm:$0xff] %vm1034, %v1589
        %1610 = vst.msk [vmem:[%s1553 + $0x80] sm:$0xff] %vm1034, %v1590
        %1611 = vst.msk [vmem:[%s1553 + $0x88] sm:$0xff] %vm1034, %v1591
        %1612 = vst.msk [vmem:[%s1553 + $0x90] sm:$0xff] %vm1034, %v1592
        %1613 = vst.msk [vmem:[%s1553 + $0x98] sm:$0xff] %vm1034, %v1593
        %s1614 = scalar_lea.vmem %s319, 2
        %v1615 = vld [vmem:[%s1614] sm:$0x3]
        %v1617 = vsel %vm805, %v1615, 0
        %1619 = vmatprep.subr.bf16.mxu0 0
        %1620 = vmatpush1.bf16.msra.mxu0 %v1617
        %1621 = vmatprep.subr.bf16.mxu0 0
        %1622 = vmatpush1.bf16.msra.mxu0 0
        %1623 = vmatprep.subr.bf16.mxu0 0
        %1624 = vmatpush1.bf16.msra.mxu0 0
        %1625 = vmatprep.subr.bf16.mxu0 0
        %1626 = vmatpush1.bf16.msra.mxu0 0
        %1627 = vmatprep.subr.bf16.mxu0 0
        %1628 = vmatpush1.bf16.msra.mxu0 0
        %1629 = vmatprep.subr.bf16.mxu0 0
        %1630 = vmatpush1.bf16.msra.mxu0 0
        %1631 = vmatprep.subr.bf16.mxu0 0
        %1632 = vmatpush1.bf16.msra.mxu0 0
        %1633 = vmatprep.subr.bf16.mxu0 0
        %1634 = vmatpush1.bf16.msra.mxu0 0
        %1635 = vmatprep.subr.bf16.mxu0 0
        %1636 = vmatpush1.bf16.msra.mxu0 0
        %1637 = vmatprep.subr.bf16.mxu0 0
        %1638 = vmatpush1.bf16.msra.mxu0 0
        %1639 = vmatprep.subr.bf16.mxu0 0
        %1640 = vmatpush1.bf16.msra.mxu0 0
        %1641 = vmatprep.subr.bf16.mxu0 0
        %1642 = vmatpush1.bf16.msra.mxu0 0
        %1643 = vmatprep.subr.bf16.mxu0 0
        %1644 = vmatpush1.bf16.msra.mxu0 0
        %1645 = vmatprep.subr.bf16.mxu0 0
        %1646 = vmatpush1.bf16.msra.mxu0 0
        %1647 = vmatprep.subr.bf16.mxu0 0
        %1648 = vmatpush1.bf16.msra.mxu0 0
        %1649 = vmatprep.subr.bf16.mxu0 0
        %1650 = vmatpush1.bf16.msra.mxu0 0
        %1651 = vmatprep.mubr.bf16.mxu0 0
        %1652 = vmatmul.mubr.bf16.gmra.mrb[0].mxu0 %v758
        %v1653 = vpop.f32.mrb[0].mxu0
        %v1654 = vadd.f32 0.0, %v1653
        %v1655 = vpop.f32.mrb[0].mxu0
        %v1656 = vpop.f32.mrb[0].mxu0
        %v1657 = vadd.f32 0.0, %v1656
        %v1658 = vpop.f32.mrb[0].mxu0
        %1659 = vmatprep.mubr.bf16.mxu0 0
        %1660 = vmatmul.mubr.bf16.gmra.mrb[0].mxu0 %v761
        %v1661 = vpop.f32.mrb[0].mxu0
        %v1662 = vadd.f32 0.0, %v1661
        %v1663 = vpop.f32.mrb[0].mxu0
        %v1664 = vpop.f32.mrb[0].mxu0
        %v1665 = vadd.f32 0.0, %v1664
        %v1666 = vpop.f32.mrb[0].mxu0
        %1667 = vmatprep.mubr.bf16.mxu0 0
        %1668 = vmatmul.mubr.bf16.gmra.mrb[0].mxu0 %v764
        %v1669 = vpop.f32.mrb[0].mxu0
        %v1670 = vadd.f32 0.0, %v1669
        %v1671 = vpop.f32.mrb[0].mxu0
        %v1672 = vpop.f32.mrb[0].mxu0
        %v1673 = vadd.f32 0.0, %v1672
        %v1674 = vpop.f32.mrb[0].mxu0
        %1675 = vmatprep.mubr.bf16.mxu0 0
        %1676 = vmatmul.mubr.bf16.gmra.mrb[0].mxu0 %v767
        %v1677 = vpop.f32.mrb[0].mxu0
        %v1678 = vadd.f32 0.0, %v1677
        %v1679 = vpop.f32.mrb[0].mxu0
        %v1680 = vpop.f32.mrb[0].mxu0
        %v1681 = vadd.f32 0.0, %v1680
        %v1682 = vpop.f32.mrb[0].mxu0
        %1683 = vmatprep.mubr.bf16.mxu0 0
        %1684 = vmatmul.mubr.bf16.gmra.mrb[0].mxu0 %v770
        %v1685 = vpop.f32.mrb[0].mxu0
        %v1686 = vadd.f32 0.0, %v1685
        %v1687 = vpop.f32.mrb[0].mxu0
        %v1688 = vpop.f32.mrb[0].mxu0
        %v1689 = vadd.f32 0.0, %v1688
        %v1690 = vpop.f32.mrb[0].mxu0
        %1691 = vmatprep.mubr.bf16.mxu0 0
        %1692 = vmatmul.mubr.bf16.gmra.mrb[0].mxu0 %v773
        %v1693 = vpop.f32.mrb[0].mxu0
        %v1694 = vadd.f32 0.0, %v1693
        %v1695 = vpop.f32.mrb[0].mxu0
        %v1696 = vpop.f32.mrb[0].mxu0
        %v1697 = vadd.f32 0.0, %v1696
        %v1698 = vpop.f32.mrb[0].mxu0
        %1699 = vmatprep.mubr.bf16.mxu0 0
        %1700 = vmatmul.mubr.bf16.gmra.mrb[0].mxu0 %v776
        %v1701 = vpop.f32.mrb[0].mxu0
        %v1702 = vadd.f32 0.0, %v1701
        %v1703 = vpop.f32.mrb[0].mxu0
        %v1704 = vpop.f32.mrb[0].mxu0
        %v1705 = vadd.f32 0.0, %v1704
        %v1706 = vpop.f32.mrb[0].mxu0
        %1707 = vmatprep.mubr.bf16.mxu0 0
        %1708 = vmatmul.mubr.bf16.gmra.mrb[0].mxu0 %v779
        %v1709 = vpop.f32.mrb[0].mxu0
        %v1710 = vadd.f32 0.0, %v1709
        %v1711 = vpop.f32.mrb[0].mxu0
        %v1712 = vpop.f32.mrb[0].mxu0
        %v1713 = vadd.f32 0.0, %v1712
        %v1714 = vpop.f32.mrb[0].mxu0
        %1715 = vmatprep.mubr.bf16.mxu0 0
        %1716 = vmatmul.mubr.bf16.gmra.mrb[0].mxu0 %v782
        %v1717 = vpop.f32.mrb[0].mxu0
        %v1718 = vadd.f32 0.0, %v1717
        %v1719 = vpop.f32.mrb[0].mxu0
        %v1720 = vpop.f32.mrb[0].mxu0
        %v1721 = vadd.f32 0.0, %v1720
        %v1722 = vpop.f32.mrb[0].mxu0
        %1723 = vmatprep.mubr.bf16.mxu0 0
        %1724 = vmatmul.mubr.bf16.gmra.mrb[0].mxu0 %v785
        %v1725 = vpop.f32.mrb[0].mxu0
        %v1726 = vadd.f32 0.0, %v1725
        %v1727 = vpop.f32.mrb[0].mxu0
        %v1728 = vpop.f32.mrb[0].mxu0
        %v1729 = vadd.f32 0.0, %v1728
        %v1730 = vpop.f32.mrb[0].mxu0
        %1731 = vmatprep.mubr.bf16.mxu0 0
        %1732 = vmatmul.mubr.bf16.gmra.mrb[0].mxu0 %v788
        %v1733 = vpop.f32.mrb[0].mxu0
        %v1734 = vadd.f32 0.0, %v1733
        %v1735 = vpop.f32.mrb[0].mxu0
        %v1736 = vpop.f32.mrb[0].mxu0
        %v1737 = vadd.f32 0.0, %v1736
        %v1738 = vpop.f32.mrb[0].mxu0
        %1739 = vmatprep.mubr.bf16.mxu0 0
        %1740 = vmatmul.mubr.bf16.gmra.mrb[0].mxu0 %v791
        %v1741 = vpop.f32.mrb[0].mxu0
        %v1742 = vadd.f32 0.0, %v1741
        %v1743 = vpop.f32.mrb[0].mxu0
        %v1744 = vpop.f32.mrb[0].mxu0
        %v1745 = vadd.f32 0.0, %v1744
        %v1746 = vpop.f32.mrb[0].mxu0
        %1747 = vmatprep.mubr.bf16.mxu0 0
        %1748 = vmatmul.mubr.bf16.gmra.mrb[0].mxu0 %v794
        %v1749 = vpop.f32.mrb[0].mxu0
        %v1750 = vadd.f32 0.0, %v1749
        %v1751 = vpop.f32.mrb[0].mxu0
        %v1752 = vpop.f32.mrb[0].mxu0
        %v1753 = vadd.f32 0.0, %v1752
        %v1754 = vpop.f32.mrb[0].mxu0
        %1755 = vmatprep.mubr.bf16.mxu0 0
        %1756 = vmatmul.mubr.bf16.gmra.mrb[0].mxu0 %v797
        %v1757 = vpop.f32.mrb[0].mxu0
        %v1758 = vadd.f32 0.0, %v1757
        %v1759 = vpop.f32.mrb[0].mxu0
        %v1760 = vpop.f32.mrb[0].mxu0
        %v1761 = vadd.f32 0.0, %v1760
        %v1762 = vpop.f32.mrb[0].mxu0
        %1763 = vmatprep.mubr.bf16.mxu0 0
        %1764 = vmatmul.mubr.bf16.gmra.mrb[0].mxu0 %v800
        %v1765 = vpop.f32.mrb[0].mxu0
        %v1766 = vadd.f32 0.0, %v1765
        %v1767 = vpop.f32.mrb[0].mxu0
        %v1768 = vpop.f32.mrb[0].mxu0
        %v1769 = vadd.f32 0.0, %v1768
        %v1770 = vpop.f32.mrb[0].mxu0
        %1771 = vmatprep.mubr.bf16.mxu0 0
        %1772 = vmatmul.mubr.bf16.gmra.mrb[0].mxu0 %v803
        %v1773 = vpop.f32.mrb[0].mxu0
        %v1774 = vadd.f32 0.0, %v1773
        %v1775 = vpop.f32.mrb[0].mxu0
        %v1776 = vpop.f32.mrb[0].mxu0
        %v1777 = vadd.f32 0.0, %v1776
        %v1778 = vpop.f32.mrb[0].mxu0
        %1779 = vdwg.mxu0
        %v1780 = vrot.slane %v1654, 2
        %v1781 = vrot.slane %v1662, 2
        %v1782 = vrot.slane %v1670, 2
        %v1783 = vrot.slane %v1678, 2
        %v1784 = vrot.slane %v1686, 2
        %v1785 = vrot.slane %v1694, 2
        %v1786 = vrot.slane %v1702, 2
        %v1787 = vrot.slane %v1710, 2
        %v1788 = vrot.slane %v1718, 2
        %v1789 = vrot.slane %v1726, 2
        %v1790 = vrot.slane %v1734, 2
        %v1791 = vrot.slane %v1742, 2
        %v1792 = vrot.slane %v1750, 2
        %v1793 = vrot.slane %v1758, 2
        %v1794 = vrot.slane %v1766, 2
        %v1795 = vrot.slane %v1774, 2
        %v1796 = vrot.slane %v1657, 2
        %v1797 = vrot.slane %v1665, 2
        %v1798 = vrot.slane %v1673, 2
        %v1799 = vrot.slane %v1681, 2
        %v1800 = vrot.slane %v1689, 2
        %v1801 = vrot.slane %v1697, 2
        %v1802 = vrot.slane %v1705, 2
        %v1803 = vrot.slane %v1713, 2
        %v1804 = vrot.slane %v1721, 2
        %v1805 = vrot.slane %v1729, 2
        %v1806 = vrot.slane %v1737, 2
        %v1807 = vrot.slane %v1745, 2
        %v1808 = vrot.slane %v1753, 2
        %v1809 = vrot.slane %v1761, 2
        %v1810 = vrot.slane %v1769, 2
        %v1811 = vrot.slane %v1777, 2
        %v1812 = vsel %vm1263, %v1780, %v1796
        %v1813 = vsel %vm1263, %v1781, %v1797
        %v1814 = vsel %vm1263, %v1782, %v1798
        %v1815 = vsel %vm1263, %v1783, %v1799
        %v1816 = vsel %vm1263, %v1784, %v1800
        %v1817 = vsel %vm1263, %v1785, %v1801
        %v1818 = vsel %vm1263, %v1786, %v1802
        %v1819 = vsel %vm1263, %v1787, %v1803
        %v1820 = vsel %vm1263, %v1788, %v1804
        %v1821 = vsel %vm1263, %v1789, %v1805
        %v1822 = vsel %vm1263, %v1790, %v1806
        %v1823 = vsel %vm1263, %v1791, %v1807
        %v1824 = vsel %vm1263, %v1792, %v1808
        %v1825 = vsel %vm1263, %v1793, %v1809
        %v1826 = vsel %vm1263, %v1794, %v1810
        %v1827 = vsel %vm1263, %v1795, %v1811
        %v1828 = vsel %vm1263, %v1796, %v1780
        %v1829 = vsel %vm1263, %v1797, %v1781
        %v1830 = vsel %vm1263, %v1798, %v1782
        %v1831 = vsel %vm1263, %v1799, %v1783
        %v1832 = vsel %vm1263, %v1800, %v1784
        %v1833 = vsel %vm1263, %v1801, %v1785
        %v1834 = vsel %vm1263, %v1802, %v1786
        %v1835 = vsel %vm1263, %v1803, %v1787
        %v1836 = vsel %vm1263, %v1804, %v1788
        %v1837 = vsel %vm1263, %v1805, %v1789
        %v1838 = vsel %vm1263, %v1806, %v1790
        %v1839 = vsel %vm1263, %v1807, %v1791
        %v1840 = vsel %vm1263, %v1808, %v1792
        %v1841 = vsel %vm1263, %v1809, %v1793
        %v1842 = vsel %vm1263, %v1810, %v1794
        %v1843 = vsel %vm1263, %v1811, %v1795
        %v1844 = vsel %vm1286, %v1828, 0.0
        %v1845 = vsel %vm1287, %v1812, 0.0
        %v1846 = vsel %vm1286, %v1829, 0.0
        %v1847 = vsel %vm1287, %v1813, 0.0
        %v1848 = vsel %vm1286, %v1830, 0.0
        %v1849 = vsel %vm1287, %v1814, 0.0
        %v1850 = vsel %vm1286, %v1831, 0.0
        %v1851 = vsel %vm1287, %v1815, 0.0
        %v1852 = vsel %vm1286, %v1832, 0.0
        %v1853 = vsel %vm1287, %v1816, 0.0
        %v1854 = vsel %vm1286, %v1833, 0.0
        %v1855 = vsel %vm1287, %v1817, 0.0
        %v1856 = vsel %vm1286, %v1834, 0.0
        %v1857 = vsel %vm1287, %v1818, 0.0
        %v1858 = vsel %vm1286, %v1835, 0.0
        %v1859 = vsel %vm1287, %v1819, 0.0
        %v1860 = vsel %vm1286, %v1836, 0.0
        %v1861 = vsel %vm1287, %v1820, 0.0
        %v1862 = vsel %vm1286, %v1837, 0.0
        %v1863 = vsel %vm1287, %v1821, 0.0
        %v1864 = vsel %vm1286, %v1838, 0.0
        %v1865 = vsel %vm1287, %v1822, 0.0
        %v1866 = vsel %vm1286, %v1839, 0.0
        %v1867 = vsel %vm1287, %v1823, 0.0
        %v1868 = vsel %vm1286, %v1840, 0.0
        %v1869 = vsel %vm1287, %v1824, 0.0
        %v1870 = vsel %vm1286, %v1841, 0.0
        %v1871 = vsel %vm1287, %v1825, 0.0
        %v1872 = vsel %vm1286, %v1842, 0.0
        %v1873 = vsel %vm1287, %v1826, 0.0
        %v1874 = vsel %vm1286, %v1843, 0.0
        %v1875 = vsel %vm1287, %v1827, 0.0
        %1908 = vrot.lane.b32.xlu0 %v1654, 120
        %v1909 = vpop.permute.xlu0 %1908
        %1910 = vrot.lane.b32.xlu0 %v1657, 120
        %v1911 = vpop.permute.xlu0 %1910
        %1912 = vrot.lane.b32.xlu0 %v1662, 120
        %v1913 = vpop.permute.xlu0 %1912
        %1914 = vrot.lane.b32.xlu0 %v1665, 120
        %v1915 = vpop.permute.xlu0 %1914
        %1916 = vrot.lane.b32.xlu0 %v1670, 120
        %v1917 = vpop.permute.xlu0 %1916
        %1918 = vrot.lane.b32.xlu0 %v1673, 120
        %v1919 = vpop.permute.xlu0 %1918
        %1920 = vrot.lane.b32.xlu0 %v1678, 120
        %v1921 = vpop.permute.xlu0 %1920
        %1922 = vrot.lane.b32.xlu0 %v1681, 120
        %v1923 = vpop.permute.xlu0 %1922
        %1924 = vrot.lane.b32.xlu0 %v1686, 120
        %v1925 = vpop.permute.xlu0 %1924
        %1926 = vrot.lane.b32.xlu0 %v1689, 120
        %v1927 = vpop.permute.xlu0 %1926
        %1928 = vrot.lane.b32.xlu0 %v1694, 120
        %v1929 = vpop.permute.xlu0 %1928
        %1930 = vrot.lane.b32.xlu0 %v1697, 120
        %v1931 = vpop.permute.xlu0 %1930
        %1932 = vrot.lane.b32.xlu0 %v1702, 120
        %v1933 = vpop.permute.xlu0 %1932
        %1934 = vrot.lane.b32.xlu0 %v1705, 120
        %v1935 = vpop.permute.xlu0 %1934
        %1936 = vrot.lane.b32.xlu0 %v1710, 120
        %v1937 = vpop.permute.xlu0 %1936
        %1938 = vrot.lane.b32.xlu0 %v1713, 120
        %v1939 = vpop.permute.xlu0 %1938
        %1940 = vrot.lane.b32.xlu0 %v1718, 120
        %v1941 = vpop.permute.xlu0 %1940
        %1942 = vrot.lane.b32.xlu0 %v1721, 120
        %v1943 = vpop.permute.xlu0 %1942
        %1944 = vrot.lane.b32.xlu0 %v1726, 120
        %v1945 = vpop.permute.xlu0 %1944
        %1946 = vrot.lane.b32.xlu0 %v1729, 120
        %v1947 = vpop.permute.xlu0 %1946
        %1948 = vrot.lane.b32.xlu0 %v1734, 120
        %v1949 = vpop.permute.xlu0 %1948
        %1950 = vrot.lane.b32.xlu0 %v1737, 120
        %v1951 = vpop.permute.xlu0 %1950
        %1952 = vrot.lane.b32.xlu0 %v1742, 120
        %v1953 = vpop.permute.xlu0 %1952
        %1954 = vrot.lane.b32.xlu0 %v1745, 120
        %v1955 = vpop.permute.xlu0 %1954
        %1956 = vrot.lane.b32.xlu0 %v1750, 120
        %v1957 = vpop.permute.xlu0 %1956
        %1958 = vrot.lane.b32.xlu0 %v1753, 120
        %v1959 = vpop.permute.xlu0 %1958
        %1960 = vrot.lane.b32.xlu0 %v1758, 120
        %v1961 = vpop.permute.xlu0 %1960
        %1962 = vrot.lane.b32.xlu0 %v1761, 120
        %v1963 = vpop.permute.xlu0 %1962
        %1964 = vrot.lane.b32.xlu0 %v1766, 120
        %v1965 = vpop.permute.xlu0 %1964
        %1966 = vrot.lane.b32.xlu0 %v1769, 120
        %v1967 = vpop.permute.xlu0 %1966
        %1968 = vrot.lane.b32.xlu0 %v1774, 120
        %v1969 = vpop.permute.xlu0 %1968
        %1970 = vrot.lane.b32.xlu0 %v1777, 120
        %v1971 = vpop.permute.xlu0 %1970
        %v2004 = vadd.f32 %v1844, %v1909
        %v2005 = vadd.f32 %v1845, %v1911
        %v2006 = vadd.f32 %v1846, %v1913
        %v2007 = vadd.f32 %v1847, %v1915
        %v2008 = vadd.f32 %v1848, %v1917
        %v2009 = vadd.f32 %v1849, %v1919
        %v2010 = vadd.f32 %v1850, %v1921
        %v2011 = vadd.f32 %v1851, %v1923
        %v2012 = vadd.f32 %v1852, %v1925
        %v2013 = vadd.f32 %v1853, %v1927
        %v2014 = vadd.f32 %v1854, %v1929
        %v2015 = vadd.f32 %v1855, %v1931
        %v2016 = vadd.f32 %v1856, %v1933
        %v2017 = vadd.f32 %v1857, %v1935
        %v2018 = vadd.f32 %v1858, %v1937
        %v2019 = vadd.f32 %v1859, %v1939
        %v2020 = vadd.f32 %v1860, %v1941
        %v2021 = vadd.f32 %v1861, %v1943
        %v2022 = vadd.f32 %v1862, %v1945
        %v2023 = vadd.f32 %v1863, %v1947
        %v2024 = vadd.f32 %v1864, %v1949
        %v2025 = vadd.f32 %v1865, %v1951
        %v2026 = vadd.f32 %v1866, %v1953
        %v2027 = vadd.f32 %v1867, %v1955
        %v2028 = vadd.f32 %v1868, %v1957
        %v2029 = vadd.f32 %v1869, %v1959
        %v2030 = vadd.f32 %v1870, %v1961
        %v2031 = vadd.f32 %v1871, %v1963
        %v2032 = vadd.f32 %v1872, %v1965
        %v2033 = vadd.f32 %v1873, %v1967
        %v2034 = vadd.f32 %v1874, %v1969
        %v2035 = vadd.f32 %v1875, %v1971
        %2036 = vrot.lane.b32.xlu0 %v1654, 112
        %v2037 = vpop.permute.xlu0 %2036
        %2038 = vrot.lane.b32.xlu0 %v1657, 112
        %v2039 = vpop.permute.xlu0 %2038
        %2040 = vrot.lane.b32.xlu0 %v1662, 112
        %v2041 = vpop.permute.xlu0 %2040
        %2042 = vrot.lane.b32.xlu0 %v1665, 112
        %v2043 = vpop.permute.xlu0 %2042
        %2044 = vrot.lane.b32.xlu0 %v1670, 112
        %v2045 = vpop.permute.xlu0 %2044
        %2046 = vrot.lane.b32.xlu0 %v1673, 112
        %v2047 = vpop.permute.xlu0 %2046
        %2048 = vrot.lane.b32.xlu0 %v1678, 112
        %v2049 = vpop.permute.xlu0 %2048
        %2050 = vrot.lane.b32.xlu0 %v1681, 112
        %v2051 = vpop.permute.xlu0 %2050
        %2052 = vrot.lane.b32.xlu0 %v1686, 112
        %v2053 = vpop.permute.xlu0 %2052
        %2054 = vrot.lane.b32.xlu0 %v1689, 112
        %v2055 = vpop.permute.xlu0 %2054
        %2056 = vrot.lane.b32.xlu0 %v1694, 112
        %v2057 = vpop.permute.xlu0 %2056
        %2058 = vrot.lane.b32.xlu0 %v1697, 112
        %v2059 = vpop.permute.xlu0 %2058
        %2060 = vrot.lane.b32.xlu0 %v1702, 112
        %v2061 = vpop.permute.xlu0 %2060
        %2062 = vrot.lane.b32.xlu0 %v1705, 112
        %v2063 = vpop.permute.xlu0 %2062
        %2064 = vrot.lane.b32.xlu0 %v1710, 112
        %v2065 = vpop.permute.xlu0 %2064
        %2066 = vrot.lane.b32.xlu0 %v1713, 112
        %v2067 = vpop.permute.xlu0 %2066
        %2068 = vrot.lane.b32.xlu0 %v1718, 112
        %v2069 = vpop.permute.xlu0 %2068
        %2070 = vrot.lane.b32.xlu0 %v1721, 112
        %v2071 = vpop.permute.xlu0 %2070
        %2072 = vrot.lane.b32.xlu0 %v1726, 112
        %v2073 = vpop.permute.xlu0 %2072
        %2074 = vrot.lane.b32.xlu0 %v1729, 112
        %v2075 = vpop.permute.xlu0 %2074
        %2076 = vrot.lane.b32.xlu0 %v1734, 112
        %v2077 = vpop.permute.xlu0 %2076
        %2078 = vrot.lane.b32.xlu0 %v1737, 112
        %v2079 = vpop.permute.xlu0 %2078
        %2080 = vrot.lane.b32.xlu0 %v1742, 112
        %v2081 = vpop.permute.xlu0 %2080
        %2082 = vrot.lane.b32.xlu0 %v1745, 112
        %v2083 = vpop.permute.xlu0 %2082
        %2084 = vrot.lane.b32.xlu0 %v1750, 112
        %v2085 = vpop.permute.xlu0 %2084
        %2086 = vrot.lane.b32.xlu0 %v1753, 112
        %v2087 = vpop.permute.xlu0 %2086
        %2088 = vrot.lane.b32.xlu0 %v1758, 112
        %v2089 = vpop.permute.xlu0 %2088
        %2090 = vrot.lane.b32.xlu0 %v1761, 112
        %v2091 = vpop.permute.xlu0 %2090
        %2092 = vrot.lane.b32.xlu0 %v1766, 112
        %v2093 = vpop.permute.xlu0 %2092
        %2094 = vrot.lane.b32.xlu0 %v1769, 112
        %v2095 = vpop.permute.xlu0 %2094
        %2096 = vrot.lane.b32.xlu0 %v1774, 112
        %v2097 = vpop.permute.xlu0 %2096
        %2098 = vrot.lane.b32.xlu0 %v1777, 112
        %v2099 = vpop.permute.xlu0 %2098
        %v2132 = vrot.slane %v2037, 6
        %v2133 = vrot.slane %v2041, 6
        %v2134 = vrot.slane %v2045, 6
        %v2135 = vrot.slane %v2049, 6
        %v2136 = vrot.slane %v2053, 6
        %v2137 = vrot.slane %v2057, 6
        %v2138 = vrot.slane %v2061, 6
        %v2139 = vrot.slane %v2065, 6
        %v2140 = vrot.slane %v2069, 6
        %v2141 = vrot.slane %v2073, 6
        %v2142 = vrot.slane %v2077, 6
        %v2143 = vrot.slane %v2081, 6
        %v2144 = vrot.slane %v2085, 6
        %v2145 = vrot.slane %v2089, 6
        %v2146 = vrot.slane %v2093, 6
        %v2147 = vrot.slane %v2097, 6
        %v2148 = vrot.slane %v2039, 6
        %v2149 = vrot.slane %v2043, 6
        %v2150 = vrot.slane %v2047, 6
        %v2151 = vrot.slane %v2051, 6
        %v2152 = vrot.slane %v2055, 6
        %v2153 = vrot.slane %v2059, 6
        %v2154 = vrot.slane %v2063, 6
        %v2155 = vrot.slane %v2067, 6
        %v2156 = vrot.slane %v2071, 6
        %v2157 = vrot.slane %v2075, 6
        %v2158 = vrot.slane %v2079, 6
        %v2159 = vrot.slane %v2083, 6
        %v2160 = vrot.slane %v2087, 6
        %v2161 = vrot.slane %v2091, 6
        %v2162 = vrot.slane %v2095, 6
        %v2163 = vrot.slane %v2099, 6
        %v2164 = vsel %vm1488, %v2132, %v2148
        %v2165 = vsel %vm1488, %v2133, %v2149
        %v2166 = vsel %vm1488, %v2134, %v2150
        %v2167 = vsel %vm1488, %v2135, %v2151
        %v2168 = vsel %vm1488, %v2136, %v2152
        %v2169 = vsel %vm1488, %v2137, %v2153
        %v2170 = vsel %vm1488, %v2138, %v2154
        %v2171 = vsel %vm1488, %v2139, %v2155
        %v2172 = vsel %vm1488, %v2140, %v2156
        %v2173 = vsel %vm1488, %v2141, %v2157
        %v2174 = vsel %vm1488, %v2142, %v2158
        %v2175 = vsel %vm1488, %v2143, %v2159
        %v2176 = vsel %vm1488, %v2144, %v2160
        %v2177 = vsel %vm1488, %v2145, %v2161
        %v2178 = vsel %vm1488, %v2146, %v2162
        %v2179 = vsel %vm1488, %v2147, %v2163
        %v2180 = vsel %vm1488, %v2148, %v2132
        %v2181 = vsel %vm1488, %v2149, %v2133
        %v2182 = vsel %vm1488, %v2150, %v2134
        %v2183 = vsel %vm1488, %v2151, %v2135
        %v2184 = vsel %vm1488, %v2152, %v2136
        %v2185 = vsel %vm1488, %v2153, %v2137
        %v2186 = vsel %vm1488, %v2154, %v2138
        %v2187 = vsel %vm1488, %v2155, %v2139
        %v2188 = vsel %vm1488, %v2156, %v2140
        %v2189 = vsel %vm1488, %v2157, %v2141
        %v2190 = vsel %vm1488, %v2158, %v2142
        %v2191 = vsel %vm1488, %v2159, %v2143
        %v2192 = vsel %vm1488, %v2160, %v2144
        %v2193 = vsel %vm1488, %v2161, %v2145
        %v2194 = vsel %vm1488, %v2162, %v2146
        %v2195 = vsel %vm1488, %v2163, %v2147
        %v2196 = vsel %vm1511, %v2164, 0.0
        %v2197 = vsel %vm1512, %v2180, 0.0
        %v2198 = vsel %vm1511, %v2165, 0.0
        %v2199 = vsel %vm1512, %v2181, 0.0
        %v2200 = vsel %vm1511, %v2166, 0.0
        %v2201 = vsel %vm1512, %v2182, 0.0
        %v2202 = vsel %vm1511, %v2167, 0.0
        %v2203 = vsel %vm1512, %v2183, 0.0
        %v2204 = vsel %vm1511, %v2168, 0.0
        %v2205 = vsel %vm1512, %v2184, 0.0
        %v2206 = vsel %vm1511, %v2169, 0.0
        %v2207 = vsel %vm1512, %v2185, 0.0
        %v2208 = vsel %vm1511, %v2170, 0.0
        %v2209 = vsel %vm1512, %v2186, 0.0
        %v2210 = vsel %vm1511, %v2171, 0.0
        %v2211 = vsel %vm1512, %v2187, 0.0
        %v2212 = vsel %vm1511, %v2172, 0.0
        %v2213 = vsel %vm1512, %v2188, 0.0
        %v2214 = vsel %vm1511, %v2173, 0.0
        %v2215 = vsel %vm1512, %v2189, 0.0
        %v2216 = vsel %vm1511, %v2174, 0.0
        %v2217 = vsel %vm1512, %v2190, 0.0
        %v2218 = vsel %vm1511, %v2175, 0.0
        %v2219 = vsel %vm1512, %v2191, 0.0
        %v2220 = vsel %vm1511, %v2176, 0.0
        %v2221 = vsel %vm1512, %v2192, 0.0
        %v2222 = vsel %vm1511, %v2177, 0.0
        %v2223 = vsel %vm1512, %v2193, 0.0
        %v2224 = vsel %vm1511, %v2178, 0.0
        %v2225 = vsel %vm1512, %v2194, 0.0
        %v2226 = vsel %vm1511, %v2179, 0.0
        %v2227 = vsel %vm1512, %v2195, 0.0
        %v2228 = vadd.f32 %v2004, %v2196
        %v2229 = vadd.f32 %v2005, %v2197
        %v2230 = vadd.f32 %v2006, %v2198
        %v2231 = vadd.f32 %v2007, %v2199
        %v2232 = vadd.f32 %v2008, %v2200
        %v2233 = vadd.f32 %v2009, %v2201
        %v2234 = vadd.f32 %v2010, %v2202
        %v2235 = vadd.f32 %v2011, %v2203
        %v2236 = vadd.f32 %v2012, %v2204
        %v2237 = vadd.f32 %v2013, %v2205
        %v2238 = vadd.f32 %v2014, %v2206
        %v2239 = vadd.f32 %v2015, %v2207
        %v2240 = vadd.f32 %v2016, %v2208
        %v2241 = vadd.f32 %v2017, %v2209
        %v2242 = vadd.f32 %v2018, %v2210
        %v2243 = vadd.f32 %v2019, %v2211
        %v2244 = vadd.f32 %v2020, %v2212
        %v2245 = vadd.f32 %v2021, %v2213
        %v2246 = vadd.f32 %v2022, %v2214
        %v2247 = vadd.f32 %v2023, %v2215
        %v2248 = vadd.f32 %v2024, %v2216
        %v2249 = vadd.f32 %v2025, %v2217
        %v2250 = vadd.f32 %v2026, %v2218
        %v2251 = vadd.f32 %v2027, %v2219
        %v2252 = vadd.f32 %v2028, %v2220
        %v2253 = vadd.f32 %v2029, %v2221
        %v2254 = vadd.f32 %v2030, %v2222
        %v2255 = vadd.f32 %v2031, %v2223
        %v2256 = vadd.f32 %v2032, %v2224
        %v2257 = vadd.f32 %v2033, %v2225
        %v2258 = vadd.f32 %v2034, %v2226
        %v2259 = vadd.f32 %v2035, %v2227
        %s2260 = scalar_lea.vmem [#allocation3], 256
        %v2261 = vld [vmem:[%s2260] sm:$0xff]
        %v2262 = vld [vmem:[%s2260 + $0x8] sm:$0xff]
        %v2263 = vld [vmem:[%s2260 + $0x10] sm:$0xff]
        %v2264 = vld [vmem:[%s2260 + $0x18] sm:$0xff]
        %v2265 = vld [vmem:[%s2260 + $0x20] sm:$0xff]
        %v2266 = vld [vmem:[%s2260 + $0x28] sm:$0xff]
        %v2267 = vld [vmem:[%s2260 + $0x30] sm:$0xff]
        %v2268 = vld [vmem:[%s2260 + $0x38] sm:$0xff]
        %v2269 = vld [vmem:[%s2260 + $0x40] sm:$0xff]
        %v2270 = vld [vmem:[%s2260 + $0x48] sm:$0xff]
        %v2271 = vld [vmem:[%s2260 + $0x50] sm:$0xff]
        %v2272 = vld [vmem:[%s2260 + $0x58] sm:$0xff]
        %v2273 = vld [vmem:[%s2260 + $0x60] sm:$0xff]
        %v2274 = vld [vmem:[%s2260 + $0x68] sm:$0xff]
        %v2275 = vld [vmem:[%s2260 + $0x70] sm:$0xff]
        %v2276 = vld [vmem:[%s2260 + $0x78] sm:$0xff]
        %v2277 = vld [vmem:[%s2260 + $0x80] sm:$0xff]
        %v2278 = vld [vmem:[%s2260 + $0x88] sm:$0xff]
        %v2279 = vld [vmem:[%s2260 + $0x90] sm:$0xff]
        %v2280 = vld [vmem:[%s2260 + $0x98] sm:$0xff]
        %v2281 = vld [vmem:[%s2260 + $0xa0] sm:$0xff]
        %v2282 = vld [vmem:[%s2260 + $0xa8] sm:$0xff]
        %v2283 = vld [vmem:[%s2260 + $0xb0] sm:$0xff]
        %v2284 = vld [vmem:[%s2260 + $0xb8] sm:$0xff]
        %v2285 = vld [vmem:[%s2260 + $0xc0] sm:$0xff]
        %v2286 = vld [vmem:[%s2260 + $0xc8] sm:$0xff]
        %v2287 = vld [vmem:[%s2260 + $0xd0] sm:$0xff]
        %v2288 = vld [vmem:[%s2260 + $0xd8] sm:$0xff]
        %v2289 = vld [vmem:[%s2260 + $0xe0] sm:$0xff]
        %v2290 = vld [vmem:[%s2260 + $0xe8] sm:$0xff]
        %v2291 = vld [vmem:[%s2260 + $0xf0] sm:$0xff]
        %v2292 = vld [vmem:[%s2260 + $0xf8] sm:$0xff]
        %v2293 = vadd.f32 %v2261, %v2228
        %v2294 = vadd.f32 %v2262, %v2229
        %v2295 = vadd.f32 %v2263, %v2230
        %v2296 = vadd.f32 %v2264, %v2231
        %v2297 = vadd.f32 %v2265, %v2232
        %v2298 = vadd.f32 %v2266, %v2233
        %v2299 = vadd.f32 %v2267, %v2234
        %v2300 = vadd.f32 %v2268, %v2235
        %v2301 = vadd.f32 %v2269, %v2236
        %v2302 = vadd.f32 %v2270, %v2237
        %v2303 = vadd.f32 %v2271, %v2238
        %v2304 = vadd.f32 %v2272, %v2239
        %v2305 = vadd.f32 %v2273, %v2240
        %v2306 = vadd.f32 %v2274, %v2241
        %v2307 = vadd.f32 %v2275, %v2242
        %v2308 = vadd.f32 %v2276, %v2243
        %v2309 = vadd.f32 %v2277, %v2244
        %v2310 = vadd.f32 %v2278, %v2245
        %v2311 = vadd.f32 %v2279, %v2246
        %v2312 = vadd.f32 %v2280, %v2247
        %v2313 = vadd.f32 %v2281, %v2248
        %v2314 = vadd.f32 %v2282, %v2249
        %v2315 = vadd.f32 %v2283, %v2250
        %v2316 = vadd.f32 %v2284, %v2251
        %v2317 = vadd.f32 %v2285, %v2252
        %v2318 = vadd.f32 %v2286, %v2253
        %v2319 = vadd.f32 %v2287, %v2254
        %v2320 = vadd.f32 %v2288, %v2255
        %v2321 = vadd.f32 %v2289, %v2256
        %v2322 = vadd.f32 %v2290, %v2257
        %v2323 = vadd.f32 %v2291, %v2258
        %v2324 = vadd.f32 %v2292, %v2259
        %2325 = vst.msk [vmem:[%s2260] sm:$0xff] %vm1034, %v2293
        %2326 = vst.msk [vmem:[%s2260 + $0x8] sm:$0xff] %vm1034, %v2294
        %2327 = vst.msk [vmem:[%s2260 + $0x10] sm:$0xff] %vm1034, %v2295
        %2328 = vst.msk [vmem:[%s2260 + $0x18] sm:$0xff] %vm1034, %v2296
        %2329 = vst.msk [vmem:[%s2260 + $0x20] sm:$0xff] %vm1034, %v2297
        %2330 = vst.msk [vmem:[%s2260 + $0x28] sm:$0xff] %vm1034, %v2298
        %2331 = vst.msk [vmem:[%s2260 + $0x30] sm:$0xff] %vm1034, %v2299
        %2332 = vst.msk [vmem:[%s2260 + $0x38] sm:$0xff] %vm1034, %v2300
        %2333 = vst.msk [vmem:[%s2260 + $0x40] sm:$0xff] %vm1034, %v2301
        %2334 = vst.msk [vmem:[%s2260 + $0x48] sm:$0xff] %vm1034, %v2302
        %2335 = vst.msk [vmem:[%s2260 + $0x50] sm:$0xff] %vm1034, %v2303
        %2336 = vst.msk [vmem:[%s2260 + $0x58] sm:$0xff] %vm1034, %v2304
        %2337 = vst.msk [vmem:[%s2260 + $0x60] sm:$0xff] %vm1034, %v2305
        %2338 = vst.msk [vmem:[%s2260 + $0x68] sm:$0xff] %vm1034, %v2306
        %2339 = vst.msk [vmem:[%s2260 + $0x70] sm:$0xff] %vm1034, %v2307
        %2340 = vst.msk [vmem:[%s2260 + $0x78] sm:$0xff] %vm1034, %v2308
        %2341 = vst.msk [vmem:[%s2260 + $0x80] sm:$0xff] %vm1034, %v2309
        %2342 = vst.msk [vmem:[%s2260 + $0x88] sm:$0xff] %vm1034, %v2310
        %2343 = vst.msk [vmem:[%s2260 + $0x90] sm:$0xff] %vm1034, %v2311
        %2344 = vst.msk [vmem:[%s2260 + $0x98] sm:$0xff] %vm1034, %v2312
        %2345 = vst.msk [vmem:[%s2260 + $0xa0] sm:$0xff] %vm1034, %v2313
        %2346 = vst.msk [vmem:[%s2260 + $0xa8] sm:$0xff] %vm1034, %v2314
        %2347 = vst.msk [vmem:[%s2260 + $0xb0] sm:$0xff] %vm1034, %v2315
        %2348 = vst.msk [vmem:[%s2260 + $0xb8] sm:$0xff] %vm1034, %v2316
        %2349 = vst.msk [vmem:[%s2260 + $0xc0] sm:$0xff] %vm1034, %v2317
        %2350 = vst.msk [vmem:[%s2260 + $0xc8] sm:$0xff] %vm1034, %v2318
        %2351 = vst.msk [vmem:[%s2260 + $0xd0] sm:$0xff] %vm1034, %v2319
        %2352 = vst.msk [vmem:[%s2260 + $0xd8] sm:$0xff] %vm1034, %v2320
        %2353 = vst.msk [vmem:[%s2260 + $0xe0] sm:$0xff] %vm1034, %v2321
        %2354 = vst.msk [vmem:[%s2260 + $0xe8] sm:$0xff] %vm1034, %v2322
        %2355 = vst.msk [vmem:[%s2260 + $0xf0] sm:$0xff] %vm1034, %v2323
        %2356 = vst.msk [vmem:[%s2260 + $0xf8] sm:$0xff] %vm1034, %v2324
        %s2357 = scalar_lea.vmem %s319, 4
        %v2358 = vld [vmem:[%s2357] sm:$0x3]
        %v2360 = vsel %vm805, %v2358, 0
        %2362 = vmatprep.subr.bf16.mxu0 0
        %2363 = vmatpush1.bf16.msra.mxu0 %v2360
        %2364 = vmatprep.subr.bf16.mxu0 0
        %2365 = vmatpush1.bf16.msra.mxu0 0
        %2366 = vmatprep.subr.bf16.mxu0 0
        %2367 = vmatpush1.bf16.msra.mxu0 0
        %2368 = vmatprep.subr.bf16.mxu0 0
        %2369 = vmatpush1.bf16.msra.mxu0 0
        %2370 = vmatprep.subr.bf16.mxu0 0
        %2371 = vmatpush1.bf16.msra.mxu0 0
        %2372 = vmatprep.subr.bf16.mxu0 0
        %2373 = vmatpush1.bf16.msra.mxu0 0
        %2374 = vmatprep.subr.bf16.mxu0 0
        %2375 = vmatpush1.bf16.msra.mxu0 0
        %2376 = vmatprep.subr.bf16.mxu0 0
        %2377 = vmatpush1.bf16.msra.mxu0 0
        %2378 = vmatprep.subr.bf16.mxu0 0
        %2379 = vmatpush1.bf16.msra.mxu0 0
        %2380 = vmatprep.subr.bf16.mxu0 0
        %2381 = vmatpush1.bf16.msra.mxu0 0
        %2382 = vmatprep.subr.bf16.mxu0 0
        %2383 = vmatpush1.bf16.msra.mxu0 0
        %2384 = vmatprep.subr.bf16.mxu0 0
        %2385 = vmatpush1.bf16.msra.mxu0 0
        %2386 = vmatprep.subr.bf16.mxu0 0
        %2387 = vmatpush1.bf16.msra.mxu0 0
        %2388 = vmatprep.subr.bf16.mxu0 0
        %2389 = vmatpush1.bf16.msra.mxu0 0
        %2390 = vmatprep.subr.bf16.mxu0 0
        %2391 = vmatpush1.bf16.msra.mxu0 0
        %2392 = vmatprep.subr.bf16.mxu0 0
        %2393 = vmatpush1.bf16.msra.mxu0 0
        %2394 = vmatprep.mubr.bf16.mxu0 0
        %2395 = vmatmul.mubr.bf16.gmra.mrb[0].mxu0 %v758
        %v2396 = vpop.f32.mrb[0].mxu0
        %v2397 = vpop.f32.mrb[0].mxu0
        %v2398 = vpop.f32.mrb[0].mxu0
        %v2399 = vpop.f32.mrb[0].mxu0
        %2400 = vmatprep.mubr.bf16.mxu0 0
        %2401 = vmatmul.mubr.bf16.gmra.mrb[0].mxu0 %v761
        %v2402 = vpop.f32.mrb[0].mxu0
        %v2403 = vpop.f32.mrb[0].mxu0
        %v2404 = vpop.f32.mrb[0].mxu0
        %v2405 = vpop.f32.mrb[0].mxu0
        %2406 = vmatprep.mubr.bf16.mxu0 0
        %2407 = vmatmul.mubr.bf16.gmra.mrb[0].mxu0 %v764
        %v2408 = vpop.f32.mrb[0].mxu0
        %v2409 = vpop.f32.mrb[0].mxu0
        %v2410 = vpop.f32.mrb[0].mxu0
        %v2411 = vpop.f32.mrb[0].mxu0
        %2412 = vmatprep.mubr.bf16.mxu0 0
        %2413 = vmatmul.mubr.bf16.gmra.mrb[0].mxu0 %v767
        %v2414 = vpop.f32.mrb[0].mxu0
        %v2415 = vpop.f32.mrb[0].mxu0
        %v2416 = vpop.f32.mrb[0].mxu0
        %v2417 = vpop.f32.mrb[0].mxu0
        %2418 = vmatprep.mubr.bf16.mxu0 0
        %2419 = vmatmul.mubr.bf16.gmra.mrb[0].mxu0 %v770
        %v2420 = vpop.f32.mrb[0].mxu0
        %v2421 = vpop.f32.mrb[0].mxu0
        %v2422 = vpop.f32.mrb[0].mxu0
        %v2423 = vpop.f32.mrb[0].mxu0
        %2424 = vmatprep.mubr.bf16.mxu0 0
        %2425 = vmatmul.mubr.bf16.gmra.mrb[0].mxu0 %v773
        %v2426 = vpop.f32.mrb[0].mxu0
        %v2427 = vpop.f32.mrb[0].mxu0
        %v2428 = vpop.f32.mrb[0].mxu0
        %v2429 = vpop.f32.mrb[0].mxu0
        %2430 = vmatprep.mubr.bf16.mxu0 0
        %2431 = vmatmul.mubr.bf16.gmra.mrb[0].mxu0 %v776
        %v2432 = vpop.f32.mrb[0].mxu0
        %v2433 = vadd.f32 0.0, %v2432
        %v2434 = vpop.f32.mrb[0].mxu0
        %v2435 = vpop.f32.mrb[0].mxu0
        %v2436 = vadd.f32 0.0, %v2435
        %v2437 = vpop.f32.mrb[0].mxu0
        %2438 = vmatprep.mubr.bf16.mxu0 0
        %2439 = vmatmul.mubr.bf16.gmra.mrb[0].mxu0 %v779
        %v2440 = vpop.f32.mrb[0].mxu0
        %v2441 = vadd.f32 0.0, %v2440
        %v2442 = vpop.f32.mrb[0].mxu0
        %v2443 = vpop.f32.mrb[0].mxu0
        %v2444 = vadd.f32 0.0, %v2443
        %v2445 = vpop.f32.mrb[0].mxu0
        %2446 = vmatprep.mubr.bf16.mxu0 0
        %2447 = vmatmul.mubr.bf16.gmra.mrb[0].mxu0 %v782
        %v2448 = vpop.f32.mrb[0].mxu0
        %v2449 = vadd.f32 0.0, %v2448
        %v2450 = vpop.f32.mrb[0].mxu0
        %v2451 = vpop.f32.mrb[0].mxu0
        %v2452 = vadd.f32 0.0, %v2451
        %v2453 = vpop.f32.mrb[0].mxu0
        %2454 = vmatprep.mubr.bf16.mxu0 0
        %2455 = vmatmul.mubr.bf16.gmra.mrb[0].mxu0 %v785
        %v2456 = vpop.f32.mrb[0].mxu0
        %v2457 = vadd.f32 0.0, %v2456
        %v2458 = vpop.f32.mrb[0].mxu0
        %v2459 = vpop.f32.mrb[0].mxu0
        %v2460 = vadd.f32 0.0, %v2459
        %v2461 = vpop.f32.mrb[0].mxu0
        %2462 = vmatprep.mubr.bf16.mxu0 0
        %2463 = vmatmul.mubr.bf16.gmra.mrb[0].mxu0 %v788
        %v2464 = vpop.f32.mrb[0].mxu0
        %v2465 = vadd.f32 0.0, %v2464
        %v2466 = vpop.f32.mrb[0].mxu0
        %v2467 = vpop.f32.mrb[0].mxu0
        %v2468 = vadd.f32 0.0, %v2467
        %v2469 = vpop.f32.mrb[0].mxu0
        %2470 = vmatprep.mubr.bf16.mxu0 0
        %2471 = vmatmul.mubr.bf16.gmra.mrb[0].mxu0 %v791
        %v2472 = vpop.f32.mrb[0].mxu0
        %v2473 = vadd.f32 0.0, %v2472
        %v2474 = vpop.f32.mrb[0].mxu0
        %v2475 = vpop.f32.mrb[0].mxu0
        %v2476 = vadd.f32 0.0, %v2475
        %v2477 = vpop.f32.mrb[0].mxu0
        %2478 = vmatprep.mubr.bf16.mxu0 0
        %2479 = vmatmul.mubr.bf16.gmra.mrb[0].mxu0 %v794
        %v2480 = vpop.f32.mrb[0].mxu0
        %v2481 = vadd.f32 0.0, %v2480
        %v2482 = vpop.f32.mrb[0].mxu0
        %v2483 = vpop.f32.mrb[0].mxu0
        %v2484 = vadd.f32 0.0, %v2483
        %v2485 = vpop.f32.mrb[0].mxu0
        %2486 = vmatprep.mubr.bf16.mxu0 0
        %2487 = vmatmul.mubr.bf16.gmra.mrb[0].mxu0 %v797
        %v2488 = vpop.f32.mrb[0].mxu0
        %v2489 = vadd.f32 0.0, %v2488
        %v2490 = vpop.f32.mrb[0].mxu0
        %v2491 = vpop.f32.mrb[0].mxu0
        %v2492 = vadd.f32 0.0, %v2491
        %v2493 = vpop.f32.mrb[0].mxu0
        %2494 = vmatprep.mubr.bf16.mxu0 0
        %2495 = vmatmul.mubr.bf16.gmra.mrb[0].mxu0 %v800
        %v2496 = vpop.f32.mrb[0].mxu0
        %v2497 = vadd.f32 0.0, %v2496
        %v2498 = vpop.f32.mrb[0].mxu0
        %v2499 = vpop.f32.mrb[0].mxu0
        %v2500 = vadd.f32 0.0, %v2499
        %v2501 = vpop.f32.mrb[0].mxu0
        %2502 = vmatprep.mubr.bf16.mxu0 0
        %2503 = vmatmul.mubr.bf16.gmra.mrb[0].mxu0 %v803
        %v2504 = vpop.f32.mrb[0].mxu0
        %v2505 = vadd.f32 0.0, %v2504
        %v2506 = vpop.f32.mrb[0].mxu0
        %v2507 = vpop.f32.mrb[0].mxu0
        %v2508 = vadd.f32 0.0, %v2507
        %v2509 = vpop.f32.mrb[0].mxu0
        %2510 = vdwg.mxu0
        %v2511 = vrot.slane %v2433, 2
        %v2512 = vrot.slane %v2441, 2
        %v2513 = vrot.slane %v2449, 2
        %v2514 = vrot.slane %v2457, 2
        %v2515 = vrot.slane %v2465, 2
        %v2516 = vrot.slane %v2473, 2
        %v2517 = vrot.slane %v2481, 2
        %v2518 = vrot.slane %v2489, 2
        %v2519 = vrot.slane %v2497, 2
        %v2520 = vrot.slane %v2505, 2
        %v2521 = vrot.slane %v2436, 2
        %v2522 = vrot.slane %v2444, 2
        %v2523 = vrot.slane %v2452, 2
        %v2524 = vrot.slane %v2460, 2
        %v2525 = vrot.slane %v2468, 2
        %v2526 = vrot.slane %v2476, 2
        %v2527 = vrot.slane %v2484, 2
        %v2528 = vrot.slane %v2492, 2
        %v2529 = vrot.slane %v2500, 2
        %v2530 = vrot.slane %v2508, 2
        %v2531 = vsel %vm1263, %v2511, %v2521
        %v2532 = vsel %vm1263, %v2512, %v2522
        %v2533 = vsel %vm1263, %v2513, %v2523
        %v2534 = vsel %vm1263, %v2514, %v2524
        %v2535 = vsel %vm1263, %v2515, %v2525
        %v2536 = vsel %vm1263, %v2516, %v2526
        %v2537 = vsel %vm1263, %v2517, %v2527
        %v2538 = vsel %vm1263, %v2518, %v2528
        %v2539 = vsel %vm1263, %v2519, %v2529
        %v2540 = vsel %vm1263, %v2520, %v2530
        %v2541 = vsel %vm1263, %v2521, %v2511
        %v2542 = vsel %vm1263, %v2522, %v2512
        %v2543 = vsel %vm1263, %v2523, %v2513
        %v2544 = vsel %vm1263, %v2524, %v2514
        %v2545 = vsel %vm1263, %v2525, %v2515
        %v2546 = vsel %vm1263, %v2526, %v2516
        %v2547 = vsel %vm1263, %v2527, %v2517
        %v2548 = vsel %vm1263, %v2528, %v2518
        %v2549 = vsel %vm1263, %v2529, %v2519
        %v2550 = vsel %vm1263, %v2530, %v2520
        %v2551 = vsel %vm1286, %v2541, 0.0
        %v2552 = vsel %vm1287, %v2531, 0.0
        %v2553 = vsel %vm1286, %v2542, 0.0
        %v2554 = vsel %vm1287, %v2532, 0.0
        %v2555 = vsel %vm1286, %v2543, 0.0
        %v2556 = vsel %vm1287, %v2533, 0.0
        %v2557 = vsel %vm1286, %v2544, 0.0
        %v2558 = vsel %vm1287, %v2534, 0.0
        %v2559 = vsel %vm1286, %v2545, 0.0
        %v2560 = vsel %vm1287, %v2535, 0.0
        %v2561 = vsel %vm1286, %v2546, 0.0
        %v2562 = vsel %vm1287, %v2536, 0.0
        %v2563 = vsel %vm1286, %v2547, 0.0
        %v2564 = vsel %vm1287, %v2537, 0.0
        %v2565 = vsel %vm1286, %v2548, 0.0
        %v2566 = vsel %vm1287, %v2538, 0.0
        %v2567 = vsel %vm1286, %v2549, 0.0
        %v2568 = vsel %vm1287, %v2539, 0.0
        %v2569 = vsel %vm1286, %v2550, 0.0
        %v2570 = vsel %vm1287, %v2540, 0.0
        %2591 = vrot.lane.b32.xlu0 %v2433, 120
        %v2592 = vpop.permute.xlu0 %2591
        %2593 = vrot.lane.b32.xlu0 %v2436, 120
        %v2594 = vpop.permute.xlu0 %2593
        %2595 = vrot.lane.b32.xlu0 %v2441, 120
        %v2596 = vpop.permute.xlu0 %2595
        %2597 = vrot.lane.b32.xlu0 %v2444, 120
        %v2598 = vpop.permute.xlu0 %2597
        %2599 = vrot.lane.b32.xlu0 %v2449, 120
        %v2600 = vpop.permute.xlu0 %2599
        %2601 = vrot.lane.b32.xlu0 %v2452, 120
        %v2602 = vpop.permute.xlu0 %2601
        %2603 = vrot.lane.b32.xlu0 %v2457, 120
        %v2604 = vpop.permute.xlu0 %2603
        %2605 = vrot.lane.b32.xlu0 %v2460, 120
        %v2606 = vpop.permute.xlu0 %2605
        %2607 = vrot.lane.b32.xlu0 %v2465, 120
        %v2608 = vpop.permute.xlu0 %2607
        %2609 = vrot.lane.b32.xlu0 %v2468, 120
        %v2610 = vpop.permute.xlu0 %2609
        %2611 = vrot.lane.b32.xlu0 %v2473, 120
        %v2612 = vpop.permute.xlu0 %2611
        %2613 = vrot.lane.b32.xlu0 %v2476, 120
        %v2614 = vpop.permute.xlu0 %2613
        %2615 = vrot.lane.b32.xlu0 %v2481, 120
        %v2616 = vpop.permute.xlu0 %2615
        %2617 = vrot.lane.b32.xlu0 %v2484, 120
        %v2618 = vpop.permute.xlu0 %2617
        %2619 = vrot.lane.b32.xlu0 %v2489, 120
        %v2620 = vpop.permute.xlu0 %2619
        %2621 = vrot.lane.b32.xlu0 %v2492, 120
        %v2622 = vpop.permute.xlu0 %2621
        %2623 = vrot.lane.b32.xlu0 %v2497, 120
        %v2624 = vpop.permute.xlu0 %2623
        %2625 = vrot.lane.b32.xlu0 %v2500, 120
        %v2626 = vpop.permute.xlu0 %2625
        %2627 = vrot.lane.b32.xlu0 %v2505, 120
        %v2628 = vpop.permute.xlu0 %2627
        %2629 = vrot.lane.b32.xlu0 %v2508, 120
        %v2630 = vpop.permute.xlu0 %2629
        %v2651 = vadd.f32 %v2551, %v2592
        %v2652 = vadd.f32 %v2552, %v2594
        %v2653 = vadd.f32 %v2553, %v2596
        %v2654 = vadd.f32 %v2554, %v2598
        %v2655 = vadd.f32 %v2555, %v2600
        %v2656 = vadd.f32 %v2556, %v2602
        %v2657 = vadd.f32 %v2557, %v2604
        %v2658 = vadd.f32 %v2558, %v2606
        %v2659 = vadd.f32 %v2559, %v2608
        %v2660 = vadd.f32 %v2560, %v2610
        %v2661 = vadd.f32 %v2561, %v2612
        %v2662 = vadd.f32 %v2562, %v2614
        %v2663 = vadd.f32 %v2563, %v2616
        %v2664 = vadd.f32 %v2564, %v2618
        %v2665 = vadd.f32 %v2565, %v2620
        %v2666 = vadd.f32 %v2566, %v2622
        %v2667 = vadd.f32 %v2567, %v2624
        %v2668 = vadd.f32 %v2568, %v2626
        %v2669 = vadd.f32 %v2569, %v2628
        %v2670 = vadd.f32 %v2570, %v2630
        %2671 = vrot.lane.b32.xlu0 %v2433, 112
        %v2672 = vpop.permute.xlu0 %2671
        %2673 = vrot.lane.b32.xlu0 %v2436, 112
        %v2674 = vpop.permute.xlu0 %2673
        %2675 = vrot.lane.b32.xlu0 %v2441, 112
        %v2676 = vpop.permute.xlu0 %2675
        %2677 = vrot.lane.b32.xlu0 %v2444, 112
        %v2678 = vpop.permute.xlu0 %2677
        %2679 = vrot.lane.b32.xlu0 %v2449, 112
        %v2680 = vpop.permute.xlu0 %2679
        %2681 = vrot.lane.b32.xlu0 %v2452, 112
        %v2682 = vpop.permute.xlu0 %2681
        %2683 = vrot.lane.b32.xlu0 %v2457, 112
        %v2684 = vpop.permute.xlu0 %2683
        %2685 = vrot.lane.b32.xlu0 %v2460, 112
        %v2686 = vpop.permute.xlu0 %2685
        %2687 = vrot.lane.b32.xlu0 %v2465, 112
        %v2688 = vpop.permute.xlu0 %2687
        %2689 = vrot.lane.b32.xlu0 %v2468, 112
        %v2690 = vpop.permute.xlu0 %2689
        %2691 = vrot.lane.b32.xlu0 %v2473, 112
        %v2692 = vpop.permute.xlu0 %2691
        %2693 = vrot.lane.b32.xlu0 %v2476, 112
        %v2694 = vpop.permute.xlu0 %2693
        %2695 = vrot.lane.b32.xlu0 %v2481, 112
        %v2696 = vpop.permute.xlu0 %2695
        %2697 = vrot.lane.b32.xlu0 %v2484, 112
        %v2698 = vpop.permute.xlu0 %2697
        %2699 = vrot.lane.b32.xlu0 %v2489, 112
        %v2700 = vpop.permute.xlu0 %2699
        %2701 = vrot.lane.b32.xlu0 %v2492, 112
        %v2702 = vpop.permute.xlu0 %2701
        %2703 = vrot.lane.b32.xlu0 %v2497, 112
        %v2704 = vpop.permute.xlu0 %2703
        %2705 = vrot.lane.b32.xlu0 %v2500, 112
        %v2706 = vpop.permute.xlu0 %2705
        %2707 = vrot.lane.b32.xlu0 %v2505, 112
        %v2708 = vpop.permute.xlu0 %2707
        %2709 = vrot.lane.b32.xlu0 %v2508, 112
        %v2710 = vpop.permute.xlu0 %2709
        %v2731 = vrot.slane %v2672, 6
        %v2732 = vrot.slane %v2676, 6
        %v2733 = vrot.slane %v2680, 6
        %v2734 = vrot.slane %v2684, 6
        %v2735 = vrot.slane %v2688, 6
        %v2736 = vrot.slane %v2692, 6
        %v2737 = vrot.slane %v2696, 6
        %v2738 = vrot.slane %v2700, 6
        %v2739 = vrot.slane %v2704, 6
        %v2740 = vrot.slane %v2708, 6
        %v2741 = vrot.slane %v2674, 6
        %v2742 = vrot.slane %v2678, 6
        %v2743 = vrot.slane %v2682, 6
        %v2744 = vrot.slane %v2686, 6
        %v2745 = vrot.slane %v2690, 6
        %v2746 = vrot.slane %v2694, 6
        %v2747 = vrot.slane %v2698, 6
        %v2748 = vrot.slane %v2702, 6
        %v2749 = vrot.slane %v2706, 6
        %v2750 = vrot.slane %v2710, 6
        %v2751 = vsel %vm1488, %v2731, %v2741
        %v2752 = vsel %vm1488, %v2732, %v2742
        %v2753 = vsel %vm1488, %v2733, %v2743
        %v2754 = vsel %vm1488, %v2734, %v2744
        %v2755 = vsel %vm1488, %v2735, %v2745
        %v2756 = vsel %vm1488, %v2736, %v2746
        %v2757 = vsel %vm1488, %v2737, %v2747
        %v2758 = vsel %vm1488, %v2738, %v2748
        %v2759 = vsel %vm1488, %v2739, %v2749
        %v2760 = vsel %vm1488, %v2740, %v2750
        %v2761 = vsel %vm1488, %v2741, %v2731
        %v2762 = vsel %vm1488, %v2742, %v2732
        %v2763 = vsel %vm1488, %v2743, %v2733
        %v2764 = vsel %vm1488, %v2744, %v2734
        %v2765 = vsel %vm1488, %v2745, %v2735
        %v2766 = vsel %vm1488, %v2746, %v2736
        %v2767 = vsel %vm1488, %v2747, %v2737
        %v2768 = vsel %vm1488, %v2748, %v2738
        %v2769 = vsel %vm1488, %v2749, %v2739
        %v2770 = vsel %vm1488, %v2750, %v2740
        %v2771 = vsel %vm1511, %v2751, 0.0
        %v2772 = vsel %vm1512, %v2761, 0.0
        %v2773 = vsel %vm1511, %v2752, 0.0
        %v2774 = vsel %vm1512, %v2762, 0.0
        %v2775 = vsel %vm1511, %v2753, 0.0
        %v2776 = vsel %vm1512, %v2763, 0.0
        %v2777 = vsel %vm1511, %v2754, 0.0
        %v2778 = vsel %vm1512, %v2764, 0.0
        %v2779 = vsel %vm1511, %v2755, 0.0
        %v2780 = vsel %vm1512, %v2765, 0.0
        %v2781 = vsel %vm1511, %v2756, 0.0
        %v2782 = vsel %vm1512, %v2766, 0.0
        %v2783 = vsel %vm1511, %v2757, 0.0
        %v2784 = vsel %vm1512, %v2767, 0.0
        %v2785 = vsel %vm1511, %v2758, 0.0
        %v2786 = vsel %vm1512, %v2768, 0.0
        %v2787 = vsel %vm1511, %v2759, 0.0
        %v2788 = vsel %vm1512, %v2769, 0.0
        %v2789 = vsel %vm1511, %v2760, 0.0
        %v2790 = vsel %vm1512, %v2770, 0.0
        %v2791 = vadd.f32 %v2651, %v2771
        %v2792 = vadd.f32 %v2652, %v2772
        %v2793 = vadd.f32 %v2653, %v2773
        %v2794 = vadd.f32 %v2654, %v2774
        %v2795 = vadd.f32 %v2655, %v2775
        %v2796 = vadd.f32 %v2656, %v2776
        %v2797 = vadd.f32 %v2657, %v2777
        %v2798 = vadd.f32 %v2658, %v2778
        %v2799 = vadd.f32 %v2659, %v2779
        %v2800 = vadd.f32 %v2660, %v2780
        %v2801 = vadd.f32 %v2661, %v2781
        %v2802 = vadd.f32 %v2662, %v2782
        %v2803 = vadd.f32 %v2663, %v2783
        %v2804 = vadd.f32 %v2664, %v2784
        %v2805 = vadd.f32 %v2665, %v2785
        %v2806 = vadd.f32 %v2666, %v2786
        %v2807 = vadd.f32 %v2667, %v2787
        %v2808 = vadd.f32 %v2668, %v2788
        %v2809 = vadd.f32 %v2669, %v2789
        %v2810 = vadd.f32 %v2670, %v2790
        %v2811 = vld [vmem:[%s2260] sm:$0xff]
        %v2812 = vld [vmem:[%s2260 + $0x8] sm:$0xff]
        %v2813 = vld [vmem:[%s2260 + $0x10] sm:$0xff]
        %v2814 = vld [vmem:[%s2260 + $0x18] sm:$0xff]
        %v2815 = vld [vmem:[%s2260 + $0x20] sm:$0xff]
        %v2816 = vld [vmem:[%s2260 + $0x28] sm:$0xff]
        %v2817 = vld [vmem:[%s2260 + $0x30] sm:$0xff]
        %v2818 = vld [vmem:[%s2260 + $0x38] sm:$0xff]
        %v2819 = vld [vmem:[%s2260 + $0x40] sm:$0xff]
        %v2820 = vld [vmem:[%s2260 + $0x48] sm:$0xff]
        %v2821 = vld [vmem:[%s2260 + $0x50] sm:$0xff]
        %v2822 = vld [vmem:[%s2260 + $0x58] sm:$0xff]
        %v2823 = vld [vmem:[%s2260 + $0x60] sm:$0xff]
        %v2824 = vld [vmem:[%s2260 + $0x68] sm:$0xff]
        %v2825 = vld [vmem:[%s2260 + $0x70] sm:$0xff]
        %v2826 = vld [vmem:[%s2260 + $0x78] sm:$0xff]
        %v2827 = vld [vmem:[%s2260 + $0x80] sm:$0xff]
        %v2828 = vld [vmem:[%s2260 + $0x88] sm:$0xff]
        %v2829 = vld [vmem:[%s2260 + $0x90] sm:$0xff]
        %v2830 = vld [vmem:[%s2260 + $0x98] sm:$0xff]
        %v2831 = vadd.f32 %v2811, %v2791
        %v2832 = vadd.f32 %v2812, %v2792
        %v2833 = vadd.f32 %v2813, %v2793
        %v2834 = vadd.f32 %v2814, %v2794
        %v2835 = vadd.f32 %v2815, %v2795
        %v2836 = vadd.f32 %v2816, %v2796
        %v2837 = vadd.f32 %v2817, %v2797
        %v2838 = vadd.f32 %v2818, %v2798
        %v2839 = vadd.f32 %v2819, %v2799
        %v2840 = vadd.f32 %v2820, %v2800
        %v2841 = vadd.f32 %v2821, %v2801
        %v2842 = vadd.f32 %v2822, %v2802
        %v2843 = vadd.f32 %v2823, %v2803
        %v2844 = vadd.f32 %v2824, %v2804
        %v2845 = vadd.f32 %v2825, %v2805
        %v2846 = vadd.f32 %v2826, %v2806
        %v2847 = vadd.f32 %v2827, %v2807
        %v2848 = vadd.f32 %v2828, %v2808
        %v2849 = vadd.f32 %v2829, %v2809
        %v2850 = vadd.f32 %v2830, %v2810
        %2851 = vst.msk [vmem:[%s2260] sm:$0xff] %vm1034, %v2831
        %2852 = vst.msk [vmem:[%s2260 + $0x8] sm:$0xff] %vm1034, %v2832
        %2853 = vst.msk [vmem:[%s2260 + $0x10] sm:$0xff] %vm1034, %v2833
        %2854 = vst.msk [vmem:[%s2260 + $0x18] sm:$0xff] %vm1034, %v2834
        %2855 = vst.msk [vmem:[%s2260 + $0x20] sm:$0xff] %vm1034, %v2835
        %2856 = vst.msk [vmem:[%s2260 + $0x28] sm:$0xff] %vm1034, %v2836
        %2857 = vst.msk [vmem:[%s2260 + $0x30] sm:$0xff] %vm1034, %v2837
        %2858 = vst.msk [vmem:[%s2260 + $0x38] sm:$0xff] %vm1034, %v2838
        %2859 = vst.msk [vmem:[%s2260 + $0x40] sm:$0xff] %vm1034, %v2839
        %2860 = vst.msk [vmem:[%s2260 + $0x48] sm:$0xff] %vm1034, %v2840
        %2861 = vst.msk [vmem:[%s2260 + $0x50] sm:$0xff] %vm1034, %v2841
        %2862 = vst.msk [vmem:[%s2260 + $0x58] sm:$0xff] %vm1034, %v2842
        %2863 = vst.msk [vmem:[%s2260 + $0x60] sm:$0xff] %vm1034, %v2843
        %2864 = vst.msk [vmem:[%s2260 + $0x68] sm:$0xff] %vm1034, %v2844
        %2865 = vst.msk [vmem:[%s2260 + $0x70] sm:$0xff] %vm1034, %v2845
        %2866 = vst.msk [vmem:[%s2260 + $0x78] sm:$0xff] %vm1034, %v2846
        %2867 = vst.msk [vmem:[%s2260 + $0x80] sm:$0xff] %vm1034, %v2847
        %2868 = vst.msk [vmem:[%s2260 + $0x88] sm:$0xff] %vm1034, %v2848
        %2869 = vst.msk [vmem:[%s2260 + $0x90] sm:$0xff] %vm1034, %v2849
        %2870 = vst.msk [vmem:[%s2260 + $0x98] sm:$0xff] %vm1034, %v2850
        %s2871 = scalar_lea.vmem %s319, 6
        %v2872 = vld [vmem:[%s2871] sm:$0x3]
        %v2874 = vsel %vm805, %v2872, 0
        %2876 = vmatprep.subr.bf16.mxu0 0
        %2877 = vmatpush1.bf16.msra.mxu0 %v2874
        %2878 = vmatprep.subr.bf16.mxu0 0
        %2879 = vmatpush1.bf16.msra.mxu0 0
        %2880 = vmatprep.subr.bf16.mxu0 0
        %2881 = vmatpush1.bf16.msra.mxu0 0
        %2882 = vmatprep.subr.bf16.mxu0 0
        %2883 = vmatpush1.bf16.msra.mxu0 0
        %2884 = vmatprep.subr.bf16.mxu0 0
        %2885 = vmatpush1.bf16.msra.mxu0 0
        %2886 = vmatprep.subr.bf16.mxu0 0
        %2887 = vmatpush1.bf16.msra.mxu0 0
        %2888 = vmatprep.subr.bf16.mxu0 0
        %2889 = vmatpush1.bf16.msra.mxu0 0
        %2890 = vmatprep.subr.bf16.mxu0 0
        %2891 = vmatpush1.bf16.msra.mxu0 0
        %2892 = vmatprep.subr.bf16.mxu0 0
        %2893 = vmatpush1.bf16.msra.mxu0 0
        %2894 = vmatprep.subr.bf16.mxu0 0
        %2895 = vmatpush1.bf16.msra.mxu0 0
        %2896 = vmatprep.subr.bf16.mxu0 0
        %2897 = vmatpush1.bf16.msra.mxu0 0
        %2898 = vmatprep.subr.bf16.mxu0 0
        %2899 = vmatpush1.bf16.msra.mxu0 0
        %2900 = vmatprep.subr.bf16.mxu0 0
        %2901 = vmatpush1.bf16.msra.mxu0 0
        %2902 = vmatprep.subr.bf16.mxu0 0
        %2903 = vmatpush1.bf16.msra.mxu0 0
        %2904 = vmatprep.subr.bf16.mxu0 0
        %2905 = vmatpush1.bf16.msra.mxu0 0
        %2906 = vmatprep.subr.bf16.mxu0 0
        %2907 = vmatpush1.bf16.msra.mxu0 0
        %2908 = vmatprep.mubr.bf16.mxu0 0
        %2909 = vmatmul.mubr.bf16.gmra.mrb[0].mxu0 %v758
        %v2910 = vpop.f32.mrb[0].mxu0
        %v2911 = vadd.f32 0.0, %v2910
        %v2912 = vpop.f32.mrb[0].mxu0
        %v2913 = vpop.f32.mrb[0].mxu0
        %v2914 = vadd.f32 0.0, %v2913
        %v2915 = vpop.f32.mrb[0].mxu0
        %2916 = vmatprep.mubr.bf16.mxu0 0
        %2917 = vmatmul.mubr.bf16.gmra.mrb[0].mxu0 %v761
        %v2918 = vpop.f32.mrb[0].mxu0
        %v2919 = vadd.f32 0.0, %v2918
        %v2920 = vpop.f32.mrb[0].mxu0
        %v2921 = vpop.f32.mrb[0].mxu0
        %v2922 = vadd.f32 0.0, %v2921
        %v2923 = vpop.f32.mrb[0].mxu0
        %2924 = vmatprep.mubr.bf16.mxu0 0
        %2925 = vmatmul.mubr.bf16.gmra.mrb[0].mxu0 %v764
        %v2926 = vpop.f32.mrb[0].mxu0
        %v2927 = vadd.f32 0.0, %v2926
        %v2928 = vpop.f32.mrb[0].mxu0
        %v2929 = vpop.f32.mrb[0].mxu0
        %v2930 = vadd.f32 0.0, %v2929
        %v2931 = vpop.f32.mrb[0].mxu0
        %2932 = vmatprep.mubr.bf16.mxu0 0
        %2933 = vmatmul.mubr.bf16.gmra.mrb[0].mxu0 %v767
        %v2934 = vpop.f32.mrb[0].mxu0
        %v2935 = vadd.f32 0.0, %v2934
        %v2936 = vpop.f32.mrb[0].mxu0
        %v2937 = vpop.f32.mrb[0].mxu0
        %v2938 = vadd.f32 0.0, %v2937
        %v2939 = vpop.f32.mrb[0].mxu0
        %2940 = vmatprep.mubr.bf16.mxu0 0
        %2941 = vmatmul.mubr.bf16.gmra.mrb[0].mxu0 %v770
        %v2942 = vpop.f32.mrb[0].mxu0
        %v2943 = vpop.f32.mrb[0].mxu0
        %v2944 = vpop.f32.mrb[0].mxu0
        %v2945 = vpop.f32.mrb[0].mxu0
        %2946 = vmatprep.mubr.bf16.mxu0 0
        %2947 = vmatmul.mubr.bf16.gmra.mrb[0].mxu0 %v773
        %v2948 = vpop.f32.mrb[0].mxu0
        %v2949 = vpop.f32.mrb[0].mxu0
        %v2950 = vpop.f32.mrb[0].mxu0
        %v2951 = vpop.f32.mrb[0].mxu0
        %2952 = vmatprep.mubr.bf16.mxu0 0
        %2953 = vmatmul.mubr.bf16.gmra.mrb[0].mxu0 %v776
        %v2954 = vpop.f32.mrb[0].mxu0
        %v2955 = vpop.f32.mrb[0].mxu0
        %v2956 = vpop.f32.mrb[0].mxu0
        %v2957 = vpop.f32.mrb[0].mxu0
        %2958 = vmatprep.mubr.bf16.mxu0 0
        %2959 = vmatmul.mubr.bf16.gmra.mrb[0].mxu0 %v779
        %v2960 = vpop.f32.mrb[0].mxu0
        %v2961 = vpop.f32.mrb[0].mxu0
        %v2962 = vpop.f32.mrb[0].mxu0
        %v2963 = vpop.f32.mrb[0].mxu0
        %2964 = vmatprep.mubr.bf16.mxu0 0
        %2965 = vmatmul.mubr.bf16.gmra.mrb[0].mxu0 %v782
        %v2966 = vpop.f32.mrb[0].mxu0
        %v2967 = vpop.f32.mrb[0].mxu0
        %v2968 = vpop.f32.mrb[0].mxu0
        %v2969 = vpop.f32.mrb[0].mxu0
        %2970 = vmatprep.mubr.bf16.mxu0 0
        %2971 = vmatmul.mubr.bf16.gmra.mrb[0].mxu0 %v785
        %v2972 = vpop.f32.mrb[0].mxu0
        %v2973 = vpop.f32.mrb[0].mxu0
        %v2974 = vpop.f32.mrb[0].mxu0
        %v2975 = vpop.f32.mrb[0].mxu0
        %2976 = vmatprep.mubr.bf16.mxu0 0
        %2977 = vmatmul.mubr.bf16.gmra.mrb[0].mxu0 %v788
        %v2978 = vpop.f32.mrb[0].mxu0
        %v2979 = vpop.f32.mrb[0].mxu0
        %v2980 = vpop.f32.mrb[0].mxu0
        %v2981 = vpop.f32.mrb[0].mxu0
        %2982 = vmatprep.mubr.bf16.mxu0 0
        %2983 = vmatmul.mubr.bf16.gmra.mrb[0].mxu0 %v791
        %v2984 = vpop.f32.mrb[0].mxu0
        %v2985 = vpop.f32.mrb[0].mxu0
        %v2986 = vpop.f32.mrb[0].mxu0
        %v2987 = vpop.f32.mrb[0].mxu0
        %2988 = vmatprep.mubr.bf16.mxu0 0
        %2989 = vmatmul.mubr.bf16.gmra.mrb[0].mxu0 %v794
        %v2990 = vpop.f32.mrb[0].mxu0
        %v2991 = vpop.f32.mrb[0].mxu0
        %v2992 = vpop.f32.mrb[0].mxu0
        %v2993 = vpop.f32.mrb[0].mxu0
        %2994 = vmatprep.mubr.bf16.mxu0 0
        %2995 = vmatmul.mubr.bf16.gmra.mrb[0].mxu0 %v797
        %v2996 = vpop.f32.mrb[0].mxu0
        %v2997 = vpop.f32.mrb[0].mxu0
        %v2998 = vpop.f32.mrb[0].mxu0
        %v2999 = vpop.f32.mrb[0].mxu0
        %3000 = vmatprep.mubr.bf16.mxu0 0
        %3001 = vmatmul.mubr.bf16.gmra.mrb[0].mxu0 %v800
        %v3002 = vpop.f32.mrb[0].mxu0
        %v3003 = vpop.f32.mrb[0].mxu0
        %v3004 = vpop.f32.mrb[0].mxu0
        %v3005 = vpop.f32.mrb[0].mxu0
        %3006 = vmatprep.mubr.bf16.mxu0 0
        %3007 = vmatmul.mubr.bf16.gmra.mrb[0].mxu0 %v803
        %v3008 = vpop.f32.mrb[0].mxu0
        %v3009 = vpop.f32.mrb[0].mxu0
        %v3010 = vpop.f32.mrb[0].mxu0
        %v3011 = vpop.f32.mrb[0].mxu0
        %3012 = vdwg.mxu0
        %v3013 = vrot.slane %v2911, 4
        %v3014 = vrot.slane %v2919, 4
        %v3015 = vrot.slane %v2927, 4
        %v3016 = vrot.slane %v2935, 4
        %v3017 = vrot.slane %v2914, 4
        %v3018 = vrot.slane %v2922, 4
        %v3019 = vrot.slane %v2930, 4
        %v3020 = vrot.slane %v2938, 4
        %v3021 = vsel %vm1086, %v3013, %v3017
        %v3022 = vsel %vm1086, %v3014, %v3018
        %v3023 = vsel %vm1086, %v3015, %v3019
        %v3024 = vsel %vm1086, %v3016, %v3020
        %v3025 = vsel %vm1086, %v3017, %v3013
        %v3026 = vsel %vm1086, %v3018, %v3014
        %v3027 = vsel %vm1086, %v3019, %v3015
        %v3028 = vsel %vm1086, %v3020, %v3016
        %v3029 = vsel %vm1084, 1, 0
        %v3030 = vsel %vm1085, 1, 0
        %vm3031 = vcmp.eq.s32.totalorder %v3029, 1
        %vm3032 = vcmp.eq.s32.totalorder %v3030, 1
        %v3033 = vsel %vm3031, %v3021, 0.0
        %v3034 = vsel %vm3032, %v3025, 0.0
        %v3035 = vsel %vm3031, %v3022, 0.0
        %v3036 = vsel %vm3032, %v3026, 0.0
        %v3037 = vsel %vm3031, %v3023, 0.0
        %v3038 = vsel %vm3032, %v3027, 0.0
        %v3039 = vsel %vm3031, %v3024, 0.0
        %v3040 = vsel %vm3032, %v3028, 0.0
        %3049 = vrot.lane.b32.xlu0 %v2911, 120
        %v3050 = vpop.permute.xlu0 %3049
        %3051 = vrot.lane.b32.xlu0 %v2914, 120
        %v3052 = vpop.permute.xlu0 %3051
        %3053 = vrot.lane.b32.xlu0 %v2919, 120
        %v3054 = vpop.permute.xlu0 %3053
        %3055 = vrot.lane.b32.xlu0 %v2922, 120
        %v3056 = vpop.permute.xlu0 %3055
        %3057 = vrot.lane.b32.xlu0 %v2927, 120
        %v3058 = vpop.permute.xlu0 %3057
        %3059 = vrot.lane.b32.xlu0 %v2930, 120
        %v3060 = vpop.permute.xlu0 %3059
        %3061 = vrot.lane.b32.xlu0 %v2935, 120
        %v3062 = vpop.permute.xlu0 %3061
        %3063 = vrot.lane.b32.xlu0 %v2938, 120
        %v3064 = vpop.permute.xlu0 %3063
        %v3073 = vadd.f32 %v3033, %v3050
        %v3074 = vadd.f32 %v3034, %v3052
        %v3075 = vadd.f32 %v3035, %v3054
        %v3076 = vadd.f32 %v3036, %v3056
        %v3077 = vadd.f32 %v3037, %v3058
        %v3078 = vadd.f32 %v3038, %v3060
        %v3079 = vadd.f32 %v3039, %v3062
        %v3080 = vadd.f32 %v3040, %v3064
        %3081 = vrot.lane.b32.xlu0 %v2911, 112
        %v3082 = vpop.permute.xlu0 %3081
        %3083 = vrot.lane.b32.xlu0 %v2914, 112
        %v3084 = vpop.permute.xlu0 %3083
        %3085 = vrot.lane.b32.xlu0 %v2919, 112
        %v3086 = vpop.permute.xlu0 %3085
        %3087 = vrot.lane.b32.xlu0 %v2922, 112
        %v3088 = vpop.permute.xlu0 %3087
        %3089 = vrot.lane.b32.xlu0 %v2927, 112
        %v3090 = vpop.permute.xlu0 %3089
        %3091 = vrot.lane.b32.xlu0 %v2930, 112
        %v3092 = vpop.permute.xlu0 %3091
        %3093 = vrot.lane.b32.xlu0 %v2935, 112
        %v3094 = vpop.permute.xlu0 %3093
        %3095 = vrot.lane.b32.xlu0 %v2938, 112
        %v3096 = vpop.permute.xlu0 %3095
        %v3105 = vrot.slane %v3082, 4
        %v3106 = vrot.slane %v3086, 4
        %v3107 = vrot.slane %v3090, 4
        %v3108 = vrot.slane %v3094, 4
        %v3109 = vrot.slane %v3084, 4
        %v3110 = vrot.slane %v3088, 4
        %v3111 = vrot.slane %v3092, 4
        %v3112 = vrot.slane %v3096, 4
        %v3113 = vsel %vm1086, %v3105, %v3109
        %v3114 = vsel %vm1086, %v3106, %v3110
        %v3115 = vsel %vm1086, %v3107, %v3111
        %v3116 = vsel %vm1086, %v3108, %v3112
        %v3117 = vsel %vm1086, %v3109, %v3105
        %v3118 = vsel %vm1086, %v3110, %v3106
        %v3119 = vsel %vm1086, %v3111, %v3107
        %v3120 = vsel %vm1086, %v3112, %v3108
        %v3121 = vsel %vm1088, 1, 0
        %v3122 = vsel %vm1089, 1, 0
        %vm3123 = vcmp.eq.s32.totalorder %v3121, 1
        %vm3124 = vcmp.eq.s32.totalorder %v3122, 1
        %v3125 = vsel %vm3123, %v3117, 0.0
        %v3126 = vsel %vm3124, %v3113, 0.0
        %v3127 = vsel %vm3123, %v3118, 0.0
        %v3128 = vsel %vm3124, %v3114, 0.0
        %v3129 = vsel %vm3123, %v3119, 0.0
        %v3130 = vsel %vm3124, %v3115, 0.0
        %v3131 = vsel %vm3123, %v3120, 0.0
        %v3132 = vsel %vm3124, %v3116, 0.0
        %v3133 = vadd.f32 %v3073, %v3125
        %v3134 = vadd.f32 %v3074, %v3126
        %v3135 = vadd.f32 %v3075, %v3127
        %v3136 = vadd.f32 %v3076, %v3128
        %v3137 = vadd.f32 %v3077, %v3129
        %v3138 = vadd.f32 %v3078, %v3130
        %v3139 = vadd.f32 %v3079, %v3131
        %v3140 = vadd.f32 %v3080, %v3132
        %s3141 = scalar_lea.vmem [#allocation3], 704
        %v3142 = vld [vmem:[%s3141] sm:$0xff]
        %v3143 = vld [vmem:[%s3141 + $0x8] sm:$0xff]
        %v3144 = vld [vmem:[%s3141 + $0x10] sm:$0xff]
        %v3145 = vld [vmem:[%s3141 + $0x18] sm:$0xff]
        %v3146 = vld [vmem:[%s3141 + $0x20] sm:$0xff]
        %v3147 = vld [vmem:[%s3141 + $0x28] sm:$0xff]
        %v3148 = vld [vmem:[%s3141 + $0x30] sm:$0xff]
        %v3149 = vld [vmem:[%s3141 + $0x38] sm:$0xff]
        %v3150 = vadd.f32 %v3142, %v3133
        %v3151 = vadd.f32 %v3143, %v3134
        %v3152 = vadd.f32 %v3144, %v3135
        %v3153 = vadd.f32 %v3145, %v3136
        %v3154 = vadd.f32 %v3146, %v3137
        %v3155 = vadd.f32 %v3147, %v3138
        %v3156 = vadd.f32 %v3148, %v3139
        %v3157 = vadd.f32 %v3149, %v3140
        %3158 = vst.msk [vmem:[%s3141] sm:$0xff] %vm1034, %v3150
        %3159 = vst.msk [vmem:[%s3141 + $0x8] sm:$0xff] %vm1034, %v3151
        %3160 = vst.msk [vmem:[%s3141 + $0x10] sm:$0xff] %vm1034, %v3152
        %3161 = vst.msk [vmem:[%s3141 + $0x18] sm:$0xff] %vm1034, %v3153
        %3162 = vst.msk [vmem:[%s3141 + $0x20] sm:$0xff] %vm1034, %v3154
        %3163 = vst.msk [vmem:[%s3141 + $0x28] sm:$0xff] %vm1034, %v3155
        %3164 = vst.msk [vmem:[%s3141 + $0x30] sm:$0xff] %vm1034, %v3156
        %3165 = vst.msk [vmem:[%s3141 + $0x38] sm:$0xff] %vm1034, %v3157
        %s3166 = scalar_lea.vmem %s319, 8
        %v3167 = vld [vmem:[%s3166] sm:$0x3]
        %v3169 = vsel %vm805, %v3167, 0
        %3171 = vmatprep.subr.bf16.mxu0 0
        %3172 = vmatpush1.bf16.msra.mxu0 %v3169
        %3173 = vmatprep.subr.bf16.mxu0 0
        %3174 = vmatpush1.bf16.msra.mxu0 0
        %3175 = vmatprep.subr.bf16.mxu0 0
        %3176 = vmatpush1.bf16.msra.mxu0 0
        %3177 = vmatprep.subr.bf16.mxu0 0
        %3178 = vmatpush1.bf16.msra.mxu0 0
        %3179 = vmatprep.subr.bf16.mxu0 0
        %3180 = vmatpush1.bf16.msra.mxu0 0
        %3181 = vmatprep.subr.bf16.mxu0 0
        %3182 = vmatpush1.bf16.msra.mxu0 0
        %3183 = vmatprep.subr.bf16.mxu0 0
        %3184 = vmatpush1.bf16.msra.mxu0 0
        %3185 = vmatprep.subr.bf16.mxu0 0
        %3186 = vmatpush1.bf16.msra.mxu0 0
        %3187 = vmatprep.subr.bf16.mxu0 0
        %3188 = vmatpush1.bf16.msra.mxu0 0
        %3189 = vmatprep.subr.bf16.mxu0 0
        %3190 = vmatpush1.bf16.msra.mxu0 0
        %3191 = vmatprep.subr.bf16.mxu0 0
        %3192 = vmatpush1.bf16.msra.mxu0 0
        %3193 = vmatprep.subr.bf16.mxu0 0
        %3194 = vmatpush1.bf16.msra.mxu0 0
        %3195 = vmatprep.subr.bf16.mxu0 0
        %3196 = vmatpush1.bf16.msra.mxu0 0
        %3197 = vmatprep.subr.bf16.mxu0 0
        %3198 = vmatpush1.bf16.msra.mxu0 0
        %3199 = vmatprep.subr.bf16.mxu0 0
        %3200 = vmatpush1.bf16.msra.mxu0 0
        %3201 = vmatprep.subr.bf16.mxu0 0
        %3202 = vmatpush1.bf16.msra.mxu0 0
        %3203 = vmatprep.mubr.bf16.mxu0 0
        %3204 = vmatmul.mubr.bf16.gmra.mrb[0].mxu0 %v758
        %v3205 = vpop.f32.mrb[0].mxu0
        %v3206 = vadd.f32 0.0, %v3205
        %v3207 = vpop.f32.mrb[0].mxu0
        %v3208 = vpop.f32.mrb[0].mxu0
        %v3209 = vadd.f32 0.0, %v3208
        %v3210 = vpop.f32.mrb[0].mxu0
        %3211 = vmatprep.mubr.bf16.mxu0 0
        %3212 = vmatmul.mubr.bf16.gmra.mrb[0].mxu0 %v761
        %v3213 = vpop.f32.mrb[0].mxu0
        %v3214 = vadd.f32 0.0, %v3213
        %v3215 = vpop.f32.mrb[0].mxu0
        %v3216 = vpop.f32.mrb[0].mxu0
        %v3217 = vadd.f32 0.0, %v3216
        %v3218 = vpop.f32.mrb[0].mxu0
        %3219 = vmatprep.mubr.bf16.mxu0 0
        %3220 = vmatmul.mubr.bf16.gmra.mrb[0].mxu0 %v764
        %v3221 = vpop.f32.mrb[0].mxu0
        %v3222 = vadd.f32 0.0, %v3221
        %v3223 = vpop.f32.mrb[0].mxu0
        %v3224 = vpop.f32.mrb[0].mxu0
        %v3225 = vadd.f32 0.0, %v3224
        %v3226 = vpop.f32.mrb[0].mxu0
        %3227 = vmatprep.mubr.bf16.mxu0 0
        %3228 = vmatmul.mubr.bf16.gmra.mrb[0].mxu0 %v767
        %v3229 = vpop.f32.mrb[0].mxu0
        %v3230 = vadd.f32 0.0, %v3229
        %v3231 = vpop.f32.mrb[0].mxu0
        %v3232 = vpop.f32.mrb[0].mxu0
        %v3233 = vadd.f32 0.0, %v3232
        %v3234 = vpop.f32.mrb[0].mxu0
        %3235 = vmatprep.mubr.bf16.mxu0 0
        %3236 = vmatmul.mubr.bf16.gmra.mrb[0].mxu0 %v770
        %v3237 = vpop.f32.mrb[0].mxu0
        %v3238 = vadd.f32 0.0, %v3237
        %v3239 = vpop.f32.mrb[0].mxu0
        %v3240 = vpop.f32.mrb[0].mxu0
        %v3241 = vadd.f32 0.0, %v3240
        %v3242 = vpop.f32.mrb[0].mxu0
        %3243 = vmatprep.mubr.bf16.mxu0 0
        %3244 = vmatmul.mubr.bf16.gmra.mrb[0].mxu0 %v773
        %v3245 = vpop.f32.mrb[0].mxu0
        %v3246 = vadd.f32 0.0, %v3245
        %v3247 = vpop.f32.mrb[0].mxu0
        %v3248 = vpop.f32.mrb[0].mxu0
        %v3249 = vadd.f32 0.0, %v3248
        %v3250 = vpop.f32.mrb[0].mxu0
        %3251 = vmatprep.mubr.bf16.mxu0 0
        %3252 = vmatmul.mubr.bf16.gmra.mrb[0].mxu0 %v776
        %v3253 = vpop.f32.mrb[0].mxu0
        %v3254 = vadd.f32 0.0, %v3253
        %v3255 = vpop.f32.mrb[0].mxu0
        %v3256 = vpop.f32.mrb[0].mxu0
        %v3257 = vadd.f32 0.0, %v3256
        %v3258 = vpop.f32.mrb[0].mxu0
        %3259 = vmatprep.mubr.bf16.mxu0 0
        %3260 = vmatmul.mubr.bf16.gmra.mrb[0].mxu0 %v779
        %v3261 = vpop.f32.mrb[0].mxu0
        %v3262 = vadd.f32 0.0, %v3261
        %v3263 = vpop.f32.mrb[0].mxu0
        %v3264 = vpop.f32.mrb[0].mxu0
        %v3265 = vadd.f32 0.0, %v3264
        %v3266 = vpop.f32.mrb[0].mxu0
        %3267 = vmatprep.mubr.bf16.mxu0 0
        %3268 = vmatmul.mubr.bf16.gmra.mrb[0].mxu0 %v782
        %v3269 = vpop.f32.mrb[0].mxu0
        %v3270 = vadd.f32 0.0, %v3269
        %v3271 = vpop.f32.mrb[0].mxu0
        %v3272 = vpop.f32.mrb[0].mxu0
        %v3273 = vadd.f32 0.0, %v3272
        %v3274 = vpop.f32.mrb[0].mxu0
        %3275 = vmatprep.mubr.bf16.mxu0 0
        %3276 = vmatmul.mubr.bf16.gmra.mrb[0].mxu0 %v785
        %v3277 = vpop.f32.mrb[0].mxu0
        %v3278 = vadd.f32 0.0, %v3277
        %v3279 = vpop.f32.mrb[0].mxu0
        %v3280 = vpop.f32.mrb[0].mxu0
        %v3281 = vadd.f32 0.0, %v3280
        %v3282 = vpop.f32.mrb[0].mxu0
        %3283 = vmatprep.mubr.bf16.mxu0 0
        %3284 = vmatmul.mubr.bf16.gmra.mrb[0].mxu0 %v788
        %v3285 = vpop.f32.mrb[0].mxu0
        %v3286 = vadd.f32 0.0, %v3285
        %v3287 = vpop.f32.mrb[0].mxu0
        %v3288 = vpop.f32.mrb[0].mxu0
        %v3289 = vadd.f32 0.0, %v3288
        %v3290 = vpop.f32.mrb[0].mxu0
        %3291 = vmatprep.mubr.bf16.mxu0 0
        %3292 = vmatmul.mubr.bf16.gmra.mrb[0].mxu0 %v791
        %v3293 = vpop.f32.mrb[0].mxu0
        %v3294 = vadd.f32 0.0, %v3293
        %v3295 = vpop.f32.mrb[0].mxu0
        %v3296 = vpop.f32.mrb[0].mxu0
        %v3297 = vadd.f32 0.0, %v3296
        %v3298 = vpop.f32.mrb[0].mxu0
        %3299 = vmatprep.mubr.bf16.mxu0 0
        %3300 = vmatmul.mubr.bf16.gmra.mrb[0].mxu0 %v794
        %v3301 = vpop.f32.mrb[0].mxu0
        %v3302 = vadd.f32 0.0, %v3301
        %v3303 = vpop.f32.mrb[0].mxu0
        %v3304 = vpop.f32.mrb[0].mxu0
        %v3305 = vadd.f32 0.0, %v3304
        %v3306 = vpop.f32.mrb[0].mxu0
        %3307 = vmatprep.mubr.bf16.mxu0 0
        %3308 = vmatmul.mubr.bf16.gmra.mrb[0].mxu0 %v797
        %v3309 = vpop.f32.mrb[0].mxu0
        %v3310 = vadd.f32 0.0, %v3309
        %v3311 = vpop.f32.mrb[0].mxu0
        %v3312 = vpop.f32.mrb[0].mxu0
        %v3313 = vadd.f32 0.0, %v3312
        %v3314 = vpop.f32.mrb[0].mxu0
        %3315 = vmatprep.mubr.bf16.mxu0 0
        %3316 = vmatmul.mubr.bf16.gmra.mrb[0].mxu0 %v800
        %v3317 = vpop.f32.mrb[0].mxu0
        %v3318 = vadd.f32 0.0, %v3317
        %v3319 = vpop.f32.mrb[0].mxu0
        %v3320 = vpop.f32.mrb[0].mxu0
        %v3321 = vadd.f32 0.0, %v3320
        %v3322 = vpop.f32.mrb[0].mxu0
        %3323 = vmatprep.mubr.bf16.mxu0 0
        %3324 = vmatmul.mubr.bf16.gmra.mrb[0].mxu0 %v803
        %v3325 = vpop.f32.mrb[0].mxu0
        %v3326 = vadd.f32 0.0, %v3325
        %v3327 = vpop.f32.mrb[0].mxu0
        %v3328 = vpop.f32.mrb[0].mxu0
        %v3329 = vadd.f32 0.0, %v3328
        %v3330 = vpop.f32.mrb[0].mxu0
        %3331 = vdwg.mxu0
        %v3332 = vrot.slane %v3206, 4
        %v3333 = vrot.slane %v3214, 4
        %v3334 = vrot.slane %v3222, 4
        %v3335 = vrot.slane %v3230, 4
        %v3336 = vrot.slane %v3238, 4
        %v3337 = vrot.slane %v3246, 4
        %v3338 = vrot.slane %v3254, 4
        %v3339 = vrot.slane %v3262, 4
        %v3340 = vrot.slane %v3270, 4
        %v3341 = vrot.slane %v3278, 4
        %v3342 = vrot.slane %v3286, 4
        %v3343 = vrot.slane %v3294, 4
        %v3344 = vrot.slane %v3302, 4
        %v3345 = vrot.slane %v3310, 4
        %v3346 = vrot.slane %v3318, 4
        %v3347 = vrot.slane %v3326, 4
        %v3348 = vrot.slane %v3209, 4
        %v3349 = vrot.slane %v3217, 4
        %v3350 = vrot.slane %v3225, 4
        %v3351 = vrot.slane %v3233, 4
        %v3352 = vrot.slane %v3241, 4
        %v3353 = vrot.slane %v3249, 4
        %v3354 = vrot.slane %v3257, 4
        %v3355 = vrot.slane %v3265, 4
        %v3356 = vrot.slane %v3273, 4
        %v3357 = vrot.slane %v3281, 4
        %v3358 = vrot.slane %v3289, 4
        %v3359 = vrot.slane %v3297, 4
        %v3360 = vrot.slane %v3305, 4
        %v3361 = vrot.slane %v3313, 4
        %v3362 = vrot.slane %v3321, 4
        %v3363 = vrot.slane %v3329, 4
        %v3364 = vsel %vm1086, %v3332, %v3348
        %v3365 = vsel %vm1086, %v3333, %v3349
        %v3366 = vsel %vm1086, %v3334, %v3350
        %v3367 = vsel %vm1086, %v3335, %v3351
        %v3368 = vsel %vm1086, %v3336, %v3352
        %v3369 = vsel %vm1086, %v3337, %v3353
        %v3370 = vsel %vm1086, %v3338, %v3354
        %v3371 = vsel %vm1086, %v3339, %v3355
        %v3372 = vsel %vm1086, %v3340, %v3356
        %v3373 = vsel %vm1086, %v3341, %v3357
        %v3374 = vsel %vm1086, %v3342, %v3358
        %v3375 = vsel %vm1086, %v3343, %v3359
        %v3376 = vsel %vm1086, %v3344, %v3360
        %v3377 = vsel %vm1086, %v3345, %v3361
        %v3378 = vsel %vm1086, %v3346, %v3362
        %v3379 = vsel %vm1086, %v3347, %v3363
        %v3380 = vsel %vm1086, %v3348, %v3332
        %v3381 = vsel %vm1086, %v3349, %v3333
        %v3382 = vsel %vm1086, %v3350, %v3334
        %v3383 = vsel %vm1086, %v3351, %v3335
        %v3384 = vsel %vm1086, %v3352, %v3336
        %v3385 = vsel %vm1086, %v3353, %v3337
        %v3386 = vsel %vm1086, %v3354, %v3338
        %v3387 = vsel %vm1086, %v3355, %v3339
        %v3388 = vsel %vm1086, %v3356, %v3340
        %v3389 = vsel %vm1086, %v3357, %v3341
        %v3390 = vsel %vm1086, %v3358, %v3342
        %v3391 = vsel %vm1086, %v3359, %v3343
        %v3392 = vsel %vm1086, %v3360, %v3344
        %v3393 = vsel %vm1086, %v3361, %v3345
        %v3394 = vsel %vm1086, %v3362, %v3346
        %v3395 = vsel %vm1086, %v3363, %v3347
        %v3396 = vsel %vm3031, %v3364, 0.0
        %v3397 = vsel %vm3032, %v3380, 0.0
        %v3398 = vsel %vm3031, %v3365, 0.0
        %v3399 = vsel %vm3032, %v3381, 0.0
        %v3400 = vsel %vm3031, %v3366, 0.0
        %v3401 = vsel %vm3032, %v3382, 0.0
        %v3402 = vsel %vm3031, %v3367, 0.0
        %v3403 = vsel %vm3032, %v3383, 0.0
        %v3404 = vsel %vm3031, %v3368, 0.0
        %v3405 = vsel %vm3032, %v3384, 0.0
        %v3406 = vsel %vm3031, %v3369, 0.0
        %v3407 = vsel %vm3032, %v3385, 0.0
        %v3408 = vsel %vm3031, %v3370, 0.0
        %v3409 = vsel %vm3032, %v3386, 0.0
        %v3410 = vsel %vm3031, %v3371, 0.0
        %v3411 = vsel %vm3032, %v3387, 0.0
        %v3412 = vsel %vm3031, %v3372, 0.0
        %v3413 = vsel %vm3032, %v3388, 0.0
        %v3414 = vsel %vm3031, %v3373, 0.0
        %v3415 = vsel %vm3032, %v3389, 0.0
        %v3416 = vsel %vm3031, %v3374, 0.0
        %v3417 = vsel %vm3032, %v3390, 0.0
        %v3418 = vsel %vm3031, %v3375, 0.0
        %v3419 = vsel %vm3032, %v3391, 0.0
        %v3420 = vsel %vm3031, %v3376, 0.0
        %v3421 = vsel %vm3032, %v3392, 0.0
        %v3422 = vsel %vm3031, %v3377, 0.0
        %v3423 = vsel %vm3032, %v3393, 0.0
        %v3424 = vsel %vm3031, %v3378, 0.0
        %v3425 = vsel %vm3032, %v3394, 0.0
        %v3426 = vsel %vm3031, %v3379, 0.0
        %v3427 = vsel %vm3032, %v3395, 0.0
        %3460 = vrot.lane.b32.xlu0 %v3206, 120
        %v3461 = vpop.permute.xlu0 %3460
        %3462 = vrot.lane.b32.xlu0 %v3209, 120
        %v3463 = vpop.permute.xlu0 %3462
        %3464 = vrot.lane.b32.xlu0 %v3214, 120
        %v3465 = vpop.permute.xlu0 %3464
        %3466 = vrot.lane.b32.xlu0 %v3217, 120
        %v3467 = vpop.permute.xlu0 %3466
        %3468 = vrot.lane.b32.xlu0 %v3222, 120
        %v3469 = vpop.permute.xlu0 %3468
        %3470 = vrot.lane.b32.xlu0 %v3225, 120
        %v3471 = vpop.permute.xlu0 %3470
        %3472 = vrot.lane.b32.xlu0 %v3230, 120
        %v3473 = vpop.permute.xlu0 %3472
        %3474 = vrot.lane.b32.xlu0 %v3233, 120
        %v3475 = vpop.permute.xlu0 %3474
        %3476 = vrot.lane.b32.xlu0 %v3238, 120
        %v3477 = vpop.permute.xlu0 %3476
        %3478 = vrot.lane.b32.xlu0 %v3241, 120
        %v3479 = vpop.permute.xlu0 %3478
        %3480 = vrot.lane.b32.xlu0 %v3246, 120
        %v3481 = vpop.permute.xlu0 %3480
        %3482 = vrot.lane.b32.xlu0 %v3249, 120
        %v3483 = vpop.permute.xlu0 %3482
        %3484 = vrot.lane.b32.xlu0 %v3254, 120
        %v3485 = vpop.permute.xlu0 %3484
        %3486 = vrot.lane.b32.xlu0 %v3257, 120
        %v3487 = vpop.permute.xlu0 %3486
        %3488 = vrot.lane.b32.xlu0 %v3262, 120
        %v3489 = vpop.permute.xlu0 %3488
        %3490 = vrot.lane.b32.xlu0 %v3265, 120
        %v3491 = vpop.permute.xlu0 %3490
        %3492 = vrot.lane.b32.xlu0 %v3270, 120
        %v3493 = vpop.permute.xlu0 %3492
        %3494 = vrot.lane.b32.xlu0 %v3273, 120
        %v3495 = vpop.permute.xlu0 %3494
        %3496 = vrot.lane.b32.xlu0 %v3278, 120
        %v3497 = vpop.permute.xlu0 %3496
        %3498 = vrot.lane.b32.xlu0 %v3281, 120
        %v3499 = vpop.permute.xlu0 %3498
        %3500 = vrot.lane.b32.xlu0 %v3286, 120
        %v3501 = vpop.permute.xlu0 %3500
        %3502 = vrot.lane.b32.xlu0 %v3289, 120
        %v3503 = vpop.permute.xlu0 %3502
        %3504 = vrot.lane.b32.xlu0 %v3294, 120
        %v3505 = vpop.permute.xlu0 %3504
        %3506 = vrot.lane.b32.xlu0 %v3297, 120
        %v3507 = vpop.permute.xlu0 %3506
        %3508 = vrot.lane.b32.xlu0 %v3302, 120
        %v3509 = vpop.permute.xlu0 %3508
        %3510 = vrot.lane.b32.xlu0 %v3305, 120
        %v3511 = vpop.permute.xlu0 %3510
        %3512 = vrot.lane.b32.xlu0 %v3310, 120
        %v3513 = vpop.permute.xlu0 %3512
        %3514 = vrot.lane.b32.xlu0 %v3313, 120
        %v3515 = vpop.permute.xlu0 %3514
        %3516 = vrot.lane.b32.xlu0 %v3318, 120
        %v3517 = vpop.permute.xlu0 %3516
        %3518 = vrot.lane.b32.xlu0 %v3321, 120
        %v3519 = vpop.permute.xlu0 %3518
        %3520 = vrot.lane.b32.xlu0 %v3326, 120
        %v3521 = vpop.permute.xlu0 %3520
        %3522 = vrot.lane.b32.xlu0 %v3329, 120
        %v3523 = vpop.permute.xlu0 %3522
        %v3556 = vadd.f32 %v3396, %v3461
        %v3557 = vadd.f32 %v3397, %v3463
        %v3558 = vadd.f32 %v3398, %v3465
        %v3559 = vadd.f32 %v3399, %v3467
        %v3560 = vadd.f32 %v3400, %v3469
        %v3561 = vadd.f32 %v3401, %v3471
        %v3562 = vadd.f32 %v3402, %v3473
        %v3563 = vadd.f32 %v3403, %v3475
        %v3564 = vadd.f32 %v3404, %v3477
        %v3565 = vadd.f32 %v3405, %v3479
        %v3566 = vadd.f32 %v3406, %v3481
        %v3567 = vadd.f32 %v3407, %v3483
        %v3568 = vadd.f32 %v3408, %v3485
        %v3569 = vadd.f32 %v3409, %v3487
        %v3570 = vadd.f32 %v3410, %v3489
        %v3571 = vadd.f32 %v3411, %v3491
        %v3572 = vadd.f32 %v3412, %v3493
        %v3573 = vadd.f32 %v3413, %v3495
        %v3574 = vadd.f32 %v3414, %v3497
        %v3575 = vadd.f32 %v3415, %v3499
        %v3576 = vadd.f32 %v3416, %v3501
        %v3577 = vadd.f32 %v3417, %v3503
        %v3578 = vadd.f32 %v3418, %v3505
        %v3579 = vadd.f32 %v3419, %v3507
        %v3580 = vadd.f32 %v3420, %v3509
        %v3581 = vadd.f32 %v3421, %v3511
        %v3582 = vadd.f32 %v3422, %v3513
        %v3583 = vadd.f32 %v3423, %v3515
        %v3584 = vadd.f32 %v3424, %v3517
        %v3585 = vadd.f32 %v3425, %v3519
        %v3586 = vadd.f32 %v3426, %v3521
        %v3587 = vadd.f32 %v3427, %v3523
        %3588 = vrot.lane.b32.xlu0 %v3206, 112
        %v3589 = vpop.permute.xlu0 %3588
        %3590 = vrot.lane.b32.xlu0 %v3209, 112
        %v3591 = vpop.permute.xlu0 %3590
        %3592 = vrot.lane.b32.xlu0 %v3214, 112
        %v3593 = vpop.permute.xlu0 %3592
        %3594 = vrot.lane.b32.xlu0 %v3217, 112
        %v3595 = vpop.permute.xlu0 %3594
        %3596 = vrot.lane.b32.xlu0 %v3222, 112
        %v3597 = vpop.permute.xlu0 %3596
        %3598 = vrot.lane.b32.xlu0 %v3225, 112
        %v3599 = vpop.permute.xlu0 %3598
        %3600 = vrot.lane.b32.xlu0 %v3230, 112
        %v3601 = vpop.permute.xlu0 %3600
        %3602 = vrot.lane.b32.xlu0 %v3233, 112
        %v3603 = vpop.permute.xlu0 %3602
        %3604 = vrot.lane.b32.xlu0 %v3238, 112
        %v3605 = vpop.permute.xlu0 %3604
        %3606 = vrot.lane.b32.xlu0 %v3241, 112
        %v3607 = vpop.permute.xlu0 %3606
        %3608 = vrot.lane.b32.xlu0 %v3246, 112
        %v3609 = vpop.permute.xlu0 %3608
        %3610 = vrot.lane.b32.xlu0 %v3249, 112
        %v3611 = vpop.permute.xlu0 %3610
        %3612 = vrot.lane.b32.xlu0 %v3254, 112
        %v3613 = vpop.permute.xlu0 %3612
        %3614 = vrot.lane.b32.xlu0 %v3257, 112
        %v3615 = vpop.permute.xlu0 %3614
        %3616 = vrot.lane.b32.xlu0 %v3262, 112
        %v3617 = vpop.permute.xlu0 %3616
        %3618 = vrot.lane.b32.xlu0 %v3265, 112
        %v3619 = vpop.permute.xlu0 %3618
        %3620 = vrot.lane.b32.xlu0 %v3270, 112
        %v3621 = vpop.permute.xlu0 %3620
        %3622 = vrot.lane.b32.xlu0 %v3273, 112
        %v3623 = vpop.permute.xlu0 %3622
        %3624 = vrot.lane.b32.xlu0 %v3278, 112
        %v3625 = vpop.permute.xlu0 %3624
        %3626 = vrot.lane.b32.xlu0 %v3281, 112
        %v3627 = vpop.permute.xlu0 %3626
        %3628 = vrot.lane.b32.xlu0 %v3286, 112
        %v3629 = vpop.permute.xlu0 %3628
        %3630 = vrot.lane.b32.xlu0 %v3289, 112
        %v3631 = vpop.permute.xlu0 %3630
        %3632 = vrot.lane.b32.xlu0 %v3294, 112
        %v3633 = vpop.permute.xlu0 %3632
        %3634 = vrot.lane.b32.xlu0 %v3297, 112
        %v3635 = vpop.permute.xlu0 %3634
        %3636 = vrot.lane.b32.xlu0 %v3302, 112
        %v3637 = vpop.permute.xlu0 %3636
        %3638 = vrot.lane.b32.xlu0 %v3305, 112
        %v3639 = vpop.permute.xlu0 %3638
        %3640 = vrot.lane.b32.xlu0 %v3310, 112
        %v3641 = vpop.permute.xlu0 %3640
        %3642 = vrot.lane.b32.xlu0 %v3313, 112
        %v3643 = vpop.permute.xlu0 %3642
        %3644 = vrot.lane.b32.xlu0 %v3318, 112
        %v3645 = vpop.permute.xlu0 %3644
        %3646 = vrot.lane.b32.xlu0 %v3321, 112
        %v3647 = vpop.permute.xlu0 %3646
        %3648 = vrot.lane.b32.xlu0 %v3326, 112
        %v3649 = vpop.permute.xlu0 %3648
        %3650 = vrot.lane.b32.xlu0 %v3329, 112
        %v3651 = vpop.permute.xlu0 %3650
        %v3684 = vrot.slane %v3589, 4
        %v3685 = vrot.slane %v3593, 4
        %v3686 = vrot.slane %v3597, 4
        %v3687 = vrot.slane %v3601, 4
        %v3688 = vrot.slane %v3605, 4
        %v3689 = vrot.slane %v3609, 4
        %v3690 = vrot.slane %v3613, 4
        %v3691 = vrot.slane %v3617, 4
        %v3692 = vrot.slane %v3621, 4
        %v3693 = vrot.slane %v3625, 4
        %v3694 = vrot.slane %v3629, 4
        %v3695 = vrot.slane %v3633, 4
        %v3696 = vrot.slane %v3637, 4
        %v3697 = vrot.slane %v3641, 4
        %v3698 = vrot.slane %v3645, 4
        %v3699 = vrot.slane %v3649, 4
        %v3700 = vrot.slane %v3591, 4
        %v3701 = vrot.slane %v3595, 4
        %v3702 = vrot.slane %v3599, 4
        %v3703 = vrot.slane %v3603, 4
        %v3704 = vrot.slane %v3607, 4
        %v3705 = vrot.slane %v3611, 4
        %v3706 = vrot.slane %v3615, 4
        %v3707 = vrot.slane %v3619, 4
        %v3708 = vrot.slane %v3623, 4
        %v3709 = vrot.slane %v3627, 4
        %v3710 = vrot.slane %v3631, 4
        %v3711 = vrot.slane %v3635, 4
        %v3712 = vrot.slane %v3639, 4
        %v3713 = vrot.slane %v3643, 4
        %v3714 = vrot.slane %v3647, 4
        %v3715 = vrot.slane %v3651, 4
        %v3716 = vsel %vm1086, %v3684, %v3700
        %v3717 = vsel %vm1086, %v3685, %v3701
        %v3718 = vsel %vm1086, %v3686, %v3702
        %v3719 = vsel %vm1086, %v3687, %v3703
        %v3720 = vsel %vm1086, %v3688, %v3704
        %v3721 = vsel %vm1086, %v3689, %v3705
        %v3722 = vsel %vm1086, %v3690, %v3706
        %v3723 = vsel %vm1086, %v3691, %v3707
        %v3724 = vsel %vm1086, %v3692, %v3708
        %v3725 = vsel %vm1086, %v3693, %v3709
        %v3726 = vsel %vm1086, %v3694, %v3710
        %v3727 = vsel %vm1086, %v3695, %v3711
        %v3728 = vsel %vm1086, %v3696, %v3712
        %v3729 = vsel %vm1086, %v3697, %v3713
        %v3730 = vsel %vm1086, %v3698, %v3714
        %v3731 = vsel %vm1086, %v3699, %v3715
        %v3732 = vsel %vm1086, %v3700, %v3684
        %v3733 = vsel %vm1086, %v3701, %v3685
        %v3734 = vsel %vm1086, %v3702, %v3686
        %v3735 = vsel %vm1086, %v3703, %v3687
        %v3736 = vsel %vm1086, %v3704, %v3688
        %v3737 = vsel %vm1086, %v3705, %v3689
        %v3738 = vsel %vm1086, %v3706, %v3690
        %v3739 = vsel %vm1086, %v3707, %v3691
        %v3740 = vsel %vm1086, %v3708, %v3692
        %v3741 = vsel %vm1086, %v3709, %v3693
        %v3742 = vsel %vm1086, %v3710, %v3694
        %v3743 = vsel %vm1086, %v3711, %v3695
        %v3744 = vsel %vm1086, %v3712, %v3696
        %v3745 = vsel %vm1086, %v3713, %v3697
        %v3746 = vsel %vm1086, %v3714, %v3698
        %v3747 = vsel %vm1086, %v3715, %v3699
        %v3748 = vsel %vm3123, %v3732, 0.0
        %v3749 = vsel %vm3124, %v3716, 0.0
        %v3750 = vsel %vm3123, %v3733, 0.0
        %v3751 = vsel %vm3124, %v3717, 0.0
        %v3752 = vsel %vm3123, %v3734, 0.0
        %v3753 = vsel %vm3124, %v3718, 0.0
        %v3754 = vsel %vm3123, %v3735, 0.0
        %v3755 = vsel %vm3124, %v3719, 0.0
        %v3756 = vsel %vm3123, %v3736, 0.0
        %v3757 = vsel %vm3124, %v3720, 0.0
        %v3758 = vsel %vm3123, %v3737, 0.0
        %v3759 = vsel %vm3124, %v3721, 0.0
        %v3760 = vsel %vm3123, %v3738, 0.0
        %v3761 = vsel %vm3124, %v3722, 0.0
        %v3762 = vsel %vm3123, %v3739, 0.0
        %v3763 = vsel %vm3124, %v3723, 0.0
        %v3764 = vsel %vm3123, %v3740, 0.0
        %v3765 = vsel %vm3124, %v3724, 0.0
        %v3766 = vsel %vm3123, %v3741, 0.0
        %v3767 = vsel %vm3124, %v3725, 0.0
        %v3768 = vsel %vm3123, %v3742, 0.0
        %v3769 = vsel %vm3124, %v3726, 0.0
        %v3770 = vsel %vm3123, %v3743, 0.0
        %v3771 = vsel %vm3124, %v3727, 0.0
        %v3772 = vsel %vm3123, %v3744, 0.0
        %v3773 = vsel %vm3124, %v3728, 0.0
        %v3774 = vsel %vm3123, %v3745, 0.0
        %v3775 = vsel %vm3124, %v3729, 0.0
        %v3776 = vsel %vm3123, %v3746, 0.0
        %v3777 = vsel %vm3124, %v3730, 0.0
        %v3778 = vsel %vm3123, %v3747, 0.0
        %v3779 = vsel %vm3124, %v3731, 0.0
        %v3780 = vadd.f32 %v3556, %v3748
        %v3781 = vadd.f32 %v3557, %v3749
        %v3782 = vadd.f32 %v3558, %v3750
        %v3783 = vadd.f32 %v3559, %v3751
        %v3784 = vadd.f32 %v3560, %v3752
        %v3785 = vadd.f32 %v3561, %v3753
        %v3786 = vadd.f32 %v3562, %v3754
        %v3787 = vadd.f32 %v3563, %v3755
        %v3788 = vadd.f32 %v3564, %v3756
        %v3789 = vadd.f32 %v3565, %v3757
        %v3790 = vadd.f32 %v3566, %v3758
        %v3791 = vadd.f32 %v3567, %v3759
        %v3792 = vadd.f32 %v3568, %v3760
        %v3793 = vadd.f32 %v3569, %v3761
        %v3794 = vadd.f32 %v3570, %v3762
        %v3795 = vadd.f32 %v3571, %v3763
        %v3796 = vadd.f32 %v3572, %v3764
        %v3797 = vadd.f32 %v3573, %v3765
        %v3798 = vadd.f32 %v3574, %v3766
        %v3799 = vadd.f32 %v3575, %v3767
        %v3800 = vadd.f32 %v3576, %v3768
        %v3801 = vadd.f32 %v3577, %v3769
        %v3802 = vadd.f32 %v3578, %v3770
        %v3803 = vadd.f32 %v3579, %v3771
        %v3804 = vadd.f32 %v3580, %v3772
        %v3805 = vadd.f32 %v3581, %v3773
        %v3806 = vadd.f32 %v3582, %v3774
        %v3807 = vadd.f32 %v3583, %v3775
        %v3808 = vadd.f32 %v3584, %v3776
        %v3809 = vadd.f32 %v3585, %v3777
        %v3810 = vadd.f32 %v3586, %v3778
        %v3811 = vadd.f32 %v3587, %v3779
        %s3812 = scalar_lea.vmem [#allocation3], 512
        %v3813 = vld [vmem:[%s3812] sm:$0xff]
        %v3814 = vld [vmem:[%s3812 + $0x8] sm:$0xff]
        %v3815 = vld [vmem:[%s3812 + $0x10] sm:$0xff]
        %v3816 = vld [vmem:[%s3812 + $0x18] sm:$0xff]
        %v3817 = vld [vmem:[%s3812 + $0x20] sm:$0xff]
        %v3818 = vld [vmem:[%s3812 + $0x28] sm:$0xff]
        %v3819 = vld [vmem:[%s3812 + $0x30] sm:$0xff]
        %v3820 = vld [vmem:[%s3812 + $0x38] sm:$0xff]
        %v3821 = vld [vmem:[%s3812 + $0x40] sm:$0xff]
        %v3822 = vld [vmem:[%s3812 + $0x48] sm:$0xff]
        %v3823 = vld [vmem:[%s3812 + $0x50] sm:$0xff]
        %v3824 = vld [vmem:[%s3812 + $0x58] sm:$0xff]
        %v3825 = vld [vmem:[%s3812 + $0x60] sm:$0xff]
        %v3826 = vld [vmem:[%s3812 + $0x68] sm:$0xff]
        %v3827 = vld [vmem:[%s3812 + $0x70] sm:$0xff]
        %v3828 = vld [vmem:[%s3812 + $0x78] sm:$0xff]
        %v3829 = vld [vmem:[%s3812 + $0x80] sm:$0xff]
        %v3830 = vld [vmem:[%s3812 + $0x88] sm:$0xff]
        %v3831 = vld [vmem:[%s3812 + $0x90] sm:$0xff]
        %v3832 = vld [vmem:[%s3812 + $0x98] sm:$0xff]
        %v3833 = vld [vmem:[%s3812 + $0xa0] sm:$0xff]
        %v3834 = vld [vmem:[%s3812 + $0xa8] sm:$0xff]
        %v3835 = vld [vmem:[%s3812 + $0xb0] sm:$0xff]
        %v3836 = vld [vmem:[%s3812 + $0xb8] sm:$0xff]
        %v3837 = vld [vmem:[%s3812 + $0xc0] sm:$0xff]
        %v3838 = vld [vmem:[%s3812 + $0xc8] sm:$0xff]
        %v3839 = vld [vmem:[%s3812 + $0xd0] sm:$0xff]
        %v3840 = vld [vmem:[%s3812 + $0xd8] sm:$0xff]
        %v3841 = vld [vmem:[%s3812 + $0xe0] sm:$0xff]
        %v3842 = vld [vmem:[%s3812 + $0xe8] sm:$0xff]
        %v3843 = vld [vmem:[%s3812 + $0xf0] sm:$0xff]
        %v3844 = vld [vmem:[%s3812 + $0xf8] sm:$0xff]
        %v3845 = vadd.f32 %v3813, %v3780
        %v3846 = vadd.f32 %v3814, %v3781
        %v3847 = vadd.f32 %v3815, %v3782
        %v3848 = vadd.f32 %v3816, %v3783
        %v3849 = vadd.f32 %v3817, %v3784
        %v3850 = vadd.f32 %v3818, %v3785
        %v3851 = vadd.f32 %v3819, %v3786
        %v3852 = vadd.f32 %v3820, %v3787
        %v3853 = vadd.f32 %v3821, %v3788
        %v3854 = vadd.f32 %v3822, %v3789
        %v3855 = vadd.f32 %v3823, %v3790
        %v3856 = vadd.f32 %v3824, %v3791
        %v3857 = vadd.f32 %v3825, %v3792
        %v3858 = vadd.f32 %v3826, %v3793
        %v3859 = vadd.f32 %v3827, %v3794
        %v3860 = vadd.f32 %v3828, %v3795
        %v3861 = vadd.f32 %v3829, %v3796
        %v3862 = vadd.f32 %v3830, %v3797
        %v3863 = vadd.f32 %v3831, %v3798
        %v3864 = vadd.f32 %v3832, %v3799
        %v3865 = vadd.f32 %v3833, %v3800
        %v3866 = vadd.f32 %v3834, %v3801
        %v3867 = vadd.f32 %v3835, %v3802
        %v3868 = vadd.f32 %v3836, %v3803
        %v3869 = vadd.f32 %v3837, %v3804
        %v3870 = vadd.f32 %v3838, %v3805
        %v3871 = vadd.f32 %v3839, %v3806
        %v3872 = vadd.f32 %v3840, %v3807
        %v3873 = vadd.f32 %v3841, %v3808
        %v3874 = vadd.f32 %v3842, %v3809
        %v3875 = vadd.f32 %v3843, %v3810
        %v3876 = vadd.f32 %v3844, %v3811
        %3877 = vst.msk [vmem:[%s3812] sm:$0xff] %vm1034, %v3845
        %3878 = vst.msk [vmem:[%s3812 + $0x8] sm:$0xff] %vm1034, %v3846
        %3879 = vst.msk [vmem:[%s3812 + $0x10] sm:$0xff] %vm1034, %v3847
        %3880 = vst.msk [vmem:[%s3812 + $0x18] sm:$0xff] %vm1034, %v3848
        %3881 = vst.msk [vmem:[%s3812 + $0x20] sm:$0xff] %vm1034, %v3849
        %3882 = vst.msk [vmem:[%s3812 + $0x28] sm:$0xff] %vm1034, %v3850
        %3883 = vst.msk [vmem:[%s3812 + $0x30] sm:$0xff] %vm1034, %v3851
        %3884 = vst.msk [vmem:[%s3812 + $0x38] sm:$0xff] %vm1034, %v3852
        %3885 = vst.msk [vmem:[%s3812 + $0x40] sm:$0xff] %vm1034, %v3853
        %3886 = vst.msk [vmem:[%s3812 + $0x48] sm:$0xff] %vm1034, %v3854
        %3887 = vst.msk [vmem:[%s3812 + $0x50] sm:$0xff] %vm1034, %v3855
        %3888 = vst.msk [vmem:[%s3812 + $0x58] sm:$0xff] %vm1034, %v3856
        %3889 = vst.msk [vmem:[%s3812 + $0x60] sm:$0xff] %vm1034, %v3857
        %3890 = vst.msk [vmem:[%s3812 + $0x68] sm:$0xff] %vm1034, %v3858
        %3891 = vst.msk [vmem:[%s3812 + $0x70] sm:$0xff] %vm1034, %v3859
        %3892 = vst.msk [vmem:[%s3812 + $0x78] sm:$0xff] %vm1034, %v3860
        %3893 = vst.msk [vmem:[%s3812 + $0x80] sm:$0xff] %vm1034, %v3861
        %3894 = vst.msk [vmem:[%s3812 + $0x88] sm:$0xff] %vm1034, %v3862
        %3895 = vst.msk [vmem:[%s3812 + $0x90] sm:$0xff] %vm1034, %v3863
        %3896 = vst.msk [vmem:[%s3812 + $0x98] sm:$0xff] %vm1034, %v3864
        %3897 = vst.msk [vmem:[%s3812 + $0xa0] sm:$0xff] %vm1034, %v3865
        %3898 = vst.msk [vmem:[%s3812 + $0xa8] sm:$0xff] %vm1034, %v3866
        %3899 = vst.msk [vmem:[%s3812 + $0xb0] sm:$0xff] %vm1034, %v3867
        %3900 = vst.msk [vmem:[%s3812 + $0xb8] sm:$0xff] %vm1034, %v3868
        %3901 = vst.msk [vmem:[%s3812 + $0xc0] sm:$0xff] %vm1034, %v3869
        %3902 = vst.msk [vmem:[%s3812 + $0xc8] sm:$0xff] %vm1034, %v3870
        %3903 = vst.msk [vmem:[%s3812 + $0xd0] sm:$0xff] %vm1034, %v3871
        %3904 = vst.msk [vmem:[%s3812 + $0xd8] sm:$0xff] %vm1034, %v3872
        %3905 = vst.msk [vmem:[%s3812 + $0xe0] sm:$0xff] %vm1034, %v3873
        %3906 = vst.msk [vmem:[%s3812 + $0xe8] sm:$0xff] %vm1034, %v3874
        %3907 = vst.msk [vmem:[%s3812 + $0xf0] sm:$0xff] %vm1034, %v3875
        %3908 = vst.msk [vmem:[%s3812 + $0xf8] sm:$0xff] %vm1034, %v3876
        %s3909 = scalar_lea.vmem %s319, 10
        %v3910 = vld [vmem:[%s3909] sm:$0x3]
        %v3912 = vsel %vm805, %v3910, 0
        %3914 = vmatprep.subr.bf16.mxu0 0
        %3915 = vmatpush1.bf16.msra.mxu0 %v3912
        %3916 = vmatprep.subr.bf16.mxu0 0
        %3917 = vmatpush1.bf16.msra.mxu0 0
        %3918 = vmatprep.subr.bf16.mxu0 0
        %3919 = vmatpush1.bf16.msra.mxu0 0
        %3920 = vmatprep.subr.bf16.mxu0 0
        %3921 = vmatpush1.bf16.msra.mxu0 0
        %3922 = vmatprep.subr.bf16.mxu0 0
        %3923 = vmatpush1.bf16.msra.mxu0 0
        %3924 = vmatprep.subr.bf16.mxu0 0
        %3925 = vmatpush1.bf16.msra.mxu0 0
        %3926 = vmatprep.subr.bf16.mxu0 0
        %3927 = vmatpush1.bf16.msra.mxu0 0
        %3928 = vmatprep.subr.bf16.mxu0 0
        %3929 = vmatpush1.bf16.msra.mxu0 0
        %3930 = vmatprep.subr.bf16.mxu0 0
        %3931 = vmatpush1.bf16.msra.mxu0 0
        %3932 = vmatprep.subr.bf16.mxu0 0
        %3933 = vmatpush1.bf16.msra.mxu0 0
        %3934 = vmatprep.subr.bf16.mxu0 0
        %3935 = vmatpush1.bf16.msra.mxu0 0
        %3936 = vmatprep.subr.bf16.mxu0 0
        %3937 = vmatpush1.bf16.msra.mxu0 0
        %3938 = vmatprep.subr.bf16.mxu0 0
        %3939 = vmatpush1.bf16.msra.mxu0 0
        %3940 = vmatprep.subr.bf16.mxu0 0
        %3941 = vmatpush1.bf16.msra.mxu0 0
        %3942 = vmatprep.subr.bf16.mxu0 0
        %3943 = vmatpush1.bf16.msra.mxu0 0
        %3944 = vmatprep.subr.bf16.mxu0 0
        %3945 = vmatpush1.bf16.msra.mxu0 0
        %3946 = vmatprep.mubr.bf16.mxu0 0
        %3947 = vmatmul.mubr.bf16.gmra.mrb[0].mxu0 %v758
        %v3948 = vpop.f32.mrb[0].mxu0
        %v3949 = vpop.f32.mrb[0].mxu0
        %v3950 = vpop.f32.mrb[0].mxu0
        %v3951 = vpop.f32.mrb[0].mxu0
        %3952 = vmatprep.mubr.bf16.mxu0 0
        %3953 = vmatmul.mubr.bf16.gmra.mrb[0].mxu0 %v761
        %v3954 = vpop.f32.mrb[0].mxu0
        %v3955 = vpop.f32.mrb[0].mxu0
        %v3956 = vpop.f32.mrb[0].mxu0
        %v3957 = vpop.f32.mrb[0].mxu0
        %3958 = vmatprep.mubr.bf16.mxu0 0
        %3959 = vmatmul.mubr.bf16.gmra.mrb[0].mxu0 %v764
        %v3960 = vpop.f32.mrb[0].mxu0
        %v3961 = vpop.f32.mrb[0].mxu0
        %v3962 = vpop.f32.mrb[0].mxu0
        %v3963 = vpop.f32.mrb[0].mxu0
        %3964 = vmatprep.mubr.bf16.mxu0 0
        %3965 = vmatmul.mubr.bf16.gmra.mrb[0].mxu0 %v767
        %v3966 = vpop.f32.mrb[0].mxu0
        %v3967 = vpop.f32.mrb[0].mxu0
        %v3968 = vpop.f32.mrb[0].mxu0
        %v3969 = vpop.f32.mrb[0].mxu0
        %3970 = vmatprep.mubr.bf16.mxu0 0
        %3971 = vmatmul.mubr.bf16.gmra.mrb[0].mxu0 %v770
        %v3972 = vpop.f32.mrb[0].mxu0
        %v3973 = vpop.f32.mrb[0].mxu0
        %v3974 = vpop.f32.mrb[0].mxu0
        %v3975 = vpop.f32.mrb[0].mxu0
        %3976 = vmatprep.mubr.bf16.mxu0 0
        %3977 = vmatmul.mubr.bf16.gmra.mrb[0].mxu0 %v773
        %v3978 = vpop.f32.mrb[0].mxu0
        %v3979 = vpop.f32.mrb[0].mxu0
        %v3980 = vpop.f32.mrb[0].mxu0
        %v3981 = vpop.f32.mrb[0].mxu0
        %3982 = vmatprep.mubr.bf16.mxu0 0
        %3983 = vmatmul.mubr.bf16.gmra.mrb[0].mxu0 %v776
        %v3984 = vpop.f32.mrb[0].mxu0
        %v3985 = vpop.f32.mrb[0].mxu0
        %v3986 = vpop.f32.mrb[0].mxu0
        %v3987 = vpop.f32.mrb[0].mxu0
        %3988 = vmatprep.mubr.bf16.mxu0 0
        %3989 = vmatmul.mubr.bf16.gmra.mrb[0].mxu0 %v779
        %v3990 = vpop.f32.mrb[0].mxu0
        %v3991 = vpop.f32.mrb[0].mxu0
        %v3992 = vpop.f32.mrb[0].mxu0
        %v3993 = vpop.f32.mrb[0].mxu0
        %3994 = vmatprep.mubr.bf16.mxu0 0
        %3995 = vmatmul.mubr.bf16.gmra.mrb[0].mxu0 %v782
        %v3996 = vpop.f32.mrb[0].mxu0
        %v3997 = vpop.f32.mrb[0].mxu0
        %v3998 = vpop.f32.mrb[0].mxu0
        %v3999 = vpop.f32.mrb[0].mxu0
        %4000 = vmatprep.mubr.bf16.mxu0 0
        %4001 = vmatmul.mubr.bf16.gmra.mrb[0].mxu0 %v785
        %v4002 = vpop.f32.mrb[0].mxu0
        %v4003 = vpop.f32.mrb[0].mxu0
        %v4004 = vpop.f32.mrb[0].mxu0
        %v4005 = vpop.f32.mrb[0].mxu0
        %4006 = vmatprep.mubr.bf16.mxu0 0
        %4007 = vmatmul.mubr.bf16.gmra.mrb[0].mxu0 %v788
        %v4008 = vpop.f32.mrb[0].mxu0
        %v4009 = vpop.f32.mrb[0].mxu0
        %v4010 = vpop.f32.mrb[0].mxu0
        %v4011 = vpop.f32.mrb[0].mxu0
        %4012 = vmatprep.mubr.bf16.mxu0 0
        %4013 = vmatmul.mubr.bf16.gmra.mrb[0].mxu0 %v791
        %v4014 = vpop.f32.mrb[0].mxu0
        %v4015 = vpop.f32.mrb[0].mxu0
        %v4016 = vpop.f32.mrb[0].mxu0
        %v4017 = vpop.f32.mrb[0].mxu0
        %4018 = vmatprep.mubr.bf16.mxu0 0
        %4019 = vmatmul.mubr.bf16.gmra.mrb[0].mxu0 %v794
        %v4020 = vpop.f32.mrb[0].mxu0
        %v4021 = vadd.f32 0.0, %v4020
        %v4022 = vpop.f32.mrb[0].mxu0
        %v4023 = vpop.f32.mrb[0].mxu0
        %v4024 = vadd.f32 0.0, %v4023
        %v4025 = vpop.f32.mrb[0].mxu0
        %4026 = vmatprep.mubr.bf16.mxu0 0
        %4027 = vmatmul.mubr.bf16.gmra.mrb[0].mxu0 %v797
        %v4028 = vpop.f32.mrb[0].mxu0
        %v4029 = vadd.f32 0.0, %v4028
        %v4030 = vpop.f32.mrb[0].mxu0
        %v4031 = vpop.f32.mrb[0].mxu0
        %v4032 = vadd.f32 0.0, %v4031
        %v4033 = vpop.f32.mrb[0].mxu0
        %4034 = vmatprep.mubr.bf16.mxu0 0
        %4035 = vmatmul.mubr.bf16.gmra.mrb[0].mxu0 %v800
        %v4036 = vpop.f32.mrb[0].mxu0
        %v4037 = vadd.f32 0.0, %v4036
        %v4038 = vpop.f32.mrb[0].mxu0
        %v4039 = vpop.f32.mrb[0].mxu0
        %v4040 = vadd.f32 0.0, %v4039
        %v4041 = vpop.f32.mrb[0].mxu0
        %4042 = vmatprep.mubr.bf16.mxu0 0
        %4043 = vmatmul.mubr.bf16.gmra.mrb[0].mxu0 %v803
        %v4044 = vpop.f32.mrb[0].mxu0
        %v4045 = vadd.f32 0.0, %v4044
        %v4046 = vpop.f32.mrb[0].mxu0
        %v4047 = vpop.f32.mrb[0].mxu0
        %v4048 = vadd.f32 0.0, %v4047
        %v4049 = vpop.f32.mrb[0].mxu0
        %4050 = vdwg.mxu0
        %v4051 = vrot.slane %v4021, 4
        %v4052 = vrot.slane %v4029, 4
        %v4053 = vrot.slane %v4037, 4
        %v4054 = vrot.slane %v4045, 4
        %v4055 = vrot.slane %v4024, 4
        %v4056 = vrot.slane %v4032, 4
        %v4057 = vrot.slane %v4040, 4
        %v4058 = vrot.slane %v4048, 4
        %v4059 = vsel %vm1086, %v4051, %v4055
        %v4060 = vsel %vm1086, %v4052, %v4056
        %v4061 = vsel %vm1086, %v4053, %v4057
        %v4062 = vsel %vm1086, %v4054, %v4058
        %v4063 = vsel %vm1086, %v4055, %v4051
        %v4064 = vsel %vm1086, %v4056, %v4052
        %v4065 = vsel %vm1086, %v4057, %v4053
        %v4066 = vsel %vm1086, %v4058, %v4054
        %v4067 = vsel %vm3031, %v4059, 0.0
        %v4068 = vsel %vm3032, %v4063, 0.0
        %v4069 = vsel %vm3031, %v4060, 0.0
        %v4070 = vsel %vm3032, %v4064, 0.0
        %v4071 = vsel %vm3031, %v4061, 0.0
        %v4072 = vsel %vm3032, %v4065, 0.0
        %v4073 = vsel %vm3031, %v4062, 0.0
        %v4074 = vsel %vm3032, %v4066, 0.0
        %4083 = vrot.lane.b32.xlu0 %v4021, 120
        %v4084 = vpop.permute.xlu0 %4083
        %4085 = vrot.lane.b32.xlu0 %v4024, 120
        %v4086 = vpop.permute.xlu0 %4085
        %4087 = vrot.lane.b32.xlu0 %v4029, 120
        %v4088 = vpop.permute.xlu0 %4087
        %4089 = vrot.lane.b32.xlu0 %v4032, 120
        %v4090 = vpop.permute.xlu0 %4089
        %4091 = vrot.lane.b32.xlu0 %v4037, 120
        %v4092 = vpop.permute.xlu0 %4091
        %4093 = vrot.lane.b32.xlu0 %v4040, 120
        %v4094 = vpop.permute.xlu0 %4093
        %4095 = vrot.lane.b32.xlu0 %v4045, 120
        %v4096 = vpop.permute.xlu0 %4095
        %4097 = vrot.lane.b32.xlu0 %v4048, 120
        %v4098 = vpop.permute.xlu0 %4097
        %v4107 = vadd.f32 %v4067, %v4084
        %v4108 = vadd.f32 %v4068, %v4086
        %v4109 = vadd.f32 %v4069, %v4088
        %v4110 = vadd.f32 %v4070, %v4090
        %v4111 = vadd.f32 %v4071, %v4092
        %v4112 = vadd.f32 %v4072, %v4094
        %v4113 = vadd.f32 %v4073, %v4096
        %v4114 = vadd.f32 %v4074, %v4098
        %4115 = vrot.lane.b32.xlu0 %v4021, 112
        %v4116 = vpop.permute.xlu0 %4115
        %4117 = vrot.lane.b32.xlu0 %v4024, 112
        %v4118 = vpop.permute.xlu0 %4117
        %4119 = vrot.lane.b32.xlu0 %v4029, 112
        %v4120 = vpop.permute.xlu0 %4119
        %4121 = vrot.lane.b32.xlu0 %v4032, 112
        %v4122 = vpop.permute.xlu0 %4121
        %4123 = vrot.lane.b32.xlu0 %v4037, 112
        %v4124 = vpop.permute.xlu0 %4123
        %4125 = vrot.lane.b32.xlu0 %v4040, 112
        %v4126 = vpop.permute.xlu0 %4125
        %4127 = vrot.lane.b32.xlu0 %v4045, 112
        %v4128 = vpop.permute.xlu0 %4127
        %4129 = vrot.lane.b32.xlu0 %v4048, 112
        %v4130 = vpop.permute.xlu0 %4129
        %v4139 = vrot.slane %v4116, 4
        %v4140 = vrot.slane %v4120, 4
        %v4141 = vrot.slane %v4124, 4
        %v4142 = vrot.slane %v4128, 4
        %v4143 = vrot.slane %v4118, 4
        %v4144 = vrot.slane %v4122, 4
        %v4145 = vrot.slane %v4126, 4
        %v4146 = vrot.slane %v4130, 4
        %v4147 = vsel %vm1086, %v4139, %v4143
        %v4148 = vsel %vm1086, %v4140, %v4144
        %v4149 = vsel %vm1086, %v4141, %v4145
        %v4150 = vsel %vm1086, %v4142, %v4146
        %v4151 = vsel %vm1086, %v4143, %v4139
        %v4152 = vsel %vm1086, %v4144, %v4140
        %v4153 = vsel %vm1086, %v4145, %v4141
        %v4154 = vsel %vm1086, %v4146, %v4142
        %v4155 = vsel %vm3123, %v4151, 0.0
        %v4156 = vsel %vm3124, %v4147, 0.0
        %v4157 = vsel %vm3123, %v4152, 0.0
        %v4158 = vsel %vm3124, %v4148, 0.0
        %v4159 = vsel %vm3123, %v4153, 0.0
        %v4160 = vsel %vm3124, %v4149, 0.0
        %v4161 = vsel %vm3123, %v4154, 0.0
        %v4162 = vsel %vm3124, %v4150, 0.0
        %v4163 = vadd.f32 %v4107, %v4155
        %v4164 = vadd.f32 %v4108, %v4156
        %v4165 = vadd.f32 %v4109, %v4157
        %v4166 = vadd.f32 %v4110, %v4158
        %v4167 = vadd.f32 %v4111, %v4159
        %v4168 = vadd.f32 %v4112, %v4160
        %v4169 = vadd.f32 %v4113, %v4161
        %v4170 = vadd.f32 %v4114, %v4162
        %v4171 = vld [vmem:[%s3812] sm:$0xff]
        %v4172 = vld [vmem:[%s3812 + $0x8] sm:$0xff]
        %v4173 = vld [vmem:[%s3812 + $0x10] sm:$0xff]
        %v4174 = vld [vmem:[%s3812 + $0x18] sm:$0xff]
        %v4175 = vld [vmem:[%s3812 + $0x20] sm:$0xff]
        %v4176 = vld [vmem:[%s3812 + $0x28] sm:$0xff]
        %v4177 = vld [vmem:[%s3812 + $0x30] sm:$0xff]
        %v4178 = vld [vmem:[%s3812 + $0x38] sm:$0xff]
        %v4179 = vadd.f32 %v4171, %v4163
        %v4180 = vadd.f32 %v4172, %v4164
        %v4181 = vadd.f32 %v4173, %v4165
        %v4182 = vadd.f32 %v4174, %v4166
        %v4183 = vadd.f32 %v4175, %v4167
        %v4184 = vadd.f32 %v4176, %v4168
        %v4185 = vadd.f32 %v4177, %v4169
        %v4186 = vadd.f32 %v4178, %v4170
        %4187 = vst.msk [vmem:[%s3812] sm:$0xff] %vm1034, %v4179
        %4188 = vst.msk [vmem:[%s3812 + $0x8] sm:$0xff] %vm1034, %v4180
        %4189 = vst.msk [vmem:[%s3812 + $0x10] sm:$0xff] %vm1034, %v4181
        %4190 = vst.msk [vmem:[%s3812 + $0x18] sm:$0xff] %vm1034, %v4182
        %4191 = vst.msk [vmem:[%s3812 + $0x20] sm:$0xff] %vm1034, %v4183
        %4192 = vst.msk [vmem:[%s3812 + $0x28] sm:$0xff] %vm1034, %v4184
        %4193 = vst.msk [vmem:[%s3812 + $0x30] sm:$0xff] %vm1034, %v4185
        %4194 = vst.msk [vmem:[%s3812 + $0x38] sm:$0xff] %vm1034, %v4186
        %s4195 = scalar_lea.vmem %s319, 14
        %v4196 = vld [vmem:[%s4195] sm:$0x3]
        %v4198 = vsel %vm805, %v4196, 0
        %4200 = vmatprep.subr.bf16.mxu0 0
        %4201 = vmatpush1.bf16.msra.mxu0 %v4198
        %4202 = vmatprep.subr.bf16.mxu0 0
        %4203 = vmatpush1.bf16.msra.mxu0 0
        %4204 = vmatprep.subr.bf16.mxu0 0
        %4205 = vmatpush1.bf16.msra.mxu0 0
        %4206 = vmatprep.subr.bf16.mxu0 0
        %4207 = vmatpush1.bf16.msra.mxu0 0
        %4208 = vmatprep.subr.bf16.mxu0 0
        %4209 = vmatpush1.bf16.msra.mxu0 0
        %4210 = vmatprep.subr.bf16.mxu0 0
        %4211 = vmatpush1.bf16.msra.mxu0 0
        %4212 = vmatprep.subr.bf16.mxu0 0
        %4213 = vmatpush1.bf16.msra.mxu0 0
        %4214 = vmatprep.subr.bf16.mxu0 0
        %4215 = vmatpush1.bf16.msra.mxu0 0
        %4216 = vmatprep.subr.bf16.mxu0 0
        %4217 = vmatpush1.bf16.msra.mxu0 0
        %4218 = vmatprep.subr.bf16.mxu0 0
        %4219 = vmatpush1.bf16.msra.mxu0 0
        %4220 = vmatprep.subr.bf16.mxu0 0
        %4221 = vmatpush1.bf16.msra.mxu0 0
        %4222 = vmatprep.subr.bf16.mxu0 0
        %4223 = vmatpush1.bf16.msra.mxu0 0
        %4224 = vmatprep.subr.bf16.mxu0 0
        %4225 = vmatpush1.bf16.msra.mxu0 0
        %4226 = vmatprep.subr.bf16.mxu0 0
        %4227 = vmatpush1.bf16.msra.mxu0 0
        %4228 = vmatprep.subr.bf16.mxu0 0
        %4229 = vmatpush1.bf16.msra.mxu0 0
        %4230 = vmatprep.subr.bf16.mxu0 0
        %4231 = vmatpush1.bf16.msra.mxu0 0
        %4232 = vmatprep.mubr.bf16.mxu0 0
        %4233 = vmatmul.mubr.bf16.gmra.mrb[0].mxu0 %v758
        %v4234 = vpop.f32.mrb[0].mxu0
        %v4235 = vadd.f32 0.0, %v4234
        %v4236 = vpop.f32.mrb[0].mxu0
        %v4237 = vpop.f32.mrb[0].mxu0
        %v4238 = vadd.f32 0.0, %v4237
        %v4239 = vpop.f32.mrb[0].mxu0
        %4240 = vmatprep.mubr.bf16.mxu0 0
        %4241 = vmatmul.mubr.bf16.gmra.mrb[0].mxu0 %v761
        %v4242 = vpop.f32.mrb[0].mxu0
        %v4243 = vadd.f32 0.0, %v4242
        %v4244 = vpop.f32.mrb[0].mxu0
        %v4245 = vpop.f32.mrb[0].mxu0
        %v4246 = vadd.f32 0.0, %v4245
        %v4247 = vpop.f32.mrb[0].mxu0
        %4248 = vmatprep.mubr.bf16.mxu0 0
        %4249 = vmatmul.mubr.bf16.gmra.mrb[0].mxu0 %v764
        %v4250 = vpop.f32.mrb[0].mxu0
        %v4251 = vadd.f32 0.0, %v4250
        %v4252 = vpop.f32.mrb[0].mxu0
        %v4253 = vpop.f32.mrb[0].mxu0
        %v4254 = vadd.f32 0.0, %v4253
        %v4255 = vpop.f32.mrb[0].mxu0
        %4256 = vmatprep.mubr.bf16.mxu0 0
        %4257 = vmatmul.mubr.bf16.gmra.mrb[0].mxu0 %v767
        %v4258 = vpop.f32.mrb[0].mxu0
        %v4259 = vadd.f32 0.0, %v4258
        %v4260 = vpop.f32.mrb[0].mxu0
        %v4261 = vpop.f32.mrb[0].mxu0
        %v4262 = vadd.f32 0.0, %v4261
        %v4263 = vpop.f32.mrb[0].mxu0
        %4264 = vmatprep.mubr.bf16.mxu0 0
        %4265 = vmatmul.mubr.bf16.gmra.mrb[0].mxu0 %v770
        %v4266 = vpop.f32.mrb[0].mxu0
        %v4267 = vadd.f32 0.0, %v4266
        %v4268 = vpop.f32.mrb[0].mxu0
        %v4269 = vpop.f32.mrb[0].mxu0
        %v4270 = vadd.f32 0.0, %v4269
        %v4271 = vpop.f32.mrb[0].mxu0
        %4272 = vmatprep.mubr.bf16.mxu0 0
        %4273 = vmatmul.mubr.bf16.gmra.mrb[0].mxu0 %v773
        %v4274 = vpop.f32.mrb[0].mxu0
        %v4275 = vadd.f32 0.0, %v4274
        %v4276 = vpop.f32.mrb[0].mxu0
        %v4277 = vpop.f32.mrb[0].mxu0
        %v4278 = vadd.f32 0.0, %v4277
        %v4279 = vpop.f32.mrb[0].mxu0
        %4280 = vmatprep.mubr.bf16.mxu0 0
        %4281 = vmatmul.mubr.bf16.gmra.mrb[0].mxu0 %v776
        %v4282 = vpop.f32.mrb[0].mxu0
        %v4283 = vadd.f32 0.0, %v4282
        %v4284 = vpop.f32.mrb[0].mxu0
        %v4285 = vpop.f32.mrb[0].mxu0
        %v4286 = vadd.f32 0.0, %v4285
        %v4287 = vpop.f32.mrb[0].mxu0
        %4288 = vmatprep.mubr.bf16.mxu0 0
        %4289 = vmatmul.mubr.bf16.gmra.mrb[0].mxu0 %v779
        %v4290 = vpop.f32.mrb[0].mxu0
        %v4291 = vadd.f32 0.0, %v4290
        %v4292 = vpop.f32.mrb[0].mxu0
        %v4293 = vpop.f32.mrb[0].mxu0
        %v4294 = vadd.f32 0.0, %v4293
        %v4295 = vpop.f32.mrb[0].mxu0
        %4296 = vmatprep.mubr.bf16.mxu0 0
        %4297 = vmatmul.mubr.bf16.gmra.mrb[0].mxu0 %v782
        %v4298 = vpop.f32.mrb[0].mxu0
        %v4299 = vadd.f32 0.0, %v4298
        %v4300 = vpop.f32.mrb[0].mxu0
        %v4301 = vpop.f32.mrb[0].mxu0
        %v4302 = vadd.f32 0.0, %v4301
        %v4303 = vpop.f32.mrb[0].mxu0
        %4304 = vmatprep.mubr.bf16.mxu0 0
        %4305 = vmatmul.mubr.bf16.gmra.mrb[0].mxu0 %v785
        %v4306 = vpop.f32.mrb[0].mxu0
        %v4307 = vadd.f32 0.0, %v4306
        %v4308 = vpop.f32.mrb[0].mxu0
        %v4309 = vpop.f32.mrb[0].mxu0
        %v4310 = vadd.f32 0.0, %v4309
        %v4311 = vpop.f32.mrb[0].mxu0
        %4312 = vmatprep.mubr.bf16.mxu0 0
        %4313 = vmatmul.mubr.bf16.gmra.mrb[0].mxu0 %v788
        %v4314 = vpop.f32.mrb[0].mxu0
        %v4315 = vadd.f32 0.0, %v4314
        %v4316 = vpop.f32.mrb[0].mxu0
        %v4317 = vpop.f32.mrb[0].mxu0
        %v4318 = vadd.f32 0.0, %v4317
        %v4319 = vpop.f32.mrb[0].mxu0
        %4320 = vmatprep.mubr.bf16.mxu0 0
        %4321 = vmatmul.mubr.bf16.gmra.mrb[0].mxu0 %v791
        %v4322 = vpop.f32.mrb[0].mxu0
        %v4323 = vadd.f32 0.0, %v4322
        %v4324 = vpop.f32.mrb[0].mxu0
        %v4325 = vpop.f32.mrb[0].mxu0
        %v4326 = vadd.f32 0.0, %v4325
        %v4327 = vpop.f32.mrb[0].mxu0
        %4328 = vmatprep.mubr.bf16.mxu0 0
        %4329 = vmatmul.mubr.bf16.gmra.mrb[0].mxu0 %v794
        %v4330 = vpop.f32.mrb[0].mxu0
        %v4331 = vadd.f32 0.0, %v4330
        %v4332 = vpop.f32.mrb[0].mxu0
        %v4333 = vpop.f32.mrb[0].mxu0
        %v4334 = vadd.f32 0.0, %v4333
        %v4335 = vpop.f32.mrb[0].mxu0
        %4336 = vmatprep.mubr.bf16.mxu0 0
        %4337 = vmatmul.mubr.bf16.gmra.mrb[0].mxu0 %v797
        %v4338 = vpop.f32.mrb[0].mxu0
        %v4339 = vadd.f32 0.0, %v4338
        %v4340 = vpop.f32.mrb[0].mxu0
        %v4341 = vpop.f32.mrb[0].mxu0
        %v4342 = vadd.f32 0.0, %v4341
        %v4343 = vpop.f32.mrb[0].mxu0
        %4344 = vmatprep.mubr.bf16.mxu0 0
        %4345 = vmatmul.mubr.bf16.gmra.mrb[0].mxu0 %v800
        %v4346 = vpop.f32.mrb[0].mxu0
        %v4347 = vadd.f32 0.0, %v4346
        %v4348 = vpop.f32.mrb[0].mxu0
        %v4349 = vpop.f32.mrb[0].mxu0
        %v4350 = vadd.f32 0.0, %v4349
        %v4351 = vpop.f32.mrb[0].mxu0
        %4352 = vmatprep.mubr.bf16.mxu0 0
        %4353 = vmatmul.mubr.bf16.gmra.mrb[0].mxu0 %v803
        %v4354 = vpop.f32.mrb[0].mxu0
        %v4355 = vadd.f32 0.0, %v4354
        %v4356 = vpop.f32.mrb[0].mxu0
        %v4357 = vpop.f32.mrb[0].mxu0
        %v4358 = vadd.f32 0.0, %v4357
        %v4359 = vpop.f32.mrb[0].mxu0
        %4360 = vdwg.mxu0
        %s4361 = scalar_lea.vmem [#allocation3], 768
        %v4362 = vld [vmem:[%s4361] sm:$0xff]
        %v4363 = vld [vmem:[%s4361 + $0x8] sm:$0xff]
        %v4364 = vld [vmem:[%s4361 + $0x10] sm:$0xff]
        %v4365 = vld [vmem:[%s4361 + $0x18] sm:$0xff]
        %v4366 = vld [vmem:[%s4361 + $0x20] sm:$0xff]
        %v4367 = vld [vmem:[%s4361 + $0x28] sm:$0xff]
        %v4368 = vld [vmem:[%s4361 + $0x30] sm:$0xff]
        %v4369 = vld [vmem:[%s4361 + $0x38] sm:$0xff]
        %v4370 = vld [vmem:[%s4361 + $0x40] sm:$0xff]
        %v4371 = vld [vmem:[%s4361 + $0x48] sm:$0xff]
        %v4372 = vld [vmem:[%s4361 + $0x50] sm:$0xff]
        %v4373 = vld [vmem:[%s4361 + $0x58] sm:$0xff]
        %v4374 = vld [vmem:[%s4361 + $0x60] sm:$0xff]
        %v4375 = vld [vmem:[%s4361 + $0x68] sm:$0xff]
        %v4376 = vld [vmem:[%s4361 + $0x70] sm:$0xff]
        %v4377 = vld [vmem:[%s4361 + $0x78] sm:$0xff]
        %v4378 = vld [vmem:[%s4361 + $0x80] sm:$0xff]
        %v4379 = vld [vmem:[%s4361 + $0x88] sm:$0xff]
        %v4380 = vld [vmem:[%s4361 + $0x90] sm:$0xff]
        %v4381 = vld [vmem:[%s4361 + $0x98] sm:$0xff]
        %v4382 = vld [vmem:[%s4361 + $0xa0] sm:$0xff]
        %v4383 = vld [vmem:[%s4361 + $0xa8] sm:$0xff]
        %v4384 = vld [vmem:[%s4361 + $0xb0] sm:$0xff]
        %v4385 = vld [vmem:[%s4361 + $0xb8] sm:$0xff]
        %v4386 = vld [vmem:[%s4361 + $0xc0] sm:$0xff]
        %v4387 = vld [vmem:[%s4361 + $0xc8] sm:$0xff]
        %v4388 = vld [vmem:[%s4361 + $0xd0] sm:$0xff]
        %v4389 = vld [vmem:[%s4361 + $0xd8] sm:$0xff]
        %v4390 = vld [vmem:[%s4361 + $0xe0] sm:$0xff]
        %v4391 = vld [vmem:[%s4361 + $0xe8] sm:$0xff]
        %v4392 = vld [vmem:[%s4361 + $0xf0] sm:$0xff]
        %v4393 = vld [vmem:[%s4361 + $0xf8] sm:$0xff]
        %4426 = vrot.lane.b32.xlu0 %v4235, 120
        %v4427 = vpop.permute.xlu0 %4426
        %4428 = vrot.lane.b32.xlu0 %v4238, 120
        %v4429 = vpop.permute.xlu0 %4428
        %4430 = vrot.lane.b32.xlu0 %v4243, 120
        %v4431 = vpop.permute.xlu0 %4430
        %4432 = vrot.lane.b32.xlu0 %v4246, 120
        %v4433 = vpop.permute.xlu0 %4432
        %4434 = vrot.lane.b32.xlu0 %v4251, 120
        %v4435 = vpop.permute.xlu0 %4434
        %4436 = vrot.lane.b32.xlu0 %v4254, 120
        %v4437 = vpop.permute.xlu0 %4436
        %4438 = vrot.lane.b32.xlu0 %v4259, 120
        %v4439 = vpop.permute.xlu0 %4438
        %4440 = vrot.lane.b32.xlu0 %v4262, 120
        %v4441 = vpop.permute.xlu0 %4440
        %4442 = vrot.lane.b32.xlu0 %v4267, 120
        %v4443 = vpop.permute.xlu0 %4442
        %4444 = vrot.lane.b32.xlu0 %v4270, 120
        %v4445 = vpop.permute.xlu0 %4444
        %4446 = vrot.lane.b32.xlu0 %v4275, 120
        %v4447 = vpop.permute.xlu0 %4446
        %4448 = vrot.lane.b32.xlu0 %v4278, 120
        %v4449 = vpop.permute.xlu0 %4448
        %4450 = vrot.lane.b32.xlu0 %v4283, 120
        %v4451 = vpop.permute.xlu0 %4450
        %4452 = vrot.lane.b32.xlu0 %v4286, 120
        %v4453 = vpop.permute.xlu0 %4452
        %4454 = vrot.lane.b32.xlu0 %v4291, 120
        %v4455 = vpop.permute.xlu0 %4454
        %4456 = vrot.lane.b32.xlu0 %v4294, 120
        %v4457 = vpop.permute.xlu0 %4456
        %4458 = vrot.lane.b32.xlu0 %v4299, 120
        %v4459 = vpop.permute.xlu0 %4458
        %4460 = vrot.lane.b32.xlu0 %v4302, 120
        %v4461 = vpop.permute.xlu0 %4460
        %4462 = vrot.lane.b32.xlu0 %v4307, 120
        %v4463 = vpop.permute.xlu0 %4462
        %4464 = vrot.lane.b32.xlu0 %v4310, 120
        %v4465 = vpop.permute.xlu0 %4464
        %4466 = vrot.lane.b32.xlu0 %v4315, 120
        %v4467 = vpop.permute.xlu0 %4466
        %4468 = vrot.lane.b32.xlu0 %v4318, 120
        %v4469 = vpop.permute.xlu0 %4468
        %4470 = vrot.lane.b32.xlu0 %v4323, 120
        %v4471 = vpop.permute.xlu0 %4470
        %4472 = vrot.lane.b32.xlu0 %v4326, 120
        %v4473 = vpop.permute.xlu0 %4472
        %4474 = vrot.lane.b32.xlu0 %v4331, 120
        %v4475 = vpop.permute.xlu0 %4474
        %4476 = vrot.lane.b32.xlu0 %v4334, 120
        %v4477 = vpop.permute.xlu0 %4476
        %4478 = vrot.lane.b32.xlu0 %v4339, 120
        %v4479 = vpop.permute.xlu0 %4478
        %4480 = vrot.lane.b32.xlu0 %v4342, 120
        %v4481 = vpop.permute.xlu0 %4480
        %4482 = vrot.lane.b32.xlu0 %v4347, 120
        %v4483 = vpop.permute.xlu0 %4482
        %4484 = vrot.lane.b32.xlu0 %v4350, 120
        %v4485 = vpop.permute.xlu0 %4484
        %4486 = vrot.lane.b32.xlu0 %v4355, 120
        %v4487 = vpop.permute.xlu0 %4486
        %4488 = vrot.lane.b32.xlu0 %v4358, 120
        %v4489 = vpop.permute.xlu0 %4488
        %v4522 = vadd.f32 %v4362, %v4427
        %v4523 = vadd.f32 %v4363, %v4429
        %v4524 = vadd.f32 %v4364, %v4431
        %v4525 = vadd.f32 %v4365, %v4433
        %v4526 = vadd.f32 %v4366, %v4435
        %v4527 = vadd.f32 %v4367, %v4437
        %v4528 = vadd.f32 %v4368, %v4439
        %v4529 = vadd.f32 %v4369, %v4441
        %v4530 = vadd.f32 %v4370, %v4443
        %v4531 = vadd.f32 %v4371, %v4445
        %v4532 = vadd.f32 %v4372, %v4447
        %v4533 = vadd.f32 %v4373, %v4449
        %v4534 = vadd.f32 %v4374, %v4451
        %v4535 = vadd.f32 %v4375, %v4453
        %v4536 = vadd.f32 %v4376, %v4455
        %v4537 = vadd.f32 %v4377, %v4457
        %v4538 = vadd.f32 %v4378, %v4459
        %v4539 = vadd.f32 %v4379, %v4461
        %v4540 = vadd.f32 %v4380, %v4463
        %v4541 = vadd.f32 %v4381, %v4465
        %v4542 = vadd.f32 %v4382, %v4467
        %v4543 = vadd.f32 %v4383, %v4469
        %v4544 = vadd.f32 %v4384, %v4471
        %v4545 = vadd.f32 %v4385, %v4473
        %v4546 = vadd.f32 %v4386, %v4475
        %v4547 = vadd.f32 %v4387, %v4477
        %v4548 = vadd.f32 %v4388, %v4479
        %v4549 = vadd.f32 %v4389, %v4481
        %v4550 = vadd.f32 %v4390, %v4483
        %v4551 = vadd.f32 %v4391, %v4485
        %v4552 = vadd.f32 %v4392, %v4487
        %v4553 = vadd.f32 %v4393, %v4489
        %4554 = vst.msk [vmem:[%s4361] sm:$0xff] %vm1034, %v4522
        %4555 = vst.msk [vmem:[%s4361 + $0x8] sm:$0xff] %vm1034, %v4523
        %4556 = vst.msk [vmem:[%s4361 + $0x10] sm:$0xff] %vm1034, %v4524
        %4557 = vst.msk [vmem:[%s4361 + $0x18] sm:$0xff] %vm1034, %v4525
        %4558 = vst.msk [vmem:[%s4361 + $0x20] sm:$0xff] %vm1034, %v4526
        %4559 = vst.msk [vmem:[%s4361 + $0x28] sm:$0xff] %vm1034, %v4527
        %4560 = vst.msk [vmem:[%s4361 + $0x30] sm:$0xff] %vm1034, %v4528
        %4561 = vst.msk [vmem:[%s4361 + $0x38] sm:$0xff] %vm1034, %v4529
        %4562 = vst.msk [vmem:[%s4361 + $0x40] sm:$0xff] %vm1034, %v4530
        %4563 = vst.msk [vmem:[%s4361 + $0x48] sm:$0xff] %vm1034, %v4531
        %4564 = vst.msk [vmem:[%s4361 + $0x50] sm:$0xff] %vm1034, %v4532
        %4565 = vst.msk [vmem:[%s4361 + $0x58] sm:$0xff] %vm1034, %v4533
        %4566 = vst.msk [vmem:[%s4361 + $0x60] sm:$0xff] %vm1034, %v4534
        %4567 = vst.msk [vmem:[%s4361 + $0x68] sm:$0xff] %vm1034, %v4535
        %4568 = vst.msk [vmem:[%s4361 + $0x70] sm:$0xff] %vm1034, %v4536
        %4569 = vst.msk [vmem:[%s4361 + $0x78] sm:$0xff] %vm1034, %v4537
        %4570 = vst.msk [vmem:[%s4361 + $0x80] sm:$0xff] %vm1034, %v4538
        %4571 = vst.msk [vmem:[%s4361 + $0x88] sm:$0xff] %vm1034, %v4539
        %4572 = vst.msk [vmem:[%s4361 + $0x90] sm:$0xff] %vm1034, %v4540
        %4573 = vst.msk [vmem:[%s4361 + $0x98] sm:$0xff] %vm1034, %v4541
        %4574 = vst.msk [vmem:[%s4361 + $0xa0] sm:$0xff] %vm1034, %v4542
        %4575 = vst.msk [vmem:[%s4361 + $0xa8] sm:$0xff] %vm1034, %v4543
        %4576 = vst.msk [vmem:[%s4361 + $0xb0] sm:$0xff] %vm1034, %v4544
        %4577 = vst.msk [vmem:[%s4361 + $0xb8] sm:$0xff] %vm1034, %v4545
        %4578 = vst.msk [vmem:[%s4361 + $0xc0] sm:$0xff] %vm1034, %v4546
        %4579 = vst.msk [vmem:[%s4361 + $0xc8] sm:$0xff] %vm1034, %v4547
        %4580 = vst.msk [vmem:[%s4361 + $0xd0] sm:$0xff] %vm1034, %v4548
        %4581 = vst.msk [vmem:[%s4361 + $0xd8] sm:$0xff] %vm1034, %v4549
        %4582 = vst.msk [vmem:[%s4361 + $0xe0] sm:$0xff] %vm1034, %v4550
        %4583 = vst.msk [vmem:[%s4361 + $0xe8] sm:$0xff] %vm1034, %v4551
        %4584 = vst.msk [vmem:[%s4361 + $0xf0] sm:$0xff] %vm1034, %v4552
        %4585 = vst.msk [vmem:[%s4361 + $0xf8] sm:$0xff] %vm1034, %v4553
        // Predicated region
        $region49: #{tpu_custom_call.1} parent=43 // pred_check
          %p4586 = pneg %p325
        $region50: #{tpu_custom_call.1} parent=43 // pred_check_branch
          %4588 = sbr.rel (%p4586) target = $region52
        $region51: #{tpu_custom_call.1} parent=43 // pred_region
          %v4589 = vld [vmem:[#allocation2] sm:$0x1]
          %v4590 = vmul.f32 %v4589, 0.00390625
          %v4591 = vld [vmem:[%s4] sm:$0x1]
          %v4592 = vadd.f32 %v4590, %v4591
          %v4593 = vmax.f32 %v4592, 0.0
          %v4595 = vlaneseq
          %v4596 = vshrl.u32 %v4595, 7
          %v4597 = vsub.s32 0, %v4596
          %v4598 = vrot.slane %v4593, %v4597
          %v4600 = vpack.c.bf16 %v4598, %v4598
          %v4602 = vunpack.c.l.b16 %v4600
          %v4603 = vpack.c.b16 %v4602, %v4602
          %vm4605 = vcmask 60416
          %4606 = vst.msk [vmem:[%s303] sm:$0xf] %vm4605, %v4603
          %4607 = vst.msk [vmem:[%s303 + $0x4] sm:$0xf] %vm4605, %v4603
          %4608 = vst.msk [vmem:[%s303 + $0x8] sm:$0xf] %vm4605, %v4603
          %4609 = vst.msk [vmem:[%s303 + $0xc] sm:$0xf] %vm4605, %v4603
          %4610 = vst.msk [vmem:[%s303 + $0x10] sm:$0xf] %vm4605, %v4603
          %4611 = vst.msk [vmem:[%s303 + $0x14] sm:$0xf] %vm4605, %v4603
          %4612 = vst.msk [vmem:[%s303 + $0x18] sm:$0xf] %vm4605, %v4603
          %4613 = vst.msk [vmem:[%s303 + $0x1c] sm:$0xf] %vm4605, %v4603
          %4614 = vst.msk [vmem:[%s303 + $0x20] sm:$0xf] %vm4605, %v4603
          %4615 = vst.msk [vmem:[%s303 + $0x24] sm:$0xf] %vm4605, %v4603
          %4616 = vst.msk [vmem:[%s303 + $0x28] sm:$0xf] %vm4605, %v4603
          %4617 = vst.msk [vmem:[%s303 + $0x2c] sm:$0xf] %vm4605, %v4603
          %4618 = vst.msk [vmem:[%s303 + $0x30] sm:$0xf] %vm4605, %v4603
          %4619 = vst.msk [vmem:[%s303 + $0x34] sm:$0xf] %vm4605, %v4603
          %4620 = vst.msk [vmem:[%s303 + $0x38] sm:$0xf] %vm4605, %v4603
          %4621 = vst.msk [vmem:[%s303 + $0x3c] sm:$0xf] %vm4605, %v4603
          %4622 = vst.msk [vmem:[%s303 + $0x40] sm:$0xf] %vm4605, %v4603
          %4623 = vst.msk [vmem:[%s303 + $0x44] sm:$0xf] %vm4605, %v4603
          %4624 = vst.msk [vmem:[%s303 + $0x48] sm:$0xf] %vm4605, %v4603
          %4625 = vst.msk [vmem:[%s303 + $0x4c] sm:$0xf] %vm4605, %v4603
          %4626 = vst.msk [vmem:[%s303 + $0x50] sm:$0xf] %vm4605, %v4603
          %4627 = vst.msk [vmem:[%s303 + $0x54] sm:$0xf] %vm4605, %v4603
          %4628 = vst.msk [vmem:[%s303 + $0x58] sm:$0xf] %vm4605, %v4603
          %4629 = vst.msk [vmem:[%s303 + $0x5c] sm:$0xf] %vm4605, %v4603
          %4630 = vst.msk [vmem:[%s303 + $0x60] sm:$0xf] %vm4605, %v4603
          %4631 = vst.msk [vmem:[%s303 + $0x64] sm:$0xf] %vm4605, %v4603
          %4632 = vst.msk [vmem:[%s303 + $0x68] sm:$0xf] %vm4605, %v4603
          %4633 = vst.msk [vmem:[%s303 + $0x6c] sm:$0xf] %vm4605, %v4603
          %4634 = vst.msk [vmem:[%s303 + $0x70] sm:$0xf] %vm4605, %v4603
          %4635 = vst.msk [vmem:[%s303 + $0x74] sm:$0xf] %vm4605, %v4603
          %4636 = vst.msk [vmem:[%s303 + $0x78] sm:$0xf] %vm4605, %v4603
          %4637 = vst.msk [vmem:[%s303 + $0x7c] sm:$0xf] %vm4605, %v4603
          %v4638 = vld [vmem:[%s5] sm:$0x1]
          %v4639 = vld [vmem:[#allocation3] sm:$0xff]
          %v4640 = vld [vmem:[#allocation3 + $0x8] sm:$0xff]
          %v4641 = vld [vmem:[#allocation3 + $0x10] sm:$0xff]
          %v4642 = vld [vmem:[#allocation3 + $0x18] sm:$0xff]
          %v4643 = vld [vmem:[#allocation3 + $0x20] sm:$0xff]
          %v4644 = vld [vmem:[#allocation3 + $0x28] sm:$0xff]
          %v4645 = vld [vmem:[#allocation3 + $0x30] sm:$0xff]
          %v4646 = vld [vmem:[#allocation3 + $0x38] sm:$0xff]
          %v4647 = vld [vmem:[#allocation3 + $0x40] sm:$0xff]
          %v4648 = vld [vmem:[#allocation3 + $0x48] sm:$0xff]
          %v4649 = vld [vmem:[#allocation3 + $0x50] sm:$0xff]
          %v4650 = vld [vmem:[#allocation3 + $0x58] sm:$0xff]
          %v4651 = vld [vmem:[#allocation3 + $0x60] sm:$0xff]
          %v4652 = vld [vmem:[#allocation3 + $0x68] sm:$0xff]
          %v4653 = vld [vmem:[#allocation3 + $0x70] sm:$0xff]
          %v4654 = vld [vmem:[#allocation3 + $0x78] sm:$0xff]
          %v4655 = vld [vmem:[#allocation3 + $0x80] sm:$0xff]
          %v4656 = vld [vmem:[#allocation3 + $0x88] sm:$0xff]
          %v4657 = vld [vmem:[#allocation3 + $0x90] sm:$0xff]
          %v4658 = vld [vmem:[#allocation3 + $0x98] sm:$0xff]
          %v4659 = vld [vmem:[#allocation3 + $0xa0] sm:$0xff]
          %v4660 = vld [vmem:[#allocation3 + $0xa8] sm:$0xff]
          %v4661 = vld [vmem:[#allocation3 + $0xb0] sm:$0xff]
          %v4662 = vld [vmem:[#allocation3 + $0xb8] sm:$0xff]
          %v4663 = vld [vmem:[#allocation3 + $0xc0] sm:$0xff]
          %v4664 = vld [vmem:[#allocation3 + $0xc8] sm:$0xff]
          %v4665 = vld [vmem:[#allocation3 + $0xd0] sm:$0xff]
          %v4666 = vld [vmem:[#allocation3 + $0xd8] sm:$0xff]
          %v4667 = vld [vmem:[#allocation3 + $0xe0] sm:$0xff]
          %v4668 = vld [vmem:[#allocation3 + $0xe8] sm:$0xff]
          %v4669 = vld [vmem:[#allocation3 + $0xf0] sm:$0xff]
          %v4670 = vld [vmem:[#allocation3 + $0xf8] sm:$0xff]
          %v4671 = vlaneseq
          %v4672 = vshrl.u32 %v4671, 7
          %v4673 = vsub.s32 0, %v4672
          %v4674 = vrot.slane %v4638, %v4673
          %v4675 = vadd.f32 %v4639, %v4674
          %v4676 = vadd.f32 %v4640, %v4674
          %v4677 = vadd.f32 %v4641, %v4674
          %v4678 = vadd.f32 %v4642, %v4674
          %v4679 = vadd.f32 %v4643, %v4674
          %v4680 = vadd.f32 %v4644, %v4674
          %v4681 = vadd.f32 %v4645, %v4674
          %v4682 = vadd.f32 %v4646, %v4674
          %v4683 = vadd.f32 %v4647, %v4674
          %v4684 = vadd.f32 %v4648, %v4674
          %v4685 = vadd.f32 %v4649, %v4674
          %v4686 = vadd.f32 %v4650, %v4674
          %v4687 = vadd.f32 %v4651, %v4674
          %v4688 = vadd.f32 %v4652, %v4674
          %v4689 = vadd.f32 %v4653, %v4674
          %v4690 = vadd.f32 %v4654, %v4674
          %v4691 = vadd.f32 %v4655, %v4674
          %v4692 = vadd.f32 %v4656, %v4674
          %v4693 = vadd.f32 %v4657, %v4674
          %v4694 = vadd.f32 %v4658, %v4674
          %v4695 = vadd.f32 %v4659, %v4674
          %v4696 = vadd.f32 %v4660, %v4674
          %v4697 = vadd.f32 %v4661, %v4674
          %v4698 = vadd.f32 %v4662, %v4674
          %v4699 = vadd.f32 %v4663, %v4674
          %v4700 = vadd.f32 %v4664, %v4674
          %v4701 = vadd.f32 %v4665, %v4674
          %v4702 = vadd.f32 %v4666, %v4674
          %v4703 = vadd.f32 %v4667, %v4674
          %v4704 = vadd.f32 %v4668, %v4674
          %v4705 = vadd.f32 %v4669, %v4674
          %v4706 = vadd.f32 %v4670, %v4674
          %v4707 = vmax.f32 %v4675, 0.0
          %v4708 = vmax.f32 %v4676, 0.0
          %v4709 = vmax.f32 %v4677, 0.0
          %v4710 = vmax.f32 %v4678, 0.0
          %v4711 = vmax.f32 %v4679, 0.0
          %v4712 = vmax.f32 %v4680, 0.0
          %v4713 = vmax.f32 %v4681, 0.0
          %v4714 = vmax.f32 %v4682, 0.0
          %v4715 = vmax.f32 %v4683, 0.0
          %v4716 = vmax.f32 %v4684, 0.0
          %v4717 = vmax.f32 %v4685, 0.0
          %v4718 = vmax.f32 %v4686, 0.0
          %v4719 = vmax.f32 %v4687, 0.0
          %v4720 = vmax.f32 %v4688, 0.0
          %v4721 = vmax.f32 %v4689, 0.0
          %v4722 = vmax.f32 %v4690, 0.0
          %v4723 = vmax.f32 %v4691, 0.0
          %v4724 = vmax.f32 %v4692, 0.0
          %v4725 = vmax.f32 %v4693, 0.0
          %v4726 = vmax.f32 %v4694, 0.0
          %v4727 = vmax.f32 %v4695, 0.0
          %v4728 = vmax.f32 %v4696, 0.0
          %v4729 = vmax.f32 %v4697, 0.0
          %v4730 = vmax.f32 %v4698, 0.0
          %v4731 = vmax.f32 %v4699, 0.0
          %v4732 = vmax.f32 %v4700, 0.0
          %v4733 = vmax.f32 %v4701, 0.0
          %v4734 = vmax.f32 %v4702, 0.0
          %v4735 = vmax.f32 %v4703, 0.0
          %v4736 = vmax.f32 %v4704, 0.0
          %v4737 = vmax.f32 %v4705, 0.0
          %v4738 = vmax.f32 %v4706, 0.0
          %v4739 = vpack.c.bf16 %v4708, %v4707
          %v4740 = vpack.c.bf16 %v4710, %v4709
          %v4741 = vpack.c.bf16 %v4712, %v4711
          %v4742 = vpack.c.bf16 %v4714, %v4713
          %v4743 = vpack.c.bf16 %v4716, %v4715
          %v4744 = vpack.c.bf16 %v4718, %v4717
          %v4745 = vpack.c.bf16 %v4720, %v4719
          %v4746 = vpack.c.bf16 %v4722, %v4721
          %v4747 = vpack.c.bf16 %v4724, %v4723
          %v4748 = vpack.c.bf16 %v4726, %v4725
          %v4749 = vpack.c.bf16 %v4728, %v4727
          %v4750 = vpack.c.bf16 %v4730, %v4729
          %v4751 = vpack.c.bf16 %v4732, %v4731
          %v4752 = vpack.c.bf16 %v4734, %v4733
          %v4753 = vpack.c.bf16 %v4736, %v4735
          %v4754 = vpack.c.bf16 %v4738, %v4737
          %v4771 = vunpack.c.l.b16 %v4739
          %v4772 = vunpack.c.h.b16 %v4739
          %v4773 = vunpack.c.l.b16 %v4740
          %v4774 = vunpack.c.h.b16 %v4740
          %v4775 = vunpack.c.l.b16 %v4741
          %v4776 = vunpack.c.h.b16 %v4741
          %v4777 = vunpack.c.l.b16 %v4742
          %v4778 = vunpack.c.h.b16 %v4742
          %v4779 = vunpack.c.l.b16 %v4743
          %v4780 = vunpack.c.h.b16 %v4743
          %v4781 = vunpack.c.l.b16 %v4744
          %v4782 = vunpack.c.h.b16 %v4744
          %v4783 = vunpack.c.l.b16 %v4745
          %v4784 = vunpack.c.h.b16 %v4745
          %v4785 = vunpack.c.l.b16 %v4746
          %v4786 = vunpack.c.h.b16 %v4746
          %v4787 = vunpack.c.l.b16 %v4747
          %v4788 = vunpack.c.h.b16 %v4747
          %v4789 = vunpack.c.l.b16 %v4748
          %v4790 = vunpack.c.h.b16 %v4748
          %v4791 = vunpack.c.l.b16 %v4749
          %v4792 = vunpack.c.h.b16 %v4749
          %v4793 = vunpack.c.l.b16 %v4750
          %v4794 = vunpack.c.h.b16 %v4750
          %v4795 = vunpack.c.l.b16 %v4751
          %v4796 = vunpack.c.h.b16 %v4751
          %v4797 = vunpack.c.l.b16 %v4752
          %v4798 = vunpack.c.h.b16 %v4752
          %v4799 = vunpack.c.l.b16 %v4753
          %v4800 = vunpack.c.h.b16 %v4753
          %v4801 = vunpack.c.l.b16 %v4754
          %v4802 = vunpack.c.h.b16 %v4754
          %v4803 = vpack.c.b16 %v4771, %v4771
          %v4804 = vpack.c.b16 %v4772, %v4772
          %v4805 = vpack.c.b16 %v4773, %v4773
          %v4806 = vpack.c.b16 %v4774, %v4774
          %v4807 = vpack.c.b16 %v4775, %v4775
          %v4808 = vpack.c.b16 %v4776, %v4776
          %v4809 = vpack.c.b16 %v4777, %v4777
          %v4810 = vpack.c.b16 %v4778, %v4778
          %v4811 = vpack.c.b16 %v4779, %v4779
          %v4812 = vpack.c.b16 %v4780, %v4780
          %v4813 = vpack.c.b16 %v4781, %v4781
          %v4814 = vpack.c.b16 %v4782, %v4782
          %v4815 = vpack.c.b16 %v4783, %v4783
          %v4816 = vpack.c.b16 %v4784, %v4784
          %v4817 = vpack.c.b16 %v4785, %v4785
          %v4818 = vpack.c.b16 %v4786, %v4786
          %v4819 = vpack.c.b16 %v4787, %v4787
          %v4820 = vpack.c.b16 %v4788, %v4788
          %v4821 = vpack.c.b16 %v4789, %v4789
          %v4822 = vpack.c.b16 %v4790, %v4790
          %v4823 = vpack.c.b16 %v4791, %v4791
          %v4824 = vpack.c.b16 %v4792, %v4792
          %v4825 = vpack.c.b16 %v4793, %v4793
          %v4826 = vpack.c.b16 %v4794, %v4794
          %v4827 = vpack.c.b16 %v4795, %v4795
          %v4828 = vpack.c.b16 %v4796, %v4796
          %v4829 = vpack.c.b16 %v4797, %v4797
          %v4830 = vpack.c.b16 %v4798, %v4798
          %v4831 = vpack.c.b16 %v4799, %v4799
          %v4832 = vpack.c.b16 %v4800, %v4800
          %v4833 = vpack.c.b16 %v4801, %v4801
          %v4834 = vpack.c.b16 %v4802, %v4802
          %4835 = vrot.lane.b32.xlu0 %v4803, 8
          %v4836 = vpop.permute.xlu0 %4835
          %4837 = vrot.lane.b32.xlu0 %v4804, 8
          %v4838 = vpop.permute.xlu0 %4837
          %4839 = vrot.lane.b32.xlu0 %v4805, 8
          %v4840 = vpop.permute.xlu0 %4839
          %4841 = vrot.lane.b32.xlu0 %v4806, 8
          %v4842 = vpop.permute.xlu0 %4841
          %4843 = vrot.lane.b32.xlu0 %v4807, 8
          %v4844 = vpop.permute.xlu0 %4843
          %4845 = vrot.lane.b32.xlu0 %v4808, 8
          %v4846 = vpop.permute.xlu0 %4845
          %4847 = vrot.lane.b32.xlu0 %v4809, 8
          %v4848 = vpop.permute.xlu0 %4847
          %4849 = vrot.lane.b32.xlu0 %v4810, 8
          %v4850 = vpop.permute.xlu0 %4849
          %4851 = vrot.lane.b32.xlu0 %v4811, 8
          %v4852 = vpop.permute.xlu0 %4851
          %4853 = vrot.lane.b32.xlu0 %v4812, 8
          %v4854 = vpop.permute.xlu0 %4853
          %4855 = vrot.lane.b32.xlu0 %v4813, 8
          %v4856 = vpop.permute.xlu0 %4855
          %4857 = vrot.lane.b32.xlu0 %v4814, 8
          %v4858 = vpop.permute.xlu0 %4857
          %4859 = vrot.lane.b32.xlu0 %v4815, 8
          %v4860 = vpop.permute.xlu0 %4859
          %4861 = vrot.lane.b32.xlu0 %v4816, 8
          %v4862 = vpop.permute.xlu0 %4861
          %4863 = vrot.lane.b32.xlu0 %v4817, 8
          %v4864 = vpop.permute.xlu0 %4863
          %4865 = vrot.lane.b32.xlu0 %v4818, 8
          %v4866 = vpop.permute.xlu0 %4865
          %4867 = vrot.lane.b32.xlu0 %v4819, 8
          %v4868 = vpop.permute.xlu0 %4867
          %4869 = vrot.lane.b32.xlu0 %v4820, 8
          %v4870 = vpop.permute.xlu0 %4869
          %4871 = vrot.lane.b32.xlu0 %v4821, 8
          %v4872 = vpop.permute.xlu0 %4871
          %4873 = vrot.lane.b32.xlu0 %v4822, 8
          %v4874 = vpop.permute.xlu0 %4873
          %4875 = vrot.lane.b32.xlu0 %v4823, 8
          %v4876 = vpop.permute.xlu0 %4875
          %4877 = vrot.lane.b32.xlu0 %v4824, 8
          %v4878 = vpop.permute.xlu0 %4877
          %4879 = vrot.lane.b32.xlu0 %v4825, 8
          %v4880 = vpop.permute.xlu0 %4879
          %4881 = vrot.lane.b32.xlu0 %v4826, 8
          %v4882 = vpop.permute.xlu0 %4881
          %4883 = vrot.lane.b32.xlu0 %v4827, 8
          %v4884 = vpop.permute.xlu0 %4883
          %4885 = vrot.lane.b32.xlu0 %v4828, 8
          %v4886 = vpop.permute.xlu0 %4885
          %4887 = vrot.lane.b32.xlu0 %v4829, 8
          %v4888 = vpop.permute.xlu0 %4887
          %4889 = vrot.lane.b32.xlu0 %v4830, 8
          %v4890 = vpop.permute.xlu0 %4889
          %4891 = vrot.lane.b32.xlu0 %v4831, 8
          %v4892 = vpop.permute.xlu0 %4891
          %4893 = vrot.lane.b32.xlu0 %v4832, 8
          %v4894 = vpop.permute.xlu0 %4893
          %4895 = vrot.lane.b32.xlu0 %v4833, 8
          %v4896 = vpop.permute.xlu0 %4895
          %4897 = vrot.lane.b32.xlu0 %v4834, 8
          %v4898 = vpop.permute.xlu0 %4897
          %vm4931 = vcmask 126016
          %4932 = vst.msk [vmem:[%s303] sm:$0xf] %vm4931, %v4836
          %4933 = vst.msk [vmem:[%s303 + $0x4] sm:$0xf] %vm4931, %v4838
          %4934 = vst.msk [vmem:[%s303 + $0x8] sm:$0xf] %vm4931, %v4840
          %4935 = vst.msk [vmem:[%s303 + $0xc] sm:$0xf] %vm4931, %v4842
          %4936 = vst.msk [vmem:[%s303 + $0x10] sm:$0xf] %vm4931, %v4844
          %4937 = vst.msk [vmem:[%s303 + $0x14] sm:$0xf] %vm4931, %v4846
          %4938 = vst.msk [vmem:[%s303 + $0x18] sm:$0xf] %vm4931, %v4848
          %4939 = vst.msk [vmem:[%s303 + $0x1c] sm:$0xf] %vm4931, %v4850
          %4940 = vst.msk [vmem:[%s303 + $0x20] sm:$0xf] %vm4931, %v4852
          %4941 = vst.msk [vmem:[%s303 + $0x24] sm:$0xf] %vm4931, %v4854
          %4942 = vst.msk [vmem:[%s303 + $0x28] sm:$0xf] %vm4931, %v4856
          %4943 = vst.msk [vmem:[%s303 + $0x2c] sm:$0xf] %vm4931, %v4858
          %4944 = vst.msk [vmem:[%s303 + $0x30] sm:$0xf] %vm4931, %v4860
          %4945 = vst.msk [vmem:[%s303 + $0x34] sm:$0xf] %vm4931, %v4862
          %4946 = vst.msk [vmem:[%s303 + $0x38] sm:$0xf] %vm4931, %v4864
          %4947 = vst.msk [vmem:[%s303 + $0x3c] sm:$0xf] %vm4931, %v4866
          %4948 = vst.msk [vmem:[%s303 + $0x40] sm:$0xf] %vm4931, %v4868
          %4949 = vst.msk [vmem:[%s303 + $0x44] sm:$0xf] %vm4931, %v4870
          %4950 = vst.msk [vmem:[%s303 + $0x48] sm:$0xf] %vm4931, %v4872
          %4951 = vst.msk [vmem:[%s303 + $0x4c] sm:$0xf] %vm4931, %v4874
          %4952 = vst.msk [vmem:[%s303 + $0x50] sm:$0xf] %vm4931, %v4876
          %4953 = vst.msk [vmem:[%s303 + $0x54] sm:$0xf] %vm4931, %v4878
          %4954 = vst.msk [vmem:[%s303 + $0x58] sm:$0xf] %vm4931, %v4880
          %4955 = vst.msk [vmem:[%s303 + $0x5c] sm:$0xf] %vm4931, %v4882
          %4956 = vst.msk [vmem:[%s303 + $0x60] sm:$0xf] %vm4931, %v4884
          %4957 = vst.msk [vmem:[%s303 + $0x64] sm:$0xf] %vm4931, %v4886
          %4958 = vst.msk [vmem:[%s303 + $0x68] sm:$0xf] %vm4931, %v4888
          %4959 = vst.msk [vmem:[%s303 + $0x6c] sm:$0xf] %vm4931, %v4890
          %4960 = vst.msk [vmem:[%s303 + $0x70] sm:$0xf] %vm4931, %v4892
          %4961 = vst.msk [vmem:[%s303 + $0x74] sm:$0xf] %vm4931, %v4894
          %4962 = vst.msk [vmem:[%s303 + $0x78] sm:$0xf] %vm4931, %v4896
          %4963 = vst.msk [vmem:[%s303 + $0x7c] sm:$0xf] %vm4931, %v4898
          %v4964 = vld [vmem:[%s5 + $0x1] sm:$0x1]
          %v4965 = vld [vmem:[%s2260] sm:$0xff]
          %v4966 = vld [vmem:[%s2260 + $0x8] sm:$0xff]
          %v4967 = vld [vmem:[%s2260 + $0x10] sm:$0xff]
          %v4968 = vld [vmem:[%s2260 + $0x18] sm:$0xff]
          %v4969 = vld [vmem:[%s2260 + $0x20] sm:$0xff]
          %v4970 = vld [vmem:[%s2260 + $0x28] sm:$0xff]
          %v4971 = vld [vmem:[%s2260 + $0x30] sm:$0xff]
          %v4972 = vld [vmem:[%s2260 + $0x38] sm:$0xff]
          %v4973 = vld [vmem:[%s2260 + $0x40] sm:$0xff]
          %v4974 = vld [vmem:[%s2260 + $0x48] sm:$0xff]
          %v4975 = vld [vmem:[%s2260 + $0x50] sm:$0xff]
          %v4976 = vld [vmem:[%s2260 + $0x58] sm:$0xff]
          %v4977 = vld [vmem:[%s2260 + $0x60] sm:$0xff]
          %v4978 = vld [vmem:[%s2260 + $0x68] sm:$0xff]
          %v4979 = vld [vmem:[%s2260 + $0x70] sm:$0xff]
          %v4980 = vld [vmem:[%s2260 + $0x78] sm:$0xff]
          %v4981 = vld [vmem:[%s2260 + $0x80] sm:$0xff]
          %v4982 = vld [vmem:[%s2260 + $0x88] sm:$0xff]
          %v4983 = vld [vmem:[%s2260 + $0x90] sm:$0xff]
          %v4984 = vld [vmem:[%s2260 + $0x98] sm:$0xff]
          %v4985 = vld [vmem:[%s2260 + $0xa0] sm:$0xff]
          %v4986 = vld [vmem:[%s2260 + $0xa8] sm:$0xff]
          %v4987 = vld [vmem:[%s2260 + $0xb0] sm:$0xff]
          %v4988 = vld [vmem:[%s2260 + $0xb8] sm:$0xff]
          %v4989 = vld [vmem:[%s2260 + $0xc0] sm:$0xff]
          %v4990 = vld [vmem:[%s2260 + $0xc8] sm:$0xff]
          %v4991 = vld [vmem:[%s2260 + $0xd0] sm:$0xff]
          %v4992 = vld [vmem:[%s2260 + $0xd8] sm:$0xff]
          %v4993 = vld [vmem:[%s2260 + $0xe0] sm:$0xff]
          %v4994 = vld [vmem:[%s2260 + $0xe8] sm:$0xff]
          %v4995 = vld [vmem:[%s2260 + $0xf0] sm:$0xff]
          %v4996 = vld [vmem:[%s2260 + $0xf8] sm:$0xff]
          %v4997 = vlaneseq
          %v4998 = vshrl.u32 %v4997, 7
          %v4999 = vsub.s32 0, %v4998
          %v5000 = vrot.slane %v4964, %v4999
          %v5001 = vadd.f32 %v4965, %v5000
          %v5002 = vadd.f32 %v4966, %v5000
          %v5003 = vadd.f32 %v4967, %v5000
          %v5004 = vadd.f32 %v4968, %v5000
          %v5005 = vadd.f32 %v4969, %v5000
          %v5006 = vadd.f32 %v4970, %v5000
          %v5007 = vadd.f32 %v4971, %v5000
          %v5008 = vadd.f32 %v4972, %v5000
          %v5009 = vadd.f32 %v4973, %v5000
          %v5010 = vadd.f32 %v4974, %v5000
          %v5011 = vadd.f32 %v4975, %v5000
          %v5012 = vadd.f32 %v4976, %v5000
          %v5013 = vadd.f32 %v4977, %v5000
          %v5014 = vadd.f32 %v4978, %v5000
          %v5015 = vadd.f32 %v4979, %v5000
          %v5016 = vadd.f32 %v4980, %v5000
          %v5017 = vadd.f32 %v4981, %v5000
          %v5018 = vadd.f32 %v4982, %v5000
          %v5019 = vadd.f32 %v4983, %v5000
          %v5020 = vadd.f32 %v4984, %v5000
          %v5021 = vadd.f32 %v4985, %v5000
          %v5022 = vadd.f32 %v4986, %v5000
          %v5023 = vadd.f32 %v4987, %v5000
          %v5024 = vadd.f32 %v4988, %v5000
          %v5025 = vadd.f32 %v4989, %v5000
          %v5026 = vadd.f32 %v4990, %v5000
          %v5027 = vadd.f32 %v4991, %v5000
          %v5028 = vadd.f32 %v4992, %v5000
          %v5029 = vadd.f32 %v4993, %v5000
          %v5030 = vadd.f32 %v4994, %v5000
          %v5031 = vadd.f32 %v4995, %v5000
          %v5032 = vadd.f32 %v4996, %v5000
          %v5033 = vmax.f32 %v5001, 0.0
          %v5034 = vmax.f32 %v5002, 0.0
          %v5035 = vmax.f32 %v5003, 0.0
          %v5036 = vmax.f32 %v5004, 0.0
          %v5037 = vmax.f32 %v5005, 0.0
          %v5038 = vmax.f32 %v5006, 0.0
          %v5039 = vmax.f32 %v5007, 0.0
          %v5040 = vmax.f32 %v5008, 0.0
          %v5041 = vmax.f32 %v5009, 0.0
          %v5042 = vmax.f32 %v5010, 0.0
          %v5043 = vmax.f32 %v5011, 0.0
          %v5044 = vmax.f32 %v5012, 0.0
          %v5045 = vmax.f32 %v5013, 0.0
          %v5046 = vmax.f32 %v5014, 0.0
          %v5047 = vmax.f32 %v5015, 0.0
          %v5048 = vmax.f32 %v5016, 0.0
          %v5049 = vmax.f32 %v5017, 0.0
          %v5050 = vmax.f32 %v5018, 0.0
          %v5051 = vmax.f32 %v5019, 0.0
          %v5052 = vmax.f32 %v5020, 0.0
          %v5053 = vmax.f32 %v5021, 0.0
          %v5054 = vmax.f32 %v5022, 0.0
          %v5055 = vmax.f32 %v5023, 0.0
          %v5056 = vmax.f32 %v5024, 0.0
          %v5057 = vmax.f32 %v5025, 0.0
          %v5058 = vmax.f32 %v5026, 0.0
          %v5059 = vmax.f32 %v5027, 0.0
          %v5060 = vmax.f32 %v5028, 0.0
          %v5061 = vmax.f32 %v5029, 0.0
          %v5062 = vmax.f32 %v5030, 0.0
          %v5063 = vmax.f32 %v5031, 0.0
          %v5064 = vmax.f32 %v5032, 0.0
          %v5065 = vpack.c.bf16 %v5034, %v5033
          %v5066 = vpack.c.bf16 %v5036, %v5035
          %v5067 = vpack.c.bf16 %v5038, %v5037
          %v5068 = vpack.c.bf16 %v5040, %v5039
          %v5069 = vpack.c.bf16 %v5042, %v5041
          %v5070 = vpack.c.bf16 %v5044, %v5043
          %v5071 = vpack.c.bf16 %v5046, %v5045
          %v5072 = vpack.c.bf16 %v5048, %v5047
          %v5073 = vpack.c.bf16 %v5050, %v5049
          %v5074 = vpack.c.bf16 %v5052, %v5051
          %v5075 = vpack.c.bf16 %v5054, %v5053
          %v5076 = vpack.c.bf16 %v5056, %v5055
          %v5077 = vpack.c.bf16 %v5058, %v5057
          %v5078 = vpack.c.bf16 %v5060, %v5059
          %v5079 = vpack.c.bf16 %v5062, %v5061
          %v5080 = vpack.c.bf16 %v5064, %v5063
          %v5097 = vunpack.c.l.b16 %v5065
          %v5098 = vunpack.c.h.b16 %v5065
          %v5099 = vunpack.c.l.b16 %v5066
          %v5100 = vunpack.c.h.b16 %v5066
          %v5101 = vunpack.c.l.b16 %v5067
          %v5102 = vunpack.c.h.b16 %v5067
          %v5103 = vunpack.c.l.b16 %v5068
          %v5104 = vunpack.c.h.b16 %v5068
          %v5105 = vunpack.c.l.b16 %v5069
          %v5106 = vunpack.c.h.b16 %v5069
          %v5107 = vunpack.c.l.b16 %v5070
          %v5108 = vunpack.c.h.b16 %v5070
          %v5109 = vunpack.c.l.b16 %v5071
          %v5110 = vunpack.c.h.b16 %v5071
          %v5111 = vunpack.c.l.b16 %v5072
          %v5112 = vunpack.c.h.b16 %v5072
          %v5113 = vunpack.c.l.b16 %v5073
          %v5114 = vunpack.c.h.b16 %v5073
          %v5115 = vunpack.c.l.b16 %v5074
          %v5116 = vunpack.c.h.b16 %v5074
          %v5117 = vunpack.c.l.b16 %v5075
          %v5118 = vunpack.c.h.b16 %v5075
          %v5119 = vunpack.c.l.b16 %v5076
          %v5120 = vunpack.c.h.b16 %v5076
          %v5121 = vunpack.c.l.b16 %v5077
          %v5122 = vunpack.c.h.b16 %v5077
          %v5123 = vunpack.c.l.b16 %v5078
          %v5124 = vunpack.c.h.b16 %v5078
          %v5125 = vunpack.c.l.b16 %v5079
          %v5126 = vunpack.c.h.b16 %v5079
          %v5127 = vunpack.c.l.b16 %v5080
          %v5128 = vunpack.c.h.b16 %v5080
          %v5129 = vpack.c.b16 %v5097, %v5097
          %v5130 = vpack.c.b16 %v5098, %v5098
          %v5131 = vpack.c.b16 %v5099, %v5099
          %v5132 = vpack.c.b16 %v5100, %v5100
          %v5133 = vpack.c.b16 %v5101, %v5101
          %v5134 = vpack.c.b16 %v5102, %v5102
          %v5135 = vpack.c.b16 %v5103, %v5103
          %v5136 = vpack.c.b16 %v5104, %v5104
          %v5137 = vpack.c.b16 %v5105, %v5105
          %v5138 = vpack.c.b16 %v5106, %v5106
          %v5139 = vpack.c.b16 %v5107, %v5107
          %v5140 = vpack.c.b16 %v5108, %v5108
          %v5141 = vpack.c.b16 %v5109, %v5109
          %v5142 = vpack.c.b16 %v5110, %v5110
          %v5143 = vpack.c.b16 %v5111, %v5111
          %v5144 = vpack.c.b16 %v5112, %v5112
          %v5145 = vpack.c.b16 %v5113, %v5113
          %v5146 = vpack.c.b16 %v5114, %v5114
          %v5147 = vpack.c.b16 %v5115, %v5115
          %v5148 = vpack.c.b16 %v5116, %v5116
          %v5149 = vpack.c.b16 %v5117, %v5117
          %v5150 = vpack.c.b16 %v5118, %v5118
          %v5151 = vpack.c.b16 %v5119, %v5119
          %v5152 = vpack.c.b16 %v5120, %v5120
          %v5153 = vpack.c.b16 %v5121, %v5121
          %v5154 = vpack.c.b16 %v5122, %v5122
          %v5155 = vpack.c.b16 %v5123, %v5123
          %v5156 = vpack.c.b16 %v5124, %v5124
          %v5157 = vpack.c.b16 %v5125, %v5125
          %v5158 = vpack.c.b16 %v5126, %v5126
          %v5159 = vpack.c.b16 %v5127, %v5127
          %v5160 = vpack.c.b16 %v5128, %v5128
          %5161 = vrot.lane.b32.xlu0 %v5129, 16
          %v5162 = vpop.permute.xlu0 %5161
          %5163 = vrot.lane.b32.xlu0 %v5130, 16
          %v5164 = vpop.permute.xlu0 %5163
          %5165 = vrot.lane.b32.xlu0 %v5131, 16
          %v5166 = vpop.permute.xlu0 %5165
          %5167 = vrot.lane.b32.xlu0 %v5132, 16
          %v5168 = vpop.permute.xlu0 %5167
          %5169 = vrot.lane.b32.xlu0 %v5133, 16
          %v5170 = vpop.permute.xlu0 %5169
          %5171 = vrot.lane.b32.xlu0 %v5134, 16
          %v5172 = vpop.permute.xlu0 %5171
          %5173 = vrot.lane.b32.xlu0 %v5135, 16
          %v5174 = vpop.permute.xlu0 %5173
          %5175 = vrot.lane.b32.xlu0 %v5136, 16
          %v5176 = vpop.permute.xlu0 %5175
          %5177 = vrot.lane.b32.xlu0 %v5137, 16
          %v5178 = vpop.permute.xlu0 %5177
          %5179 = vrot.lane.b32.xlu0 %v5138, 16
          %v5180 = vpop.permute.xlu0 %5179
          %5181 = vrot.lane.b32.xlu0 %v5139, 16
          %v5182 = vpop.permute.xlu0 %5181
          %5183 = vrot.lane.b32.xlu0 %v5140, 16
          %v5184 = vpop.permute.xlu0 %5183
          %5185 = vrot.lane.b32.xlu0 %v5141, 16
          %v5186 = vpop.permute.xlu0 %5185
          %5187 = vrot.lane.b32.xlu0 %v5142, 16
          %v5188 = vpop.permute.xlu0 %5187
          %5189 = vrot.lane.b32.xlu0 %v5143, 16
          %v5190 = vpop.permute.xlu0 %5189
          %5191 = vrot.lane.b32.xlu0 %v5144, 16
          %v5192 = vpop.permute.xlu0 %5191
          %5193 = vrot.lane.b32.xlu0 %v5145, 16
          %v5194 = vpop.permute.xlu0 %5193
          %5195 = vrot.lane.b32.xlu0 %v5146, 16
          %v5196 = vpop.permute.xlu0 %5195
          %5197 = vrot.lane.b32.xlu0 %v5147, 16
          %v5198 = vpop.permute.xlu0 %5197
          %5199 = vrot.lane.b32.xlu0 %v5148, 16
          %v5200 = vpop.permute.xlu0 %5199
          %5201 = vrot.lane.b32.xlu0 %v5149, 16
          %v5202 = vpop.permute.xlu0 %5201
          %5203 = vrot.lane.b32.xlu0 %v5150, 16
          %v5204 = vpop.permute.xlu0 %5203
          %5205 = vrot.lane.b32.xlu0 %v5151, 16
          %v5206 = vpop.permute.xlu0 %5205
          %5207 = vrot.lane.b32.xlu0 %v5152, 16
          %v5208 = vpop.permute.xlu0 %5207
          %5209 = vrot.lane.b32.xlu0 %v5153, 16
          %v5210 = vpop.permute.xlu0 %5209
          %5211 = vrot.lane.b32.xlu0 %v5154, 16
          %v5212 = vpop.permute.xlu0 %5211
          %5213 = vrot.lane.b32.xlu0 %v5155, 16
          %v5214 = vpop.permute.xlu0 %5213
          %5215 = vrot.lane.b32.xlu0 %v5156, 16
          %v5216 = vpop.permute.xlu0 %5215
          %5217 = vrot.lane.b32.xlu0 %v5157, 16
          %v5218 = vpop.permute.xlu0 %5217
          %5219 = vrot.lane.b32.xlu0 %v5158, 16
          %v5220 = vpop.permute.xlu0 %5219
          %5221 = vrot.lane.b32.xlu0 %v5159, 16
          %v5222 = vpop.permute.xlu0 %5221
          %5223 = vrot.lane.b32.xlu0 %v5160, 16
          %v5224 = vpop.permute.xlu0 %5223
          %vm5257 = vcmask 191616
          %5258 = vst.msk [vmem:[%s303] sm:$0xf] %vm5257, %v5162
          %5259 = vst.msk [vmem:[%s303 + $0x4] sm:$0xf] %vm5257, %v5164
          %5260 = vst.msk [vmem:[%s303 + $0x8] sm:$0xf] %vm5257, %v5166
          %5261 = vst.msk [vmem:[%s303 + $0xc] sm:$0xf] %vm5257, %v5168
          %5262 = vst.msk [vmem:[%s303 + $0x10] sm:$0xf] %vm5257, %v5170
          %5263 = vst.msk [vmem:[%s303 + $0x14] sm:$0xf] %vm5257, %v5172
          %5264 = vst.msk [vmem:[%s303 + $0x18] sm:$0xf] %vm5257, %v5174
          %5265 = vst.msk [vmem:[%s303 + $0x1c] sm:$0xf] %vm5257, %v5176
          %5266 = vst.msk [vmem:[%s303 + $0x20] sm:$0xf] %vm5257, %v5178
          %5267 = vst.msk [vmem:[%s303 + $0x24] sm:$0xf] %vm5257, %v5180
          %5268 = vst.msk [vmem:[%s303 + $0x28] sm:$0xf] %vm5257, %v5182
          %5269 = vst.msk [vmem:[%s303 + $0x2c] sm:$0xf] %vm5257, %v5184
          %5270 = vst.msk [vmem:[%s303 + $0x30] sm:$0xf] %vm5257, %v5186
          %5271 = vst.msk [vmem:[%s303 + $0x34] sm:$0xf] %vm5257, %v5188
          %5272 = vst.msk [vmem:[%s303 + $0x38] sm:$0xf] %vm5257, %v5190
          %5273 = vst.msk [vmem:[%s303 + $0x3c] sm:$0xf] %vm5257, %v5192
          %5274 = vst.msk [vmem:[%s303 + $0x40] sm:$0xf] %vm5257, %v5194
          %5275 = vst.msk [vmem:[%s303 + $0x44] sm:$0xf] %vm5257, %v5196
          %5276 = vst.msk [vmem:[%s303 + $0x48] sm:$0xf] %vm5257, %v5198
          %5277 = vst.msk [vmem:[%s303 + $0x4c] sm:$0xf] %vm5257, %v5200
          %5278 = vst.msk [vmem:[%s303 + $0x50] sm:$0xf] %vm5257, %v5202
          %5279 = vst.msk [vmem:[%s303 + $0x54] sm:$0xf] %vm5257, %v5204
          %5280 = vst.msk [vmem:[%s303 + $0x58] sm:$0xf] %vm5257, %v5206
          %5281 = vst.msk [vmem:[%s303 + $0x5c] sm:$0xf] %vm5257, %v5208
          %5282 = vst.msk [vmem:[%s303 + $0x60] sm:$0xf] %vm5257, %v5210
          %5283 = vst.msk [vmem:[%s303 + $0x64] sm:$0xf] %vm5257, %v5212
          %5284 = vst.msk [vmem:[%s303 + $0x68] sm:$0xf] %vm5257, %v5214
          %5285 = vst.msk [vmem:[%s303 + $0x6c] sm:$0xf] %vm5257, %v5216
          %5286 = vst.msk [vmem:[%s303 + $0x70] sm:$0xf] %vm5257, %v5218
          %5287 = vst.msk [vmem:[%s303 + $0x74] sm:$0xf] %vm5257, %v5220
          %5288 = vst.msk [vmem:[%s303 + $0x78] sm:$0xf] %vm5257, %v5222
          %5289 = vst.msk [vmem:[%s303 + $0x7c] sm:$0xf] %vm5257, %v5224
          %v5290 = vld [vmem:[%s5 + $0x2] sm:$0x1]
          %v5291 = vld [vmem:[%s3812] sm:$0xff]
          %v5292 = vld [vmem:[%s3812 + $0x8] sm:$0xff]
          %v5293 = vld [vmem:[%s3812 + $0x10] sm:$0xff]
          %v5294 = vld [vmem:[%s3812 + $0x18] sm:$0xff]
          %v5295 = vld [vmem:[%s3812 + $0x20] sm:$0xff]
          %v5296 = vld [vmem:[%s3812 + $0x28] sm:$0xff]
          %v5297 = vld [vmem:[%s3812 + $0x30] sm:$0xff]
          %v5298 = vld [vmem:[%s3812 + $0x38] sm:$0xff]
          %v5299 = vld [vmem:[%s3812 + $0x40] sm:$0xff]
          %v5300 = vld [vmem:[%s3812 + $0x48] sm:$0xff]
          %v5301 = vld [vmem:[%s3812 + $0x50] sm:$0xff]
          %v5302 = vld [vmem:[%s3812 + $0x58] sm:$0xff]
          %v5303 = vld [vmem:[%s3812 + $0x60] sm:$0xff]
          %v5304 = vld [vmem:[%s3812 + $0x68] sm:$0xff]
          %v5305 = vld [vmem:[%s3812 + $0x70] sm:$0xff]
          %v5306 = vld [vmem:[%s3812 + $0x78] sm:$0xff]
          %v5307 = vld [vmem:[%s3812 + $0x80] sm:$0xff]
          %v5308 = vld [vmem:[%s3812 + $0x88] sm:$0xff]
          %v5309 = vld [vmem:[%s3812 + $0x90] sm:$0xff]
          %v5310 = vld [vmem:[%s3812 + $0x98] sm:$0xff]
          %v5311 = vld [vmem:[%s3812 + $0xa0] sm:$0xff]
          %v5312 = vld [vmem:[%s3812 + $0xa8] sm:$0xff]
          %v5313 = vld [vmem:[%s3812 + $0xb0] sm:$0xff]
          %v5314 = vld [vmem:[%s3812 + $0xb8] sm:$0xff]
          %v5315 = vld [vmem:[%s3812 + $0xc0] sm:$0xff]
          %v5316 = vld [vmem:[%s3812 + $0xc8] sm:$0xff]
          %v5317 = vld [vmem:[%s3812 + $0xd0] sm:$0xff]
          %v5318 = vld [vmem:[%s3812 + $0xd8] sm:$0xff]
          %v5319 = vld [vmem:[%s3812 + $0xe0] sm:$0xff]
          %v5320 = vld [vmem:[%s3812 + $0xe8] sm:$0xff]
          %v5321 = vld [vmem:[%s3812 + $0xf0] sm:$0xff]
          %v5322 = vld [vmem:[%s3812 + $0xf8] sm:$0xff]
          %v5323 = vlaneseq
          %v5324 = vshrl.u32 %v5323, 7
          %v5325 = vsub.s32 0, %v5324
          %v5326 = vrot.slane %v5290, %v5325
          %v5327 = vadd.f32 %v5291, %v5326
          %v5328 = vadd.f32 %v5292, %v5326
          %v5329 = vadd.f32 %v5293, %v5326
          %v5330 = vadd.f32 %v5294, %v5326
          %v5331 = vadd.f32 %v5295, %v5326
          %v5332 = vadd.f32 %v5296, %v5326
          %v5333 = vadd.f32 %v5297, %v5326
          %v5334 = vadd.f32 %v5298, %v5326
          %v5335 = vadd.f32 %v5299, %v5326
          %v5336 = vadd.f32 %v5300, %v5326
          %v5337 = vadd.f32 %v5301, %v5326
          %v5338 = vadd.f32 %v5302, %v5326
          %v5339 = vadd.f32 %v5303, %v5326
          %v5340 = vadd.f32 %v5304, %v5326
          %v5341 = vadd.f32 %v5305, %v5326
          %v5342 = vadd.f32 %v5306, %v5326
          %v5343 = vadd.f32 %v5307, %v5326
          %v5344 = vadd.f32 %v5308, %v5326
          %v5345 = vadd.f32 %v5309, %v5326
          %v5346 = vadd.f32 %v5310, %v5326
          %v5347 = vadd.f32 %v5311, %v5326
          %v5348 = vadd.f32 %v5312, %v5326
          %v5349 = vadd.f32 %v5313, %v5326
          %v5350 = vadd.f32 %v5314, %v5326
          %v5351 = vadd.f32 %v5315, %v5326
          %v5352 = vadd.f32 %v5316, %v5326
          %v5353 = vadd.f32 %v5317, %v5326
          %v5354 = vadd.f32 %v5318, %v5326
          %v5355 = vadd.f32 %v5319, %v5326
          %v5356 = vadd.f32 %v5320, %v5326
          %v5357 = vadd.f32 %v5321, %v5326
          %v5358 = vadd.f32 %v5322, %v5326
          %v5359 = vmax.f32 %v5327, 0.0
          %v5360 = vmax.f32 %v5328, 0.0
          %v5361 = vmax.f32 %v5329, 0.0
          %v5362 = vmax.f32 %v5330, 0.0
          %v5363 = vmax.f32 %v5331, 0.0
          %v5364 = vmax.f32 %v5332, 0.0
          %v5365 = vmax.f32 %v5333, 0.0
          %v5366 = vmax.f32 %v5334, 0.0
          %v5367 = vmax.f32 %v5335, 0.0
          %v5368 = vmax.f32 %v5336, 0.0
          %v5369 = vmax.f32 %v5337, 0.0
          %v5370 = vmax.f32 %v5338, 0.0
          %v5371 = vmax.f32 %v5339, 0.0
          %v5372 = vmax.f32 %v5340, 0.0
          %v5373 = vmax.f32 %v5341, 0.0
          %v5374 = vmax.f32 %v5342, 0.0
          %v5375 = vmax.f32 %v5343, 0.0
          %v5376 = vmax.f32 %v5344, 0.0
          %v5377 = vmax.f32 %v5345, 0.0
          %v5378 = vmax.f32 %v5346, 0.0
          %v5379 = vmax.f32 %v5347, 0.0
          %v5380 = vmax.f32 %v5348, 0.0
          %v5381 = vmax.f32 %v5349, 0.0
          %v5382 = vmax.f32 %v5350, 0.0
          %v5383 = vmax.f32 %v5351, 0.0
          %v5384 = vmax.f32 %v5352, 0.0
          %v5385 = vmax.f32 %v5353, 0.0
          %v5386 = vmax.f32 %v5354, 0.0
          %v5387 = vmax.f32 %v5355, 0.0
          %v5388 = vmax.f32 %v5356, 0.0
          %v5389 = vmax.f32 %v5357, 0.0
          %v5390 = vmax.f32 %v5358, 0.0
          %v5391 = vpack.c.bf16 %v5360, %v5359
          %v5392 = vpack.c.bf16 %v5362, %v5361
          %v5393 = vpack.c.bf16 %v5364, %v5363
          %v5394 = vpack.c.bf16 %v5366, %v5365
          %v5395 = vpack.c.bf16 %v5368, %v5367
          %v5396 = vpack.c.bf16 %v5370, %v5369
          %v5397 = vpack.c.bf16 %v5372, %v5371
          %v5398 = vpack.c.bf16 %v5374, %v5373
          %v5399 = vpack.c.bf16 %v5376, %v5375
          %v5400 = vpack.c.bf16 %v5378, %v5377
          %v5401 = vpack.c.bf16 %v5380, %v5379
          %v5402 = vpack.c.bf16 %v5382, %v5381
          %v5403 = vpack.c.bf16 %v5384, %v5383
          %v5404 = vpack.c.bf16 %v5386, %v5385
          %v5405 = vpack.c.bf16 %v5388, %v5387
          %v5406 = vpack.c.bf16 %v5390, %v5389
          %v5423 = vunpack.c.l.b16 %v5391
          %v5424 = vunpack.c.h.b16 %v5391
          %v5425 = vunpack.c.l.b16 %v5392
          %v5426 = vunpack.c.h.b16 %v5392
          %v5427 = vunpack.c.l.b16 %v5393
          %v5428 = vunpack.c.h.b16 %v5393
          %v5429 = vunpack.c.l.b16 %v5394
          %v5430 = vunpack.c.h.b16 %v5394
          %v5431 = vunpack.c.l.b16 %v5395
          %v5432 = vunpack.c.h.b16 %v5395
          %v5433 = vunpack.c.l.b16 %v5396
          %v5434 = vunpack.c.h.b16 %v5396
          %v5435 = vunpack.c.l.b16 %v5397
          %v5436 = vunpack.c.h.b16 %v5397
          %v5437 = vunpack.c.l.b16 %v5398
          %v5438 = vunpack.c.h.b16 %v5398
          %v5439 = vunpack.c.l.b16 %v5399
          %v5440 = vunpack.c.h.b16 %v5399
          %v5441 = vunpack.c.l.b16 %v5400
          %v5442 = vunpack.c.h.b16 %v5400
          %v5443 = vunpack.c.l.b16 %v5401
          %v5444 = vunpack.c.h.b16 %v5401
          %v5445 = vunpack.c.l.b16 %v5402
          %v5446 = vunpack.c.h.b16 %v5402
          %v5447 = vunpack.c.l.b16 %v5403
          %v5448 = vunpack.c.h.b16 %v5403
          %v5449 = vunpack.c.l.b16 %v5404
          %v5450 = vunpack.c.h.b16 %v5404
          %v5451 = vunpack.c.l.b16 %v5405
          %v5452 = vunpack.c.h.b16 %v5405
          %v5453 = vunpack.c.l.b16 %v5406
          %v5454 = vunpack.c.h.b16 %v5406
          %v5455 = vpack.c.b16 %v5423, %v5423
          %v5456 = vpack.c.b16 %v5424, %v5424
          %v5457 = vpack.c.b16 %v5425, %v5425
          %v5458 = vpack.c.b16 %v5426, %v5426
          %v5459 = vpack.c.b16 %v5427, %v5427
          %v5460 = vpack.c.b16 %v5428, %v5428
          %v5461 = vpack.c.b16 %v5429, %v5429
          %v5462 = vpack.c.b16 %v5430, %v5430
          %v5463 = vpack.c.b16 %v5431, %v5431
          %v5464 = vpack.c.b16 %v5432, %v5432
          %v5465 = vpack.c.b16 %v5433, %v5433
          %v5466 = vpack.c.b16 %v5434, %v5434
          %v5467 = vpack.c.b16 %v5435, %v5435
          %v5468 = vpack.c.b16 %v5436, %v5436
          %v5469 = vpack.c.b16 %v5437, %v5437
          %v5470 = vpack.c.b16 %v5438, %v5438
          %v5471 = vpack.c.b16 %v5439, %v5439
          %v5472 = vpack.c.b16 %v5440, %v5440
          %v5473 = vpack.c.b16 %v5441, %v5441
          %v5474 = vpack.c.b16 %v5442, %v5442
          %v5475 = vpack.c.b16 %v5443, %v5443
          %v5476 = vpack.c.b16 %v5444, %v5444
          %v5477 = vpack.c.b16 %v5445, %v5445
          %v5478 = vpack.c.b16 %v5446, %v5446
          %v5479 = vpack.c.b16 %v5447, %v5447
          %v5480 = vpack.c.b16 %v5448, %v5448
          %v5481 = vpack.c.b16 %v5449, %v5449
          %v5482 = vpack.c.b16 %v5450, %v5450
          %v5483 = vpack.c.b16 %v5451, %v5451
          %v5484 = vpack.c.b16 %v5452, %v5452
          %v5485 = vpack.c.b16 %v5453, %v5453
          %v5486 = vpack.c.b16 %v5454, %v5454
          %5487 = vrot.lane.b32.xlu0 %v5455, 24
          %v5488 = vpop.permute.xlu0 %5487
          %5489 = vrot.lane.b32.xlu0 %v5456, 24
          %v5490 = vpop.permute.xlu0 %5489
          %5491 = vrot.lane.b32.xlu0 %v5457, 24
          %v5492 = vpop.permute.xlu0 %5491
          %5493 = vrot.lane.b32.xlu0 %v5458, 24
          %v5494 = vpop.permute.xlu0 %5493
          %5495 = vrot.lane.b32.xlu0 %v5459, 24
          %v5496 = vpop.permute.xlu0 %5495
          %5497 = vrot.lane.b32.xlu0 %v5460, 24
          %v5498 = vpop.permute.xlu0 %5497
          %5499 = vrot.lane.b32.xlu0 %v5461, 24
          %v5500 = vpop.permute.xlu0 %5499
          %5501 = vrot.lane.b32.xlu0 %v5462, 24
          %v5502 = vpop.permute.xlu0 %5501
          %5503 = vrot.lane.b32.xlu0 %v5463, 24
          %v5504 = vpop.permute.xlu0 %5503
          %5505 = vrot.lane.b32.xlu0 %v5464, 24
          %v5506 = vpop.permute.xlu0 %5505
          %5507 = vrot.lane.b32.xlu0 %v5465, 24
          %v5508 = vpop.permute.xlu0 %5507
          %5509 = vrot.lane.b32.xlu0 %v5466, 24
          %v5510 = vpop.permute.xlu0 %5509
          %5511 = vrot.lane.b32.xlu0 %v5467, 24
          %v5512 = vpop.permute.xlu0 %5511
          %5513 = vrot.lane.b32.xlu0 %v5468, 24
          %v5514 = vpop.permute.xlu0 %5513
          %5515 = vrot.lane.b32.xlu0 %v5469, 24
          %v5516 = vpop.permute.xlu0 %5515
          %5517 = vrot.lane.b32.xlu0 %v5470, 24
          %v5518 = vpop.permute.xlu0 %5517
          %5519 = vrot.lane.b32.xlu0 %v5471, 24
          %v5520 = vpop.permute.xlu0 %5519
          %5521 = vrot.lane.b32.xlu0 %v5472, 24
          %v5522 = vpop.permute.xlu0 %5521
          %5523 = vrot.lane.b32.xlu0 %v5473, 24
          %v5524 = vpop.permute.xlu0 %5523
          %5525 = vrot.lane.b32.xlu0 %v5474, 24
          %v5526 = vpop.permute.xlu0 %5525
          %5527 = vrot.lane.b32.xlu0 %v5475, 24
          %v5528 = vpop.permute.xlu0 %5527
          %5529 = vrot.lane.b32.xlu0 %v5476, 24
          %v5530 = vpop.permute.xlu0 %5529
          %5531 = vrot.lane.b32.xlu0 %v5477, 24
          %v5532 = vpop.permute.xlu0 %5531
          %5533 = vrot.lane.b32.xlu0 %v5478, 24
          %v5534 = vpop.permute.xlu0 %5533
          %5535 = vrot.lane.b32.xlu0 %v5479, 24
          %v5536 = vpop.permute.xlu0 %5535
          %5537 = vrot.lane.b32.xlu0 %v5480, 24
          %v5538 = vpop.permute.xlu0 %5537
          %5539 = vrot.lane.b32.xlu0 %v5481, 24
          %v5540 = vpop.permute.xlu0 %5539
          %5541 = vrot.lane.b32.xlu0 %v5482, 24
          %v5542 = vpop.permute.xlu0 %5541
          %5543 = vrot.lane.b32.xlu0 %v5483, 24
          %v5544 = vpop.permute.xlu0 %5543
          %5545 = vrot.lane.b32.xlu0 %v5484, 24
          %v5546 = vpop.permute.xlu0 %5545
          %5547 = vrot.lane.b32.xlu0 %v5485, 24
          %v5548 = vpop.permute.xlu0 %5547
          %5549 = vrot.lane.b32.xlu0 %v5486, 24
          %v5550 = vpop.permute.xlu0 %5549
          %vm5583 = vcmask 257216
          %5584 = vst.msk [vmem:[%s303] sm:$0xf] %vm5583, %v5488
          %5585 = vst.msk [vmem:[%s303 + $0x4] sm:$0xf] %vm5583, %v5490
          %5586 = vst.msk [vmem:[%s303 + $0x8] sm:$0xf] %vm5583, %v5492
          %5587 = vst.msk [vmem:[%s303 + $0xc] sm:$0xf] %vm5583, %v5494
          %5588 = vst.msk [vmem:[%s303 + $0x10] sm:$0xf] %vm5583, %v5496
          %5589 = vst.msk [vmem:[%s303 + $0x14] sm:$0xf] %vm5583, %v5498
          %5590 = vst.msk [vmem:[%s303 + $0x18] sm:$0xf] %vm5583, %v5500
          %5591 = vst.msk [vmem:[%s303 + $0x1c] sm:$0xf] %vm5583, %v5502
          %5592 = vst.msk [vmem:[%s303 + $0x20] sm:$0xf] %vm5583, %v5504
          %5593 = vst.msk [vmem:[%s303 + $0x24] sm:$0xf] %vm5583, %v5506
          %5594 = vst.msk [vmem:[%s303 + $0x28] sm:$0xf] %vm5583, %v5508
          %5595 = vst.msk [vmem:[%s303 + $0x2c] sm:$0xf] %vm5583, %v5510
          %5596 = vst.msk [vmem:[%s303 + $0x30] sm:$0xf] %vm5583, %v5512
          %5597 = vst.msk [vmem:[%s303 + $0x34] sm:$0xf] %vm5583, %v5514
          %5598 = vst.msk [vmem:[%s303 + $0x38] sm:$0xf] %vm5583, %v5516
          %5599 = vst.msk [vmem:[%s303 + $0x3c] sm:$0xf] %vm5583, %v5518
          %5600 = vst.msk [vmem:[%s303 + $0x40] sm:$0xf] %vm5583, %v5520
          %5601 = vst.msk [vmem:[%s303 + $0x44] sm:$0xf] %vm5583, %v5522
          %5602 = vst.msk [vmem:[%s303 + $0x48] sm:$0xf] %vm5583, %v5524
          %5603 = vst.msk [vmem:[%s303 + $0x4c] sm:$0xf] %vm5583, %v5526
          %5604 = vst.msk [vmem:[%s303 + $0x50] sm:$0xf] %vm5583, %v5528
          %5605 = vst.msk [vmem:[%s303 + $0x54] sm:$0xf] %vm5583, %v5530
          %5606 = vst.msk [vmem:[%s303 + $0x58] sm:$0xf] %vm5583, %v5532
          %5607 = vst.msk [vmem:[%s303 + $0x5c] sm:$0xf] %vm5583, %v5534
          %5608 = vst.msk [vmem:[%s303 + $0x60] sm:$0xf] %vm5583, %v5536
          %5609 = vst.msk [vmem:[%s303 + $0x64] sm:$0xf] %vm5583, %v5538
          %5610 = vst.msk [vmem:[%s303 + $0x68] sm:$0xf] %vm5583, %v5540
          %5611 = vst.msk [vmem:[%s303 + $0x6c] sm:$0xf] %vm5583, %v5542
          %5612 = vst.msk [vmem:[%s303 + $0x70] sm:$0xf] %vm5583, %v5544
          %5613 = vst.msk [vmem:[%s303 + $0x74] sm:$0xf] %vm5583, %v5546
          %5614 = vst.msk [vmem:[%s303 + $0x78] sm:$0xf] %vm5583, %v5548
          %5615 = vst.msk [vmem:[%s303 + $0x7c] sm:$0xf] %vm5583, %v5550
          %v5616 = vld [vmem:[%s5 + $0x3] sm:$0x1]
          %v5617 = vld [vmem:[%s4361] sm:$0xff]
          %v5618 = vld [vmem:[%s4361 + $0x8] sm:$0xff]
          %v5619 = vld [vmem:[%s4361 + $0x10] sm:$0xff]
          %v5620 = vld [vmem:[%s4361 + $0x18] sm:$0xff]
          %v5621 = vld [vmem:[%s4361 + $0x20] sm:$0xff]
          %v5622 = vld [vmem:[%s4361 + $0x28] sm:$0xff]
          %v5623 = vld [vmem:[%s4361 + $0x30] sm:$0xff]
          %v5624 = vld [vmem:[%s4361 + $0x38] sm:$0xff]
          %v5625 = vld [vmem:[%s4361 + $0x40] sm:$0xff]
          %v5626 = vld [vmem:[%s4361 + $0x48] sm:$0xff]
          %v5627 = vld [vmem:[%s4361 + $0x50] sm:$0xff]
          %v5628 = vld [vmem:[%s4361 + $0x58] sm:$0xff]
          %v5629 = vld [vmem:[%s4361 + $0x60] sm:$0xff]
          %v5630 = vld [vmem:[%s4361 + $0x68] sm:$0xff]
          %v5631 = vld [vmem:[%s4361 + $0x70] sm:$0xff]
          %v5632 = vld [vmem:[%s4361 + $0x78] sm:$0xff]
          %v5633 = vld [vmem:[%s4361 + $0x80] sm:$0xff]
          %v5634 = vld [vmem:[%s4361 + $0x88] sm:$0xff]
          %v5635 = vld [vmem:[%s4361 + $0x90] sm:$0xff]
          %v5636 = vld [vmem:[%s4361 + $0x98] sm:$0xff]
          %v5637 = vld [vmem:[%s4361 + $0xa0] sm:$0xff]
          %v5638 = vld [vmem:[%s4361 + $0xa8] sm:$0xff]
          %v5639 = vld [vmem:[%s4361 + $0xb0] sm:$0xff]
          %v5640 = vld [vmem:[%s4361 + $0xb8] sm:$0xff]
          %v5641 = vld [vmem:[%s4361 + $0xc0] sm:$0xff]
          %v5642 = vld [vmem:[%s4361 + $0xc8] sm:$0xff]
          %v5643 = vld [vmem:[%s4361 + $0xd0] sm:$0xff]
          %v5644 = vld [vmem:[%s4361 + $0xd8] sm:$0xff]
          %v5645 = vld [vmem:[%s4361 + $0xe0] sm:$0xff]
          %v5646 = vld [vmem:[%s4361 + $0xe8] sm:$0xff]
          %v5647 = vld [vmem:[%s4361 + $0xf0] sm:$0xff]
          %v5648 = vld [vmem:[%s4361 + $0xf8] sm:$0xff]
          %v5649 = vlaneseq
          %v5650 = vshrl.u32 %v5649, 7
          %v5651 = vsub.s32 0, %v5650
          %v5652 = vrot.slane %v5616, %v5651
          %v5653 = vadd.f32 %v5617, %v5652
          %v5654 = vadd.f32 %v5618, %v5652
          %v5655 = vadd.f32 %v5619, %v5652
          %v5656 = vadd.f32 %v5620, %v5652
          %v5657 = vadd.f32 %v5621, %v5652
          %v5658 = vadd.f32 %v5622, %v5652
          %v5659 = vadd.f32 %v5623, %v5652
          %v5660 = vadd.f32 %v5624, %v5652
          %v5661 = vadd.f32 %v5625, %v5652
          %v5662 = vadd.f32 %v5626, %v5652
          %v5663 = vadd.f32 %v5627, %v5652
          %v5664 = vadd.f32 %v5628, %v5652
          %v5665 = vadd.f32 %v5629, %v5652
          %v5666 = vadd.f32 %v5630, %v5652
          %v5667 = vadd.f32 %v5631, %v5652
          %v5668 = vadd.f32 %v5632, %v5652
          %v5669 = vadd.f32 %v5633, %v5652
          %v5670 = vadd.f32 %v5634, %v5652
          %v5671 = vadd.f32 %v5635, %v5652
          %v5672 = vadd.f32 %v5636, %v5652
          %v5673 = vadd.f32 %v5637, %v5652
          %v5674 = vadd.f32 %v5638, %v5652
          %v5675 = vadd.f32 %v5639, %v5652
          %v5676 = vadd.f32 %v5640, %v5652
          %v5677 = vadd.f32 %v5641, %v5652
          %v5678 = vadd.f32 %v5642, %v5652
          %v5679 = vadd.f32 %v5643, %v5652
          %v5680 = vadd.f32 %v5644, %v5652
          %v5681 = vadd.f32 %v5645, %v5652
          %v5682 = vadd.f32 %v5646, %v5652
          %v5683 = vadd.f32 %v5647, %v5652
          %v5684 = vadd.f32 %v5648, %v5652
          %v5685 = vmax.f32 %v5653, 0.0
          %v5686 = vmax.f32 %v5654, 0.0
          %v5687 = vmax.f32 %v5655, 0.0
          %v5688 = vmax.f32 %v5656, 0.0
          %v5689 = vmax.f32 %v5657, 0.0
          %v5690 = vmax.f32 %v5658, 0.0
          %v5691 = vmax.f32 %v5659, 0.0
          %v5692 = vmax.f32 %v5660, 0.0
          %v5693 = vmax.f32 %v5661, 0.0
          %v5694 = vmax.f32 %v5662, 0.0
          %v5695 = vmax.f32 %v5663, 0.0
          %v5696 = vmax.f32 %v5664, 0.0
          %v5697 = vmax.f32 %v5665, 0.0
          %v5698 = vmax.f32 %v5666, 0.0
          %v5699 = vmax.f32 %v5667, 0.0
          %v5700 = vmax.f32 %v5668, 0.0
          %v5701 = vmax.f32 %v5669, 0.0
          %v5702 = vmax.f32 %v5670, 0.0
          %v5703 = vmax.f32 %v5671, 0.0
          %v5704 = vmax.f32 %v5672, 0.0
          %v5705 = vmax.f32 %v5673, 0.0
          %v5706 = vmax.f32 %v5674, 0.0
          %v5707 = vmax.f32 %v5675, 0.0
          %v5708 = vmax.f32 %v5676, 0.0
          %v5709 = vmax.f32 %v5677, 0.0
          %v5710 = vmax.f32 %v5678, 0.0
          %v5711 = vmax.f32 %v5679, 0.0
          %v5712 = vmax.f32 %v5680, 0.0
          %v5713 = vmax.f32 %v5681, 0.0
          %v5714 = vmax.f32 %v5682, 0.0
          %v5715 = vmax.f32 %v5683, 0.0
          %v5716 = vmax.f32 %v5684, 0.0
          %v5717 = vpack.c.bf16 %v5686, %v5685
          %v5718 = vpack.c.bf16 %v5688, %v5687
          %v5719 = vpack.c.bf16 %v5690, %v5689
          %v5720 = vpack.c.bf16 %v5692, %v5691
          %v5721 = vpack.c.bf16 %v5694, %v5693
          %v5722 = vpack.c.bf16 %v5696, %v5695
          %v5723 = vpack.c.bf16 %v5698, %v5697
          %v5724 = vpack.c.bf16 %v5700, %v5699
          %v5725 = vpack.c.bf16 %v5702, %v5701
          %v5726 = vpack.c.bf16 %v5704, %v5703
          %v5727 = vpack.c.bf16 %v5706, %v5705
          %v5728 = vpack.c.bf16 %v5708, %v5707
          %v5729 = vpack.c.bf16 %v5710, %v5709
          %v5730 = vpack.c.bf16 %v5712, %v5711
          %v5731 = vpack.c.bf16 %v5714, %v5713
          %v5732 = vpack.c.bf16 %v5716, %v5715
          %v5749 = vunpack.c.l.b16 %v5717
          %v5750 = vunpack.c.h.b16 %v5717
          %v5751 = vunpack.c.l.b16 %v5718
          %v5752 = vunpack.c.h.b16 %v5718
          %v5753 = vunpack.c.l.b16 %v5719
          %v5754 = vunpack.c.h.b16 %v5719
          %v5755 = vunpack.c.l.b16 %v5720
          %v5756 = vunpack.c.h.b16 %v5720
          %v5757 = vunpack.c.l.b16 %v5721
          %v5758 = vunpack.c.h.b16 %v5721
          %v5759 = vunpack.c.l.b16 %v5722
          %v5760 = vunpack.c.h.b16 %v5722
          %v5761 = vunpack.c.l.b16 %v5723
          %v5762 = vunpack.c.h.b16 %v5723
          %v5763 = vunpack.c.l.b16 %v5724
          %v5764 = vunpack.c.h.b16 %v5724
          %v5765 = vunpack.c.l.b16 %v5725
          %v5766 = vunpack.c.h.b16 %v5725
          %v5767 = vunpack.c.l.b16 %v5726
          %v5768 = vunpack.c.h.b16 %v5726
          %v5769 = vunpack.c.l.b16 %v5727
          %v5770 = vunpack.c.h.b16 %v5727
          %v5771 = vunpack.c.l.b16 %v5728
          %v5772 = vunpack.c.h.b16 %v5728
          %v5773 = vunpack.c.l.b16 %v5729
          %v5774 = vunpack.c.h.b16 %v5729
          %v5775 = vunpack.c.l.b16 %v5730
          %v5776 = vunpack.c.h.b16 %v5730
          %v5777 = vunpack.c.l.b16 %v5731
          %v5778 = vunpack.c.h.b16 %v5731
          %v5779 = vunpack.c.l.b16 %v5732
          %v5780 = vunpack.c.h.b16 %v5732
          %v5781 = vpack.c.b16 %v5749, %v5749
          %v5782 = vpack.c.b16 %v5750, %v5750
          %v5783 = vpack.c.b16 %v5751, %v5751
          %v5784 = vpack.c.b16 %v5752, %v5752
          %v5785 = vpack.c.b16 %v5753, %v5753
          %v5786 = vpack.c.b16 %v5754, %v5754
          %v5787 = vpack.c.b16 %v5755, %v5755
          %v5788 = vpack.c.b16 %v5756, %v5756
          %v5789 = vpack.c.b16 %v5757, %v5757
          %v5790 = vpack.c.b16 %v5758, %v5758
          %v5791 = vpack.c.b16 %v5759, %v5759
          %v5792 = vpack.c.b16 %v5760, %v5760
          %v5793 = vpack.c.b16 %v5761, %v5761
          %v5794 = vpack.c.b16 %v5762, %v5762
          %v5795 = vpack.c.b16 %v5763, %v5763
          %v5796 = vpack.c.b16 %v5764, %v5764
          %v5797 = vpack.c.b16 %v5765, %v5765
          %v5798 = vpack.c.b16 %v5766, %v5766
          %v5799 = vpack.c.b16 %v5767, %v5767
          %v5800 = vpack.c.b16 %v5768, %v5768
          %v5801 = vpack.c.b16 %v5769, %v5769
          %v5802 = vpack.c.b16 %v5770, %v5770
          %v5803 = vpack.c.b16 %v5771, %v5771
          %v5804 = vpack.c.b16 %v5772, %v5772
          %v5805 = vpack.c.b16 %v5773, %v5773
          %v5806 = vpack.c.b16 %v5774, %v5774
          %v5807 = vpack.c.b16 %v5775, %v5775
          %v5808 = vpack.c.b16 %v5776, %v5776
          %v5809 = vpack.c.b16 %v5777, %v5777
          %v5810 = vpack.c.b16 %v5778, %v5778
          %v5811 = vpack.c.b16 %v5779, %v5779
          %v5812 = vpack.c.b16 %v5780, %v5780
          %5813 = vrot.lane.b32.xlu0 %v5781, 32
          %v5814 = vpop.permute.xlu0 %5813
          %5815 = vrot.lane.b32.xlu0 %v5782, 32
          %v5816 = vpop.permute.xlu0 %5815
          %5817 = vrot.lane.b32.xlu0 %v5783, 32
          %v5818 = vpop.permute.xlu0 %5817
          %5819 = vrot.lane.b32.xlu0 %v5784, 32
          %v5820 = vpop.permute.xlu0 %5819
          %5821 = vrot.lane.b32.xlu0 %v5785, 32
          %v5822 = vpop.permute.xlu0 %5821
          %5823 = vrot.lane.b32.xlu0 %v5786, 32
          %v5824 = vpop.permute.xlu0 %5823
          %5825 = vrot.lane.b32.xlu0 %v5787, 32
          %v5826 = vpop.permute.xlu0 %5825
          %5827 = vrot.lane.b32.xlu0 %v5788, 32
          %v5828 = vpop.permute.xlu0 %5827
          %5829 = vrot.lane.b32.xlu0 %v5789, 32
          %v5830 = vpop.permute.xlu0 %5829
          %5831 = vrot.lane.b32.xlu0 %v5790, 32
          %v5832 = vpop.permute.xlu0 %5831
          %5833 = vrot.lane.b32.xlu0 %v5791, 32
          %v5834 = vpop.permute.xlu0 %5833
          %5835 = vrot.lane.b32.xlu0 %v5792, 32
          %v5836 = vpop.permute.xlu0 %5835
          %5837 = vrot.lane.b32.xlu0 %v5793, 32
          %v5838 = vpop.permute.xlu0 %5837
          %5839 = vrot.lane.b32.xlu0 %v5794, 32
          %v5840 = vpop.permute.xlu0 %5839
          %5841 = vrot.lane.b32.xlu0 %v5795, 32
          %v5842 = vpop.permute.xlu0 %5841
          %5843 = vrot.lane.b32.xlu0 %v5796, 32
          %v5844 = vpop.permute.xlu0 %5843
          %5845 = vrot.lane.b32.xlu0 %v5797, 32
          %v5846 = vpop.permute.xlu0 %5845
          %5847 = vrot.lane.b32.xlu0 %v5798, 32
          %v5848 = vpop.permute.xlu0 %5847
          %5849 = vrot.lane.b32.xlu0 %v5799, 32
          %v5850 = vpop.permute.xlu0 %5849
          %5851 = vrot.lane.b32.xlu0 %v5800, 32
          %v5852 = vpop.permute.xlu0 %5851
          %5853 = vrot.lane.b32.xlu0 %v5801, 32
          %v5854 = vpop.permute.xlu0 %5853
          %5855 = vrot.lane.b32.xlu0 %v5802, 32
          %v5856 = vpop.permute.xlu0 %5855
          %5857 = vrot.lane.b32.xlu0 %v5803, 32
          %v5858 = vpop.permute.xlu0 %5857
          %5859 = vrot.lane.b32.xlu0 %v5804, 32
          %v5860 = vpop.permute.xlu0 %5859
          %5861 = vrot.lane.b32.xlu0 %v5805, 32
          %v5862 = vpop.permute.xlu0 %5861
          %5863 = vrot.lane.b32.xlu0 %v5806, 32
          %v5864 = vpop.permute.xlu0 %5863
          %5865 = vrot.lane.b32.xlu0 %v5807, 32
          %v5866 = vpop.permute.xlu0 %5865
          %5867 = vrot.lane.b32.xlu0 %v5808, 32
          %v5868 = vpop.permute.xlu0 %5867
          %5869 = vrot.lane.b32.xlu0 %v5809, 32
          %v5870 = vpop.permute.xlu0 %5869
          %5871 = vrot.lane.b32.xlu0 %v5810, 32
          %v5872 = vpop.permute.xlu0 %5871
          %5873 = vrot.lane.b32.xlu0 %v5811, 32
          %v5874 = vpop.permute.xlu0 %5873
          %5875 = vrot.lane.b32.xlu0 %v5812, 32
          %v5876 = vpop.permute.xlu0 %5875
          %vm5909 = vcmask 322816
          %5910 = vst.msk [vmem:[%s303] sm:$0xf] %vm5909, %v5814
          %5911 = vst.msk [vmem:[%s303 + $0x4] sm:$0xf] %vm5909, %v5816
          %5912 = vst.msk [vmem:[%s303 + $0x8] sm:$0xf] %vm5909, %v5818
          %5913 = vst.msk [vmem:[%s303 + $0xc] sm:$0xf] %vm5909, %v5820
          %5914 = vst.msk [vmem:[%s303 + $0x10] sm:$0xf] %vm5909, %v5822
          %5915 = vst.msk [vmem:[%s303 + $0x14] sm:$0xf] %vm5909, %v5824
          %5916 = vst.msk [vmem:[%s303 + $0x18] sm:$0xf] %vm5909, %v5826
          %5917 = vst.msk [vmem:[%s303 + $0x1c] sm:$0xf] %vm5909, %v5828
          %5918 = vst.msk [vmem:[%s303 + $0x20] sm:$0xf] %vm5909, %v5830
          %5919 = vst.msk [vmem:[%s303 + $0x24] sm:$0xf] %vm5909, %v5832
          %5920 = vst.msk [vmem:[%s303 + $0x28] sm:$0xf] %vm5909, %v5834
          %5921 = vst.msk [vmem:[%s303 + $0x2c] sm:$0xf] %vm5909, %v5836
          %5922 = vst.msk [vmem:[%s303 + $0x30] sm:$0xf] %vm5909, %v5838
          %5923 = vst.msk [vmem:[%s303 + $0x34] sm:$0xf] %vm5909, %v5840
          %5924 = vst.msk [vmem:[%s303 + $0x38] sm:$0xf] %vm5909, %v5842
          %5925 = vst.msk [vmem:[%s303 + $0x3c] sm:$0xf] %vm5909, %v5844
          %5926 = vst.msk [vmem:[%s303 + $0x40] sm:$0xf] %vm5909, %v5846
          %5927 = vst.msk [vmem:[%s303 + $0x44] sm:$0xf] %vm5909, %v5848
          %5928 = vst.msk [vmem:[%s303 + $0x48] sm:$0xf] %vm5909, %v5850
          %5929 = vst.msk [vmem:[%s303 + $0x4c] sm:$0xf] %vm5909, %v5852
          %5930 = vst.msk [vmem:[%s303 + $0x50] sm:$0xf] %vm5909, %v5854
          %5931 = vst.msk [vmem:[%s303 + $0x54] sm:$0xf] %vm5909, %v5856
          %5932 = vst.msk [vmem:[%s303 + $0x58] sm:$0xf] %vm5909, %v5858
          %5933 = vst.msk [vmem:[%s303 + $0x5c] sm:$0xf] %vm5909, %v5860
          %5934 = vst.msk [vmem:[%s303 + $0x60] sm:$0xf] %vm5909, %v5862
          %5935 = vst.msk [vmem:[%s303 + $0x64] sm:$0xf] %vm5909, %v5864
          %5936 = vst.msk [vmem:[%s303 + $0x68] sm:$0xf] %vm5909, %v5866
          %5937 = vst.msk [vmem:[%s303 + $0x6c] sm:$0xf] %vm5909, %v5868
          %5938 = vst.msk [vmem:[%s303 + $0x70] sm:$0xf] %vm5909, %v5870
          %5939 = vst.msk [vmem:[%s303 + $0x74] sm:$0xf] %vm5909, %v5872
          %5940 = vst.msk [vmem:[%s303 + $0x78] sm:$0xf] %vm5909, %v5874
          %5941 = vst.msk [vmem:[%s303 + $0x7c] sm:$0xf] %vm5909, %v5876
        $region52: #{tpu_custom_call.1} parent=43 // pred_fallthru
          _
        %s5942 = sand.u32 %s188, 1
        %s5943 = scalar_lea.sflag [#allocation5], %s5942
        %s5944 = sand.u32 %s188, 1
        %s5945 = smul.addr %s5944, 128
        %s5946 = scalar_lea.vmem [#allocation4], %s5945
        // Predicated region
        $region53: #{tpu_custom_call.1} parent=43 // pred_check
          %p5947 = pneg %p198
        $region54: #{tpu_custom_call.1} parent=43 // pred_check_branch
          %5949 = sbr.rel (%p5947) target = $region56
        $region55: #{tpu_custom_call.1} parent=43 // pred_region
          %s5951 = ssub.s32 2048, 2048
          %5952 = vsyncadd %s5943, %s5951
          %s5953 = smul.addr %s24, 32
          %s5954 = smul.addr %s5953, 64
          %s5955 = scalar_lea.hbm %s6, %s5954
          %s5956 = sshll.u32 %s5946, 4
          %s5957 = int_to_ptr.vmem [resolvable:$true] %s5956
          %5962 = dma.vmem_to_hbm [thread:$0]  %s5957, 2048, %s5955, %s5943, 64, 64, 4
        $region56: #{tpu_custom_call.1} parent=43 // pred_fallthru
          _
      $region44: #{tpu_custom_call.1} parent=5 // pred_fallthru
        _
      %p5963 = scmp.le.s32.totalorder 2, %s15
      // Predicated region
      $region57: #{tpu_custom_call.1} parent=5 // pred_check
        %p5964 = pneg %p5963
      $region58: #{tpu_custom_call.1} parent=5 // pred_check_branch
        %5966 = sbr.rel (%p5964) target = $region60
      $region59: #{tpu_custom_call.1} parent=5 // pred_region
        %s5967 = ssub.s32 %s15, 2
        // Predicated region
        $region61: #{tpu_custom_call.1} parent=59 // pred_check
          %p5968 = pneg %p204
        $region62: #{tpu_custom_call.1} parent=59 // pred_check_branch
          %5970 = sbr.rel (%p5968) target = $region64
        $region63: #{tpu_custom_call.1} parent=59 // pred_region
          %s5971 = sand.u32 %s189, 1
          %s5972 = scalar_lea.sflag [#allocation5], %s5971
          %s5973 = sand.u32 %s189, 1
          %s5974 = smul.addr %s5973, 128
          %s5975 = scalar_lea.vmem [#allocation4], %s5974
          %5976 = dma.done %s5972, 2048
        $region64: #{tpu_custom_call.1} parent=59 // pred_fallthru
          _
      $region60: #{tpu_custom_call.1} parent=5 // pred_fallthru
        _
    $region6: #{tpu_custom_call.1} parent=1 // loop_footer
      %s19 = sadd.s32 1, %s15
    $region7: #{tpu_custom_call.1} parent=1 // loop_footer_branch
      %14 = sbr.rel target = $region3
    $region8: #{tpu_custom_call.1} parent=1 // loop_exit
      _
    %5977 = vsyncpa [#allocation5], 1
    %s5978 = scalar_lea.sflag [#allocation5], 1
    %5979 = vsyncpa %s5978, 1

</llo_original>
